<compile_context>
chip_gen: v7x
topology: tpu7x:2x2x1
jax: 0.10.0
libtpu: 0.0.40
codegen_flags: <defaults>
</compile_context>

<pallas_src>
import functools

import jax
import jax.numpy as jnp
from jax import lax
from jax.experimental import pallas as pl
from jax.experimental.pallas import tpu as pltpu


def _round_up(x, m):
    return (x + m - 1) // m * m


# ---------------------------------------------------------------------------
# Pallas tiled matmul with fused epilogue: act((A @ B) * scale + bias)
# A, B are consumed in bf16; accumulation is f32.
# ---------------------------------------------------------------------------
def _matmul_kernel(a_ref, b_ref, scale_ref, bias_ref, o_ref, acc_ref, *, act, n_valid):
    k = pl.program_id(2)

    @pl.when(k == 0)
    def _():
        acc_ref[...] = jnp.zeros_like(acc_ref)

    acc_ref[...] += jnp.dot(a_ref[...], b_ref[...],
                            preferred_element_type=jnp.float32)

    @pl.when(k == pl.num_programs(2) - 1)
    def _():
        y = acc_ref[...] * scale_ref[...] + bias_ref[...]
        if act == "relu":
            y = jnp.maximum(y, 0.0)
        elif act == "softmax":
            tm, tn = y.shape
            col = lax.broadcasted_iota(jnp.int32, (tm, tn), 1)
            y = jnp.where(col < n_valid, y, -1e30)   # mask padded class columns
            y = y - jnp.max(y, axis=-1, keepdims=True)
            e = jnp.exp(y)
            y = e / jnp.sum(e, axis=-1, keepdims=True)
        o_ref[...] = y.astype(o_ref.dtype)


def matmul_bias_act(a, b, bias, scale=None, act="none", out_dtype=jnp.float32,
                    tm=1024, tk=512, tn=256):
    """act((a @ b) * scale + bias), scale/bias broadcast along rows (per-column)."""
    M, K = a.shape
    K2, N = b.shape
    assert K == K2
    if scale is None:
        scale = jnp.ones((N,), jnp.float32)

    tm = min(tm, _round_up(M, 8))
    tk = min(tk, _round_up(K, 128))
    tn = min(tn, _round_up(N, 128))
    Mp, Kp, Np = _round_up(M, tm), _round_up(K, tk), _round_up(N, tn)
    if act == "softmax":
        assert Np == tn, "softmax epilogue requires a single N tile"

    # bf16 operands for the MXU (the dtype convert has to touch the data
    # anyway, so XLA fuses the ragged-edge pad into the same pass).
    a_p = a.astype(jnp.bfloat16)
    if (Mp, Kp) != (M, K):
        a_p = jnp.pad(a_p, ((0, Mp - M), (0, Kp - K)))
    b_p = b.astype(jnp.bfloat16)
    if (Kp, Np) != (K, N):
        b_p = jnp.pad(b_p, ((0, Kp - K), (0, Np - N)))
    scale_p = jnp.pad(scale.astype(jnp.float32), (0, Np - N)).reshape(1, Np)
    bias_p = jnp.pad(bias.astype(jnp.float32), (0, Np - N)).reshape(1, Np)

    out = pl.pallas_call(
        functools.partial(_matmul_kernel, act=act, n_valid=N),
        out_shape=jax.ShapeDtypeStruct((Mp, Np), out_dtype),
        grid_spec=pltpu.PrefetchScalarGridSpec(
            num_scalar_prefetch=0,
            grid=(Mp // tm, Np // tn, Kp // tk),
            in_specs=[
                pl.BlockSpec((tm, tk), lambda i, j, k: (i, k)),
                pl.BlockSpec((tk, tn), lambda i, j, k: (k, j)),
                pl.BlockSpec((1, tn), lambda i, j, k: (0, j)),
                pl.BlockSpec((1, tn), lambda i, j, k: (0, j)),
            ],
            out_specs=pl.BlockSpec((tm, tn), lambda i, j, k: (i, j)),
            scratch_shapes=[pltpu.VMEM((tm, tn), jnp.float32)],
        ),
        compiler_params=pltpu.CompilerParams(
            dimension_semantics=("parallel", "parallel", "arbitrary"),
            vmem_limit_bytes=32 * 1024 * 1024),   # fits v7x's 64 MiB VMEM too
    )(a_p, b_p, scale_p, bias_p)
    return out[:M, :N]


# ---------------------------------------------------------------------------
# Pallas LSTM recurrence: whole time loop inside one kernel invocation.
# Grid = (2,) over directions ("parallel" -> both TCs on v7x).  Only the final
# hidden state is needed downstream (h_n), so that is all we emit.
# ---------------------------------------------------------------------------
def _lstm_kernel(gx_ref, whh_ref, h_out_ref, *, hidden, seq_len):
    whh = whh_ref[...]                       # (H, 4H) bf16, resident in VMEM
    batch = gx_ref.shape[1]

    def sigmoid(z):
        return 1.0 / (1.0 + jnp.exp(-z))

    def step(t, carry):
        h, c = carry
        # gates = (x_t @ W_ih^T + b_ih + b_hh) + h_{t-1} @ W_hh^T ; order i,f,g,o
        gates = gx_ref[t] + jnp.dot(h.astype(whh.dtype), whh,
                                    preferred_element_type=jnp.float32)
        i_g = sigmoid(gates[:, 0:hidden])
        f_g = sigmoid(gates[:, hidden:2 * hidden])
        g_g = jnp.tanh(gates[:, 2 * hidden:3 * hidden])
        o_g = sigmoid(gates[:, 3 * hidden:4 * hidden])
        c = f_g * c + i_g * g_g
        h = o_g * jnp.tanh(c)
        return h, c

    h0 = jnp.zeros((batch, hidden), jnp.float32)
    c0 = jnp.zeros((batch, hidden), jnp.float32)
    h, _ = lax.fori_loop(0, seq_len, step, (h0, c0))
    h_out_ref[...] = h


def lstm_final_hidden(gx_all, whh_all, hidden):
    """gx_all: (2, T, B, 4H) precomputed input gates per direction, already in
    consumption order (direction 1 is time-reversed).  whh_all: (2, H, 4H)
    bf16 = W_hh^T per direction.  Returns (2, B, H) final hidden states."""
    ndir, T, B, G = gx_all.shape
    return pl.pallas_call(
        functools.partial(_lstm_kernel, hidden=hidden, seq_len=T),
        out_shape=jax.ShapeDtypeStruct((ndir, B, hidden), jnp.float32),
        grid_spec=pltpu.PrefetchScalarGridSpec(
            num_scalar_prefetch=0,
            grid=(ndir,),
            in_specs=[
                pl.BlockSpec((None, T, B, G), lambda d: (d, 0, 0, 0)),
                pl.BlockSpec((None, hidden, G), lambda d: (d, 0, 0)),
            ],
            out_specs=pl.BlockSpec((None, B, hidden), lambda d: (d, 0, 0)),
        ),
        compiler_params=pltpu.CompilerParams(
            dimension_semantics=("parallel",),
            vmem_limit_bytes=32 * 1024 * 1024),
    )(gx_all, whh_all)


# ---------------------------------------------------------------------------
# Conv as im2col + Pallas GEMM (NHWC layout), 2x2 maxpool (floor semantics)
# ---------------------------------------------------------------------------
def conv2d_gemm_nhwc(x, w, bias, stride, padding, scale=None, act="relu",
                     out_dtype=jnp.bfloat16):
    """x: (N, H, W, Cin) NHWC; w: (Cout, Cin, kh, kw) PyTorch layout."""
    N, H, W, Cin = x.shape
    Cout, _, kh, kw = w.shape
    Ho = (H + 2 * padding - kh) // stride + 1
    Wo = (W + 2 * padding - kw) // stride + 1
    xp = jnp.pad(x, ((0, 0), (padding, padding), (padding, padding), (0, 0)))
    cols = []
    for i in range(kh):
        for j in range(kw):
            cols.append(xp[:, i::stride, j::stride, :][:, :Ho, :Wo, :])
    patches = jnp.concatenate(cols, axis=-1)         # (N, Ho, Wo, kh*kw*Cin)
    a = patches.reshape(N * Ho * Wo, kh * kw * Cin)  # K order = (kh, kw, cin)
    b = jnp.transpose(w, (2, 3, 1, 0)).reshape(kh * kw * Cin, Cout)
    out = matmul_bias_act(a, b, bias, scale=scale, act=act, out_dtype=out_dtype)
    return out.reshape(N, Ho, Wo, Cout)


def maxpool_2x2_nhwc(x):
    # F.max_pool2d(kernel=2, stride=2): floor mode, trailing row/col dropped.
    N, H, W, C = x.shape
    x = x[:, : (H // 2) * 2, : (W // 2) * 2, :]
    a = x[:, 0::2, 0::2, :]
    b = x[:, 0::2, 1::2, :]
    c = x[:, 1::2, 0::2, :]
    d = x[:, 1::2, 1::2, :]
    return jnp.maximum(jnp.maximum(a, b), jnp.maximum(c, d))


# ---------------------------------------------------------------------------
# Parameter init (deterministic, PyTorch-like uniform fan-in scaling)
# ---------------------------------------------------------------------------
def init_params(key, cfg):
    in_s, out_s, ks = cfg["in_shape"], cfg["out_shape"], cfg["kernel_size"]
    keys = iter(jax.random.split(key, 40))

    def u(k, shape, fan_in):
        bound = 1.0 / float(fan_in) ** 0.5
        return jax.random.uniform(k, shape, jnp.float32, -bound, bound)

    p = {}
    for idx in range(5):
        cin, cout, kk = in_s[idx], out_s[idx], ks[idx]
        fan = cin * kk * kk
        p[f"conv{idx + 1}_w"] = u(next(keys), (cout, cin, kk, kk), fan)
        p[f"conv{idx + 1}_b"] = u(next(keys), (cout,), fan)
    # BatchNorm2d defaults (eval-mode running stats)
    c1 = out_s[0]
    p["bn_gamma"] = jnp.ones((c1,), jnp.float32)
    p["bn_beta"] = jnp.zeros((c1,), jnp.float32)
    p["bn_mean"] = jnp.zeros((c1,), jnp.float32)
    p["bn_var"] = jnp.ones((c1,), jnp.float32)
    # bidirectional LSTM(input=in_s[5], hidden=out_s[5])
    D_in, Hd = in_s[5], out_s[5]
    for d in ("fwd", "rev"):
        p[f"lstm_wih_{d}"] = u(next(keys), (4 * Hd, D_in), Hd)
        p[f"lstm_whh_{d}"] = u(next(keys), (4 * Hd, Hd), Hd)
        p[f"lstm_bih_{d}"] = u(next(keys), (4 * Hd,), Hd)
        p[f"lstm_bhh_{d}"] = u(next(keys), (4 * Hd,), Hd)
    # Linear(2*hidden -> n_classes)
    nc = cfg["n_classes"]
    p["l1_w"] = u(next(keys), (nc, 2 * Hd), 2 * Hd)
    p["l1_b"] = u(next(keys), (nc,), 2 * Hd)
    return p


# ---------------------------------------------------------------------------
# Full forward pass
# ---------------------------------------------------------------------------
def depth_lstm_forward(params, x, cfg):
    in_s, out_s, st = cfg["in_shape"], cfg["out_shape"], cfg["stride"]
    B, T, Hin, Win = x.shape
    # flatten(0,1) + unsqueeze(1)  -> NHWC (B*T, H, W, 1)
    xf = x.reshape(B * T, Hin, Win)[..., None]

    # conv1 + BatchNorm(eval) + ReLU, BN folded into the GEMM epilogue
    eps = 1e-5
    bn_scale = params["bn_gamma"] / jnp.sqrt(params["bn_var"] + eps)
    bn_bias = (params["conv1_b"] - params["bn_mean"]) * bn_scale + params["bn_beta"]
    y = conv2d_gemm_nhwc(xf, params["conv1_w"], bn_bias, st[0], 1,
                         scale=bn_scale, act="relu")
    y = maxpool_2x2_nhwc(y)
    y = conv2d_gemm_nhwc(y, params["conv2_w"], params["conv2_b"], st[1], 1, act="relu")
    y = maxpool_2x2_nhwc(y)
    y = conv2d_gemm_nhwc(y, params["conv3_w"], params["conv3_b"], st[2], 1, act="relu")
    y = conv2d_gemm_nhwc(y, params["conv4_w"], params["conv4_b"], st[3], 1, act="relu")
    y = conv2d_gemm_nhwc(y, params["conv5_w"], params["conv5_b"], st[4], 1, act="relu")
    y = maxpool_2x2_nhwc(y)

    # torch.flatten(x, 1) on NCHW => channel-major feature order: one tiny
    # transpose here instead of NCHW<->NHWC passes around every conv.
    feat = jnp.transpose(y, (0, 3, 1, 2)).reshape(B * T, -1)
    D_in = in_s[5]
    seq = feat.reshape(B, 60, D_in)          # hard-coded 60 as in the module
    # TODO(synk): F.dropout(0.5) on the LSTM input is random; identity (eval mode).

    Hd = out_s[5]
    # Fused fwd+rev input projection: one GEMM (B*60, D_in) @ (D_in, 8H)
    wih_cat = jnp.concatenate(
        [params["lstm_wih_fwd"].T, params["lstm_wih_rev"].T], axis=1)
    bias_cat = jnp.concatenate(
        [params["lstm_bih_fwd"] + params["lstm_bhh_fwd"],
         params["lstm_bih_rev"] + params["lstm_bhh_rev"]])
    gx = matmul_bias_act(seq.reshape(B * 60, D_in), wih_cat, bias_cat,
                         act="none", out_dtype=jnp.float32)
    gx = gx.reshape(B, 60, 2, 4 * Hd)                       # [:, :, 0]=fwd, 1=rev
    gx_f = jnp.transpose(gx[:, :, 0, :], (1, 0, 2))         # (T, B, 4H)
    gx_r = jnp.transpose(gx[:, ::-1, 1, :], (1, 0, 2))      # reverse consumes t=T-1..0
    gx_all = jnp.stack([gx_f, gx_r], axis=0)                # (2, T, B, 4H)
    whh_all = jnp.stack([params["lstm_whh_fwd"].T,
                         params["lstm_whh_rev"].T], axis=0).astype(jnp.bfloat16)

    h_fin = lstm_final_hidden(gx_all, whh_all, Hd)          # (2, B, H)

    # h_n[-2:] -> transpose(0,1) -> flatten(1): per-example [h_fwd, h_rev]
    hcat = jnp.concatenate([h_fin[0], h_fin[1]], axis=-1)   # (B, 2H)
    # TODO(synk): F.dropout(0.3) before the classifier is random; identity (eval mode).
    probs = matmul_bias_act(hcat, params["l1_w"].T, params["l1_b"],
                            act="softmax", out_dtype=jnp.float32)
    return probs, probs


if __name__ == "__main__":
    # Small configuration consistent with the module's structure:
    #   16x16 frames, 8 channels, k=3/s=1 convs, three 2x2 pools ->
    #   conv output 8 x 2 x 2 = 32 features per frame, hidden=32, T=60
    #   (60 is hard-coded in the module's reshape).
    cfg = dict(
        n_classes=10,
        in_shape=[1, 8, 8, 8, 8, 32, 16],
        out_shape=[8, 8, 8, 8, 8, 32, 16],
        kernel_size=[3, 3, 3, 3, 3],
        stride=[1, 1, 1, 1, 1],
    )

    key = jax.random.PRNGKey(0)
    pkey, xkey = jax.random.split(key)
    params = init_params(pkey, cfg)
    x = jax.random.normal(xkey, (2, 60, 16, 16), jnp.float32)

    fwd = jax.jit(functools.partial(depth_lstm_forward, cfg=cfg))
    out, out_dup = fwd(params, x)
    jax.block_until_ready(out)

    assert out.shape == (2, cfg["n_classes"])
    assert bool(jnp.allclose(jnp.sum(out, axis=-1), 1.0, atol=1e-4))
    print("KERNEL_OK")
</pallas_src>

<mosaic_0001>
module attributes {stable_mosaic.version = 11 : i64} {
  func.func @_matmul_kernel(%arg0: i32, %arg1: i32, %arg2: i32, %arg3: memref<1024x128xbf16, #tpu.memory_space<vmem>>, %arg4: memref<128x128xbf16, #tpu.memory_space<vmem>>, %arg5: memref<1x128xf32, #tpu.memory_space<vmem>>, %arg6: memref<1x128xf32, #tpu.memory_space<vmem>>, %arg7: memref<1024x128xbf16, #tpu.memory_space<vmem>>, %arg8: memref<1024x128xf32, #tpu.memory_space<vmem>>) attributes {dimension_semantics = [#tpu.dimension_semantics<parallel>, #tpu.dimension_semantics<parallel>, #tpu.dimension_semantics<arbitrary>], iteration_bounds = array<i64: 30, 1, 1>, scalar_prefetch = 0 : i64, scratch_operands = 1 : i64, tpu.core_type = #tpu.core_type<tc>, window_params = [{transform_indices = @transform_0, window_bounds = array<i64: 1024, 128>}, {transform_indices = @transform_1, window_bounds = array<i64: 128, 128>}, {transform_indices = @transform_2, window_bounds = array<i64: 1, 128>}, {transform_indices = @transform_3, window_bounds = array<i64: 1, 128>}, {transform_indices = @transform_4, window_bounds = array<i64: 1024, 128>}]} {
    %c0_i32 = arith.constant 0 : i32
    %0 = arith.cmpi eq, %arg2, %c0_i32 : i32
    %1 = arith.extui %0 : i1 to i32
    %c0_i32_0 = arith.constant 0 : i32
    %2 = arith.cmpi ne, %1, %c0_i32_0 : i32
    scf.if %2 {
      %cst_10 = arith.constant 0.000000e+00 : f32
      %12 = vector.broadcast %cst_10 : f32 to vector<1024x128xf32>
      %c0_11 = arith.constant 0 : index
      %c0_12 = arith.constant 0 : index
      %13 = vector.load %arg8[%c0_11, %c0_12] : memref<1024x128xf32, #tpu.memory_space<vmem>>, vector<1024x128xf32>
      tpu.vector_store %arg8[%c0_11, %c0_12], %12 {strides = array<i32>} : memref<1024x128xf32, #tpu.memory_space<vmem>>, vector<1024x128xf32>,
    } else {
    }
    %c0 = arith.constant 0 : index
    %c0_1 = arith.constant 0 : index
    %3 = vector.load %arg8[%c0, %c0_1] : memref<1024x128xf32, #tpu.memory_space<vmem>>, vector<1024x128xf32>
    %c0_2 = arith.constant 0 : index
    %c0_3 = arith.constant 0 : index
    %4 = vector.load %arg3[%c0_2, %c0_3] : memref<1024x128xbf16, #tpu.memory_space<vmem>>, vector<1024x128xbf16>
    %c0_4 = arith.constant 0 : index
    %c0_5 = arith.constant 0 : index
    %5 = vector.load %arg4[%c0_4, %c0_5] : memref<128x128xbf16, #tpu.memory_space<vmem>>, vector<128x128xbf16>
    %cst = arith.constant dense<0.000000e+00> : vector<1024x128xf32>
    %6 = tpu.matmul %4, %5, %cst {dimension_numbers = #tpu.dot_dimension_numbers<[1], [0], [0], [1], [0, 0, 1, 1], [], []>} : vector<1024x128xbf16>, vector<128x128xbf16>, vector<1024x128xf32> -> vector<1024x128xf32>
    %7 = arith.addf %3, %6 : vector<1024x128xf32>
    %c0_6 = arith.constant 0 : index
    %c0_7 = arith.constant 0 : index
    %8 = vector.load %arg8[%c0_6, %c0_7] : memref<1024x128xf32, #tpu.memory_space<vmem>>, vector<1024x128xf32>
    tpu.vector_store %arg8[%c0_6, %c0_7], %7 {strides = array<i32>} : memref<1024x128xf32, #tpu.memory_space<vmem>>, vector<1024x128xf32>,
    %c0_i32_8 = arith.constant 0 : i32
    %9 = arith.cmpi eq, %arg2, %c0_i32_8 : i32
    %10 = arith.extui %9 : i1 to i32
    %c0_i32_9 = arith.constant 0 : i32
    %11 = arith.cmpi ne, %10, %c0_i32_9 : i32
    scf.if %11 {
      %c0_10 = arith.constant 0 : index
      %c0_11 = arith.constant 0 : index
      %12 = vector.load %arg8[%c0_10, %c0_11] : memref<1024x128xf32, #tpu.memory_space<vmem>>, vector<1024x128xf32>
      %c0_12 = arith.constant 0 : index
      %c0_13 = arith.constant 0 : index
      %13 = vector.load %arg5[%c0_12, %c0_13] : memref<1x128xf32, #tpu.memory_space<vmem>>, vector<1x128xf32>
      %14 = vector.broadcast %13 : vector<1x128xf32> to vector<1024x128xf32>
      %15 = arith.mulf %12, %14 : vector<1024x128xf32>
      %c0_14 = arith.constant 0 : index
      %c0_15 = arith.constant 0 : index
      %16 = vector.load %arg6[%c0_14, %c0_15] : memref<1x128xf32, #tpu.memory_space<vmem>>, vector<1x128xf32>
      %17 = vector.broadcast %16 : vector<1x128xf32> to vector<1024x128xf32>
      %18 = arith.addf %15, %17 : vector<1024x128xf32>
      %cst_16 = arith.constant 0.000000e+00 : f32
      %19 = vector.broadcast %cst_16 : f32 to vector<1024x128xf32>
      %20 = arith.maximumf %18, %19 : vector<1024x128xf32>
      %21 = arith.truncf %20 : vector<1024x128xf32> to vector<1024x128xbf16>
      %c0_17 = arith.constant 0 : index
      %c0_18 = arith.constant 0 : index
      %22 = vector.load %arg7[%c0_17, %c0_18] : memref<1024x128xbf16, #tpu.memory_space<vmem>>, vector<1024x128xbf16>
      tpu.vector_store %arg7[%c0_17, %c0_18], %21 {strides = array<i32>} : memref<1024x128xbf16, #tpu.memory_space<vmem>>, vector<1024x128xbf16>,
    } else {
    }
    return
  }
  func.func @transform_0(%arg0: i32, %arg1: i32, %arg2: i32) -> (i32, i32) {
    %c0_i32 = arith.constant 0 : i32
    return %arg0, %arg2 : i32, i32
  }
  func.func @transform_1(%arg0: i32, %arg1: i32, %arg2: i32) -> (i32, i32) {
    %c0_i32 = arith.constant 0 : i32
    return %arg2, %arg1 : i32, i32
  }
  func.func @transform_2(%arg0: i32, %arg1: i32, %arg2: i32) -> (i32, i32) {
    %c0_i32 = arith.constant 0 : i32
    %c0_i32_0 = arith.constant 0 : i32
    return %c0_i32, %arg1 : i32, i32
  }
  func.func @transform_3(%arg0: i32, %arg1: i32, %arg2: i32) -> (i32, i32) {
    %c0_i32 = arith.constant 0 : i32
    %c0_i32_0 = arith.constant 0 : i32
    return %c0_i32, %arg1 : i32, i32
  }
  func.func @transform_4(%arg0: i32, %arg1: i32, %arg2: i32) -> (i32, i32) {
    %c0_i32 = arith.constant 0 : i32
    return %arg0, %arg1 : i32, i32
  }
}

module attributes {stable_mosaic.version = 11 : i64} {
  func.func @_matmul_kernel(%arg0: i32, %arg1: i32, %arg2: i32, %arg3: memref<1024x128xbf16, #tpu.memory_space<vmem>>, %arg4: memref<128x128xbf16, #tpu.memory_space<vmem>>, %arg5: memref<1x128xf32, #tpu.memory_space<vmem>>, %arg6: memref<1x128xf32, #tpu.memory_space<vmem>>, %arg7: memref<1024x128xbf16, #tpu.memory_space<vmem>>, %arg8: memref<1024x128xf32, #tpu.memory_space<vmem>>) attributes {dimension_semantics = [#tpu.dimension_semantics<parallel>, #tpu.dimension_semantics<parallel>, #tpu.dimension_semantics<arbitrary>], iteration_bounds = array<i64: 8, 1, 1>, scalar_prefetch = 0 : i64, scratch_operands = 1 : i64, tpu.core_type = #tpu.core_type<tc>, window_params = [{transform_indices = @transform_0, window_bounds = array<i64: 1024, 128>}, {transform_indices = @transform_1, window_bounds = array<i64: 128, 128>}, {transform_indices = @transform_2, window_bounds = array<i64: 1, 128>}, {transform_indices = @transform_3, window_bounds = array<i64: 1, 128>}, {transform_indices = @transform_4, window_bounds = array<i64: 1024, 128>}]} {
    %c0_i32 = arith.constant 0 : i32
    %0 = arith.cmpi eq, %arg2, %c0_i32 : i32
    %1 = arith.extui %0 : i1 to i32
    %c0_i32_0 = arith.constant 0 : i32
    %2 = arith.cmpi ne, %1, %c0_i32_0 : i32
    scf.if %2 {
      %cst_10 = arith.constant 0.000000e+00 : f32
      %12 = vector.broadcast %cst_10 : f32 to vector<1024x128xf32>
      %c0_11 = arith.constant 0 : index
      %c0_12 = arith.constant 0 : index
      %13 = vector.load %arg8[%c0_11, %c0_12] : memref<1024x128xf32, #tpu.memory_space<vmem>>, vector<1024x128xf32>
      tpu.vector_store %arg8[%c0_11, %c0_12], %12 {strides = array<i32>} : memref<1024x128xf32, #tpu.memory_space<vmem>>, vector<1024x128xf32>,
    } else {
    }
    %c0 = arith.constant 0 : index
    %c0_1 = arith.constant 0 : index
    %3 = vector.load %arg8[%c0, %c0_1] : memref<1024x128xf32, #tpu.memory_space<vmem>>, vector<1024x128xf32>
    %c0_2 = arith.constant 0 : index
    %c0_3 = arith.constant 0 : index
    %4 = vector.load %arg3[%c0_2, %c0_3] : memref<1024x128xbf16, #tpu.memory_space<vmem>>, vector<1024x128xbf16>
    %c0_4 = arith.constant 0 : index
    %c0_5 = arith.constant 0 : index
    %5 = vector.load %arg4[%c0_4, %c0_5] : memref<128x128xbf16, #tpu.memory_space<vmem>>, vector<128x128xbf16>
    %cst = arith.constant dense<0.000000e+00> : vector<1024x128xf32>
    %6 = tpu.matmul %4, %5, %cst {dimension_numbers = #tpu.dot_dimension_numbers<[1], [0], [0], [1], [0, 0, 1, 1], [], []>} : vector<1024x128xbf16>, vector<128x128xbf16>, vector<1024x128xf32> -> vector<1024x128xf32>
    %7 = arith.addf %3, %6 : vector<1024x128xf32>
    %c0_6 = arith.constant 0 : index
    %c0_7 = arith.constant 0 : index
    %8 = vector.load %arg8[%c0_6, %c0_7] : memref<1024x128xf32, #tpu.memory_space<vmem>>, vector<1024x128xf32>
    tpu.vector_store %arg8[%c0_6, %c0_7], %7 {strides = array<i32>} : memref<1024x128xf32, #tpu.memory_space<vmem>>, vector<1024x128xf32>,
    %c0_i32_8 = arith.constant 0 : i32
    %9 = arith.cmpi eq, %arg2, %c0_i32_8 : i32
    %10 = arith.extui %9 : i1 to i32
    %c0_i32_9 = arith.constant 0 : i32
    %11 = arith.cmpi ne, %10, %c0_i32_9 : i32
    scf.if %11 {
      %c0_10 = arith.constant 0 : index
      %c0_11 = arith.constant 0 : index
      %12 = vector.load %arg8[%c0_10, %c0_11] : memref<1024x128xf32, #tpu.memory_space<vmem>>, vector<1024x128xf32>
      %c0_12 = arith.constant 0 : index
      %c0_13 = arith.constant 0 : index
      %13 = vector.load %arg5[%c0_12, %c0_13] : memref<1x128xf32, #tpu.memory_space<vmem>>, vector<1x128xf32>
      %14 = vector.broadcast %13 : vector<1x128xf32> to vector<1024x128xf32>
      %15 = arith.mulf %12, %14 : vector<1024x128xf32>
      %c0_14 = arith.constant 0 : index
      %c0_15 = arith.constant 0 : index
      %16 = vector.load %arg6[%c0_14, %c0_15] : memref<1x128xf32, #tpu.memory_space<vmem>>, vector<1x128xf32>
      %17 = vector.broadcast %16 : vector<1x128xf32> to vector<1024x128xf32>
      %18 = arith.addf %15, %17 : vector<1024x128xf32>
      %cst_16 = arith.constant 0.000000e+00 : f32
      %19 = vector.broadcast %cst_16 : f32 to vector<1024x128xf32>
      %20 = arith.maximumf %18, %19 : vector<1024x128xf32>
      %21 = arith.truncf %20 : vector<1024x128xf32> to vector<1024x128xbf16>
      %c0_17 = arith.constant 0 : index
      %c0_18 = arith.constant 0 : index
      %22 = vector.load %arg7[%c0_17, %c0_18] : memref<1024x128xbf16, #tpu.memory_space<vmem>>, vector<1024x128xbf16>
      tpu.vector_store %arg7[%c0_17, %c0_18], %21 {strides = array<i32>} : memref<1024x128xbf16, #tpu.memory_space<vmem>>, vector<1024x128xbf16>,
    } else {
    }
    return
  }
  func.func @transform_0(%arg0: i32, %arg1: i32, %arg2: i32) -> (i32, i32) {
    %c0_i32 = arith.constant 0 : i32
    return %arg0, %arg2 : i32, i32
  }
  func.func @transform_1(%arg0: i32, %arg1: i32, %arg2: i32) -> (i32, i32) {
    %c0_i32 = arith.constant 0 : i32
    return %arg2, %arg1 : i32, i32
  }
  func.func @transform_2(%arg0: i32, %arg1: i32, %arg2: i32) -> (i32, i32) {
    %c0_i32 = arith.constant 0 : i32
    %c0_i32_0 = arith.constant 0 : i32
    return %c0_i32, %arg1 : i32, i32
  }
  func.func @transform_3(%arg0: i32, %arg1: i32, %arg2: i32) -> (i32, i32) {
    %c0_i32 = arith.constant 0 : i32
    %c0_i32_0 = arith.constant 0 : i32
    return %c0_i32, %arg1 : i32, i32
  }
  func.func @transform_4(%arg0: i32, %arg1: i32, %arg2: i32) -> (i32, i32) {
    %c0_i32 = arith.constant 0 : i32
    return %arg0, %arg1 : i32, i32
  }
}

module attributes {stable_mosaic.version = 11 : i64} {
  func.func @_matmul_kernel(%arg0: i32, %arg1: i32, %arg2: i32, %arg3: memref<1024x128xbf16, #tpu.memory_space<vmem>>, %arg4: memref<128x128xbf16, #tpu.memory_space<vmem>>, %arg5: memref<1x128xf32, #tpu.memory_space<vmem>>, %arg6: memref<1x128xf32, #tpu.memory_space<vmem>>, %arg7: memref<1024x128xbf16, #tpu.memory_space<vmem>>, %arg8: memref<1024x128xf32, #tpu.memory_space<vmem>>) attributes {dimension_semantics = [#tpu.dimension_semantics<parallel>, #tpu.dimension_semantics<parallel>, #tpu.dimension_semantics<arbitrary>], iteration_bounds = array<i64: 2, 1, 1>, scalar_prefetch = 0 : i64, scratch_operands = 1 : i64, tpu.core_type = #tpu.core_type<tc>, window_params = [{transform_indices = @transform_0, window_bounds = array<i64: 1024, 128>}, {transform_indices = @transform_1, window_bounds = array<i64: 128, 128>}, {transform_indices = @transform_2, window_bounds = array<i64: 1, 128>}, {transform_indices = @transform_3, window_bounds = array<i64: 1, 128>}, {transform_indices = @transform_4, window_bounds = array<i64: 1024, 128>}]} {
    %c0_i32 = arith.constant 0 : i32
    %0 = arith.cmpi eq, %arg2, %c0_i32 : i32
    %1 = arith.extui %0 : i1 to i32
    %c0_i32_0 = arith.constant 0 : i32
    %2 = arith.cmpi ne, %1, %c0_i32_0 : i32
    scf.if %2 {
      %cst_10 = arith.constant 0.000000e+00 : f32
      %12 = vector.broadcast %cst_10 : f32 to vector<1024x128xf32>
      %c0_11 = arith.constant 0 : index
      %c0_12 = arith.constant 0 : index
      %13 = vector.load %arg8[%c0_11, %c0_12] : memref<1024x128xf32, #tpu.memory_space<vmem>>, vector<1024x128xf32>
      tpu.vector_store %arg8[%c0_11, %c0_12], %12 {strides = array<i32>} : memref<1024x128xf32, #tpu.memory_space<vmem>>, vector<1024x128xf32>,
    } else {
    }
    %c0 = arith.constant 0 : index
    %c0_1 = arith.constant 0 : index
    %3 = vector.load %arg8[%c0, %c0_1] : memref<1024x128xf32, #tpu.memory_space<vmem>>, vector<1024x128xf32>
    %c0_2 = arith.constant 0 : index
    %c0_3 = arith.constant 0 : index
    %4 = vector.load %arg3[%c0_2, %c0_3] : memref<1024x128xbf16, #tpu.memory_space<vmem>>, vector<1024x128xbf16>
    %c0_4 = arith.constant 0 : index
    %c0_5 = arith.constant 0 : index
    %5 = vector.load %arg4[%c0_4, %c0_5] : memref<128x128xbf16, #tpu.memory_space<vmem>>, vector<128x128xbf16>
    %cst = arith.constant dense<0.000000e+00> : vector<1024x128xf32>
    %6 = tpu.matmul %4, %5, %cst {dimension_numbers = #tpu.dot_dimension_numbers<[1], [0], [0], [1], [0, 0, 1, 1], [], []>} : vector<1024x128xbf16>, vector<128x128xbf16>, vector<1024x128xf32> -> vector<1024x128xf32>
    %7 = arith.addf %3, %6 : vector<1024x128xf32>
    %c0_6 = arith.constant 0 : index
    %c0_7 = arith.constant 0 : index
    %8 = vector.load %arg8[%c0_6, %c0_7] : memref<1024x128xf32, #tpu.memory_space<vmem>>, vector<1024x128xf32>
    tpu.vector_store %arg8[%c0_6, %c0_7], %7 {strides = array<i32>} : memref<1024x128xf32, #tpu.memory_space<vmem>>, vector<1024x128xf32>,
    %c0_i32_8 = arith.constant 0 : i32
    %9 = arith.cmpi eq, %arg2, %c0_i32_8 : i32
    %10 = arith.extui %9 : i1 to i32
    %c0_i32_9 = arith.constant 0 : i32
    %11 = arith.cmpi ne, %10, %c0_i32_9 : i32
    scf.if %11 {
      %c0_10 = arith.constant 0 : index
      %c0_11 = arith.constant 0 : index
      %12 = vector.load %arg8[%c0_10, %c0_11] : memref<1024x128xf32, #tpu.memory_space<vmem>>, vector<1024x128xf32>
      %c0_12 = arith.constant 0 : index
      %c0_13 = arith.constant 0 : index
      %13 = vector.load %arg5[%c0_12, %c0_13] : memref<1x128xf32, #tpu.memory_space<vmem>>, vector<1x128xf32>
      %14 = vector.broadcast %13 : vector<1x128xf32> to vector<1024x128xf32>
      %15 = arith.mulf %12, %14 : vector<1024x128xf32>
      %c0_14 = arith.constant 0 : index
      %c0_15 = arith.constant 0 : index
      %16 = vector.load %arg6[%c0_14, %c0_15] : memref<1x128xf32, #tpu.memory_space<vmem>>, vector<1x128xf32>
      %17 = vector.broadcast %16 : vector<1x128xf32> to vector<1024x128xf32>
      %18 = arith.addf %15, %17 : vector<1024x128xf32>
      %cst_16 = arith.constant 0.000000e+00 : f32
      %19 = vector.broadcast %cst_16 : f32 to vector<1024x128xf32>
      %20 = arith.maximumf %18, %19 : vector<1024x128xf32>
      %21 = arith.truncf %20 : vector<1024x128xf32> to vector<1024x128xbf16>
      %c0_17 = arith.constant 0 : index
      %c0_18 = arith.constant 0 : index
      %22 = vector.load %arg7[%c0_17, %c0_18] : memref<1024x128xbf16, #tpu.memory_space<vmem>>, vector<1024x128xbf16>
      tpu.vector_store %arg7[%c0_17, %c0_18], %21 {strides = array<i32>} : memref<1024x128xbf16, #tpu.memory_space<vmem>>, vector<1024x128xbf16>,
    } else {
    }
    return
  }
  func.func @transform_0(%arg0: i32, %arg1: i32, %arg2: i32) -> (i32, i32) {
    %c0_i32 = arith.constant 0 : i32
    return %arg0, %arg2 : i32, i32
  }
  func.func @transform_1(%arg0: i32, %arg1: i32, %arg2: i32) -> (i32, i32) {
    %c0_i32 = arith.constant 0 : i32
    return %arg2, %arg1 : i32, i32
  }
  func.func @transform_2(%arg0: i32, %arg1: i32, %arg2: i32) -> (i32, i32) {
    %c0_i32 = arith.constant 0 : i32
    %c0_i32_0 = arith.constant 0 : i32
    return %c0_i32, %arg1 : i32, i32
  }
  func.func @transform_3(%arg0: i32, %arg1: i32, %arg2: i32) -> (i32, i32) {
    %c0_i32 = arith.constant 0 : i32
    %c0_i32_0 = arith.constant 0 : i32
    return %c0_i32, %arg1 : i32, i32
  }
  func.func @transform_4(%arg0: i32, %arg1: i32, %arg2: i32) -> (i32, i32) {
    %c0_i32 = arith.constant 0 : i32
    return %arg0, %arg1 : i32, i32
  }
}

module attributes {stable_mosaic.version = 11 : i64} {
  func.func @_matmul_kernel(%arg0: i32, %arg1: i32, %arg2: i32, %arg3: memref<120x128xbf16, #tpu.memory_space<vmem>>, %arg4: memref<128x256xbf16, #tpu.memory_space<vmem>>, %arg5: memref<1x256xf32, #tpu.memory_space<vmem>>, %arg6: memref<1x256xf32, #tpu.memory_space<vmem>>, %arg7: memref<120x256xf32, #tpu.memory_space<vmem>>, %arg8: memref<120x256xf32, #tpu.memory_space<vmem>>) attributes {dimension_semantics = [#tpu.dimension_semantics<parallel>, #tpu.dimension_semantics<parallel>, #tpu.dimension_semantics<arbitrary>], iteration_bounds = array<i64: 1, 1, 1>, scalar_prefetch = 0 : i64, scratch_operands = 1 : i64, tpu.core_type = #tpu.core_type<tc>, window_params = [{transform_indices = @transform_0, window_bounds = array<i64: 120, 128>}, {transform_indices = @transform_1, window_bounds = array<i64: 128, 256>}, {transform_indices = @transform_2, window_bounds = array<i64: 1, 256>}, {transform_indices = @transform_3, window_bounds = array<i64: 1, 256>}, {transform_indices = @transform_4, window_bounds = array<i64: 120, 256>}]} {
    %c0_i32 = arith.constant 0 : i32
    %0 = arith.cmpi eq, %arg2, %c0_i32 : i32
    %1 = arith.extui %0 : i1 to i32
    %c0_i32_0 = arith.constant 0 : i32
    %2 = arith.cmpi ne, %1, %c0_i32_0 : i32
    scf.if %2 {
      %cst_10 = arith.constant 0.000000e+00 : f32
      %12 = vector.broadcast %cst_10 : f32 to vector<120x256xf32>
      %c0_11 = arith.constant 0 : index
      %c0_12 = arith.constant 0 : index
      %13 = vector.load %arg8[%c0_11, %c0_12] : memref<120x256xf32, #tpu.memory_space<vmem>>, vector<120x256xf32>
      tpu.vector_store %arg8[%c0_11, %c0_12], %12 {strides = array<i32>} : memref<120x256xf32, #tpu.memory_space<vmem>>, vector<120x256xf32>,
    } else {
    }
    %c0 = arith.constant 0 : index
    %c0_1 = arith.constant 0 : index
    %3 = vector.load %arg8[%c0, %c0_1] : memref<120x256xf32, #tpu.memory_space<vmem>>, vector<120x256xf32>
    %c0_2 = arith.constant 0 : index
    %c0_3 = arith.constant 0 : index
    %4 = vector.load %arg3[%c0_2, %c0_3] : memref<120x128xbf16, #tpu.memory_space<vmem>>, vector<120x128xbf16>
    %c0_4 = arith.constant 0 : index
    %c0_5 = arith.constant 0 : index
    %5 = vector.load %arg4[%c0_4, %c0_5] : memref<128x256xbf16, #tpu.memory_space<vmem>>, vector<128x256xbf16>
    %cst = arith.constant dense<0.000000e+00> : vector<120x256xf32>
    %6 = tpu.matmul %4, %5, %cst {dimension_numbers = #tpu.dot_dimension_numbers<[1], [0], [0], [1], [0, 0, 1, 1], [], []>} : vector<120x128xbf16>, vector<128x256xbf16>, vector<120x256xf32> -> vector<120x256xf32>
    %7 = arith.addf %3, %6 : vector<120x256xf32>
    %c0_6 = arith.constant 0 : index
    %c0_7 = arith.constant 0 : index
    %8 = vector.load %arg8[%c0_6, %c0_7] : memref<120x256xf32, #tpu.memory_space<vmem>>, vector<120x256xf32>
    tpu.vector_store %arg8[%c0_6, %c0_7], %7 {strides = array<i32>} : memref<120x256xf32, #tpu.memory_space<vmem>>, vector<120x256xf32>,
    %c0_i32_8 = arith.constant 0 : i32
    %9 = arith.cmpi eq, %arg2, %c0_i32_8 : i32
    %10 = arith.extui %9 : i1 to i32
    %c0_i32_9 = arith.constant 0 : i32
    %11 = arith.cmpi ne, %10, %c0_i32_9 : i32
    scf.if %11 {
      %c0_10 = arith.constant 0 : index
      %c0_11 = arith.constant 0 : index
      %12 = vector.load %arg8[%c0_10, %c0_11] : memref<120x256xf32, #tpu.memory_space<vmem>>, vector<120x256xf32>
      %c0_12 = arith.constant 0 : index
      %c0_13 = arith.constant 0 : index
      %13 = vector.load %arg5[%c0_12, %c0_13] : memref<1x256xf32, #tpu.memory_space<vmem>>, vector<1x256xf32>
      %14 = vector.broadcast %13 : vector<1x256xf32> to vector<120x256xf32>
      %15 = arith.mulf %12, %14 : vector<120x256xf32>
      %c0_14 = arith.constant 0 : index
      %c0_15 = arith.constant 0 : index
      %16 = vector.load %arg6[%c0_14, %c0_15] : memref<1x256xf32, #tpu.memory_space<vmem>>, vector<1x256xf32>
      %17 = vector.broadcast %16 : vector<1x256xf32> to vector<120x256xf32>
      %18 = arith.addf %15, %17 : vector<120x256xf32>
      %c0_16 = arith.constant 0 : index
      %c0_17 = arith.constant 0 : index
      %19 = vector.load %arg7[%c0_16, %c0_17] : memref<120x256xf32, #tpu.memory_space<vmem>>, vector<120x256xf32>
      tpu.vector_store %arg7[%c0_16, %c0_17], %18 {strides = array<i32>} : memref<120x256xf32, #tpu.memory_space<vmem>>, vector<120x256xf32>,
    } else {
    }
    return
  }
  func.func @transform_0(%arg0: i32, %arg1: i32, %arg2: i32) -> (i32, i32) {
    %c0_i32 = arith.constant 0 : i32
    return %arg0, %arg2 : i32, i32
  }
  func.func @transform_1(%arg0: i32, %arg1: i32, %arg2: i32) -> (i32, i32) {
    %c0_i32 = arith.constant 0 : i32
    return %arg2, %arg1 : i32, i32
  }
  func.func @transform_2(%arg0: i32, %arg1: i32, %arg2: i32) -> (i32, i32) {
    %c0_i32 = arith.constant 0 : i32
    %c0_i32_0 = arith.constant 0 : i32
    return %c0_i32, %arg1 : i32, i32
  }
  func.func @transform_3(%arg0: i32, %arg1: i32, %arg2: i32) -> (i32, i32) {
    %c0_i32 = arith.constant 0 : i32
    %c0_i32_0 = arith.constant 0 : i32
    return %c0_i32, %arg1 : i32, i32
  }
  func.func @transform_4(%arg0: i32, %arg1: i32, %arg2: i32) -> (i32, i32) {
    %c0_i32 = arith.constant 0 : i32
    return %arg0, %arg1 : i32, i32
  }
}

module attributes {stable_mosaic.version = 11 : i64} {
  func.func @_lstm_kernel(%arg0: i32, %arg1: memref<1x60x2x128xf32, #tpu.memory_space<vmem>>, %arg2: memref<1x32x128xbf16, #tpu.memory_space<vmem>>, %arg3: memref<1x2x32xf32, #tpu.memory_space<vmem>>) attributes {dimension_semantics = [#tpu.dimension_semantics<parallel>], iteration_bounds = array<i64: 2>, scalar_prefetch = 0 : i64, scratch_operands = 0 : i64, tpu.core_type = #tpu.core_type<tc>, window_params = [{transform_indices = @transform_0, window_bounds = array<i64: 1, 60, 2, 128>}, {transform_indices = @transform_1, window_bounds = array<i64: 1, 32, 128>}, {transform_indices = @transform_2, window_bounds = array<i64: 1, 2, 32>}]} {
    %c0 = arith.constant 0 : index
    %c0_0 = arith.constant 0 : index
    %c0_1 = arith.constant 0 : index
    %0 = vector.load %arg2[%c0, %c0_0, %c0_1] : memref<1x32x128xbf16, #tpu.memory_space<vmem>>, vector<1x32x128xbf16>
    %1 = vector.shape_cast %0 : vector<1x32x128xbf16> to vector<32x128xbf16>
    %cst = arith.constant 0.000000e+00 : f32
    %2 = vector.broadcast %cst : f32 to vector<2x32xf32>
    %cst_2 = arith.constant 0.000000e+00 : f32
    %3 = vector.broadcast %cst_2 : f32 to vector<2x32xf32>
    %c0_i32 = arith.constant 0 : i32
    %c60_i32 = arith.constant 60 : i32
    %4 = arith.addi %c0_i32, %c60_i32 : i32
    %c1_i32 = arith.constant 1 : i32
    %5:2 = scf.for %arg4 = %c0_i32 to %4 step %c1_i32 iter_args(%arg5 = %2, %arg6 = %3) -> (vector<2x32xf32>, vector<2x32xf32>)  : i32 {
      %c0_7 = arith.constant 0 : index
      %9 = arith.index_cast %arg4 : i32 to index
      %c0_8 = arith.constant 0 : index
      %c0_9 = arith.constant 0 : index
      %10 = vector.load %arg1[%c0_7, %9, %c0_8, %c0_9] : memref<1x60x2x128xf32, #tpu.memory_space<vmem>>, vector<1x1x2x128xf32>
      %11 = vector.shape_cast %10 : vector<1x1x2x128xf32> to vector<2x128xf32>
      %12 = arith.truncf %arg5 : vector<2x32xf32> to vector<2x32xbf16>
      %cst_10 = arith.constant dense<0.000000e+00> : vector<2x128xf32>
      %13 = tpu.matmul %12, %1, %cst_10 {dimension_numbers = #tpu.dot_dimension_numbers<[1], [0], [0], [1], [0, 0, 1, 1], [], []>} : vector<2x32xbf16>, vector<32x128xbf16>, vector<2x128xf32> -> vector<2x128xf32>
      %14 = arith.addf %11, %13 : vector<2x128xf32>
      %15 = vector.extract_strided_slice %14 {offsets = [0, 0], sizes = [2, 32], strides = [1, 1]} : vector<2x128xf32> to vector<2x32xf32>
      %cst_11 = arith.constant 0.000000e+00 : f32
      %16 = vector.broadcast %cst_11 : f32 to vector<2x32xf32>
      %17 = arith.subf %16, %15 : vector<2x32xf32>
      %18 = math.exp %17 : vector<2x32xf32>
      %cst_12 = arith.constant 1.000000e+00 : f32
      %19 = vector.broadcast %cst_12 : f32 to vector<2x32xf32>
      %20 = arith.addf %19, %18 : vector<2x32xf32>
      %cst_13 = arith.constant 1.000000e+00 : f32
      %21 = vector.broadcast %cst_13 : f32 to vector<2x32xf32>
      %22 = arith.divf %21, %20 : vector<2x32xf32>
      %23 = vector.extract_strided_slice %14 {offsets = [0, 32], sizes = [2, 32], strides = [1, 1]} : vector<2x128xf32> to vector<2x32xf32>
      %cst_14 = arith.constant 0.000000e+00 : f32
      %24 = vector.broadcast %cst_14 : f32 to vector<2x32xf32>
      %25 = arith.subf %24, %23 : vector<2x32xf32>
      %26 = math.exp %25 : vector<2x32xf32>
      %cst_15 = arith.constant 1.000000e+00 : f32
      %27 = vector.broadcast %cst_15 : f32 to vector<2x32xf32>
      %28 = arith.addf %27, %26 : vector<2x32xf32>
      %cst_16 = arith.constant 1.000000e+00 : f32
      %29 = vector.broadcast %cst_16 : f32 to vector<2x32xf32>
      %30 = arith.divf %29, %28 : vector<2x32xf32>
      %31 = vector.extract_strided_slice %14 {offsets = [0, 64], sizes = [2, 32], strides = [1, 1]} : vector<2x128xf32> to vector<2x32xf32>
      %32 = math.tanh %31 : vector<2x32xf32>
      %33 = vector.extract_strided_slice %14 {offsets = [0, 96], sizes = [2, 32], strides = [1, 1]} : vector<2x128xf32> to vector<2x32xf32>
      %cst_17 = arith.constant 0.000000e+00 : f32
      %34 = vector.broadcast %cst_17 : f32 to vector<2x32xf32>
      %35 = arith.subf %34, %33 : vector<2x32xf32>
      %36 = math.exp %35 : vector<2x32xf32>
      %cst_18 = arith.constant 1.000000e+00 : f32
      %37 = vector.broadcast %cst_18 : f32 to vector<2x32xf32>
      %38 = arith.addf %37, %36 : vector<2x32xf32>
      %cst_19 = arith.constant 1.000000e+00 : f32
      %39 = vector.broadcast %cst_19 : f32 to vector<2x32xf32>
      %40 = arith.divf %39, %38 : vector<2x32xf32>
      %41 = arith.mulf %30, %arg6 : vector<2x32xf32>
      %42 = arith.mulf %22, %32 : vector<2x32xf32>
      %43 = arith.addf %41, %42 : vector<2x32xf32>
      %44 = math.tanh %43 : vector<2x32xf32>
      %45 = arith.mulf %40, %44 : vector<2x32xf32>
      scf.yield %45, %43 : vector<2x32xf32>, vector<2x32xf32>
    }
    %c60_i32_3 = arith.constant 60 : i32
    %c0_4 = arith.constant 0 : index
    %c0_5 = arith.constant 0 : index
    %c0_6 = arith.constant 0 : index
    %6 = vector.load %arg3[%c0_4, %c0_5, %c0_6] : memref<1x2x32xf32, #tpu.memory_space<vmem>>, vector<1x2x32xf32>
    %7 = vector.shape_cast %6 : vector<1x2x32xf32> to vector<2x32xf32>
    %8 = vector.shape_cast %5#0 : vector<2x32xf32> to vector<1x2x32xf32>
    tpu.vector_store %arg3[%c0_4, %c0_5, %c0_6], %8 {strides = array<i32>} : memref<1x2x32xf32, #tpu.memory_space<vmem>>, vector<1x2x32xf32>,
    return
  }
  func.func @transform_0(%arg0: i32) -> (i32, i32, i32, i32) {
    %c0_i32 = arith.constant 0 : i32
    %c0_i32_0 = arith.constant 0 : i32
    %c0_i32_1 = arith.constant 0 : i32
    %c0_i32_2 = arith.constant 0 : i32
    return %arg0, %c0_i32, %c0_i32_0, %c0_i32_1 : i32, i32, i32, i32
  }
  func.func @transform_1(%arg0: i32) -> (i32, i32, i32) {
    %c0_i32 = arith.constant 0 : i32
    %c0_i32_0 = arith.constant 0 : i32
    %c0_i32_1 = arith.constant 0 : i32
    return %arg0, %c0_i32, %c0_i32_0 : i32, i32, i32
  }
  func.func @transform_2(%arg0: i32) -> (i32, i32, i32) {
    %c0_i32 = arith.constant 0 : i32
    %c0_i32_0 = arith.constant 0 : i32
    %c0_i32_1 = arith.constant 0 : i32
    return %arg0, %c0_i32, %c0_i32_0 : i32, i32, i32
  }
}

module attributes {stable_mosaic.version = 11 : i64} {
  func.func @_matmul_kernel(%arg0: i32, %arg1: i32, %arg2: i32, %arg3: memref<8x128xbf16, #tpu.memory_space<vmem>>, %arg4: memref<128x128xbf16, #tpu.memory_space<vmem>>, %arg5: memref<1x128xf32, #tpu.memory_space<vmem>>, %arg6: memref<1x128xf32, #tpu.memory_space<vmem>>, %arg7: memref<8x128xf32, #tpu.memory_space<vmem>>, %arg8: memref<8x128xf32, #tpu.memory_space<vmem>>) attributes {dimension_semantics = [#tpu.dimension_semantics<parallel>, #tpu.dimension_semantics<parallel>, #tpu.dimension_semantics<arbitrary>], iteration_bounds = array<i64: 1, 1, 1>, scalar_prefetch = 0 : i64, scratch_operands = 1 : i64, tpu.core_type = #tpu.core_type<tc>, window_params = [{transform_indices = @transform_0, window_bounds = array<i64: 8, 128>}, {transform_indices = @transform_1, window_bounds = array<i64: 128, 128>}, {transform_indices = @transform_2, window_bounds = array<i64: 1, 128>}, {transform_indices = @transform_3, window_bounds = array<i64: 1, 128>}, {transform_indices = @transform_4, window_bounds = array<i64: 8, 128>}]} {
    %c0_i32 = arith.constant 0 : i32
    %0 = arith.cmpi eq, %arg2, %c0_i32 : i32
    %1 = arith.extui %0 : i1 to i32
    %c0_i32_0 = arith.constant 0 : i32
    %2 = arith.cmpi ne, %1, %c0_i32_0 : i32
    scf.if %2 {
      %cst_10 = arith.constant 0.000000e+00 : f32
      %12 = vector.broadcast %cst_10 : f32 to vector<8x128xf32>
      %c0_11 = arith.constant 0 : index
      %c0_12 = arith.constant 0 : index
      %13 = vector.load %arg8[%c0_11, %c0_12] : memref<8x128xf32, #tpu.memory_space<vmem>>, vector<8x128xf32>
      tpu.vector_store %arg8[%c0_11, %c0_12], %12 {strides = array<i32>} : memref<8x128xf32, #tpu.memory_space<vmem>>, vector<8x128xf32>,
    } else {
    }
    %c0 = arith.constant 0 : index
    %c0_1 = arith.constant 0 : index
    %3 = vector.load %arg8[%c0, %c0_1] : memref<8x128xf32, #tpu.memory_space<vmem>>, vector<8x128xf32>
    %c0_2 = arith.constant 0 : index
    %c0_3 = arith.constant 0 : index
    %4 = vector.load %arg3[%c0_2, %c0_3] : memref<8x128xbf16, #tpu.memory_space<vmem>>, vector<8x128xbf16>
    %c0_4 = arith.constant 0 : index
    %c0_5 = arith.constant 0 : index
    %5 = vector.load %arg4[%c0_4, %c0_5] : memref<128x128xbf16, #tpu.memory_space<vmem>>, vector<128x128xbf16>
    %cst = arith.constant dense<0.000000e+00> : vector<8x128xf32>
    %6 = tpu.matmul %4, %5, %cst {dimension_numbers = #tpu.dot_dimension_numbers<[1], [0], [0], [1], [0, 0, 1, 1], [], []>} : vector<8x128xbf16>, vector<128x128xbf16>, vector<8x128xf32> -> vector<8x128xf32>
    %7 = arith.addf %3, %6 : vector<8x128xf32>
    %c0_6 = arith.constant 0 : index
    %c0_7 = arith.constant 0 : index
    %8 = vector.load %arg8[%c0_6, %c0_7] : memref<8x128xf32, #tpu.memory_space<vmem>>, vector<8x128xf32>
    tpu.vector_store %arg8[%c0_6, %c0_7], %7 {strides = array<i32>} : memref<8x128xf32, #tpu.memory_space<vmem>>, vector<8x128xf32>,
    %c0_i32_8 = arith.constant 0 : i32
    %9 = arith.cmpi eq, %arg2, %c0_i32_8 : i32
    %10 = arith.extui %9 : i1 to i32
    %c0_i32_9 = arith.constant 0 : i32
    %11 = arith.cmpi ne, %10, %c0_i32_9 : i32
    scf.if %11 {
      %c0_10 = arith.constant 0 : index
      %c0_11 = arith.constant 0 : index
      %12 = vector.load %arg8[%c0_10, %c0_11] : memref<8x128xf32, #tpu.memory_space<vmem>>, vector<8x128xf32>
      %c0_12 = arith.constant 0 : index
      %c0_13 = arith.constant 0 : index
      %13 = vector.load %arg5[%c0_12, %c0_13] : memref<1x128xf32, #tpu.memory_space<vmem>>, vector<1x128xf32>
      %14 = vector.broadcast %13 : vector<1x128xf32> to vector<8x128xf32>
      %15 = arith.mulf %12, %14 : vector<8x128xf32>
      %c0_14 = arith.constant 0 : index
      %c0_15 = arith.constant 0 : index
      %16 = vector.load %arg6[%c0_14, %c0_15] : memref<1x128xf32, #tpu.memory_space<vmem>>, vector<1x128xf32>
      %17 = vector.broadcast %16 : vector<1x128xf32> to vector<8x128xf32>
      %18 = arith.addf %15, %17 : vector<8x128xf32>
      %19 = tpu.iota {dimensions = array<i32: 1>} : vector<8x128xi32>
      %c10_i32 = arith.constant 10 : i32
      %20 = vector.broadcast %c10_i32 : i32 to vector<8x128xi32>
      %21 = arith.cmpi slt, %19, %20 : vector<8x128xi32>
      %cst_16 = arith.constant -1.000000e+30 : f32
      %22 = vector.broadcast %cst_16 : f32 to vector<8x128xf32>
      %23 = arith.select %21, %18, %22 : vector<8x128xi1>, vector<8x128xf32>
      %cst_17 = arith.constant dense<0xFF800000> : vector<8xf32>
      %24 = vector.multi_reduction <maximumf>, %23, %cst_17 [1] : vector<8x128xf32> to vector<8xf32>
      %25 = vector.shape_cast %24 : vector<8xf32> to vector<8x1xf32>
      %26 = vector.broadcast %25 : vector<8x1xf32> to vector<8x128xf32>
      %27 = arith.subf %23, %26 : vector<8x128xf32>
      %28 = math.exp %27 : vector<8x128xf32>
      %cst_18 = arith.constant dense<0.000000e+00> : vector<8xf32>
      %29 = vector.multi_reduction <add>, %28, %cst_18 [1] : vector<8x128xf32> to vector<8xf32>
      %30 = vector.shape_cast %29 : vector<8xf32> to vector<8x1xf32>
      %31 = vector.broadcast %30 : vector<8x1xf32> to vector<8x128xf32>
      %32 = arith.divf %28, %31 : vector<8x128xf32>
      %c0_19 = arith.constant 0 : index
      %c0_20 = arith.constant 0 : index
      %33 = vector.load %arg7[%c0_19, %c0_20] : memref<8x128xf32, #tpu.memory_space<vmem>>, vector<8x128xf32>
      tpu.vector_store %arg7[%c0_19, %c0_20], %32 {strides = array<i32>} : memref<8x128xf32, #tpu.memory_space<vmem>>, vector<8x128xf32>,
    } else {
    }
    return
  }
  func.func @transform_0(%arg0: i32, %arg1: i32, %arg2: i32) -> (i32, i32) {
    %c0_i32 = arith.constant 0 : i32
    return %arg0, %arg2 : i32, i32
  }
  func.func @transform_1(%arg0: i32, %arg1: i32, %arg2: i32) -> (i32, i32) {
    %c0_i32 = arith.constant 0 : i32
    return %arg2, %arg1 : i32, i32
  }
  func.func @transform_2(%arg0: i32, %arg1: i32, %arg2: i32) -> (i32, i32) {
    %c0_i32 = arith.constant 0 : i32
    %c0_i32_0 = arith.constant 0 : i32
    return %c0_i32, %arg1 : i32, i32
  }
  func.func @transform_3(%arg0: i32, %arg1: i32, %arg2: i32) -> (i32, i32) {
    %c0_i32 = arith.constant 0 : i32
    %c0_i32_0 = arith.constant 0 : i32
    return %c0_i32, %arg1 : i32, i32
  }
  func.func @transform_4(%arg0: i32, %arg1: i32, %arg2: i32) -> (i32, i32) {
    %c0_i32 = arith.constant 0 : i32
    return %arg0, %arg1 : i32, i32
  }
}

</mosaic_0001>

<llo_original>
// kernel: depth_lstm_forward.8
$region0: #{depth_lstm_forward.8}
  #allocation0 [shape = 'u32[]', space=smem, size = 0x4, offset = 0x4, fixed_abs, tag = 'smem constant byte address 0x4 - core index']
  #allocation1 [shape = 'u32[144,128]{1,0:T(1,128)}', space=vmem, size = 0x12000, scoped, tag = 'internal scratch']
  #allocation2 [shape = 'f32[1024,128]{1,0:T(8,128)}', space=vmem, size = 0x80000, scoped, tag = 'scratch operand']
  %s0 = inlined_call_operand.vmem [shape: bf16[30720,128], index: 0, kind: input, shape index: {}]
  %s1 = inlined_call_operand.vmem [shape: bf16[128,128], index: 1, kind: input, shape index: {}]
  %s2 = inlined_call_operand.vmem [shape: f32[1,128], index: 2, kind: input, shape index: {}]
  %s3 = inlined_call_operand.vmem [shape: f32[1,128], index: 3, kind: input, shape index: {}]
  %s4 = inlined_call_operand.vmem [shape: bf16[30720,128], index: 4, kind: output, shape index: {}]
  %s5 = sld [smem:[#allocation0]]
  $region57: #{depth_lstm_forward.8} parent=0
    _
  %s7 = ssub.s32 1, %s5
  %s8 = scalar_select 0, %s7, %s5
  loop: start=0, step=1, limit=32
  $region2: #{depth_lstm_forward.8} parent=0 // loop_pre_header
    _
  $region3: #{depth_lstm_forward.8} parent=0 // loop_header
    %s10 = sphi 0, %s14
    %p11 = scmp.ge.s32.totalorder %s10, 32
    %s17 = sphi 0, %s36
    %s18 = sphi 0, %s32
    %s19 = sphi 0, %s28
    %s20 = sphi 0, %s17
    %s21 = sphi 0, %s18
    %s22 = sphi 0, %s19
    %s23 = sphi 0, %s20
    %s24 = sphi 0, %s21
    %s25 = sphi 0, %s22
    %s41 = sphi 0, %s43
    %s44 = sphi 0, %s41
    %s45 = sphi 0, %s44
    %s61 = sphi 0, %s45
    %s69 = sphi 0, %s71
    %s72 = sphi 0, %s69
    %s73 = sphi 0, %s72
    %s89 = sphi 0, %s73
    %s95 = sphi 0, %s97
    %s98 = sphi 0, %s95
    %s99 = sphi 0, %s98
    %s115 = sphi 0, %s99
    %s121 = sphi 0, %s123
    %s124 = sphi 0, %s121
    %s125 = sphi 0, %s124
    %s141 = sphi 0, %s125
    %s149 = sphi 0, %s151
    %s152 = sphi 0, %s149
    %s153 = sphi 0, %s152
    %s169 = sphi 0, %s153
  $region4: #{depth_lstm_forward.8} parent=0 // loop_header_branch
    %13 = sbr.rel (%p11) target = $region8
  $region5: #{depth_lstm_forward.8} parent=0 // loop_body
    %s15 = ssub.s32 %s10, 1
    %s16 = ssub.s32 %s10, 2
    %s26 = sadd.s32 1, %s19
    %p27 = scmp.ge.s32.totalorder %s26, 1
    %s28 = scalar_select %p27, 0, %s26
    %s29 = sadd.s32 1, %s18
    %s30 = scalar_select %p27, %s29, %s18
    %p31 = scmp.ge.s32.totalorder %s30, 1
    %s32 = scalar_select %p31, 0, %s30
    %s33 = sadd.s32 1, %s17
    %s34 = scalar_select %p31, %s33, %s17
    %p35 = scmp.ge.s32.totalorder %s34, 30
    %s36 = scalar_select %p35, 0, %s34
    %s37 = ssub.s32 %s17, %s36
    %s38 = ssub.s32 %s19, %s28
    %s39 = sor.u32 %s37, %s38
    %p40 = scmp.eq.s32.totalorder %s39, 0
    %s42 = sadd.s32 %s41, 1
    %s43 = scalar_select %p40, %s41, %s42
    %p46 = pneg %p40
    %p47 = scmp.eq.s32.totalorder %s10, 29
    %p48 = por %p46, %p47
    %p49 = scmp.ne.s32.totalorder %s41, %s44
    %p50 = scmp.eq.s32.totalorder %s10, 0
    %p51 = por %p49, %p50
    %p52 = scmp.ne.s32.totalorder %s41, %s44
    %p53 = scmp.eq.s32.totalorder %s15, 29
    %p54 = por %p52, %p53
    %p55 = scmp.ne.s32.totalorder %s44, %s45
    %p56 = scmp.eq.s32.totalorder %s15, 0
    %p57 = por %p55, %p56
    %p58 = scmp.ne.s32.totalorder %s44, %s45
    %p59 = scmp.eq.s32.totalorder %s16, 29
    %p60 = por %p58, %p59
    %p62 = scmp.ne.s32.totalorder %s45, %s61
    %p63 = scmp.eq.s32.totalorder %s16, 0
    %p64 = por %p62, %p63
    %s65 = ssub.s32 %s19, %s28
    %s66 = ssub.s32 %s18, %s32
    %s67 = sor.u32 %s65, %s66
    %p68 = scmp.eq.s32.totalorder %s67, 0
    %s70 = sadd.s32 %s69, 1
    %s71 = scalar_select %p68, %s69, %s70
    %p74 = pneg %p68
    %p75 = scmp.eq.s32.totalorder %s10, 29
    %p76 = por %p74, %p75
    %p77 = scmp.ne.s32.totalorder %s69, %s72
    %p78 = scmp.eq.s32.totalorder %s10, 0
    %p79 = por %p77, %p78
    %p80 = scmp.ne.s32.totalorder %s69, %s72
    %p81 = scmp.eq.s32.totalorder %s15, 29
    %p82 = por %p80, %p81
    %p83 = scmp.ne.s32.totalorder %s72, %s73
    %p84 = scmp.eq.s32.totalorder %s15, 0
    %p85 = por %p83, %p84
    %p86 = scmp.ne.s32.totalorder %s72, %s73
    %p87 = scmp.eq.s32.totalorder %s16, 29
    %p88 = por %p86, %p87
    %p90 = scmp.ne.s32.totalorder %s73, %s89
    %p91 = scmp.eq.s32.totalorder %s16, 0
    %p92 = por %p90, %p91
    %s93 = ssub.s32 %s18, %s32
    %p94 = scmp.eq.s32.totalorder %s93, 0
    %s96 = sadd.s32 %s95, 1
    %s97 = scalar_select %p94, %s95, %s96
    %p100 = pneg %p94
    %p101 = scmp.eq.s32.totalorder %s10, 29
    %p102 = por %p100, %p101
    %p103 = scmp.ne.s32.totalorder %s95, %s98
    %p104 = scmp.eq.s32.totalorder %s10, 0
    %p105 = por %p103, %p104
    %p106 = scmp.ne.s32.totalorder %s95, %s98
    %p107 = scmp.eq.s32.totalorder %s15, 29
    %p108 = por %p106, %p107
    %p109 = scmp.ne.s32.totalorder %s98, %s99
    %p110 = scmp.eq.s32.totalorder %s15, 0
    %p111 = por %p109, %p110
    %p112 = scmp.ne.s32.totalorder %s98, %s99
    %p113 = scmp.eq.s32.totalorder %s16, 29
    %p114 = por %p112, %p113
    %p116 = scmp.ne.s32.totalorder %s99, %s115
    %p117 = scmp.eq.s32.totalorder %s16, 0
    %p118 = por %p116, %p117
    %s119 = ssub.s32 %s18, %s32
    %p120 = scmp.eq.s32.totalorder %s119, 0
    %s122 = sadd.s32 %s121, 1
    %s123 = scalar_select %p120, %s121, %s122
    %p126 = pneg %p120
    %p127 = scmp.eq.s32.totalorder %s10, 29
    %p128 = por %p126, %p127
    %p129 = scmp.ne.s32.totalorder %s121, %s124
    %p130 = scmp.eq.s32.totalorder %s10, 0
    %p131 = por %p129, %p130
    %p132 = scmp.ne.s32.totalorder %s121, %s124
    %p133 = scmp.eq.s32.totalorder %s15, 29
    %p134 = por %p132, %p133
    %p135 = scmp.ne.s32.totalorder %s124, %s125
    %p136 = scmp.eq.s32.totalorder %s15, 0
    %p137 = por %p135, %p136
    %p138 = scmp.ne.s32.totalorder %s124, %s125
    %p139 = scmp.eq.s32.totalorder %s16, 29
    %p140 = por %p138, %p139
    %p142 = scmp.ne.s32.totalorder %s125, %s141
    %p143 = scmp.eq.s32.totalorder %s16, 0
    %p144 = por %p142, %p143
    %s145 = ssub.s32 %s17, %s36
    %s146 = ssub.s32 %s18, %s32
    %s147 = sor.u32 %s145, %s146
    %p148 = scmp.eq.s32.totalorder %s147, 0
    %s150 = sadd.s32 %s149, 1
    %s151 = scalar_select %p148, %s149, %s150
    %p154 = pneg %p148
    %p155 = scmp.eq.s32.totalorder %s10, 29
    %p156 = por %p154, %p155
    %p157 = scmp.ne.s32.totalorder %s149, %s152
    %p158 = scmp.eq.s32.totalorder %s10, 0
    %p159 = por %p157, %p158
    %p160 = scmp.ne.s32.totalorder %s149, %s152
    %p161 = scmp.eq.s32.totalorder %s15, 29
    %p162 = por %p160, %p161
    %p163 = scmp.ne.s32.totalorder %s152, %s153
    %p164 = scmp.eq.s32.totalorder %s15, 0
    %p165 = por %p163, %p164
    %p166 = scmp.ne.s32.totalorder %s152, %s153
    %p167 = scmp.eq.s32.totalorder %s16, 29
    %p168 = por %p166, %p167
    %p170 = scmp.ne.s32.totalorder %s153, %s169
    %p171 = scmp.eq.s32.totalorder %s16, 0
    %p172 = por %p170, %p171
    %p173 = scmp.le.s32.totalorder 1, %s10
    %p174 = scmp.lt.s32.totalorder %s10, 31
    %p175 = pnand %p173, %p174
    %p176 = pneg %p175
    // Predicated region
    $region9: #{depth_lstm_forward.8} parent=5 // pred_check
      _
    $region10: #{depth_lstm_forward.8} parent=5 // pred_check_branch
      %178 = sbr.rel (%p175) target = $region12
    $region11: #{depth_lstm_forward.8} parent=5 // pred_region
      %s179 = ssub.s32 %s10, 1
      // Predicated region
      $region13: #{depth_lstm_forward.8} parent=11 // pred_check
        %p180 = pneg %p85
      $region14: #{depth_lstm_forward.8} parent=11 // pred_check_branch
        %182 = sbr.rel (%p180) target = $region16
      $region15: #{depth_lstm_forward.8} parent=11 // pred_region
        %s183 = smul.u32 16, %s22
        %p184 = scmp.lt.s32.totalorder %s183, 15
        %s185 = scalar_select %p184, %s183, 15
        %p186 = scmp.lt.s32.totalorder %s21, 0
        %s187 = scalar_select %p186, %s21, 0
        %s188 = sadd.s32 %s187, %s185
        %s189 = smul.addr %s188, 4
        %s190 = scalar_lea.vmem %s1, %s189
        %s191 = smul.u32 16, %s22
      $region16: #{depth_lstm_forward.8} parent=11 // pred_fallthru
        _
      // Predicated region
      $region17: #{depth_lstm_forward.8} parent=11 // pred_check
        %p192 = pneg %p111
      $region18: #{depth_lstm_forward.8} parent=11 // pred_check_branch
        %194 = sbr.rel (%p192) target = $region20
      $region19: #{depth_lstm_forward.8} parent=11 // pred_region
        %p195 = scmp.lt.s32.totalorder %s21, 0
        %s196 = scalar_select %p195, %s21, 0
        %s197 = scalar_lea.vmem %s2, %s196
      $region20: #{depth_lstm_forward.8} parent=11 // pred_fallthru
        _
      // Predicated region
      $region21: #{depth_lstm_forward.8} parent=11 // pred_check
        %p198 = pneg %p137
      $region22: #{depth_lstm_forward.8} parent=11 // pred_check_branch
        %200 = sbr.rel (%p198) target = $region24
      $region23: #{depth_lstm_forward.8} parent=11 // pred_region
        %p201 = scmp.lt.s32.totalorder %s21, 0
        %s202 = scalar_select %p201, %s21, 0
        %s203 = scalar_lea.vmem %s3, %s202
      $region24: #{depth_lstm_forward.8} parent=11 // pred_fallthru
        _
    $region12: #{depth_lstm_forward.8} parent=5 // pred_fallthru
      _
    %p204 = scmp.lt.s32.totalorder %s10, 30
    // Predicated region
    $region25: #{depth_lstm_forward.8} parent=5 // pred_check
      %p205 = pneg %p204
    $region26: #{depth_lstm_forward.8} parent=5 // pred_check_branch
      %207 = sbr.rel (%p205) target = $region28
    $region27: #{depth_lstm_forward.8} parent=5 // pred_region
      // Predicated region
      $region29: #{depth_lstm_forward.8} parent=27 // pred_check
        %p208 = pneg %p51
      $region30: #{depth_lstm_forward.8} parent=27 // pred_check_branch
        %210 = sbr.rel (%p208) target = $region32
      $region31: #{depth_lstm_forward.8} parent=27 // pred_region
        %s211 = smul.u32 128, %s17
        %p212 = scmp.lt.s32.totalorder %s211, 3839
        %s213 = scalar_select %p212, %s211, 3839
        %p214 = scmp.lt.s32.totalorder %s19, 0
        %s215 = scalar_select %p214, %s19, 0
        %s216 = sadd.s32 %s215, %s213
        %s217 = smul.addr %s216, 4
        %s218 = scalar_lea.vmem %s0, %s217
        %s219 = smul.u32 128, %s17
      $region32: #{depth_lstm_forward.8} parent=27 // pred_fallthru
        _
    $region28: #{depth_lstm_forward.8} parent=5 // pred_fallthru
      _
    %p220 = scmp.le.s32.totalorder 1, %s10
    %p221 = scmp.lt.s32.totalorder %s10, 31
    %p222 = pnand %p220, %p221
    %p223 = pneg %p222
    // Predicated region
    $region33: #{depth_lstm_forward.8} parent=5 // pred_check
      _
    $region34: #{depth_lstm_forward.8} parent=5 // pred_check_branch
      %225 = sbr.rel (%p222) target = $region36
    $region35: #{depth_lstm_forward.8} parent=5 // pred_region
      %s226 = ssub.s32 %s10, 1
      %s227 = smul.u32 128, %s20
      %p228 = scmp.lt.s32.totalorder %s227, 3839
      %s229 = scalar_select %p228, %s227, 3839
      %p230 = scmp.lt.s32.totalorder %s22, 0
      %s231 = scalar_select %p230, %s22, 0
      %s232 = sadd.s32 %s231, %s229
      %s233 = smul.addr %s232, 4
      %s234 = scalar_lea.vmem %s0, %s233
      %p235 = pneg %p57
      %p236 = pneg %p54
      %s237 = smul.u32 16, %s22
      %p238 = scmp.lt.s32.totalorder %s237, 15
      %s239 = scalar_select %p238, %s237, 15
      %p240 = scmp.lt.s32.totalorder %s21, 0
      %s241 = scalar_select %p240, %s21, 0
      %s242 = sadd.s32 %s241, %s239
      %s243 = smul.addr %s242, 4
      %s244 = scalar_lea.vmem %s1, %s243
      %p245 = pneg %p85
      %p246 = pneg %p82
      %p247 = scmp.lt.s32.totalorder %s21, 0
      %s248 = scalar_select %p247, %s21, 0
      %s249 = scalar_lea.vmem %s2, %s248
      %p250 = pneg %p111
      %p251 = pneg %p108
      %p252 = scmp.lt.s32.totalorder %s21, 0
      %s253 = scalar_select %p252, %s21, 0
      %s254 = scalar_lea.vmem %s3, %s253
      %p255 = pneg %p137
      %p256 = pneg %p134
      %p257 = pneg %p165
      %p258 = pneg %p162
      %s259 = smul.u32 128, %s20
      %p260 = scmp.lt.s32.totalorder %s259, 3839
      %s261 = scalar_select %p260, %s259, 3839
      %p262 = scmp.lt.s32.totalorder %s21, 0
      %s263 = scalar_select %p262, %s21, 0
      %s264 = sadd.s32 %s263, %s261
      %s265 = smul.addr %s264, 4
      %s266 = scalar_lea.vmem %s4, %s265
      %s267 = smul.u32 128, %s20
      %p268 = scmp.lt.s32.totalorder %s267, 3839
      %s269 = scalar_select %p268, %s267, 3839
      %p270 = scmp.lt.s32.totalorder %s22, 0
      %s271 = scalar_select %p270, %s22, 0
      %s272 = sadd.s32 %s271, %s269
      %s273 = smul.addr %s272, 4
      %s274 = scalar_lea.vmem %s0, %s273
      %s275 = smul.u32 128, %s20
      %s276 = smul.u32 16, %s22
      %p277 = scmp.lt.s32.totalorder %s276, 15
      %s278 = scalar_select %p277, %s276, 15
      %p279 = scmp.lt.s32.totalorder %s21, 0
      %s280 = scalar_select %p279, %s21, 0
      %s281 = sadd.s32 %s280, %s278
      %s282 = smul.addr %s281, 4
      %s283 = scalar_lea.vmem %s1, %s282
      %s284 = smul.u32 16, %s22
      %p285 = scmp.lt.s32.totalorder %s21, 0
      %s286 = scalar_select %p285, %s21, 0
      %s287 = scalar_lea.vmem %s2, %s286
      %p288 = scmp.lt.s32.totalorder %s21, 0
      %s289 = scalar_select %p288, %s21, 0
      %s290 = scalar_lea.vmem %s3, %s289
      %s291 = smul.u32 128, %s20
      %p292 = scmp.lt.s32.totalorder %s291, 3839
      %s293 = scalar_select %p292, %s291, 3839
      %p294 = scmp.lt.s32.totalorder %s21, 0
      %s295 = scalar_select %p294, %s21, 0
      %s296 = sadd.s32 %s295, %s293
      %s297 = smul.addr %s296, 4
      %s298 = scalar_lea.vmem %s4, %s297
      %s299 = smul.u32 128, %s20
      %p301 = scmp.eq.s32.totalorder %s22, 0
      // Predicated region
      $region37: #{depth_lstm_forward.8} parent=35 // pred_check
        %p302 = pneg %p301
      $region38: #{depth_lstm_forward.8} parent=35 // pred_check_branch
        %304 = sbr.rel (%p302) target = $region40
      $region39: #{depth_lstm_forward.8} parent=35 // pred_region
        %305 = vst [vmem:[#allocation2] sm:$0xff] 0.0
        %306 = vst [vmem:[#allocation2 + $0x8] sm:$0xff] 0.0
        %307 = vst [vmem:[#allocation2 + $0x10] sm:$0xff] 0.0
        %308 = vst [vmem:[#allocation2 + $0x18] sm:$0xff] 0.0
        %309 = vst [vmem:[#allocation2 + $0x20] sm:$0xff] 0.0
        %310 = vst [vmem:[#allocation2 + $0x28] sm:$0xff] 0.0
        %311 = vst [vmem:[#allocation2 + $0x30] sm:$0xff] 0.0
        %312 = vst [vmem:[#allocation2 + $0x38] sm:$0xff] 0.0
        %313 = vst [vmem:[#allocation2 + $0x40] sm:$0xff] 0.0
        %314 = vst [vmem:[#allocation2 + $0x48] sm:$0xff] 0.0
        %315 = vst [vmem:[#allocation2 + $0x50] sm:$0xff] 0.0
        %316 = vst [vmem:[#allocation2 + $0x58] sm:$0xff] 0.0
        %317 = vst [vmem:[#allocation2 + $0x60] sm:$0xff] 0.0
        %318 = vst [vmem:[#allocation2 + $0x68] sm:$0xff] 0.0
        %319 = vst [vmem:[#allocation2 + $0x70] sm:$0xff] 0.0
        %320 = vst [vmem:[#allocation2 + $0x78] sm:$0xff] 0.0
        %321 = vst [vmem:[#allocation2 + $0x80] sm:$0xff] 0.0
        %322 = vst [vmem:[#allocation2 + $0x88] sm:$0xff] 0.0
        %323 = vst [vmem:[#allocation2 + $0x90] sm:$0xff] 0.0
        %324 = vst [vmem:[#allocation2 + $0x98] sm:$0xff] 0.0
        %325 = vst [vmem:[#allocation2 + $0xa0] sm:$0xff] 0.0
        %326 = vst [vmem:[#allocation2 + $0xa8] sm:$0xff] 0.0
        %327 = vst [vmem:[#allocation2 + $0xb0] sm:$0xff] 0.0
        %328 = vst [vmem:[#allocation2 + $0xb8] sm:$0xff] 0.0
        %329 = vst [vmem:[#allocation2 + $0xc0] sm:$0xff] 0.0
        %330 = vst [vmem:[#allocation2 + $0xc8] sm:$0xff] 0.0
        %331 = vst [vmem:[#allocation2 + $0xd0] sm:$0xff] 0.0
        %332 = vst [vmem:[#allocation2 + $0xd8] sm:$0xff] 0.0
        %333 = vst [vmem:[#allocation2 + $0xe0] sm:$0xff] 0.0
        %334 = vst [vmem:[#allocation2 + $0xe8] sm:$0xff] 0.0
        %335 = vst [vmem:[#allocation2 + $0xf0] sm:$0xff] 0.0
        %336 = vst [vmem:[#allocation2 + $0xf8] sm:$0xff] 0.0
        %337 = vst [vmem:[#allocation2 + $0x100] sm:$0xff] 0.0
        %338 = vst [vmem:[#allocation2 + $0x108] sm:$0xff] 0.0
        %339 = vst [vmem:[#allocation2 + $0x110] sm:$0xff] 0.0
        %340 = vst [vmem:[#allocation2 + $0x118] sm:$0xff] 0.0
        %341 = vst [vmem:[#allocation2 + $0x120] sm:$0xff] 0.0
        %342 = vst [vmem:[#allocation2 + $0x128] sm:$0xff] 0.0
        %343 = vst [vmem:[#allocation2 + $0x130] sm:$0xff] 0.0
        %344 = vst [vmem:[#allocation2 + $0x138] sm:$0xff] 0.0
        %345 = vst [vmem:[#allocation2 + $0x140] sm:$0xff] 0.0
        %346 = vst [vmem:[#allocation2 + $0x148] sm:$0xff] 0.0
        %347 = vst [vmem:[#allocation2 + $0x150] sm:$0xff] 0.0
        %348 = vst [vmem:[#allocation2 + $0x158] sm:$0xff] 0.0
        %349 = vst [vmem:[#allocation2 + $0x160] sm:$0xff] 0.0
        %350 = vst [vmem:[#allocation2 + $0x168] sm:$0xff] 0.0
        %351 = vst [vmem:[#allocation2 + $0x170] sm:$0xff] 0.0
        %352 = vst [vmem:[#allocation2 + $0x178] sm:$0xff] 0.0
        %353 = vst [vmem:[#allocation2 + $0x180] sm:$0xff] 0.0
        %354 = vst [vmem:[#allocation2 + $0x188] sm:$0xff] 0.0
        %355 = vst [vmem:[#allocation2 + $0x190] sm:$0xff] 0.0
        %356 = vst [vmem:[#allocation2 + $0x198] sm:$0xff] 0.0
        %357 = vst [vmem:[#allocation2 + $0x1a0] sm:$0xff] 0.0
        %358 = vst [vmem:[#allocation2 + $0x1a8] sm:$0xff] 0.0
        %359 = vst [vmem:[#allocation2 + $0x1b0] sm:$0xff] 0.0
        %360 = vst [vmem:[#allocation2 + $0x1b8] sm:$0xff] 0.0
        %361 = vst [vmem:[#allocation2 + $0x1c0] sm:$0xff] 0.0
        %362 = vst [vmem:[#allocation2 + $0x1c8] sm:$0xff] 0.0
        %363 = vst [vmem:[#allocation2 + $0x1d0] sm:$0xff] 0.0
        %364 = vst [vmem:[#allocation2 + $0x1d8] sm:$0xff] 0.0
        %365 = vst [vmem:[#allocation2 + $0x1e0] sm:$0xff] 0.0
        %366 = vst [vmem:[#allocation2 + $0x1e8] sm:$0xff] 0.0
        %367 = vst [vmem:[#allocation2 + $0x1f0] sm:$0xff] 0.0
        %368 = vst [vmem:[#allocation2 + $0x1f8] sm:$0xff] 0.0
        %369 = vst [vmem:[#allocation2 + $0x200] sm:$0xff] 0.0
        %370 = vst [vmem:[#allocation2 + $0x208] sm:$0xff] 0.0
        %371 = vst [vmem:[#allocation2 + $0x210] sm:$0xff] 0.0
        %372 = vst [vmem:[#allocation2 + $0x218] sm:$0xff] 0.0
        %373 = vst [vmem:[#allocation2 + $0x220] sm:$0xff] 0.0
        %374 = vst [vmem:[#allocation2 + $0x228] sm:$0xff] 0.0
        %375 = vst [vmem:[#allocation2 + $0x230] sm:$0xff] 0.0
        %376 = vst [vmem:[#allocation2 + $0x238] sm:$0xff] 0.0
        %377 = vst [vmem:[#allocation2 + $0x240] sm:$0xff] 0.0
        %378 = vst [vmem:[#allocation2 + $0x248] sm:$0xff] 0.0
        %379 = vst [vmem:[#allocation2 + $0x250] sm:$0xff] 0.0
        %380 = vst [vmem:[#allocation2 + $0x258] sm:$0xff] 0.0
        %381 = vst [vmem:[#allocation2 + $0x260] sm:$0xff] 0.0
        %382 = vst [vmem:[#allocation2 + $0x268] sm:$0xff] 0.0
        %383 = vst [vmem:[#allocation2 + $0x270] sm:$0xff] 0.0
        %384 = vst [vmem:[#allocation2 + $0x278] sm:$0xff] 0.0
        %385 = vst [vmem:[#allocation2 + $0x280] sm:$0xff] 0.0
        %386 = vst [vmem:[#allocation2 + $0x288] sm:$0xff] 0.0
        %387 = vst [vmem:[#allocation2 + $0x290] sm:$0xff] 0.0
        %388 = vst [vmem:[#allocation2 + $0x298] sm:$0xff] 0.0
        %389 = vst [vmem:[#allocation2 + $0x2a0] sm:$0xff] 0.0
        %390 = vst [vmem:[#allocation2 + $0x2a8] sm:$0xff] 0.0
        %391 = vst [vmem:[#allocation2 + $0x2b0] sm:$0xff] 0.0
        %392 = vst [vmem:[#allocation2 + $0x2b8] sm:$0xff] 0.0
        %393 = vst [vmem:[#allocation2 + $0x2c0] sm:$0xff] 0.0
        %394 = vst [vmem:[#allocation2 + $0x2c8] sm:$0xff] 0.0
        %395 = vst [vmem:[#allocation2 + $0x2d0] sm:$0xff] 0.0
        %396 = vst [vmem:[#allocation2 + $0x2d8] sm:$0xff] 0.0
        %397 = vst [vmem:[#allocation2 + $0x2e0] sm:$0xff] 0.0
        %398 = vst [vmem:[#allocation2 + $0x2e8] sm:$0xff] 0.0
        %399 = vst [vmem:[#allocation2 + $0x2f0] sm:$0xff] 0.0
        %400 = vst [vmem:[#allocation2 + $0x2f8] sm:$0xff] 0.0
        %401 = vst [vmem:[#allocation2 + $0x300] sm:$0xff] 0.0
        %402 = vst [vmem:[#allocation2 + $0x308] sm:$0xff] 0.0
        %403 = vst [vmem:[#allocation2 + $0x310] sm:$0xff] 0.0
        %404 = vst [vmem:[#allocation2 + $0x318] sm:$0xff] 0.0
        %405 = vst [vmem:[#allocation2 + $0x320] sm:$0xff] 0.0
        %406 = vst [vmem:[#allocation2 + $0x328] sm:$0xff] 0.0
        %407 = vst [vmem:[#allocation2 + $0x330] sm:$0xff] 0.0
        %408 = vst [vmem:[#allocation2 + $0x338] sm:$0xff] 0.0
        %409 = vst [vmem:[#allocation2 + $0x340] sm:$0xff] 0.0
        %410 = vst [vmem:[#allocation2 + $0x348] sm:$0xff] 0.0
        %411 = vst [vmem:[#allocation2 + $0x350] sm:$0xff] 0.0
        %412 = vst [vmem:[#allocation2 + $0x358] sm:$0xff] 0.0
        %413 = vst [vmem:[#allocation2 + $0x360] sm:$0xff] 0.0
        %414 = vst [vmem:[#allocation2 + $0x368] sm:$0xff] 0.0
        %415 = vst [vmem:[#allocation2 + $0x370] sm:$0xff] 0.0
        %416 = vst [vmem:[#allocation2 + $0x378] sm:$0xff] 0.0
        %417 = vst [vmem:[#allocation2 + $0x380] sm:$0xff] 0.0
        %418 = vst [vmem:[#allocation2 + $0x388] sm:$0xff] 0.0
        %419 = vst [vmem:[#allocation2 + $0x390] sm:$0xff] 0.0
        %420 = vst [vmem:[#allocation2 + $0x398] sm:$0xff] 0.0
        %421 = vst [vmem:[#allocation2 + $0x3a0] sm:$0xff] 0.0
        %422 = vst [vmem:[#allocation2 + $0x3a8] sm:$0xff] 0.0
        %423 = vst [vmem:[#allocation2 + $0x3b0] sm:$0xff] 0.0
        %424 = vst [vmem:[#allocation2 + $0x3b8] sm:$0xff] 0.0
        %425 = vst [vmem:[#allocation2 + $0x3c0] sm:$0xff] 0.0
        %426 = vst [vmem:[#allocation2 + $0x3c8] sm:$0xff] 0.0
        %427 = vst [vmem:[#allocation2 + $0x3d0] sm:$0xff] 0.0
        %428 = vst [vmem:[#allocation2 + $0x3d8] sm:$0xff] 0.0
        %429 = vst [vmem:[#allocation2 + $0x3e0] sm:$0xff] 0.0
        %430 = vst [vmem:[#allocation2 + $0x3e8] sm:$0xff] 0.0
        %431 = vst [vmem:[#allocation2 + $0x3f0] sm:$0xff] 0.0
        %432 = vst [vmem:[#allocation2 + $0x3f8] sm:$0xff] 0.0
      $region40: #{depth_lstm_forward.8} parent=35 // pred_fallthru
        _
      %v433 = vld [vmem:[#allocation2] sm:$0xff]
      %v434 = vld [vmem:[#allocation2 + $0x8] sm:$0xff]
      %v435 = vld [vmem:[#allocation2 + $0x10] sm:$0xff]
      %v436 = vld [vmem:[#allocation2 + $0x18] sm:$0xff]
      %v437 = vld [vmem:[#allocation2 + $0x20] sm:$0xff]
      %v438 = vld [vmem:[#allocation2 + $0x28] sm:$0xff]
      %v439 = vld [vmem:[#allocation2 + $0x30] sm:$0xff]
      %v440 = vld [vmem:[#allocation2 + $0x38] sm:$0xff]
      %v441 = vld [vmem:[#allocation2 + $0x40] sm:$0xff]
      %v442 = vld [vmem:[#allocation2 + $0x48] sm:$0xff]
      %v443 = vld [vmem:[#allocation2 + $0x50] sm:$0xff]
      %v444 = vld [vmem:[#allocation2 + $0x58] sm:$0xff]
      %v445 = vld [vmem:[#allocation2 + $0x60] sm:$0xff]
      %v446 = vld [vmem:[#allocation2 + $0x68] sm:$0xff]
      %v447 = vld [vmem:[#allocation2 + $0x70] sm:$0xff]
      %v448 = vld [vmem:[#allocation2 + $0x78] sm:$0xff]
      %v449 = vld [vmem:[#allocation2 + $0x80] sm:$0xff]
      %v450 = vld [vmem:[#allocation2 + $0x88] sm:$0xff]
      %v451 = vld [vmem:[#allocation2 + $0x90] sm:$0xff]
      %v452 = vld [vmem:[#allocation2 + $0x98] sm:$0xff]
      %v453 = vld [vmem:[#allocation2 + $0xa0] sm:$0xff]
      %v454 = vld [vmem:[#allocation2 + $0xa8] sm:$0xff]
      %v455 = vld [vmem:[#allocation2 + $0xb0] sm:$0xff]
      %v456 = vld [vmem:[#allocation2 + $0xb8] sm:$0xff]
      %v457 = vld [vmem:[#allocation2 + $0xc0] sm:$0xff]
      %v458 = vld [vmem:[#allocation2 + $0xc8] sm:$0xff]
      %v459 = vld [vmem:[#allocation2 + $0xd0] sm:$0xff]
      %v460 = vld [vmem:[#allocation2 + $0xd8] sm:$0xff]
      %v461 = vld [vmem:[#allocation2 + $0xe0] sm:$0xff]
      %v462 = vld [vmem:[#allocation2 + $0xe8] sm:$0xff]
      %v463 = vld [vmem:[#allocation2 + $0xf0] sm:$0xff]
      %v464 = vld [vmem:[#allocation2 + $0xf8] sm:$0xff]
      %v465 = vld [vmem:[#allocation2 + $0x100] sm:$0xff]
      %v466 = vld [vmem:[#allocation2 + $0x108] sm:$0xff]
      %v467 = vld [vmem:[#allocation2 + $0x110] sm:$0xff]
      %v468 = vld [vmem:[#allocation2 + $0x118] sm:$0xff]
      %v469 = vld [vmem:[#allocation2 + $0x120] sm:$0xff]
      %v470 = vld [vmem:[#allocation2 + $0x128] sm:$0xff]
      %v471 = vld [vmem:[#allocation2 + $0x130] sm:$0xff]
      %v472 = vld [vmem:[#allocation2 + $0x138] sm:$0xff]
      %v473 = vld [vmem:[#allocation2 + $0x140] sm:$0xff]
      %v474 = vld [vmem:[#allocation2 + $0x148] sm:$0xff]
      %v475 = vld [vmem:[#allocation2 + $0x150] sm:$0xff]
      %v476 = vld [vmem:[#allocation2 + $0x158] sm:$0xff]
      %v477 = vld [vmem:[#allocation2 + $0x160] sm:$0xff]
      %v478 = vld [vmem:[#allocation2 + $0x168] sm:$0xff]
      %v479 = vld [vmem:[#allocation2 + $0x170] sm:$0xff]
      %v480 = vld [vmem:[#allocation2 + $0x178] sm:$0xff]
      %v481 = vld [vmem:[#allocation2 + $0x180] sm:$0xff]
      %v482 = vld [vmem:[#allocation2 + $0x188] sm:$0xff]
      %v483 = vld [vmem:[#allocation2 + $0x190] sm:$0xff]
      %v484 = vld [vmem:[#allocation2 + $0x198] sm:$0xff]
      %v485 = vld [vmem:[#allocation2 + $0x1a0] sm:$0xff]
      %v486 = vld [vmem:[#allocation2 + $0x1a8] sm:$0xff]
      %v487 = vld [vmem:[#allocation2 + $0x1b0] sm:$0xff]
      %v488 = vld [vmem:[#allocation2 + $0x1b8] sm:$0xff]
      %v489 = vld [vmem:[#allocation2 + $0x1c0] sm:$0xff]
      %v490 = vld [vmem:[#allocation2 + $0x1c8] sm:$0xff]
      %v491 = vld [vmem:[#allocation2 + $0x1d0] sm:$0xff]
      %v492 = vld [vmem:[#allocation2 + $0x1d8] sm:$0xff]
      %v493 = vld [vmem:[#allocation2 + $0x1e0] sm:$0xff]
      %v494 = vld [vmem:[#allocation2 + $0x1e8] sm:$0xff]
      %v495 = vld [vmem:[#allocation2 + $0x1f0] sm:$0xff]
      %v496 = vld [vmem:[#allocation2 + $0x1f8] sm:$0xff]
      %v497 = vld [vmem:[#allocation2 + $0x200] sm:$0xff]
      %v498 = vld [vmem:[#allocation2 + $0x208] sm:$0xff]
      %v499 = vld [vmem:[#allocation2 + $0x210] sm:$0xff]
      %v500 = vld [vmem:[#allocation2 + $0x218] sm:$0xff]
      %v501 = vld [vmem:[#allocation2 + $0x220] sm:$0xff]
      %v502 = vld [vmem:[#allocation2 + $0x228] sm:$0xff]
      %v503 = vld [vmem:[#allocation2 + $0x230] sm:$0xff]
      %v504 = vld [vmem:[#allocation2 + $0x238] sm:$0xff]
      %v505 = vld [vmem:[#allocation2 + $0x240] sm:$0xff]
      %v506 = vld [vmem:[#allocation2 + $0x248] sm:$0xff]
      %v507 = vld [vmem:[#allocation2 + $0x250] sm:$0xff]
      %v508 = vld [vmem:[#allocation2 + $0x258] sm:$0xff]
      %v509 = vld [vmem:[#allocation2 + $0x260] sm:$0xff]
      %v510 = vld [vmem:[#allocation2 + $0x268] sm:$0xff]
      %v511 = vld [vmem:[#allocation2 + $0x270] sm:$0xff]
      %v512 = vld [vmem:[#allocation2 + $0x278] sm:$0xff]
      %v513 = vld [vmem:[#allocation2 + $0x280] sm:$0xff]
      %v514 = vld [vmem:[#allocation2 + $0x288] sm:$0xff]
      %v515 = vld [vmem:[#allocation2 + $0x290] sm:$0xff]
      %v516 = vld [vmem:[#allocation2 + $0x298] sm:$0xff]
      %v517 = vld [vmem:[#allocation2 + $0x2a0] sm:$0xff]
      %v518 = vld [vmem:[#allocation2 + $0x2a8] sm:$0xff]
      %v519 = vld [vmem:[#allocation2 + $0x2b0] sm:$0xff]
      %v520 = vld [vmem:[#allocation2 + $0x2b8] sm:$0xff]
      %v521 = vld [vmem:[#allocation2 + $0x2c0] sm:$0xff]
      %v522 = vld [vmem:[#allocation2 + $0x2c8] sm:$0xff]
      %v523 = vld [vmem:[#allocation2 + $0x2d0] sm:$0xff]
      %v524 = vld [vmem:[#allocation2 + $0x2d8] sm:$0xff]
      %v525 = vld [vmem:[#allocation2 + $0x2e0] sm:$0xff]
      %v526 = vld [vmem:[#allocation2 + $0x2e8] sm:$0xff]
      %v527 = vld [vmem:[#allocation2 + $0x2f0] sm:$0xff]
      %v528 = vld [vmem:[#allocation2 + $0x2f8] sm:$0xff]
      %v529 = vld [vmem:[#allocation2 + $0x300] sm:$0xff]
      %v530 = vld [vmem:[#allocation2 + $0x308] sm:$0xff]
      %v531 = vld [vmem:[#allocation2 + $0x310] sm:$0xff]
      %v532 = vld [vmem:[#allocation2 + $0x318] sm:$0xff]
      %v533 = vld [vmem:[#allocation2 + $0x320] sm:$0xff]
      %v534 = vld [vmem:[#allocation2 + $0x328] sm:$0xff]
      %v535 = vld [vmem:[#allocation2 + $0x330] sm:$0xff]
      %v536 = vld [vmem:[#allocation2 + $0x338] sm:$0xff]
      %v537 = vld [vmem:[#allocation2 + $0x340] sm:$0xff]
      %v538 = vld [vmem:[#allocation2 + $0x348] sm:$0xff]
      %v539 = vld [vmem:[#allocation2 + $0x350] sm:$0xff]
      %v540 = vld [vmem:[#allocation2 + $0x358] sm:$0xff]
      %v541 = vld [vmem:[#allocation2 + $0x360] sm:$0xff]
      %v542 = vld [vmem:[#allocation2 + $0x368] sm:$0xff]
      %v543 = vld [vmem:[#allocation2 + $0x370] sm:$0xff]
      %v544 = vld [vmem:[#allocation2 + $0x378] sm:$0xff]
      %v545 = vld [vmem:[#allocation2 + $0x380] sm:$0xff]
      %v546 = vld [vmem:[#allocation2 + $0x388] sm:$0xff]
      %v547 = vld [vmem:[#allocation2 + $0x390] sm:$0xff]
      %v548 = vld [vmem:[#allocation2 + $0x398] sm:$0xff]
      %v549 = vld [vmem:[#allocation2 + $0x3a0] sm:$0xff]
      %v550 = vld [vmem:[#allocation2 + $0x3a8] sm:$0xff]
      %v551 = vld [vmem:[#allocation2 + $0x3b0] sm:$0xff]
      %v552 = vld [vmem:[#allocation2 + $0x3b8] sm:$0xff]
      %v553 = vld [vmem:[#allocation2 + $0x3c0] sm:$0xff]
      %v554 = vld [vmem:[#allocation2 + $0x3c8] sm:$0xff]
      %v555 = vld [vmem:[#allocation2 + $0x3d0] sm:$0xff]
      %v556 = vld [vmem:[#allocation2 + $0x3d8] sm:$0xff]
      %v557 = vld [vmem:[#allocation2 + $0x3e0] sm:$0xff]
      %v558 = vld [vmem:[#allocation2 + $0x3e8] sm:$0xff]
      %v559 = vld [vmem:[#allocation2 + $0x3f0] sm:$0xff]
      %v560 = vld [vmem:[#allocation2 + $0x3f8] sm:$0xff]
      %v561 = vld [vmem:[%s274] sm:$0xf]
      %v562 = vld [vmem:[%s274 + $0x4] sm:$0xf]
      %v563 = vld [vmem:[%s274 + $0x8] sm:$0xf]
      %v564 = vld [vmem:[%s274 + $0xc] sm:$0xf]
      %v565 = vld [vmem:[%s274 + $0x10] sm:$0xf]
      %v566 = vld [vmem:[%s274 + $0x14] sm:$0xf]
      %v567 = vld [vmem:[%s274 + $0x18] sm:$0xf]
      %v568 = vld [vmem:[%s274 + $0x1c] sm:$0xf]
      %v569 = vld [vmem:[%s274 + $0x20] sm:$0xf]
      %v570 = vld [vmem:[%s274 + $0x24] sm:$0xf]
      %v571 = vld [vmem:[%s274 + $0x28] sm:$0xf]
      %v572 = vld [vmem:[%s274 + $0x2c] sm:$0xf]
      %v573 = vld [vmem:[%s274 + $0x30] sm:$0xf]
      %v574 = vld [vmem:[%s274 + $0x34] sm:$0xf]
      %v575 = vld [vmem:[%s274 + $0x38] sm:$0xf]
      %v576 = vld [vmem:[%s274 + $0x3c] sm:$0xf]
      %v577 = vld [vmem:[%s274 + $0x40] sm:$0xf]
      %v578 = vld [vmem:[%s274 + $0x44] sm:$0xf]
      %v579 = vld [vmem:[%s274 + $0x48] sm:$0xf]
      %v580 = vld [vmem:[%s274 + $0x4c] sm:$0xf]
      %v581 = vld [vmem:[%s274 + $0x50] sm:$0xf]
      %v582 = vld [vmem:[%s274 + $0x54] sm:$0xf]
      %v583 = vld [vmem:[%s274 + $0x58] sm:$0xf]
      %v584 = vld [vmem:[%s274 + $0x5c] sm:$0xf]
      %v585 = vld [vmem:[%s274 + $0x60] sm:$0xf]
      %v586 = vld [vmem:[%s274 + $0x64] sm:$0xf]
      %v587 = vld [vmem:[%s274 + $0x68] sm:$0xf]
      %v588 = vld [vmem:[%s274 + $0x6c] sm:$0xf]
      %v589 = vld [vmem:[%s274 + $0x70] sm:$0xf]
      %v590 = vld [vmem:[%s274 + $0x74] sm:$0xf]
      %v591 = vld [vmem:[%s274 + $0x78] sm:$0xf]
      %v592 = vld [vmem:[%s274 + $0x7c] sm:$0xf]
      %v593 = vld [vmem:[%s274 + $0x80] sm:$0xf]
      %v594 = vld [vmem:[%s274 + $0x84] sm:$0xf]
      %v595 = vld [vmem:[%s274 + $0x88] sm:$0xf]
      %v596 = vld [vmem:[%s274 + $0x8c] sm:$0xf]
      %v597 = vld [vmem:[%s274 + $0x90] sm:$0xf]
      %v598 = vld [vmem:[%s274 + $0x94] sm:$0xf]
      %v599 = vld [vmem:[%s274 + $0x98] sm:$0xf]
      %v600 = vld [vmem:[%s274 + $0x9c] sm:$0xf]
      %v601 = vld [vmem:[%s274 + $0xa0] sm:$0xf]
      %v602 = vld [vmem:[%s274 + $0xa4] sm:$0xf]
      %v603 = vld [vmem:[%s274 + $0xa8] sm:$0xf]
      %v604 = vld [vmem:[%s274 + $0xac] sm:$0xf]
      %v605 = vld [vmem:[%s274 + $0xb0] sm:$0xf]
      %v606 = vld [vmem:[%s274 + $0xb4] sm:$0xf]
      %v607 = vld [vmem:[%s274 + $0xb8] sm:$0xf]
      %v608 = vld [vmem:[%s274 + $0xbc] sm:$0xf]
      %v609 = vld [vmem:[%s274 + $0xc0] sm:$0xf]
      %v610 = vld [vmem:[%s274 + $0xc4] sm:$0xf]
      %v611 = vld [vmem:[%s274 + $0xc8] sm:$0xf]
      %v612 = vld [vmem:[%s274 + $0xcc] sm:$0xf]
      %v613 = vld [vmem:[%s274 + $0xd0] sm:$0xf]
      %v614 = vld [vmem:[%s274 + $0xd4] sm:$0xf]
      %v615 = vld [vmem:[%s274 + $0xd8] sm:$0xf]
      %v616 = vld [vmem:[%s274 + $0xdc] sm:$0xf]
      %v617 = vld [vmem:[%s274 + $0xe0] sm:$0xf]
      %v618 = vld [vmem:[%s274 + $0xe4] sm:$0xf]
      %v619 = vld [vmem:[%s274 + $0xe8] sm:$0xf]
      %v620 = vld [vmem:[%s274 + $0xec] sm:$0xf]
      %v621 = vld [vmem:[%s274 + $0xf0] sm:$0xf]
      %v622 = vld [vmem:[%s274 + $0xf4] sm:$0xf]
      %v623 = vld [vmem:[%s274 + $0xf8] sm:$0xf]
      %v624 = vld [vmem:[%s274 + $0xfc] sm:$0xf]
      %v625 = vld [vmem:[%s274 + $0x100] sm:$0xf]
      %v626 = vld [vmem:[%s274 + $0x104] sm:$0xf]
      %v627 = vld [vmem:[%s274 + $0x108] sm:$0xf]
      %v628 = vld [vmem:[%s274 + $0x10c] sm:$0xf]
      %v629 = vld [vmem:[%s274 + $0x110] sm:$0xf]
      %v630 = vld [vmem:[%s274 + $0x114] sm:$0xf]
      %v631 = vld [vmem:[%s274 + $0x118] sm:$0xf]
      %v632 = vld [vmem:[%s274 + $0x11c] sm:$0xf]
      %v633 = vld [vmem:[%s274 + $0x120] sm:$0xf]
      %v634 = vld [vmem:[%s274 + $0x124] sm:$0xf]
      %v635 = vld [vmem:[%s274 + $0x128] sm:$0xf]
      %v636 = vld [vmem:[%s274 + $0x12c] sm:$0xf]
      %v637 = vld [vmem:[%s274 + $0x130] sm:$0xf]
      %v638 = vld [vmem:[%s274 + $0x134] sm:$0xf]
      %v639 = vld [vmem:[%s274 + $0x138] sm:$0xf]
      %v640 = vld [vmem:[%s274 + $0x13c] sm:$0xf]
      %v641 = vld [vmem:[%s274 + $0x140] sm:$0xf]
      %v642 = vld [vmem:[%s274 + $0x144] sm:$0xf]
      %v643 = vld [vmem:[%s274 + $0x148] sm:$0xf]
      %v644 = vld [vmem:[%s274 + $0x14c] sm:$0xf]
      %v645 = vld [vmem:[%s274 + $0x150] sm:$0xf]
      %v646 = vld [vmem:[%s274 + $0x154] sm:$0xf]
      %v647 = vld [vmem:[%s274 + $0x158] sm:$0xf]
      %v648 = vld [vmem:[%s274 + $0x15c] sm:$0xf]
      %v649 = vld [vmem:[%s274 + $0x160] sm:$0xf]
      %v650 = vld [vmem:[%s274 + $0x164] sm:$0xf]
      %v651 = vld [vmem:[%s274 + $0x168] sm:$0xf]
      %v652 = vld [vmem:[%s274 + $0x16c] sm:$0xf]
      %v653 = vld [vmem:[%s274 + $0x170] sm:$0xf]
      %v654 = vld [vmem:[%s274 + $0x174] sm:$0xf]
      %v655 = vld [vmem:[%s274 + $0x178] sm:$0xf]
      %v656 = vld [vmem:[%s274 + $0x17c] sm:$0xf]
      %v657 = vld [vmem:[%s274 + $0x180] sm:$0xf]
      %v658 = vld [vmem:[%s274 + $0x184] sm:$0xf]
      %v659 = vld [vmem:[%s274 + $0x188] sm:$0xf]
      %v660 = vld [vmem:[%s274 + $0x18c] sm:$0xf]
      %v661 = vld [vmem:[%s274 + $0x190] sm:$0xf]
      %v662 = vld [vmem:[%s274 + $0x194] sm:$0xf]
      %v663 = vld [vmem:[%s274 + $0x198] sm:$0xf]
      %v664 = vld [vmem:[%s274 + $0x19c] sm:$0xf]
      %v665 = vld [vmem:[%s274 + $0x1a0] sm:$0xf]
      %v666 = vld [vmem:[%s274 + $0x1a4] sm:$0xf]
      %v667 = vld [vmem:[%s274 + $0x1a8] sm:$0xf]
      %v668 = vld [vmem:[%s274 + $0x1ac] sm:$0xf]
      %v669 = vld [vmem:[%s274 + $0x1b0] sm:$0xf]
      %v670 = vld [vmem:[%s274 + $0x1b4] sm:$0xf]
      %v671 = vld [vmem:[%s274 + $0x1b8] sm:$0xf]
      %v672 = vld [vmem:[%s274 + $0x1bc] sm:$0xf]
      %v673 = vld [vmem:[%s274 + $0x1c0] sm:$0xf]
      %v674 = vld [vmem:[%s274 + $0x1c4] sm:$0xf]
      %v675 = vld [vmem:[%s274 + $0x1c8] sm:$0xf]
      %v676 = vld [vmem:[%s274 + $0x1cc] sm:$0xf]
      %v677 = vld [vmem:[%s274 + $0x1d0] sm:$0xf]
      %v678 = vld [vmem:[%s274 + $0x1d4] sm:$0xf]
      %v679 = vld [vmem:[%s274 + $0x1d8] sm:$0xf]
      %v680 = vld [vmem:[%s274 + $0x1dc] sm:$0xf]
      %v681 = vld [vmem:[%s274 + $0x1e0] sm:$0xf]
      %v682 = vld [vmem:[%s274 + $0x1e4] sm:$0xf]
      %v683 = vld [vmem:[%s274 + $0x1e8] sm:$0xf]
      %v684 = vld [vmem:[%s274 + $0x1ec] sm:$0xf]
      %v685 = vld [vmem:[%s274 + $0x1f0] sm:$0xf]
      %v686 = vld [vmem:[%s274 + $0x1f4] sm:$0xf]
      %v687 = vld [vmem:[%s274 + $0x1f8] sm:$0xf]
      %v688 = vld [vmem:[%s274 + $0x1fc] sm:$0xf]
      %v689 = vld [vmem:[%s283] sm:$0xf]
      %v690 = vld [vmem:[%s283 + $0x4] sm:$0xf]
      %v691 = vld [vmem:[%s283 + $0x8] sm:$0xf]
      %v692 = vld [vmem:[%s283 + $0xc] sm:$0xf]
      %v693 = vld [vmem:[%s283 + $0x10] sm:$0xf]
      %v694 = vld [vmem:[%s283 + $0x14] sm:$0xf]
      %v695 = vld [vmem:[%s283 + $0x18] sm:$0xf]
      %v696 = vld [vmem:[%s283 + $0x1c] sm:$0xf]
      %v697 = vld [vmem:[%s283 + $0x20] sm:$0xf]
      %v698 = vld [vmem:[%s283 + $0x24] sm:$0xf]
      %v699 = vld [vmem:[%s283 + $0x28] sm:$0xf]
      %v700 = vld [vmem:[%s283 + $0x2c] sm:$0xf]
      %v701 = vld [vmem:[%s283 + $0x30] sm:$0xf]
      %v702 = vld [vmem:[%s283 + $0x34] sm:$0xf]
      %v703 = vld [vmem:[%s283 + $0x38] sm:$0xf]
      %v704 = vld [vmem:[%s283 + $0x3c] sm:$0xf]
      %v833 = vunpack.c.l.b16 %v561
      %v834 = vunpack.c.l.b16 %v562
      %v835 = vunpack.c.l.b16 %v563
      %v836 = vunpack.c.l.b16 %v564
      %v837 = vunpack.c.l.b16 %v565
      %v838 = vunpack.c.l.b16 %v566
      %v839 = vunpack.c.l.b16 %v567
      %v840 = vunpack.c.l.b16 %v568
      %v841 = vunpack.c.l.b16 %v569
      %v842 = vunpack.c.l.b16 %v570
      %v843 = vunpack.c.l.b16 %v571
      %v844 = vunpack.c.l.b16 %v572
      %v845 = vunpack.c.l.b16 %v573
      %v846 = vunpack.c.l.b16 %v574
      %v847 = vunpack.c.l.b16 %v575
      %v848 = vunpack.c.l.b16 %v576
      %v849 = vunpack.c.l.b16 %v577
      %v850 = vunpack.c.l.b16 %v578
      %v851 = vunpack.c.l.b16 %v579
      %v852 = vunpack.c.l.b16 %v580
      %v853 = vunpack.c.l.b16 %v581
      %v854 = vunpack.c.l.b16 %v582
      %v855 = vunpack.c.l.b16 %v583
      %v856 = vunpack.c.l.b16 %v584
      %v857 = vunpack.c.l.b16 %v585
      %v858 = vunpack.c.l.b16 %v586
      %v859 = vunpack.c.l.b16 %v587
      %v860 = vunpack.c.l.b16 %v588
      %v861 = vunpack.c.l.b16 %v589
      %v862 = vunpack.c.l.b16 %v590
      %v863 = vunpack.c.l.b16 %v591
      %v864 = vunpack.c.l.b16 %v592
      %v865 = vunpack.c.l.b16 %v593
      %v866 = vunpack.c.l.b16 %v594
      %v867 = vunpack.c.l.b16 %v595
      %v868 = vunpack.c.l.b16 %v596
      %v869 = vunpack.c.l.b16 %v597
      %v870 = vunpack.c.l.b16 %v598
      %v871 = vunpack.c.l.b16 %v599
      %v872 = vunpack.c.l.b16 %v600
      %v873 = vunpack.c.l.b16 %v601
      %v874 = vunpack.c.l.b16 %v602
      %v875 = vunpack.c.l.b16 %v603
      %v876 = vunpack.c.l.b16 %v604
      %v877 = vunpack.c.l.b16 %v605
      %v878 = vunpack.c.l.b16 %v606
      %v879 = vunpack.c.l.b16 %v607
      %v880 = vunpack.c.l.b16 %v608
      %v881 = vunpack.c.l.b16 %v609
      %v882 = vunpack.c.l.b16 %v610
      %v883 = vunpack.c.l.b16 %v611
      %v884 = vunpack.c.l.b16 %v612
      %v885 = vunpack.c.l.b16 %v613
      %v886 = vunpack.c.l.b16 %v614
      %v887 = vunpack.c.l.b16 %v615
      %v888 = vunpack.c.l.b16 %v616
      %v889 = vunpack.c.l.b16 %v617
      %v890 = vunpack.c.l.b16 %v618
      %v891 = vunpack.c.l.b16 %v619
      %v892 = vunpack.c.l.b16 %v620
      %v893 = vunpack.c.l.b16 %v621
      %v894 = vunpack.c.l.b16 %v622
      %v895 = vunpack.c.l.b16 %v623
      %v896 = vunpack.c.l.b16 %v624
      %v897 = vunpack.c.l.b16 %v625
      %v898 = vunpack.c.l.b16 %v626
      %v899 = vunpack.c.l.b16 %v627
      %v900 = vunpack.c.l.b16 %v628
      %v901 = vunpack.c.l.b16 %v629
      %v902 = vunpack.c.l.b16 %v630
      %v903 = vunpack.c.l.b16 %v631
      %v904 = vunpack.c.l.b16 %v632
      %v905 = vunpack.c.l.b16 %v633
      %v906 = vunpack.c.l.b16 %v634
      %v907 = vunpack.c.l.b16 %v635
      %v908 = vunpack.c.l.b16 %v636
      %v909 = vunpack.c.l.b16 %v637
      %v910 = vunpack.c.l.b16 %v638
      %v911 = vunpack.c.l.b16 %v639
      %v912 = vunpack.c.l.b16 %v640
      %v913 = vunpack.c.l.b16 %v641
      %v914 = vunpack.c.l.b16 %v642
      %v915 = vunpack.c.l.b16 %v643
      %v916 = vunpack.c.l.b16 %v644
      %v917 = vunpack.c.l.b16 %v645
      %v918 = vunpack.c.l.b16 %v646
      %v919 = vunpack.c.l.b16 %v647
      %v920 = vunpack.c.l.b16 %v648
      %v921 = vunpack.c.l.b16 %v649
      %v922 = vunpack.c.l.b16 %v650
      %v923 = vunpack.c.l.b16 %v651
      %v924 = vunpack.c.l.b16 %v652
      %v925 = vunpack.c.l.b16 %v653
      %v926 = vunpack.c.l.b16 %v654
      %v927 = vunpack.c.l.b16 %v655
      %v928 = vunpack.c.l.b16 %v656
      %v929 = vunpack.c.l.b16 %v657
      %v930 = vunpack.c.l.b16 %v658
      %v931 = vunpack.c.l.b16 %v659
      %v932 = vunpack.c.l.b16 %v660
      %v933 = vunpack.c.l.b16 %v661
      %v934 = vunpack.c.l.b16 %v662
      %v935 = vunpack.c.l.b16 %v663
      %v936 = vunpack.c.l.b16 %v664
      %v937 = vunpack.c.l.b16 %v665
      %v938 = vunpack.c.l.b16 %v666
      %v939 = vunpack.c.l.b16 %v667
      %v940 = vunpack.c.l.b16 %v668
      %v941 = vunpack.c.l.b16 %v669
      %v942 = vunpack.c.l.b16 %v670
      %v943 = vunpack.c.l.b16 %v671
      %v944 = vunpack.c.l.b16 %v672
      %v945 = vunpack.c.l.b16 %v673
      %v946 = vunpack.c.l.b16 %v674
      %v947 = vunpack.c.l.b16 %v675
      %v948 = vunpack.c.l.b16 %v676
      %v949 = vunpack.c.l.b16 %v677
      %v950 = vunpack.c.l.b16 %v678
      %v951 = vunpack.c.l.b16 %v679
      %v952 = vunpack.c.l.b16 %v680
      %v953 = vunpack.c.l.b16 %v681
      %v954 = vunpack.c.l.b16 %v682
      %v955 = vunpack.c.l.b16 %v683
      %v956 = vunpack.c.l.b16 %v684
      %v957 = vunpack.c.l.b16 %v685
      %v958 = vunpack.c.l.b16 %v686
      %v959 = vunpack.c.l.b16 %v687
      %v960 = vunpack.c.l.b16 %v688
      %v961 = vpack.c.b16 %v834, %v833
      %v962 = vpack.c.b16 %v836, %v835
      %v963 = vpack.c.b16 %v838, %v837
      %v964 = vpack.c.b16 %v840, %v839
      %v965 = vpack.c.b16 %v842, %v841
      %v966 = vpack.c.b16 %v844, %v843
      %v967 = vpack.c.b16 %v846, %v845
      %v968 = vpack.c.b16 %v848, %v847
      %v969 = vpack.c.b16 %v850, %v849
      %v970 = vpack.c.b16 %v852, %v851
      %v971 = vpack.c.b16 %v854, %v853
      %v972 = vpack.c.b16 %v856, %v855
      %v973 = vpack.c.b16 %v858, %v857
      %v974 = vpack.c.b16 %v860, %v859
      %v975 = vpack.c.b16 %v862, %v861
      %v976 = vpack.c.b16 %v864, %v863
      %v977 = vpack.c.b16 %v866, %v865
      %v978 = vpack.c.b16 %v868, %v867
      %v979 = vpack.c.b16 %v870, %v869
      %v980 = vpack.c.b16 %v872, %v871
      %v981 = vpack.c.b16 %v874, %v873
      %v982 = vpack.c.b16 %v876, %v875
      %v983 = vpack.c.b16 %v878, %v877
      %v984 = vpack.c.b16 %v880, %v879
      %v985 = vpack.c.b16 %v882, %v881
      %v986 = vpack.c.b16 %v884, %v883
      %v987 = vpack.c.b16 %v886, %v885
      %v988 = vpack.c.b16 %v888, %v887
      %v989 = vpack.c.b16 %v890, %v889
      %v990 = vpack.c.b16 %v892, %v891
      %v991 = vpack.c.b16 %v894, %v893
      %v992 = vpack.c.b16 %v896, %v895
      %v993 = vpack.c.b16 %v898, %v897
      %v994 = vpack.c.b16 %v900, %v899
      %v995 = vpack.c.b16 %v902, %v901
      %v996 = vpack.c.b16 %v904, %v903
      %v997 = vpack.c.b16 %v906, %v905
      %v998 = vpack.c.b16 %v908, %v907
      %v999 = vpack.c.b16 %v910, %v909
      %v1000 = vpack.c.b16 %v912, %v911
      %v1001 = vpack.c.b16 %v914, %v913
      %v1002 = vpack.c.b16 %v916, %v915
      %v1003 = vpack.c.b16 %v918, %v917
      %v1004 = vpack.c.b16 %v920, %v919
      %v1005 = vpack.c.b16 %v922, %v921
      %v1006 = vpack.c.b16 %v924, %v923
      %v1007 = vpack.c.b16 %v926, %v925
      %v1008 = vpack.c.b16 %v928, %v927
      %v1009 = vpack.c.b16 %v930, %v929
      %v1010 = vpack.c.b16 %v932, %v931
      %v1011 = vpack.c.b16 %v934, %v933
      %v1012 = vpack.c.b16 %v936, %v935
      %v1013 = vpack.c.b16 %v938, %v937
      %v1014 = vpack.c.b16 %v940, %v939
      %v1015 = vpack.c.b16 %v942, %v941
      %v1016 = vpack.c.b16 %v944, %v943
      %v1017 = vpack.c.b16 %v946, %v945
      %v1018 = vpack.c.b16 %v948, %v947
      %v1019 = vpack.c.b16 %v950, %v949
      %v1020 = vpack.c.b16 %v952, %v951
      %v1021 = vpack.c.b16 %v954, %v953
      %v1022 = vpack.c.b16 %v956, %v955
      %v1023 = vpack.c.b16 %v958, %v957
      %v1024 = vpack.c.b16 %v960, %v959
      %v1105 = vunpack.c.l.b16 %v689
      %v1106 = vunpack.c.l.b16 %v690
      %v1107 = vunpack.c.l.b16 %v691
      %v1108 = vunpack.c.l.b16 %v692
      %v1109 = vunpack.c.l.b16 %v693
      %v1110 = vunpack.c.l.b16 %v694
      %v1111 = vunpack.c.l.b16 %v695
      %v1112 = vunpack.c.l.b16 %v696
      %v1113 = vunpack.c.l.b16 %v697
      %v1114 = vunpack.c.l.b16 %v698
      %v1115 = vunpack.c.l.b16 %v699
      %v1116 = vunpack.c.l.b16 %v700
      %v1117 = vunpack.c.l.b16 %v701
      %v1118 = vunpack.c.l.b16 %v702
      %v1119 = vunpack.c.l.b16 %v703
      %v1120 = vunpack.c.l.b16 %v704
      %v1121 = vpack.c.b16 %v1106, %v1105
      %v1122 = vpack.c.b16 %v1108, %v1107
      %v1123 = vpack.c.b16 %v1110, %v1109
      %v1124 = vpack.c.b16 %v1112, %v1111
      %v1125 = vpack.c.b16 %v1114, %v1113
      %v1126 = vpack.c.b16 %v1116, %v1115
      %v1127 = vpack.c.b16 %v1118, %v1117
      %v1128 = vpack.c.b16 %v1120, %v1119
      %1137 = vmatprep.subr.bf16.mxu0 0
      %1138 = vmatpush1.bf16.msra.mxu0 %v1121
      %1139 = vmatprep.subr.bf16.mxu0 0
      %1140 = vmatpush1.bf16.msra.mxu0 %v1122
      %1141 = vmatprep.subr.bf16.mxu0 0
      %1142 = vmatpush1.bf16.msra.mxu0 %v1123
      %1143 = vmatprep.subr.bf16.mxu0 0
      %1144 = vmatpush1.bf16.msra.mxu0 %v1124
      %1145 = vmatprep.subr.bf16.mxu0 0
      %1146 = vmatpush1.bf16.msra.mxu0 %v1125
      %1147 = vmatprep.subr.bf16.mxu0 0
      %1148 = vmatpush1.bf16.msra.mxu0 %v1126
      %1149 = vmatprep.subr.bf16.mxu0 0
      %1150 = vmatpush1.bf16.msra.mxu0 %v1127
      %1151 = vmatprep.subr.bf16.mxu0 0
      %1152 = vmatpush1.bf16.msra.mxu0 %v1128
      %1153 = vmatprep.subr.bf16.mxu0 0
      %1154 = vmatpush1.bf16.msra.mxu0 0
      %1155 = vmatprep.subr.bf16.mxu0 0
      %1156 = vmatpush1.bf16.msra.mxu0 0
      %1157 = vmatprep.subr.bf16.mxu0 0
      %1158 = vmatpush1.bf16.msra.mxu0 0
      %1159 = vmatprep.subr.bf16.mxu0 0
      %1160 = vmatpush1.bf16.msra.mxu0 0
      %1161 = vmatprep.subr.bf16.mxu0 0
      %1162 = vmatpush1.bf16.msra.mxu0 0
      %1163 = vmatprep.subr.bf16.mxu0 0
      %1164 = vmatpush1.bf16.msra.mxu0 0
      %1165 = vmatprep.subr.bf16.mxu0 0
      %1166 = vmatpush1.bf16.msra.mxu0 0
      %1167 = vmatprep.subr.bf16.mxu0 0
      %1168 = vmatpush1.bf16.msra.mxu0 0
      %1169 = vmatprep.mubr.bf16.mxu0 0
      %1170 = vmatmul.mubr.bf16.gmra.mrb[0].mxu0 %v961
      %v1171 = vpop.f32.mrb[0].mxu0
      %v1172 = vadd.f32 0.0, %v1171
      %v1173 = vpop.f32.mrb[0].mxu0
      %v1174 = vpop.f32.mrb[0].mxu0
      %v1175 = vadd.f32 0.0, %v1174
      %v1176 = vpop.f32.mrb[0].mxu0
      %1177 = vmatprep.mubr.bf16.mxu0 0
      %1178 = vmatmul.mubr.bf16.gmra.mrb[0].mxu0 %v962
      %v1179 = vpop.f32.mrb[0].mxu0
      %v1180 = vadd.f32 0.0, %v1179
      %v1181 = vpop.f32.mrb[0].mxu0
      %v1182 = vpop.f32.mrb[0].mxu0
      %v1183 = vadd.f32 0.0, %v1182
      %v1184 = vpop.f32.mrb[0].mxu0
      %1185 = vmatprep.mubr.bf16.mxu0 0
      %1186 = vmatmul.mubr.bf16.gmra.mrb[0].mxu0 %v963
      %v1187 = vpop.f32.mrb[0].mxu0
      %v1188 = vadd.f32 0.0, %v1187
      %v1189 = vpop.f32.mrb[0].mxu0
      %v1190 = vpop.f32.mrb[0].mxu0
      %v1191 = vadd.f32 0.0, %v1190
      %v1192 = vpop.f32.mrb[0].mxu0
      %1193 = vmatprep.mubr.bf16.mxu0 0
      %1194 = vmatmul.mubr.bf16.gmra.mrb[0].mxu0 %v964
      %v1195 = vpop.f32.mrb[0].mxu0
      %v1196 = vadd.f32 0.0, %v1195
      %v1197 = vpop.f32.mrb[0].mxu0
      %v1198 = vpop.f32.mrb[0].mxu0
      %v1199 = vadd.f32 0.0, %v1198
      %v1200 = vpop.f32.mrb[0].mxu0
      %1201 = vmatprep.mubr.bf16.mxu0 0
      %1202 = vmatmul.mubr.bf16.gmra.mrb[0].mxu0 %v965
      %v1203 = vpop.f32.mrb[0].mxu0
      %v1204 = vadd.f32 0.0, %v1203
      %v1205 = vpop.f32.mrb[0].mxu0
      %v1206 = vpop.f32.mrb[0].mxu0
      %v1207 = vadd.f32 0.0, %v1206
      %v1208 = vpop.f32.mrb[0].mxu0
      %1209 = vmatprep.mubr.bf16.mxu0 0
      %1210 = vmatmul.mubr.bf16.gmra.mrb[0].mxu0 %v966
      %v1211 = vpop.f32.mrb[0].mxu0
      %v1212 = vadd.f32 0.0, %v1211
      %v1213 = vpop.f32.mrb[0].mxu0
      %v1214 = vpop.f32.mrb[0].mxu0
      %v1215 = vadd.f32 0.0, %v1214
      %v1216 = vpop.f32.mrb[0].mxu0
      %1217 = vmatprep.mubr.bf16.mxu0 0
      %1218 = vmatmul.mubr.bf16.gmra.mrb[0].mxu0 %v967
      %v1219 = vpop.f32.mrb[0].mxu0
      %v1220 = vadd.f32 0.0, %v1219
      %v1221 = vpop.f32.mrb[0].mxu0
      %v1222 = vpop.f32.mrb[0].mxu0
      %v1223 = vadd.f32 0.0, %v1222
      %v1224 = vpop.f32.mrb[0].mxu0
      %1225 = vmatprep.mubr.bf16.mxu0 0
      %1226 = vmatmul.mubr.bf16.gmra.mrb[0].mxu0 %v968
      %v1227 = vpop.f32.mrb[0].mxu0
      %v1228 = vadd.f32 0.0, %v1227
      %v1229 = vpop.f32.mrb[0].mxu0
      %v1230 = vpop.f32.mrb[0].mxu0
      %v1231 = vadd.f32 0.0, %v1230
      %v1232 = vpop.f32.mrb[0].mxu0
      %1233 = vmatprep.mubr.bf16.mxu0 0
      %1234 = vmatmul.mubr.bf16.gmra.mrb[0].mxu0 %v969
      %v1235 = vpop.f32.mrb[0].mxu0
      %v1236 = vadd.f32 0.0, %v1235
      %v1237 = vpop.f32.mrb[0].mxu0
      %v1238 = vpop.f32.mrb[0].mxu0
      %v1239 = vadd.f32 0.0, %v1238
      %v1240 = vpop.f32.mrb[0].mxu0
      %1241 = vmatprep.mubr.bf16.mxu0 0
      %1242 = vmatmul.mubr.bf16.gmra.mrb[0].mxu0 %v970
      %v1243 = vpop.f32.mrb[0].mxu0
      %v1244 = vadd.f32 0.0, %v1243
      %v1245 = vpop.f32.mrb[0].mxu0
      %v1246 = vpop.f32.mrb[0].mxu0
      %v1247 = vadd.f32 0.0, %v1246
      %v1248 = vpop.f32.mrb[0].mxu0
      %1249 = vmatprep.mubr.bf16.mxu0 0
      %1250 = vmatmul.mubr.bf16.gmra.mrb[0].mxu0 %v971
      %v1251 = vpop.f32.mrb[0].mxu0
      %v1252 = vadd.f32 0.0, %v1251
      %v1253 = vpop.f32.mrb[0].mxu0
      %v1254 = vpop.f32.mrb[0].mxu0
      %v1255 = vadd.f32 0.0, %v1254
      %v1256 = vpop.f32.mrb[0].mxu0
      %1257 = vmatprep.mubr.bf16.mxu0 0
      %1258 = vmatmul.mubr.bf16.gmra.mrb[0].mxu0 %v972
      %v1259 = vpop.f32.mrb[0].mxu0
      %v1260 = vadd.f32 0.0, %v1259
      %v1261 = vpop.f32.mrb[0].mxu0
      %v1262 = vpop.f32.mrb[0].mxu0
      %v1263 = vadd.f32 0.0, %v1262
      %v1264 = vpop.f32.mrb[0].mxu0
      %1265 = vmatprep.mubr.bf16.mxu0 0
      %1266 = vmatmul.mubr.bf16.gmra.mrb[0].mxu0 %v973
      %v1267 = vpop.f32.mrb[0].mxu0
      %v1268 = vadd.f32 0.0, %v1267
      %v1269 = vpop.f32.mrb[0].mxu0
      %v1270 = vpop.f32.mrb[0].mxu0
      %v1271 = vadd.f32 0.0, %v1270
      %v1272 = vpop.f32.mrb[0].mxu0
      %1273 = vmatprep.mubr.bf16.mxu0 0
      %1274 = vmatmul.mubr.bf16.gmra.mrb[0].mxu0 %v974
      %v1275 = vpop.f32.mrb[0].mxu0
      %v1276 = vadd.f32 0.0, %v1275
      %v1277 = vpop.f32.mrb[0].mxu0
      %v1278 = vpop.f32.mrb[0].mxu0
      %v1279 = vadd.f32 0.0, %v1278
      %v1280 = vpop.f32.mrb[0].mxu0
      %1281 = vmatprep.mubr.bf16.mxu0 0
      %1282 = vmatmul.mubr.bf16.gmra.mrb[0].mxu0 %v975
      %v1283 = vpop.f32.mrb[0].mxu0
      %v1284 = vadd.f32 0.0, %v1283
      %v1285 = vpop.f32.mrb[0].mxu0
      %v1286 = vpop.f32.mrb[0].mxu0
      %v1287 = vadd.f32 0.0, %v1286
      %v1288 = vpop.f32.mrb[0].mxu0
      %1289 = vmatprep.mubr.bf16.mxu0 0
      %1290 = vmatmul.mubr.bf16.gmra.mrb[0].mxu0 %v976
      %v1291 = vpop.f32.mrb[0].mxu0
      %v1292 = vadd.f32 0.0, %v1291
      %v1293 = vpop.f32.mrb[0].mxu0
      %v1294 = vpop.f32.mrb[0].mxu0
      %v1295 = vadd.f32 0.0, %v1294
      %v1296 = vpop.f32.mrb[0].mxu0
      %1297 = vmatprep.mubr.bf16.mxu0 0
      %1298 = vmatmul.mubr.bf16.gmra.mrb[0].mxu0 %v977
      %v1299 = vpop.f32.mrb[0].mxu0
      %v1300 = vadd.f32 0.0, %v1299
      %v1301 = vpop.f32.mrb[0].mxu0
      %v1302 = vpop.f32.mrb[0].mxu0
      %v1303 = vadd.f32 0.0, %v1302
      %v1304 = vpop.f32.mrb[0].mxu0
      %1305 = vmatprep.mubr.bf16.mxu0 0
      %1306 = vmatmul.mubr.bf16.gmra.mrb[0].mxu0 %v978
      %v1307 = vpop.f32.mrb[0].mxu0
      %v1308 = vadd.f32 0.0, %v1307
      %v1309 = vpop.f32.mrb[0].mxu0
      %v1310 = vpop.f32.mrb[0].mxu0
      %v1311 = vadd.f32 0.0, %v1310
      %v1312 = vpop.f32.mrb[0].mxu0
      %1313 = vmatprep.mubr.bf16.mxu0 0
      %1314 = vmatmul.mubr.bf16.gmra.mrb[0].mxu0 %v979
      %v1315 = vpop.f32.mrb[0].mxu0
      %v1316 = vadd.f32 0.0, %v1315
      %v1317 = vpop.f32.mrb[0].mxu0
      %v1318 = vpop.f32.mrb[0].mxu0
      %v1319 = vadd.f32 0.0, %v1318
      %v1320 = vpop.f32.mrb[0].mxu0
      %1321 = vmatprep.mubr.bf16.mxu0 0
      %1322 = vmatmul.mubr.bf16.gmra.mrb[0].mxu0 %v980
      %v1323 = vpop.f32.mrb[0].mxu0
      %v1324 = vadd.f32 0.0, %v1323
      %v1325 = vpop.f32.mrb[0].mxu0
      %v1326 = vpop.f32.mrb[0].mxu0
      %v1327 = vadd.f32 0.0, %v1326
      %v1328 = vpop.f32.mrb[0].mxu0
      %1329 = vmatprep.mubr.bf16.mxu0 0
      %1330 = vmatmul.mubr.bf16.gmra.mrb[0].mxu0 %v981
      %v1331 = vpop.f32.mrb[0].mxu0
      %v1332 = vadd.f32 0.0, %v1331
      %v1333 = vpop.f32.mrb[0].mxu0
      %v1334 = vpop.f32.mrb[0].mxu0
      %v1335 = vadd.f32 0.0, %v1334
      %v1336 = vpop.f32.mrb[0].mxu0
      %1337 = vmatprep.mubr.bf16.mxu0 0
      %1338 = vmatmul.mubr.bf16.gmra.mrb[0].mxu0 %v982
      %v1339 = vpop.f32.mrb[0].mxu0
      %v1340 = vadd.f32 0.0, %v1339
      %v1341 = vpop.f32.mrb[0].mxu0
      %v1342 = vpop.f32.mrb[0].mxu0
      %v1343 = vadd.f32 0.0, %v1342
      %v1344 = vpop.f32.mrb[0].mxu0
      %1345 = vmatprep.mubr.bf16.mxu0 0
      %1346 = vmatmul.mubr.bf16.gmra.mrb[0].mxu0 %v983
      %v1347 = vpop.f32.mrb[0].mxu0
      %v1348 = vadd.f32 0.0, %v1347
      %v1349 = vpop.f32.mrb[0].mxu0
      %v1350 = vpop.f32.mrb[0].mxu0
      %v1351 = vadd.f32 0.0, %v1350
      %v1352 = vpop.f32.mrb[0].mxu0
      %1353 = vmatprep.mubr.bf16.mxu0 0
      %1354 = vmatmul.mubr.bf16.gmra.mrb[0].mxu0 %v984
      %v1355 = vpop.f32.mrb[0].mxu0
      %v1356 = vadd.f32 0.0, %v1355
      %v1357 = vpop.f32.mrb[0].mxu0
      %v1358 = vpop.f32.mrb[0].mxu0
      %v1359 = vadd.f32 0.0, %v1358
      %v1360 = vpop.f32.mrb[0].mxu0
      %1361 = vmatprep.mubr.bf16.mxu0 0
      %1362 = vmatmul.mubr.bf16.gmra.mrb[0].mxu0 %v985
      %v1363 = vpop.f32.mrb[0].mxu0
      %v1364 = vadd.f32 0.0, %v1363
      %v1365 = vpop.f32.mrb[0].mxu0
      %v1366 = vpop.f32.mrb[0].mxu0
      %v1367 = vadd.f32 0.0, %v1366
      %v1368 = vpop.f32.mrb[0].mxu0
      %1369 = vmatprep.mubr.bf16.mxu0 0
      %1370 = vmatmul.mubr.bf16.gmra.mrb[0].mxu0 %v986
      %v1371 = vpop.f32.mrb[0].mxu0
      %v1372 = vadd.f32 0.0, %v1371
      %v1373 = vpop.f32.mrb[0].mxu0
      %v1374 = vpop.f32.mrb[0].mxu0
      %v1375 = vadd.f32 0.0, %v1374
      %v1376 = vpop.f32.mrb[0].mxu0
      %1377 = vmatprep.mubr.bf16.mxu0 0
      %1378 = vmatmul.mubr.bf16.gmra.mrb[0].mxu0 %v987
      %v1379 = vpop.f32.mrb[0].mxu0
      %v1380 = vadd.f32 0.0, %v1379
      %v1381 = vpop.f32.mrb[0].mxu0
      %v1382 = vpop.f32.mrb[0].mxu0
      %v1383 = vadd.f32 0.0, %v1382
      %v1384 = vpop.f32.mrb[0].mxu0
      %1385 = vmatprep.mubr.bf16.mxu0 0
      %1386 = vmatmul.mubr.bf16.gmra.mrb[0].mxu0 %v988
      %v1387 = vpop.f32.mrb[0].mxu0
      %v1388 = vadd.f32 0.0, %v1387
      %v1389 = vpop.f32.mrb[0].mxu0
      %v1390 = vpop.f32.mrb[0].mxu0
      %v1391 = vadd.f32 0.0, %v1390
      %v1392 = vpop.f32.mrb[0].mxu0
      %1393 = vmatprep.mubr.bf16.mxu0 0
      %1394 = vmatmul.mubr.bf16.gmra.mrb[0].mxu0 %v989
      %v1395 = vpop.f32.mrb[0].mxu0
      %v1396 = vadd.f32 0.0, %v1395
      %v1397 = vpop.f32.mrb[0].mxu0
      %v1398 = vpop.f32.mrb[0].mxu0
      %v1399 = vadd.f32 0.0, %v1398
      %v1400 = vpop.f32.mrb[0].mxu0
      %1401 = vmatprep.mubr.bf16.mxu0 0
      %1402 = vmatmul.mubr.bf16.gmra.mrb[0].mxu0 %v990
      %v1403 = vpop.f32.mrb[0].mxu0
      %v1404 = vadd.f32 0.0, %v1403
      %v1405 = vpop.f32.mrb[0].mxu0
      %v1406 = vpop.f32.mrb[0].mxu0
      %v1407 = vadd.f32 0.0, %v1406
      %v1408 = vpop.f32.mrb[0].mxu0
      %1409 = vmatprep.mubr.bf16.mxu0 0
      %1410 = vmatmul.mubr.bf16.gmra.mrb[0].mxu0 %v991
      %v1411 = vpop.f32.mrb[0].mxu0
      %v1412 = vadd.f32 0.0, %v1411
      %v1413 = vpop.f32.mrb[0].mxu0
      %v1414 = vpop.f32.mrb[0].mxu0
      %v1415 = vadd.f32 0.0, %v1414
      %v1416 = vpop.f32.mrb[0].mxu0
      %1417 = vmatprep.mubr.bf16.mxu0 0
      %1418 = vmatmul.mubr.bf16.gmra.mrb[0].mxu0 %v992
      %v1419 = vpop.f32.mrb[0].mxu0
      %v1420 = vadd.f32 0.0, %v1419
      %v1421 = vpop.f32.mrb[0].mxu0
      %v1422 = vpop.f32.mrb[0].mxu0
      %v1423 = vadd.f32 0.0, %v1422
      %v1424 = vpop.f32.mrb[0].mxu0
      %1425 = vmatprep.mubr.bf16.mxu0 0
      %1426 = vmatmul.mubr.bf16.gmra.mrb[0].mxu0 %v993
      %v1427 = vpop.f32.mrb[0].mxu0
      %v1428 = vadd.f32 0.0, %v1427
      %v1429 = vpop.f32.mrb[0].mxu0
      %v1430 = vpop.f32.mrb[0].mxu0
      %v1431 = vadd.f32 0.0, %v1430
      %v1432 = vpop.f32.mrb[0].mxu0
      %1433 = vmatprep.mubr.bf16.mxu0 0
      %1434 = vmatmul.mubr.bf16.gmra.mrb[0].mxu0 %v994
      %v1435 = vpop.f32.mrb[0].mxu0
      %v1436 = vadd.f32 0.0, %v1435
      %v1437 = vpop.f32.mrb[0].mxu0
      %v1438 = vpop.f32.mrb[0].mxu0
      %v1439 = vadd.f32 0.0, %v1438
      %v1440 = vpop.f32.mrb[0].mxu0
      %1441 = vmatprep.mubr.bf16.mxu0 0
      %1442 = vmatmul.mubr.bf16.gmra.mrb[0].mxu0 %v995
      %v1443 = vpop.f32.mrb[0].mxu0
      %v1444 = vadd.f32 0.0, %v1443
      %v1445 = vpop.f32.mrb[0].mxu0
      %v1446 = vpop.f32.mrb[0].mxu0
      %v1447 = vadd.f32 0.0, %v1446
      %v1448 = vpop.f32.mrb[0].mxu0
      %1449 = vmatprep.mubr.bf16.mxu0 0
      %1450 = vmatmul.mubr.bf16.gmra.mrb[0].mxu0 %v996
      %v1451 = vpop.f32.mrb[0].mxu0
      %v1452 = vadd.f32 0.0, %v1451
      %v1453 = vpop.f32.mrb[0].mxu0
      %v1454 = vpop.f32.mrb[0].mxu0
      %v1455 = vadd.f32 0.0, %v1454
      %v1456 = vpop.f32.mrb[0].mxu0
      %1457 = vmatprep.mubr.bf16.mxu0 0
      %1458 = vmatmul.mubr.bf16.gmra.mrb[0].mxu0 %v997
      %v1459 = vpop.f32.mrb[0].mxu0
      %v1460 = vadd.f32 0.0, %v1459
      %v1461 = vpop.f32.mrb[0].mxu0
      %v1462 = vpop.f32.mrb[0].mxu0
      %v1463 = vadd.f32 0.0, %v1462
      %v1464 = vpop.f32.mrb[0].mxu0
      %1465 = vmatprep.mubr.bf16.mxu0 0
      %1466 = vmatmul.mubr.bf16.gmra.mrb[0].mxu0 %v998
      %v1467 = vpop.f32.mrb[0].mxu0
      %v1468 = vadd.f32 0.0, %v1467
      %v1469 = vpop.f32.mrb[0].mxu0
      %v1470 = vpop.f32.mrb[0].mxu0
      %v1471 = vadd.f32 0.0, %v1470
      %v1472 = vpop.f32.mrb[0].mxu0
      %1473 = vmatprep.mubr.bf16.mxu0 0
      %1474 = vmatmul.mubr.bf16.gmra.mrb[0].mxu0 %v999
      %v1475 = vpop.f32.mrb[0].mxu0
      %v1476 = vadd.f32 0.0, %v1475
      %v1477 = vpop.f32.mrb[0].mxu0
      %v1478 = vpop.f32.mrb[0].mxu0
      %v1479 = vadd.f32 0.0, %v1478
      %v1480 = vpop.f32.mrb[0].mxu0
      %1481 = vmatprep.mubr.bf16.mxu0 0
      %1482 = vmatmul.mubr.bf16.gmra.mrb[0].mxu0 %v1000
      %v1483 = vpop.f32.mrb[0].mxu0
      %v1484 = vadd.f32 0.0, %v1483
      %v1485 = vpop.f32.mrb[0].mxu0
      %v1486 = vpop.f32.mrb[0].mxu0
      %v1487 = vadd.f32 0.0, %v1486
      %v1488 = vpop.f32.mrb[0].mxu0
      %1489 = vmatprep.mubr.bf16.mxu0 0
      %1490 = vmatmul.mubr.bf16.gmra.mrb[0].mxu0 %v1001
      %v1491 = vpop.f32.mrb[0].mxu0
      %v1492 = vadd.f32 0.0, %v1491
      %v1493 = vpop.f32.mrb[0].mxu0
      %v1494 = vpop.f32.mrb[0].mxu0
      %v1495 = vadd.f32 0.0, %v1494
      %v1496 = vpop.f32.mrb[0].mxu0
      %1497 = vmatprep.mubr.bf16.mxu0 0
      %1498 = vmatmul.mubr.bf16.gmra.mrb[0].mxu0 %v1002
      %v1499 = vpop.f32.mrb[0].mxu0
      %v1500 = vadd.f32 0.0, %v1499
      %v1501 = vpop.f32.mrb[0].mxu0
      %v1502 = vpop.f32.mrb[0].mxu0
      %v1503 = vadd.f32 0.0, %v1502
      %v1504 = vpop.f32.mrb[0].mxu0
      %1505 = vmatprep.mubr.bf16.mxu0 0
      %1506 = vmatmul.mubr.bf16.gmra.mrb[0].mxu0 %v1003
      %v1507 = vpop.f32.mrb[0].mxu0
      %v1508 = vadd.f32 0.0, %v1507
      %v1509 = vpop.f32.mrb[0].mxu0
      %v1510 = vpop.f32.mrb[0].mxu0
      %v1511 = vadd.f32 0.0, %v1510
      %v1512 = vpop.f32.mrb[0].mxu0
      %1513 = vmatprep.mubr.bf16.mxu0 0
      %1514 = vmatmul.mubr.bf16.gmra.mrb[0].mxu0 %v1004
      %v1515 = vpop.f32.mrb[0].mxu0
      %v1516 = vadd.f32 0.0, %v1515
      %v1517 = vpop.f32.mrb[0].mxu0
      %v1518 = vpop.f32.mrb[0].mxu0
      %v1519 = vadd.f32 0.0, %v1518
      %v1520 = vpop.f32.mrb[0].mxu0
      %1521 = vmatprep.mubr.bf16.mxu0 0
      %1522 = vmatmul.mubr.bf16.gmra.mrb[0].mxu0 %v1005
      %v1523 = vpop.f32.mrb[0].mxu0
      %v1524 = vadd.f32 0.0, %v1523
      %v1525 = vpop.f32.mrb[0].mxu0
      %v1526 = vpop.f32.mrb[0].mxu0
      %v1527 = vadd.f32 0.0, %v1526
      %v1528 = vpop.f32.mrb[0].mxu0
      %1529 = vmatprep.mubr.bf16.mxu0 0
      %1530 = vmatmul.mubr.bf16.gmra.mrb[0].mxu0 %v1006
      %v1531 = vpop.f32.mrb[0].mxu0
      %v1532 = vadd.f32 0.0, %v1531
      %v1533 = vpop.f32.mrb[0].mxu0
      %v1534 = vpop.f32.mrb[0].mxu0
      %v1535 = vadd.f32 0.0, %v1534
      %v1536 = vpop.f32.mrb[0].mxu0
      %1537 = vmatprep.mubr.bf16.mxu0 0
      %1538 = vmatmul.mubr.bf16.gmra.mrb[0].mxu0 %v1007
      %v1539 = vpop.f32.mrb[0].mxu0
      %v1540 = vadd.f32 0.0, %v1539
      %v1541 = vpop.f32.mrb[0].mxu0
      %v1542 = vpop.f32.mrb[0].mxu0
      %v1543 = vadd.f32 0.0, %v1542
      %v1544 = vpop.f32.mrb[0].mxu0
      %1545 = vmatprep.mubr.bf16.mxu0 0
      %1546 = vmatmul.mubr.bf16.gmra.mrb[0].mxu0 %v1008
      %v1547 = vpop.f32.mrb[0].mxu0
      %v1548 = vadd.f32 0.0, %v1547
      %v1549 = vpop.f32.mrb[0].mxu0
      %v1550 = vpop.f32.mrb[0].mxu0
      %v1551 = vadd.f32 0.0, %v1550
      %v1552 = vpop.f32.mrb[0].mxu0
      %1553 = vmatprep.mubr.bf16.mxu0 0
      %1554 = vmatmul.mubr.bf16.gmra.mrb[0].mxu0 %v1009
      %v1555 = vpop.f32.mrb[0].mxu0
      %v1556 = vadd.f32 0.0, %v1555
      %v1557 = vpop.f32.mrb[0].mxu0
      %v1558 = vpop.f32.mrb[0].mxu0
      %v1559 = vadd.f32 0.0, %v1558
      %v1560 = vpop.f32.mrb[0].mxu0
      %1561 = vmatprep.mubr.bf16.mxu0 0
      %1562 = vmatmul.mubr.bf16.gmra.mrb[0].mxu0 %v1010
      %v1563 = vpop.f32.mrb[0].mxu0
      %v1564 = vadd.f32 0.0, %v1563
      %v1565 = vpop.f32.mrb[0].mxu0
      %v1566 = vpop.f32.mrb[0].mxu0
      %v1567 = vadd.f32 0.0, %v1566
      %v1568 = vpop.f32.mrb[0].mxu0
      %1569 = vmatprep.mubr.bf16.mxu0 0
      %1570 = vmatmul.mubr.bf16.gmra.mrb[0].mxu0 %v1011
      %v1571 = vpop.f32.mrb[0].mxu0
      %v1572 = vadd.f32 0.0, %v1571
      %v1573 = vpop.f32.mrb[0].mxu0
      %v1574 = vpop.f32.mrb[0].mxu0
      %v1575 = vadd.f32 0.0, %v1574
      %v1576 = vpop.f32.mrb[0].mxu0
      %1577 = vmatprep.mubr.bf16.mxu0 0
      %1578 = vmatmul.mubr.bf16.gmra.mrb[0].mxu0 %v1012
      %v1579 = vpop.f32.mrb[0].mxu0
      %v1580 = vadd.f32 0.0, %v1579
      %v1581 = vpop.f32.mrb[0].mxu0
      %v1582 = vpop.f32.mrb[0].mxu0
      %v1583 = vadd.f32 0.0, %v1582
      %v1584 = vpop.f32.mrb[0].mxu0
      %1585 = vmatprep.mubr.bf16.mxu0 0
      %1586 = vmatmul.mubr.bf16.gmra.mrb[0].mxu0 %v1013
      %v1587 = vpop.f32.mrb[0].mxu0
      %v1588 = vadd.f32 0.0, %v1587
      %v1589 = vpop.f32.mrb[0].mxu0
      %v1590 = vpop.f32.mrb[0].mxu0
      %v1591 = vadd.f32 0.0, %v1590
      %v1592 = vpop.f32.mrb[0].mxu0
      %1593 = vmatprep.mubr.bf16.mxu0 0
      %1594 = vmatmul.mubr.bf16.gmra.mrb[0].mxu0 %v1014
      %v1595 = vpop.f32.mrb[0].mxu0
      %v1596 = vadd.f32 0.0, %v1595
      %v1597 = vpop.f32.mrb[0].mxu0
      %v1598 = vpop.f32.mrb[0].mxu0
      %v1599 = vadd.f32 0.0, %v1598
      %v1600 = vpop.f32.mrb[0].mxu0
      %1601 = vmatprep.mubr.bf16.mxu0 0
      %1602 = vmatmul.mubr.bf16.gmra.mrb[0].mxu0 %v1015
      %v1603 = vpop.f32.mrb[0].mxu0
      %v1604 = vadd.f32 0.0, %v1603
      %v1605 = vpop.f32.mrb[0].mxu0
      %v1606 = vpop.f32.mrb[0].mxu0
      %v1607 = vadd.f32 0.0, %v1606
      %v1608 = vpop.f32.mrb[0].mxu0
      %1609 = vmatprep.mubr.bf16.mxu0 0
      %1610 = vmatmul.mubr.bf16.gmra.mrb[0].mxu0 %v1016
      %v1611 = vpop.f32.mrb[0].mxu0
      %v1612 = vadd.f32 0.0, %v1611
      %v1613 = vpop.f32.mrb[0].mxu0
      %v1614 = vpop.f32.mrb[0].mxu0
      %v1615 = vadd.f32 0.0, %v1614
      %v1616 = vpop.f32.mrb[0].mxu0
      %1617 = vmatprep.mubr.bf16.mxu0 0
      %1618 = vmatmul.mubr.bf16.gmra.mrb[0].mxu0 %v1017
      %v1619 = vpop.f32.mrb[0].mxu0
      %v1620 = vadd.f32 0.0, %v1619
      %v1621 = vpop.f32.mrb[0].mxu0
      %v1622 = vpop.f32.mrb[0].mxu0
      %v1623 = vadd.f32 0.0, %v1622
      %v1624 = vpop.f32.mrb[0].mxu0
      %1625 = vmatprep.mubr.bf16.mxu0 0
      %1626 = vmatmul.mubr.bf16.gmra.mrb[0].mxu0 %v1018
      %v1627 = vpop.f32.mrb[0].mxu0
      %v1628 = vadd.f32 0.0, %v1627
      %v1629 = vpop.f32.mrb[0].mxu0
      %v1630 = vpop.f32.mrb[0].mxu0
      %v1631 = vadd.f32 0.0, %v1630
      %v1632 = vpop.f32.mrb[0].mxu0
      %1633 = vmatprep.mubr.bf16.mxu0 0
      %1634 = vmatmul.mubr.bf16.gmra.mrb[0].mxu0 %v1019
      %v1635 = vpop.f32.mrb[0].mxu0
      %v1636 = vadd.f32 0.0, %v1635
      %v1637 = vpop.f32.mrb[0].mxu0
      %v1638 = vpop.f32.mrb[0].mxu0
      %v1639 = vadd.f32 0.0, %v1638
      %v1640 = vpop.f32.mrb[0].mxu0
      %1641 = vmatprep.mubr.bf16.mxu0 0
      %1642 = vmatmul.mubr.bf16.gmra.mrb[0].mxu0 %v1020
      %v1643 = vpop.f32.mrb[0].mxu0
      %v1644 = vadd.f32 0.0, %v1643
      %v1645 = vpop.f32.mrb[0].mxu0
      %v1646 = vpop.f32.mrb[0].mxu0
      %v1647 = vadd.f32 0.0, %v1646
      %v1648 = vpop.f32.mrb[0].mxu0
      %1649 = vmatprep.mubr.bf16.mxu0 0
      %1650 = vmatmul.mubr.bf16.gmra.mrb[0].mxu0 %v1021
      %v1651 = vpop.f32.mrb[0].mxu0
      %v1652 = vadd.f32 0.0, %v1651
      %v1653 = vpop.f32.mrb[0].mxu0
      %v1654 = vpop.f32.mrb[0].mxu0
      %v1655 = vadd.f32 0.0, %v1654
      %v1656 = vpop.f32.mrb[0].mxu0
      %1657 = vmatprep.mubr.bf16.mxu0 0
      %1658 = vmatmul.mubr.bf16.gmra.mrb[0].mxu0 %v1022
      %v1659 = vpop.f32.mrb[0].mxu0
      %v1660 = vadd.f32 0.0, %v1659
      %v1661 = vpop.f32.mrb[0].mxu0
      %v1662 = vpop.f32.mrb[0].mxu0
      %v1663 = vadd.f32 0.0, %v1662
      %v1664 = vpop.f32.mrb[0].mxu0
      %1665 = vmatprep.mubr.bf16.mxu0 0
      %1666 = vmatmul.mubr.bf16.gmra.mrb[0].mxu0 %v1023
      %v1667 = vpop.f32.mrb[0].mxu0
      %v1668 = vadd.f32 0.0, %v1667
      %v1669 = vpop.f32.mrb[0].mxu0
      %v1670 = vpop.f32.mrb[0].mxu0
      %v1671 = vadd.f32 0.0, %v1670
      %v1672 = vpop.f32.mrb[0].mxu0
      %1673 = vmatprep.mubr.bf16.mxu0 0
      %1674 = vmatmul.mubr.bf16.gmra.mrb[0].mxu0 %v1024
      %v1675 = vpop.f32.mrb[0].mxu0
      %v1676 = vadd.f32 0.0, %v1675
      %v1677 = vpop.f32.mrb[0].mxu0
      %v1678 = vpop.f32.mrb[0].mxu0
      %v1679 = vadd.f32 0.0, %v1678
      %v1680 = vpop.f32.mrb[0].mxu0
      %1681 = vdwg.mxu0
      %v1682 = vadd.f32 %v433, %v1172
      %v1683 = vadd.f32 %v434, %v1175
      %v1684 = vadd.f32 %v435, %v1180
      %v1685 = vadd.f32 %v436, %v1183
      %v1686 = vadd.f32 %v437, %v1188
      %v1687 = vadd.f32 %v438, %v1191
      %v1688 = vadd.f32 %v439, %v1196
      %v1689 = vadd.f32 %v440, %v1199
      %v1690 = vadd.f32 %v441, %v1204
      %v1691 = vadd.f32 %v442, %v1207
      %v1692 = vadd.f32 %v443, %v1212
      %v1693 = vadd.f32 %v444, %v1215
      %v1694 = vadd.f32 %v445, %v1220
      %v1695 = vadd.f32 %v446, %v1223
      %v1696 = vadd.f32 %v447, %v1228
      %v1697 = vadd.f32 %v448, %v1231
      %v1698 = vadd.f32 %v449, %v1236
      %v1699 = vadd.f32 %v450, %v1239
      %v1700 = vadd.f32 %v451, %v1244
      %v1701 = vadd.f32 %v452, %v1247
      %v1702 = vadd.f32 %v453, %v1252
      %v1703 = vadd.f32 %v454, %v1255
      %v1704 = vadd.f32 %v455, %v1260
      %v1705 = vadd.f32 %v456, %v1263
      %v1706 = vadd.f32 %v457, %v1268
      %v1707 = vadd.f32 %v458, %v1271
      %v1708 = vadd.f32 %v459, %v1276
      %v1709 = vadd.f32 %v460, %v1279
      %v1710 = vadd.f32 %v461, %v1284
      %v1711 = vadd.f32 %v462, %v1287
      %v1712 = vadd.f32 %v463, %v1292
      %v1713 = vadd.f32 %v464, %v1295
      %v1714 = vadd.f32 %v465, %v1300
      %v1715 = vadd.f32 %v466, %v1303
      %v1716 = vadd.f32 %v467, %v1308
      %v1717 = vadd.f32 %v468, %v1311
      %v1718 = vadd.f32 %v469, %v1316
      %v1719 = vadd.f32 %v470, %v1319
      %v1720 = vadd.f32 %v471, %v1324
      %v1721 = vadd.f32 %v472, %v1327
      %v1722 = vadd.f32 %v473, %v1332
      %v1723 = vadd.f32 %v474, %v1335
      %v1724 = vadd.f32 %v475, %v1340
      %v1725 = vadd.f32 %v476, %v1343
      %v1726 = vadd.f32 %v477, %v1348
      %v1727 = vadd.f32 %v478, %v1351
      %v1728 = vadd.f32 %v479, %v1356
      %v1729 = vadd.f32 %v480, %v1359
      %v1730 = vadd.f32 %v481, %v1364
      %v1731 = vadd.f32 %v482, %v1367
      %v1732 = vadd.f32 %v483, %v1372
      %v1733 = vadd.f32 %v484, %v1375
      %v1734 = vadd.f32 %v485, %v1380
      %v1735 = vadd.f32 %v486, %v1383
      %v1736 = vadd.f32 %v487, %v1388
      %v1737 = vadd.f32 %v488, %v1391
      %v1738 = vadd.f32 %v489, %v1396
      %v1739 = vadd.f32 %v490, %v1399
      %v1740 = vadd.f32 %v491, %v1404
      %v1741 = vadd.f32 %v492, %v1407
      %v1742 = vadd.f32 %v493, %v1412
      %v1743 = vadd.f32 %v494, %v1415
      %v1744 = vadd.f32 %v495, %v1420
      %v1745 = vadd.f32 %v496, %v1423
      %v1746 = vadd.f32 %v497, %v1428
      %v1747 = vadd.f32 %v498, %v1431
      %v1748 = vadd.f32 %v499, %v1436
      %v1749 = vadd.f32 %v500, %v1439
      %v1750 = vadd.f32 %v501, %v1444
      %v1751 = vadd.f32 %v502, %v1447
      %v1752 = vadd.f32 %v503, %v1452
      %v1753 = vadd.f32 %v504, %v1455
      %v1754 = vadd.f32 %v505, %v1460
      %v1755 = vadd.f32 %v506, %v1463
      %v1756 = vadd.f32 %v507, %v1468
      %v1757 = vadd.f32 %v508, %v1471
      %v1758 = vadd.f32 %v509, %v1476
      %v1759 = vadd.f32 %v510, %v1479
      %v1760 = vadd.f32 %v511, %v1484
      %v1761 = vadd.f32 %v512, %v1487
      %v1762 = vadd.f32 %v513, %v1492
      %v1763 = vadd.f32 %v514, %v1495
      %v1764 = vadd.f32 %v515, %v1500
      %v1765 = vadd.f32 %v516, %v1503
      %v1766 = vadd.f32 %v517, %v1508
      %v1767 = vadd.f32 %v518, %v1511
      %v1768 = vadd.f32 %v519, %v1516
      %v1769 = vadd.f32 %v520, %v1519
      %v1770 = vadd.f32 %v521, %v1524
      %v1771 = vadd.f32 %v522, %v1527
      %v1772 = vadd.f32 %v523, %v1532
      %v1773 = vadd.f32 %v524, %v1535
      %v1774 = vadd.f32 %v525, %v1540
      %v1775 = vadd.f32 %v526, %v1543
      %v1776 = vadd.f32 %v527, %v1548
      %v1777 = vadd.f32 %v528, %v1551
      %v1778 = vadd.f32 %v529, %v1556
      %v1779 = vadd.f32 %v530, %v1559
      %v1780 = vadd.f32 %v531, %v1564
      %v1781 = vadd.f32 %v532, %v1567
      %v1782 = vadd.f32 %v533, %v1572
      %v1783 = vadd.f32 %v534, %v1575
      %v1784 = vadd.f32 %v535, %v1580
      %v1785 = vadd.f32 %v536, %v1583
      %v1786 = vadd.f32 %v537, %v1588
      %v1787 = vadd.f32 %v538, %v1591
      %v1788 = vadd.f32 %v539, %v1596
      %v1789 = vadd.f32 %v540, %v1599
      %v1790 = vadd.f32 %v541, %v1604
      %v1791 = vadd.f32 %v542, %v1607
      %v1792 = vadd.f32 %v543, %v1612
      %v1793 = vadd.f32 %v544, %v1615
      %v1794 = vadd.f32 %v545, %v1620
      %v1795 = vadd.f32 %v546, %v1623
      %v1796 = vadd.f32 %v547, %v1628
      %v1797 = vadd.f32 %v548, %v1631
      %v1798 = vadd.f32 %v549, %v1636
      %v1799 = vadd.f32 %v550, %v1639
      %v1800 = vadd.f32 %v551, %v1644
      %v1801 = vadd.f32 %v552, %v1647
      %v1802 = vadd.f32 %v553, %v1652
      %v1803 = vadd.f32 %v554, %v1655
      %v1804 = vadd.f32 %v555, %v1660
      %v1805 = vadd.f32 %v556, %v1663
      %v1806 = vadd.f32 %v557, %v1668
      %v1807 = vadd.f32 %v558, %v1671
      %v1808 = vadd.f32 %v559, %v1676
      %v1809 = vadd.f32 %v560, %v1679
      %1810 = vst [vmem:[#allocation2] sm:$0xff] %v1682
      %1811 = vst [vmem:[#allocation2 + $0x8] sm:$0xff] %v1683
      %1812 = vst [vmem:[#allocation2 + $0x10] sm:$0xff] %v1684
      %1813 = vst [vmem:[#allocation2 + $0x18] sm:$0xff] %v1685
      %1814 = vst [vmem:[#allocation2 + $0x20] sm:$0xff] %v1686
      %1815 = vst [vmem:[#allocation2 + $0x28] sm:$0xff] %v1687
      %1816 = vst [vmem:[#allocation2 + $0x30] sm:$0xff] %v1688
      %1817 = vst [vmem:[#allocation2 + $0x38] sm:$0xff] %v1689
      %1818 = vst [vmem:[#allocation2 + $0x40] sm:$0xff] %v1690
      %1819 = vst [vmem:[#allocation2 + $0x48] sm:$0xff] %v1691
      %1820 = vst [vmem:[#allocation2 + $0x50] sm:$0xff] %v1692
      %1821 = vst [vmem:[#allocation2 + $0x58] sm:$0xff] %v1693
      %1822 = vst [vmem:[#allocation2 + $0x60] sm:$0xff] %v1694
      %1823 = vst [vmem:[#allocation2 + $0x68] sm:$0xff] %v1695
      %1824 = vst [vmem:[#allocation2 + $0x70] sm:$0xff] %v1696
      %1825 = vst [vmem:[#allocation2 + $0x78] sm:$0xff] %v1697
      %1826 = vst [vmem:[#allocation2 + $0x80] sm:$0xff] %v1698
      %1827 = vst [vmem:[#allocation2 + $0x88] sm:$0xff] %v1699
      %1828 = vst [vmem:[#allocation2 + $0x90] sm:$0xff] %v1700
      %1829 = vst [vmem:[#allocation2 + $0x98] sm:$0xff] %v1701
      %1830 = vst [vmem:[#allocation2 + $0xa0] sm:$0xff] %v1702
      %1831 = vst [vmem:[#allocation2 + $0xa8] sm:$0xff] %v1703
      %1832 = vst [vmem:[#allocation2 + $0xb0] sm:$0xff] %v1704
      %1833 = vst [vmem:[#allocation2 + $0xb8] sm:$0xff] %v1705
      %1834 = vst [vmem:[#allocation2 + $0xc0] sm:$0xff] %v1706
      %1835 = vst [vmem:[#allocation2 + $0xc8] sm:$0xff] %v1707
      %1836 = vst [vmem:[#allocation2 + $0xd0] sm:$0xff] %v1708
      %1837 = vst [vmem:[#allocation2 + $0xd8] sm:$0xff] %v1709
      %1838 = vst [vmem:[#allocation2 + $0xe0] sm:$0xff] %v1710
      %1839 = vst [vmem:[#allocation2 + $0xe8] sm:$0xff] %v1711
      %1840 = vst [vmem:[#allocation2 + $0xf0] sm:$0xff] %v1712
      %1841 = vst [vmem:[#allocation2 + $0xf8] sm:$0xff] %v1713
      %1842 = vst [vmem:[#allocation2 + $0x100] sm:$0xff] %v1714
      %1843 = vst [vmem:[#allocation2 + $0x108] sm:$0xff] %v1715
      %1844 = vst [vmem:[#allocation2 + $0x110] sm:$0xff] %v1716
      %1845 = vst [vmem:[#allocation2 + $0x118] sm:$0xff] %v1717
      %1846 = vst [vmem:[#allocation2 + $0x120] sm:$0xff] %v1718
      %1847 = vst [vmem:[#allocation2 + $0x128] sm:$0xff] %v1719
      %1848 = vst [vmem:[#allocation2 + $0x130] sm:$0xff] %v1720
      %1849 = vst [vmem:[#allocation2 + $0x138] sm:$0xff] %v1721
      %1850 = vst [vmem:[#allocation2 + $0x140] sm:$0xff] %v1722
      %1851 = vst [vmem:[#allocation2 + $0x148] sm:$0xff] %v1723
      %1852 = vst [vmem:[#allocation2 + $0x150] sm:$0xff] %v1724
      %1853 = vst [vmem:[#allocation2 + $0x158] sm:$0xff] %v1725
      %1854 = vst [vmem:[#allocation2 + $0x160] sm:$0xff] %v1726
      %1855 = vst [vmem:[#allocation2 + $0x168] sm:$0xff] %v1727
      %1856 = vst [vmem:[#allocation2 + $0x170] sm:$0xff] %v1728
      %1857 = vst [vmem:[#allocation2 + $0x178] sm:$0xff] %v1729
      %1858 = vst [vmem:[#allocation2 + $0x180] sm:$0xff] %v1730
      %1859 = vst [vmem:[#allocation2 + $0x188] sm:$0xff] %v1731
      %1860 = vst [vmem:[#allocation2 + $0x190] sm:$0xff] %v1732
      %1861 = vst [vmem:[#allocation2 + $0x198] sm:$0xff] %v1733
      %1862 = vst [vmem:[#allocation2 + $0x1a0] sm:$0xff] %v1734
      %1863 = vst [vmem:[#allocation2 + $0x1a8] sm:$0xff] %v1735
      %1864 = vst [vmem:[#allocation2 + $0x1b0] sm:$0xff] %v1736
      %1865 = vst [vmem:[#allocation2 + $0x1b8] sm:$0xff] %v1737
      %1866 = vst [vmem:[#allocation2 + $0x1c0] sm:$0xff] %v1738
      %1867 = vst [vmem:[#allocation2 + $0x1c8] sm:$0xff] %v1739
      %1868 = vst [vmem:[#allocation2 + $0x1d0] sm:$0xff] %v1740
      %1869 = vst [vmem:[#allocation2 + $0x1d8] sm:$0xff] %v1741
      %1870 = vst [vmem:[#allocation2 + $0x1e0] sm:$0xff] %v1742
      %1871 = vst [vmem:[#allocation2 + $0x1e8] sm:$0xff] %v1743
      %1872 = vst [vmem:[#allocation2 + $0x1f0] sm:$0xff] %v1744
      %1873 = vst [vmem:[#allocation2 + $0x1f8] sm:$0xff] %v1745
      %1874 = vst [vmem:[#allocation2 + $0x200] sm:$0xff] %v1746
      %1875 = vst [vmem:[#allocation2 + $0x208] sm:$0xff] %v1747
      %1876 = vst [vmem:[#allocation2 + $0x210] sm:$0xff] %v1748
      %1877 = vst [vmem:[#allocation2 + $0x218] sm:$0xff] %v1749
      %1878 = vst [vmem:[#allocation2 + $0x220] sm:$0xff] %v1750
      %1879 = vst [vmem:[#allocation2 + $0x228] sm:$0xff] %v1751
      %1880 = vst [vmem:[#allocation2 + $0x230] sm:$0xff] %v1752
      %1881 = vst [vmem:[#allocation2 + $0x238] sm:$0xff] %v1753
      %1882 = vst [vmem:[#allocation2 + $0x240] sm:$0xff] %v1754
      %1883 = vst [vmem:[#allocation2 + $0x248] sm:$0xff] %v1755
      %1884 = vst [vmem:[#allocation2 + $0x250] sm:$0xff] %v1756
      %1885 = vst [vmem:[#allocation2 + $0x258] sm:$0xff] %v1757
      %1886 = vst [vmem:[#allocation2 + $0x260] sm:$0xff] %v1758
      %1887 = vst [vmem:[#allocation2 + $0x268] sm:$0xff] %v1759
      %1888 = vst [vmem:[#allocation2 + $0x270] sm:$0xff] %v1760
      %1889 = vst [vmem:[#allocation2 + $0x278] sm:$0xff] %v1761
      %1890 = vst [vmem:[#allocation2 + $0x280] sm:$0xff] %v1762
      %1891 = vst [vmem:[#allocation2 + $0x288] sm:$0xff] %v1763
      %1892 = vst [vmem:[#allocation2 + $0x290] sm:$0xff] %v1764
      %1893 = vst [vmem:[#allocation2 + $0x298] sm:$0xff] %v1765
      %1894 = vst [vmem:[#allocation2 + $0x2a0] sm:$0xff] %v1766
      %1895 = vst [vmem:[#allocation2 + $0x2a8] sm:$0xff] %v1767
      %1896 = vst [vmem:[#allocation2 + $0x2b0] sm:$0xff] %v1768
      %1897 = vst [vmem:[#allocation2 + $0x2b8] sm:$0xff] %v1769
      %1898 = vst [vmem:[#allocation2 + $0x2c0] sm:$0xff] %v1770
      %1899 = vst [vmem:[#allocation2 + $0x2c8] sm:$0xff] %v1771
      %1900 = vst [vmem:[#allocation2 + $0x2d0] sm:$0xff] %v1772
      %1901 = vst [vmem:[#allocation2 + $0x2d8] sm:$0xff] %v1773
      %1902 = vst [vmem:[#allocation2 + $0x2e0] sm:$0xff] %v1774
      %1903 = vst [vmem:[#allocation2 + $0x2e8] sm:$0xff] %v1775
      %1904 = vst [vmem:[#allocation2 + $0x2f0] sm:$0xff] %v1776
      %1905 = vst [vmem:[#allocation2 + $0x2f8] sm:$0xff] %v1777
      %1906 = vst [vmem:[#allocation2 + $0x300] sm:$0xff] %v1778
      %1907 = vst [vmem:[#allocation2 + $0x308] sm:$0xff] %v1779
      %1908 = vst [vmem:[#allocation2 + $0x310] sm:$0xff] %v1780
      %1909 = vst [vmem:[#allocation2 + $0x318] sm:$0xff] %v1781
      %1910 = vst [vmem:[#allocation2 + $0x320] sm:$0xff] %v1782
      %1911 = vst [vmem:[#allocation2 + $0x328] sm:$0xff] %v1783
      %1912 = vst [vmem:[#allocation2 + $0x330] sm:$0xff] %v1784
      %1913 = vst [vmem:[#allocation2 + $0x338] sm:$0xff] %v1785
      %1914 = vst [vmem:[#allocation2 + $0x340] sm:$0xff] %v1786
      %1915 = vst [vmem:[#allocation2 + $0x348] sm:$0xff] %v1787
      %1916 = vst [vmem:[#allocation2 + $0x350] sm:$0xff] %v1788
      %1917 = vst [vmem:[#allocation2 + $0x358] sm:$0xff] %v1789
      %1918 = vst [vmem:[#allocation2 + $0x360] sm:$0xff] %v1790
      %1919 = vst [vmem:[#allocation2 + $0x368] sm:$0xff] %v1791
      %1920 = vst [vmem:[#allocation2 + $0x370] sm:$0xff] %v1792
      %1921 = vst [vmem:[#allocation2 + $0x378] sm:$0xff] %v1793
      %1922 = vst [vmem:[#allocation2 + $0x380] sm:$0xff] %v1794
      %1923 = vst [vmem:[#allocation2 + $0x388] sm:$0xff] %v1795
      %1924 = vst [vmem:[#allocation2 + $0x390] sm:$0xff] %v1796
      %1925 = vst [vmem:[#allocation2 + $0x398] sm:$0xff] %v1797
      %1926 = vst [vmem:[#allocation2 + $0x3a0] sm:$0xff] %v1798
      %1927 = vst [vmem:[#allocation2 + $0x3a8] sm:$0xff] %v1799
      %1928 = vst [vmem:[#allocation2 + $0x3b0] sm:$0xff] %v1800
      %1929 = vst [vmem:[#allocation2 + $0x3b8] sm:$0xff] %v1801
      %1930 = vst [vmem:[#allocation2 + $0x3c0] sm:$0xff] %v1802
      %1931 = vst [vmem:[#allocation2 + $0x3c8] sm:$0xff] %v1803
      %1932 = vst [vmem:[#allocation2 + $0x3d0] sm:$0xff] %v1804
      %1933 = vst [vmem:[#allocation2 + $0x3d8] sm:$0xff] %v1805
      %1934 = vst [vmem:[#allocation2 + $0x3e0] sm:$0xff] %v1806
      %1935 = vst [vmem:[#allocation2 + $0x3e8] sm:$0xff] %v1807
      %1936 = vst [vmem:[#allocation2 + $0x3f0] sm:$0xff] %v1808
      %1937 = vst [vmem:[#allocation2 + $0x3f8] sm:$0xff] %v1809
      // Predicated region
      $region41: #{depth_lstm_forward.8} parent=35 // pred_check
        %p1938 = pneg %p301
      $region42: #{depth_lstm_forward.8} parent=35 // pred_check_branch
        %1940 = sbr.rel (%p1938) target = $region44
      $region43: #{depth_lstm_forward.8} parent=35 // pred_region
        %v1941 = vld [vmem:[#allocation2] sm:$0xff]
        %v1942 = vld [vmem:[#allocation2 + $0x8] sm:$0xff]
        %v1943 = vld [vmem:[#allocation2 + $0x10] sm:$0xff]
        %v1944 = vld [vmem:[#allocation2 + $0x18] sm:$0xff]
        %v1945 = vld [vmem:[#allocation2 + $0x20] sm:$0xff]
        %v1946 = vld [vmem:[#allocation2 + $0x28] sm:$0xff]
        %v1947 = vld [vmem:[#allocation2 + $0x30] sm:$0xff]
        %v1948 = vld [vmem:[#allocation2 + $0x38] sm:$0xff]
        %v1949 = vld [vmem:[#allocation2 + $0x40] sm:$0xff]
        %v1950 = vld [vmem:[#allocation2 + $0x48] sm:$0xff]
        %v1951 = vld [vmem:[#allocation2 + $0x50] sm:$0xff]
        %v1952 = vld [vmem:[#allocation2 + $0x58] sm:$0xff]
        %v1953 = vld [vmem:[#allocation2 + $0x60] sm:$0xff]
        %v1954 = vld [vmem:[#allocation2 + $0x68] sm:$0xff]
        %v1955 = vld [vmem:[#allocation2 + $0x70] sm:$0xff]
        %v1956 = vld [vmem:[#allocation2 + $0x78] sm:$0xff]
        %v1957 = vld [vmem:[#allocation2 + $0x80] sm:$0xff]
        %v1958 = vld [vmem:[#allocation2 + $0x88] sm:$0xff]
        %v1959 = vld [vmem:[#allocation2 + $0x90] sm:$0xff]
        %v1960 = vld [vmem:[#allocation2 + $0x98] sm:$0xff]
        %v1961 = vld [vmem:[#allocation2 + $0xa0] sm:$0xff]
        %v1962 = vld [vmem:[#allocation2 + $0xa8] sm:$0xff]
        %v1963 = vld [vmem:[#allocation2 + $0xb0] sm:$0xff]
        %v1964 = vld [vmem:[#allocation2 + $0xb8] sm:$0xff]
        %v1965 = vld [vmem:[#allocation2 + $0xc0] sm:$0xff]
        %v1966 = vld [vmem:[#allocation2 + $0xc8] sm:$0xff]
        %v1967 = vld [vmem:[#allocation2 + $0xd0] sm:$0xff]
        %v1968 = vld [vmem:[#allocation2 + $0xd8] sm:$0xff]
        %v1969 = vld [vmem:[#allocation2 + $0xe0] sm:$0xff]
        %v1970 = vld [vmem:[#allocation2 + $0xe8] sm:$0xff]
        %v1971 = vld [vmem:[#allocation2 + $0xf0] sm:$0xff]
        %v1972 = vld [vmem:[#allocation2 + $0xf8] sm:$0xff]
        %v1973 = vld [vmem:[#allocation2 + $0x100] sm:$0xff]
        %v1974 = vld [vmem:[#allocation2 + $0x108] sm:$0xff]
        %v1975 = vld [vmem:[#allocation2 + $0x110] sm:$0xff]
        %v1976 = vld [vmem:[#allocation2 + $0x118] sm:$0xff]
        %v1977 = vld [vmem:[#allocation2 + $0x120] sm:$0xff]
        %v1978 = vld [vmem:[#allocation2 + $0x128] sm:$0xff]
        %v1979 = vld [vmem:[#allocation2 + $0x130] sm:$0xff]
        %v1980 = vld [vmem:[#allocation2 + $0x138] sm:$0xff]
        %v1981 = vld [vmem:[#allocation2 + $0x140] sm:$0xff]
        %v1982 = vld [vmem:[#allocation2 + $0x148] sm:$0xff]
        %v1983 = vld [vmem:[#allocation2 + $0x150] sm:$0xff]
        %v1984 = vld [vmem:[#allocation2 + $0x158] sm:$0xff]
        %v1985 = vld [vmem:[#allocation2 + $0x160] sm:$0xff]
        %v1986 = vld [vmem:[#allocation2 + $0x168] sm:$0xff]
        %v1987 = vld [vmem:[#allocation2 + $0x170] sm:$0xff]
        %v1988 = vld [vmem:[#allocation2 + $0x178] sm:$0xff]
        %v1989 = vld [vmem:[#allocation2 + $0x180] sm:$0xff]
        %v1990 = vld [vmem:[#allocation2 + $0x188] sm:$0xff]
        %v1991 = vld [vmem:[#allocation2 + $0x190] sm:$0xff]
        %v1992 = vld [vmem:[#allocation2 + $0x198] sm:$0xff]
        %v1993 = vld [vmem:[#allocation2 + $0x1a0] sm:$0xff]
        %v1994 = vld [vmem:[#allocation2 + $0x1a8] sm:$0xff]
        %v1995 = vld [vmem:[#allocation2 + $0x1b0] sm:$0xff]
        %v1996 = vld [vmem:[#allocation2 + $0x1b8] sm:$0xff]
        %v1997 = vld [vmem:[#allocation2 + $0x1c0] sm:$0xff]
        %v1998 = vld [vmem:[#allocation2 + $0x1c8] sm:$0xff]
        %v1999 = vld [vmem:[#allocation2 + $0x1d0] sm:$0xff]
        %v2000 = vld [vmem:[#allocation2 + $0x1d8] sm:$0xff]
        %v2001 = vld [vmem:[#allocation2 + $0x1e0] sm:$0xff]
        %v2002 = vld [vmem:[#allocation2 + $0x1e8] sm:$0xff]
        %v2003 = vld [vmem:[#allocation2 + $0x1f0] sm:$0xff]
        %v2004 = vld [vmem:[#allocation2 + $0x1f8] sm:$0xff]
        %v2005 = vld [vmem:[#allocation2 + $0x200] sm:$0xff]
        %v2006 = vld [vmem:[#allocation2 + $0x208] sm:$0xff]
        %v2007 = vld [vmem:[#allocation2 + $0x210] sm:$0xff]
        %v2008 = vld [vmem:[#allocation2 + $0x218] sm:$0xff]
        %v2009 = vld [vmem:[#allocation2 + $0x220] sm:$0xff]
        %v2010 = vld [vmem:[#allocation2 + $0x228] sm:$0xff]
        %v2011 = vld [vmem:[#allocation2 + $0x230] sm:$0xff]
        %v2012 = vld [vmem:[#allocation2 + $0x238] sm:$0xff]
        %v2013 = vld [vmem:[#allocation2 + $0x240] sm:$0xff]
        %v2014 = vld [vmem:[#allocation2 + $0x248] sm:$0xff]
        %v2015 = vld [vmem:[#allocation2 + $0x250] sm:$0xff]
        %v2016 = vld [vmem:[#allocation2 + $0x258] sm:$0xff]
        %v2017 = vld [vmem:[#allocation2 + $0x260] sm:$0xff]
        %v2018 = vld [vmem:[#allocation2 + $0x268] sm:$0xff]
        %v2019 = vld [vmem:[#allocation2 + $0x270] sm:$0xff]
        %v2020 = vld [vmem:[#allocation2 + $0x278] sm:$0xff]
        %v2021 = vld [vmem:[#allocation2 + $0x280] sm:$0xff]
        %v2022 = vld [vmem:[#allocation2 + $0x288] sm:$0xff]
        %v2023 = vld [vmem:[#allocation2 + $0x290] sm:$0xff]
        %v2024 = vld [vmem:[#allocation2 + $0x298] sm:$0xff]
        %v2025 = vld [vmem:[#allocation2 + $0x2a0] sm:$0xff]
        %v2026 = vld [vmem:[#allocation2 + $0x2a8] sm:$0xff]
        %v2027 = vld [vmem:[#allocation2 + $0x2b0] sm:$0xff]
        %v2028 = vld [vmem:[#allocation2 + $0x2b8] sm:$0xff]
        %v2029 = vld [vmem:[#allocation2 + $0x2c0] sm:$0xff]
        %v2030 = vld [vmem:[#allocation2 + $0x2c8] sm:$0xff]
        %v2031 = vld [vmem:[#allocation2 + $0x2d0] sm:$0xff]
        %v2032 = vld [vmem:[#allocation2 + $0x2d8] sm:$0xff]
        %v2033 = vld [vmem:[#allocation2 + $0x2e0] sm:$0xff]
        %v2034 = vld [vmem:[#allocation2 + $0x2e8] sm:$0xff]
        %v2035 = vld [vmem:[#allocation2 + $0x2f0] sm:$0xff]
        %v2036 = vld [vmem:[#allocation2 + $0x2f8] sm:$0xff]
        %v2037 = vld [vmem:[#allocation2 + $0x300] sm:$0xff]
        %v2038 = vld [vmem:[#allocation2 + $0x308] sm:$0xff]
        %v2039 = vld [vmem:[#allocation2 + $0x310] sm:$0xff]
        %v2040 = vld [vmem:[#allocation2 + $0x318] sm:$0xff]
        %v2041 = vld [vmem:[#allocation2 + $0x320] sm:$0xff]
        %v2042 = vld [vmem:[#allocation2 + $0x328] sm:$0xff]
        %v2043 = vld [vmem:[#allocation2 + $0x330] sm:$0xff]
        %v2044 = vld [vmem:[#allocation2 + $0x338] sm:$0xff]
        %v2045 = vld [vmem:[#allocation2 + $0x340] sm:$0xff]
        %v2046 = vld [vmem:[#allocation2 + $0x348] sm:$0xff]
        %v2047 = vld [vmem:[#allocation2 + $0x350] sm:$0xff]
        %v2048 = vld [vmem:[#allocation2 + $0x358] sm:$0xff]
        %v2049 = vld [vmem:[#allocation2 + $0x360] sm:$0xff]
        %v2050 = vld [vmem:[#allocation2 + $0x368] sm:$0xff]
        %v2051 = vld [vmem:[#allocation2 + $0x370] sm:$0xff]
        %v2052 = vld [vmem:[#allocation2 + $0x378] sm:$0xff]
        %v2053 = vld [vmem:[#allocation2 + $0x380] sm:$0xff]
        %v2054 = vld [vmem:[#allocation2 + $0x388] sm:$0xff]
        %v2055 = vld [vmem:[#allocation2 + $0x390] sm:$0xff]
        %v2056 = vld [vmem:[#allocation2 + $0x398] sm:$0xff]
        %v2057 = vld [vmem:[#allocation2 + $0x3a0] sm:$0xff]
        %v2058 = vld [vmem:[#allocation2 + $0x3a8] sm:$0xff]
        %v2059 = vld [vmem:[#allocation2 + $0x3b0] sm:$0xff]
        %v2060 = vld [vmem:[#allocation2 + $0x3b8] sm:$0xff]
        %v2061 = vld [vmem:[#allocation2 + $0x3c0] sm:$0xff]
        %v2062 = vld [vmem:[#allocation2 + $0x3c8] sm:$0xff]
        %v2063 = vld [vmem:[#allocation2 + $0x3d0] sm:$0xff]
        %v2064 = vld [vmem:[#allocation2 + $0x3d8] sm:$0xff]
        %v2065 = vld [vmem:[#allocation2 + $0x3e0] sm:$0xff]
        %v2066 = vld [vmem:[#allocation2 + $0x3e8] sm:$0xff]
        %v2067 = vld [vmem:[#allocation2 + $0x3f0] sm:$0xff]
        %v2068 = vld [vmem:[#allocation2 + $0x3f8] sm:$0xff]
        %v2069 = vld [vmem:[%s287] sm:$0x1]
        %v2071 = vlaneseq
        %v2072 = vshrl.u32 %v2071, 7
        %v2073 = vsub.s32 0, %v2072
        %v2074 = vrot.slane %v2069, %v2073
        %v2076 = vmul.f32 %v1941, %v2074
        %v2077 = vmul.f32 %v1942, %v2074
        %v2078 = vmul.f32 %v1943, %v2074
        %v2079 = vmul.f32 %v1944, %v2074
        %v2080 = vmul.f32 %v1945, %v2074
        %v2081 = vmul.f32 %v1946, %v2074
        %v2082 = vmul.f32 %v1947, %v2074
        %v2083 = vmul.f32 %v1948, %v2074
        %v2084 = vmul.f32 %v1949, %v2074
        %v2085 = vmul.f32 %v1950, %v2074
        %v2086 = vmul.f32 %v1951, %v2074
        %v2087 = vmul.f32 %v1952, %v2074
        %v2088 = vmul.f32 %v1953, %v2074
        %v2089 = vmul.f32 %v1954, %v2074
        %v2090 = vmul.f32 %v1955, %v2074
        %v2091 = vmul.f32 %v1956, %v2074
        %v2092 = vmul.f32 %v1957, %v2074
        %v2093 = vmul.f32 %v1958, %v2074
        %v2094 = vmul.f32 %v1959, %v2074
        %v2095 = vmul.f32 %v1960, %v2074
        %v2096 = vmul.f32 %v1961, %v2074
        %v2097 = vmul.f32 %v1962, %v2074
        %v2098 = vmul.f32 %v1963, %v2074
        %v2099 = vmul.f32 %v1964, %v2074
        %v2100 = vmul.f32 %v1965, %v2074
        %v2101 = vmul.f32 %v1966, %v2074
        %v2102 = vmul.f32 %v1967, %v2074
        %v2103 = vmul.f32 %v1968, %v2074
        %v2104 = vmul.f32 %v1969, %v2074
        %v2105 = vmul.f32 %v1970, %v2074
        %v2106 = vmul.f32 %v1971, %v2074
        %v2107 = vmul.f32 %v1972, %v2074
        %v2108 = vmul.f32 %v1973, %v2074
        %v2109 = vmul.f32 %v1974, %v2074
        %v2110 = vmul.f32 %v1975, %v2074
        %v2111 = vmul.f32 %v1976, %v2074
        %v2112 = vmul.f32 %v1977, %v2074
        %v2113 = vmul.f32 %v1978, %v2074
        %v2114 = vmul.f32 %v1979, %v2074
        %v2115 = vmul.f32 %v1980, %v2074
        %v2116 = vmul.f32 %v1981, %v2074
        %v2117 = vmul.f32 %v1982, %v2074
        %v2118 = vmul.f32 %v1983, %v2074
        %v2119 = vmul.f32 %v1984, %v2074
        %v2120 = vmul.f32 %v1985, %v2074
        %v2121 = vmul.f32 %v1986, %v2074
        %v2122 = vmul.f32 %v1987, %v2074
        %v2123 = vmul.f32 %v1988, %v2074
        %v2124 = vmul.f32 %v1989, %v2074
        %v2125 = vmul.f32 %v1990, %v2074
        %v2126 = vmul.f32 %v1991, %v2074
        %v2127 = vmul.f32 %v1992, %v2074
        %v2128 = vmul.f32 %v1993, %v2074
        %v2129 = vmul.f32 %v1994, %v2074
        %v2130 = vmul.f32 %v1995, %v2074
        %v2131 = vmul.f32 %v1996, %v2074
        %v2132 = vmul.f32 %v1997, %v2074
        %v2133 = vmul.f32 %v1998, %v2074
        %v2134 = vmul.f32 %v1999, %v2074
        %v2135 = vmul.f32 %v2000, %v2074
        %v2136 = vmul.f32 %v2001, %v2074
        %v2137 = vmul.f32 %v2002, %v2074
        %v2138 = vmul.f32 %v2003, %v2074
        %v2139 = vmul.f32 %v2004, %v2074
        %v2140 = vmul.f32 %v2005, %v2074
        %v2141 = vmul.f32 %v2006, %v2074
        %v2142 = vmul.f32 %v2007, %v2074
        %v2143 = vmul.f32 %v2008, %v2074
        %v2144 = vmul.f32 %v2009, %v2074
        %v2145 = vmul.f32 %v2010, %v2074
        %v2146 = vmul.f32 %v2011, %v2074
        %v2147 = vmul.f32 %v2012, %v2074
        %v2148 = vmul.f32 %v2013, %v2074
        %v2149 = vmul.f32 %v2014, %v2074
        %v2150 = vmul.f32 %v2015, %v2074
        %v2151 = vmul.f32 %v2016, %v2074
        %v2152 = vmul.f32 %v2017, %v2074
        %v2153 = vmul.f32 %v2018, %v2074
        %v2154 = vmul.f32 %v2019, %v2074
        %v2155 = vmul.f32 %v2020, %v2074
        %v2156 = vmul.f32 %v2021, %v2074
        %v2157 = vmul.f32 %v2022, %v2074
        %v2158 = vmul.f32 %v2023, %v2074
        %v2159 = vmul.f32 %v2024, %v2074
        %v2160 = vmul.f32 %v2025, %v2074
        %v2161 = vmul.f32 %v2026, %v2074
        %v2162 = vmul.f32 %v2027, %v2074
        %v2163 = vmul.f32 %v2028, %v2074
        %v2164 = vmul.f32 %v2029, %v2074
        %v2165 = vmul.f32 %v2030, %v2074
        %v2166 = vmul.f32 %v2031, %v2074
        %v2167 = vmul.f32 %v2032, %v2074
        %v2168 = vmul.f32 %v2033, %v2074
        %v2169 = vmul.f32 %v2034, %v2074
        %v2170 = vmul.f32 %v2035, %v2074
        %v2171 = vmul.f32 %v2036, %v2074
        %v2172 = vmul.f32 %v2037, %v2074
        %v2173 = vmul.f32 %v2038, %v2074
        %v2174 = vmul.f32 %v2039, %v2074
        %v2175 = vmul.f32 %v2040, %v2074
        %v2176 = vmul.f32 %v2041, %v2074
        %v2177 = vmul.f32 %v2042, %v2074
        %v2178 = vmul.f32 %v2043, %v2074
        %v2179 = vmul.f32 %v2044, %v2074
        %v2180 = vmul.f32 %v2045, %v2074
        %v2181 = vmul.f32 %v2046, %v2074
        %v2182 = vmul.f32 %v2047, %v2074
        %v2183 = vmul.f32 %v2048, %v2074
        %v2184 = vmul.f32 %v2049, %v2074
        %v2185 = vmul.f32 %v2050, %v2074
        %v2186 = vmul.f32 %v2051, %v2074
        %v2187 = vmul.f32 %v2052, %v2074
        %v2188 = vmul.f32 %v2053, %v2074
        %v2189 = vmul.f32 %v2054, %v2074
        %v2190 = vmul.f32 %v2055, %v2074
        %v2191 = vmul.f32 %v2056, %v2074
        %v2192 = vmul.f32 %v2057, %v2074
        %v2193 = vmul.f32 %v2058, %v2074
        %v2194 = vmul.f32 %v2059, %v2074
        %v2195 = vmul.f32 %v2060, %v2074
        %v2196 = vmul.f32 %v2061, %v2074
        %v2197 = vmul.f32 %v2062, %v2074
        %v2198 = vmul.f32 %v2063, %v2074
        %v2199 = vmul.f32 %v2064, %v2074
        %v2200 = vmul.f32 %v2065, %v2074
        %v2201 = vmul.f32 %v2066, %v2074
        %v2202 = vmul.f32 %v2067, %v2074
        %v2203 = vmul.f32 %v2068, %v2074
        %v2204 = vld [vmem:[%s290] sm:$0x1]
        %v2206 = vlaneseq
        %v2207 = vshrl.u32 %v2206, 7
        %v2208 = vsub.s32 0, %v2207
        %v2209 = vrot.slane %v2204, %v2208
        %v2211 = vadd.f32 %v2076, %v2209
        %v2212 = vadd.f32 %v2077, %v2209
        %v2213 = vadd.f32 %v2078, %v2209
        %v2214 = vadd.f32 %v2079, %v2209
        %v2215 = vadd.f32 %v2080, %v2209
        %v2216 = vadd.f32 %v2081, %v2209
        %v2217 = vadd.f32 %v2082, %v2209
        %v2218 = vadd.f32 %v2083, %v2209
        %v2219 = vadd.f32 %v2084, %v2209
        %v2220 = vadd.f32 %v2085, %v2209
        %v2221 = vadd.f32 %v2086, %v2209
        %v2222 = vadd.f32 %v2087, %v2209
        %v2223 = vadd.f32 %v2088, %v2209
        %v2224 = vadd.f32 %v2089, %v2209
        %v2225 = vadd.f32 %v2090, %v2209
        %v2226 = vadd.f32 %v2091, %v2209
        %v2227 = vadd.f32 %v2092, %v2209
        %v2228 = vadd.f32 %v2093, %v2209
        %v2229 = vadd.f32 %v2094, %v2209
        %v2230 = vadd.f32 %v2095, %v2209
        %v2231 = vadd.f32 %v2096, %v2209
        %v2232 = vadd.f32 %v2097, %v2209
        %v2233 = vadd.f32 %v2098, %v2209
        %v2234 = vadd.f32 %v2099, %v2209
        %v2235 = vadd.f32 %v2100, %v2209
        %v2236 = vadd.f32 %v2101, %v2209
        %v2237 = vadd.f32 %v2102, %v2209
        %v2238 = vadd.f32 %v2103, %v2209
        %v2239 = vadd.f32 %v2104, %v2209
        %v2240 = vadd.f32 %v2105, %v2209
        %v2241 = vadd.f32 %v2106, %v2209
        %v2242 = vadd.f32 %v2107, %v2209
        %v2243 = vadd.f32 %v2108, %v2209
        %v2244 = vadd.f32 %v2109, %v2209
        %v2245 = vadd.f32 %v2110, %v2209
        %v2246 = vadd.f32 %v2111, %v2209
        %v2247 = vadd.f32 %v2112, %v2209
        %v2248 = vadd.f32 %v2113, %v2209
        %v2249 = vadd.f32 %v2114, %v2209
        %v2250 = vadd.f32 %v2115, %v2209
        %v2251 = vadd.f32 %v2116, %v2209
        %v2252 = vadd.f32 %v2117, %v2209
        %v2253 = vadd.f32 %v2118, %v2209
        %v2254 = vadd.f32 %v2119, %v2209
        %v2255 = vadd.f32 %v2120, %v2209
        %v2256 = vadd.f32 %v2121, %v2209
        %v2257 = vadd.f32 %v2122, %v2209
        %v2258 = vadd.f32 %v2123, %v2209
        %v2259 = vadd.f32 %v2124, %v2209
        %v2260 = vadd.f32 %v2125, %v2209
        %v2261 = vadd.f32 %v2126, %v2209
        %v2262 = vadd.f32 %v2127, %v2209
        %v2263 = vadd.f32 %v2128, %v2209
        %v2264 = vadd.f32 %v2129, %v2209
        %v2265 = vadd.f32 %v2130, %v2209
        %v2266 = vadd.f32 %v2131, %v2209
        %v2267 = vadd.f32 %v2132, %v2209
        %v2268 = vadd.f32 %v2133, %v2209
        %v2269 = vadd.f32 %v2134, %v2209
        %v2270 = vadd.f32 %v2135, %v2209
        %v2271 = vadd.f32 %v2136, %v2209
        %v2272 = vadd.f32 %v2137, %v2209
        %v2273 = vadd.f32 %v2138, %v2209
        %v2274 = vadd.f32 %v2139, %v2209
        %v2275 = vadd.f32 %v2140, %v2209
        %v2276 = vadd.f32 %v2141, %v2209
        %v2277 = vadd.f32 %v2142, %v2209
        %v2278 = vadd.f32 %v2143, %v2209
        %v2279 = vadd.f32 %v2144, %v2209
        %v2280 = vadd.f32 %v2145, %v2209
        %v2281 = vadd.f32 %v2146, %v2209
        %v2282 = vadd.f32 %v2147, %v2209
        %v2283 = vadd.f32 %v2148, %v2209
        %v2284 = vadd.f32 %v2149, %v2209
        %v2285 = vadd.f32 %v2150, %v2209
        %v2286 = vadd.f32 %v2151, %v2209
        %v2287 = vadd.f32 %v2152, %v2209
        %v2288 = vadd.f32 %v2153, %v2209
        %v2289 = vadd.f32 %v2154, %v2209
        %v2290 = vadd.f32 %v2155, %v2209
        %v2291 = vadd.f32 %v2156, %v2209
        %v2292 = vadd.f32 %v2157, %v2209
        %v2293 = vadd.f32 %v2158, %v2209
        %v2294 = vadd.f32 %v2159, %v2209
        %v2295 = vadd.f32 %v2160, %v2209
        %v2296 = vadd.f32 %v2161, %v2209
        %v2297 = vadd.f32 %v2162, %v2209
        %v2298 = vadd.f32 %v2163, %v2209
        %v2299 = vadd.f32 %v2164, %v2209
        %v2300 = vadd.f32 %v2165, %v2209
        %v2301 = vadd.f32 %v2166, %v2209
        %v2302 = vadd.f32 %v2167, %v2209
        %v2303 = vadd.f32 %v2168, %v2209
        %v2304 = vadd.f32 %v2169, %v2209
        %v2305 = vadd.f32 %v2170, %v2209
        %v2306 = vadd.f32 %v2171, %v2209
        %v2307 = vadd.f32 %v2172, %v2209
        %v2308 = vadd.f32 %v2173, %v2209
        %v2309 = vadd.f32 %v2174, %v2209
        %v2310 = vadd.f32 %v2175, %v2209
        %v2311 = vadd.f32 %v2176, %v2209
        %v2312 = vadd.f32 %v2177, %v2209
        %v2313 = vadd.f32 %v2178, %v2209
        %v2314 = vadd.f32 %v2179, %v2209
        %v2315 = vadd.f32 %v2180, %v2209
        %v2316 = vadd.f32 %v2181, %v2209
        %v2317 = vadd.f32 %v2182, %v2209
        %v2318 = vadd.f32 %v2183, %v2209
        %v2319 = vadd.f32 %v2184, %v2209
        %v2320 = vadd.f32 %v2185, %v2209
        %v2321 = vadd.f32 %v2186, %v2209
        %v2322 = vadd.f32 %v2187, %v2209
        %v2323 = vadd.f32 %v2188, %v2209
        %v2324 = vadd.f32 %v2189, %v2209
        %v2325 = vadd.f32 %v2190, %v2209
        %v2326 = vadd.f32 %v2191, %v2209
        %v2327 = vadd.f32 %v2192, %v2209
        %v2328 = vadd.f32 %v2193, %v2209
        %v2329 = vadd.f32 %v2194, %v2209
        %v2330 = vadd.f32 %v2195, %v2209
        %v2331 = vadd.f32 %v2196, %v2209
        %v2332 = vadd.f32 %v2197, %v2209
        %v2333 = vadd.f32 %v2198, %v2209
        %v2334 = vadd.f32 %v2199, %v2209
        %v2335 = vadd.f32 %v2200, %v2209
        %v2336 = vadd.f32 %v2201, %v2209
        %v2337 = vadd.f32 %v2202, %v2209
        %v2338 = vadd.f32 %v2203, %v2209
        %v2339 = vmax.f32 %v2211, 0.0
        %v2340 = vmax.f32 %v2212, 0.0
        %v2341 = vmax.f32 %v2213, 0.0
        %v2342 = vmax.f32 %v2214, 0.0
        %v2343 = vmax.f32 %v2215, 0.0
        %v2344 = vmax.f32 %v2216, 0.0
        %v2345 = vmax.f32 %v2217, 0.0
        %v2346 = vmax.f32 %v2218, 0.0
        %v2347 = vmax.f32 %v2219, 0.0
        %v2348 = vmax.f32 %v2220, 0.0
        %v2349 = vmax.f32 %v2221, 0.0
        %v2350 = vmax.f32 %v2222, 0.0
        %v2351 = vmax.f32 %v2223, 0.0
        %v2352 = vmax.f32 %v2224, 0.0
        %v2353 = vmax.f32 %v2225, 0.0
        %v2354 = vmax.f32 %v2226, 0.0
        %v2355 = vmax.f32 %v2227, 0.0
        %v2356 = vmax.f32 %v2228, 0.0
        %v2357 = vmax.f32 %v2229, 0.0
        %v2358 = vmax.f32 %v2230, 0.0
        %v2359 = vmax.f32 %v2231, 0.0
        %v2360 = vmax.f32 %v2232, 0.0
        %v2361 = vmax.f32 %v2233, 0.0
        %v2362 = vmax.f32 %v2234, 0.0
        %v2363 = vmax.f32 %v2235, 0.0
        %v2364 = vmax.f32 %v2236, 0.0
        %v2365 = vmax.f32 %v2237, 0.0
        %v2366 = vmax.f32 %v2238, 0.0
        %v2367 = vmax.f32 %v2239, 0.0
        %v2368 = vmax.f32 %v2240, 0.0
        %v2369 = vmax.f32 %v2241, 0.0
        %v2370 = vmax.f32 %v2242, 0.0
        %v2371 = vmax.f32 %v2243, 0.0
        %v2372 = vmax.f32 %v2244, 0.0
        %v2373 = vmax.f32 %v2245, 0.0
        %v2374 = vmax.f32 %v2246, 0.0
        %v2375 = vmax.f32 %v2247, 0.0
        %v2376 = vmax.f32 %v2248, 0.0
        %v2377 = vmax.f32 %v2249, 0.0
        %v2378 = vmax.f32 %v2250, 0.0
        %v2379 = vmax.f32 %v2251, 0.0
        %v2380 = vmax.f32 %v2252, 0.0
        %v2381 = vmax.f32 %v2253, 0.0
        %v2382 = vmax.f32 %v2254, 0.0
        %v2383 = vmax.f32 %v2255, 0.0
        %v2384 = vmax.f32 %v2256, 0.0
        %v2385 = vmax.f32 %v2257, 0.0
        %v2386 = vmax.f32 %v2258, 0.0
        %v2387 = vmax.f32 %v2259, 0.0
        %v2388 = vmax.f32 %v2260, 0.0
        %v2389 = vmax.f32 %v2261, 0.0
        %v2390 = vmax.f32 %v2262, 0.0
        %v2391 = vmax.f32 %v2263, 0.0
        %v2392 = vmax.f32 %v2264, 0.0
        %v2393 = vmax.f32 %v2265, 0.0
        %v2394 = vmax.f32 %v2266, 0.0
        %v2395 = vmax.f32 %v2267, 0.0
        %v2396 = vmax.f32 %v2268, 0.0
        %v2397 = vmax.f32 %v2269, 0.0
        %v2398 = vmax.f32 %v2270, 0.0
        %v2399 = vmax.f32 %v2271, 0.0
        %v2400 = vmax.f32 %v2272, 0.0
        %v2401 = vmax.f32 %v2273, 0.0
        %v2402 = vmax.f32 %v2274, 0.0
        %v2403 = vmax.f32 %v2275, 0.0
        %v2404 = vmax.f32 %v2276, 0.0
        %v2405 = vmax.f32 %v2277, 0.0
        %v2406 = vmax.f32 %v2278, 0.0
        %v2407 = vmax.f32 %v2279, 0.0
        %v2408 = vmax.f32 %v2280, 0.0
        %v2409 = vmax.f32 %v2281, 0.0
        %v2410 = vmax.f32 %v2282, 0.0
        %v2411 = vmax.f32 %v2283, 0.0
        %v2412 = vmax.f32 %v2284, 0.0
        %v2413 = vmax.f32 %v2285, 0.0
        %v2414 = vmax.f32 %v2286, 0.0
        %v2415 = vmax.f32 %v2287, 0.0
        %v2416 = vmax.f32 %v2288, 0.0
        %v2417 = vmax.f32 %v2289, 0.0
        %v2418 = vmax.f32 %v2290, 0.0
        %v2419 = vmax.f32 %v2291, 0.0
        %v2420 = vmax.f32 %v2292, 0.0
        %v2421 = vmax.f32 %v2293, 0.0
        %v2422 = vmax.f32 %v2294, 0.0
        %v2423 = vmax.f32 %v2295, 0.0
        %v2424 = vmax.f32 %v2296, 0.0
        %v2425 = vmax.f32 %v2297, 0.0
        %v2426 = vmax.f32 %v2298, 0.0
        %v2427 = vmax.f32 %v2299, 0.0
        %v2428 = vmax.f32 %v2300, 0.0
        %v2429 = vmax.f32 %v2301, 0.0
        %v2430 = vmax.f32 %v2302, 0.0
        %v2431 = vmax.f32 %v2303, 0.0
        %v2432 = vmax.f32 %v2304, 0.0
        %v2433 = vmax.f32 %v2305, 0.0
        %v2434 = vmax.f32 %v2306, 0.0
        %v2435 = vmax.f32 %v2307, 0.0
        %v2436 = vmax.f32 %v2308, 0.0
        %v2437 = vmax.f32 %v2309, 0.0
        %v2438 = vmax.f32 %v2310, 0.0
        %v2439 = vmax.f32 %v2311, 0.0
        %v2440 = vmax.f32 %v2312, 0.0
        %v2441 = vmax.f32 %v2313, 0.0
        %v2442 = vmax.f32 %v2314, 0.0
        %v2443 = vmax.f32 %v2315, 0.0
        %v2444 = vmax.f32 %v2316, 0.0
        %v2445 = vmax.f32 %v2317, 0.0
        %v2446 = vmax.f32 %v2318, 0.0
        %v2447 = vmax.f32 %v2319, 0.0
        %v2448 = vmax.f32 %v2320, 0.0
        %v2449 = vmax.f32 %v2321, 0.0
        %v2450 = vmax.f32 %v2322, 0.0
        %v2451 = vmax.f32 %v2323, 0.0
        %v2452 = vmax.f32 %v2324, 0.0
        %v2453 = vmax.f32 %v2325, 0.0
        %v2454 = vmax.f32 %v2326, 0.0
        %v2455 = vmax.f32 %v2327, 0.0
        %v2456 = vmax.f32 %v2328, 0.0
        %v2457 = vmax.f32 %v2329, 0.0
        %v2458 = vmax.f32 %v2330, 0.0
        %v2459 = vmax.f32 %v2331, 0.0
        %v2460 = vmax.f32 %v2332, 0.0
        %v2461 = vmax.f32 %v2333, 0.0
        %v2462 = vmax.f32 %v2334, 0.0
        %v2463 = vmax.f32 %v2335, 0.0
        %v2464 = vmax.f32 %v2336, 0.0
        %v2465 = vmax.f32 %v2337, 0.0
        %v2466 = vmax.f32 %v2338, 0.0
        %v2467 = vpack.c.bf16 %v2340, %v2339
        %v2468 = vpack.c.bf16 %v2342, %v2341
        %v2469 = vpack.c.bf16 %v2344, %v2343
        %v2470 = vpack.c.bf16 %v2346, %v2345
        %v2471 = vpack.c.bf16 %v2348, %v2347
        %v2472 = vpack.c.bf16 %v2350, %v2349
        %v2473 = vpack.c.bf16 %v2352, %v2351
        %v2474 = vpack.c.bf16 %v2354, %v2353
        %v2475 = vpack.c.bf16 %v2356, %v2355
        %v2476 = vpack.c.bf16 %v2358, %v2357
        %v2477 = vpack.c.bf16 %v2360, %v2359
        %v2478 = vpack.c.bf16 %v2362, %v2361
        %v2479 = vpack.c.bf16 %v2364, %v2363
        %v2480 = vpack.c.bf16 %v2366, %v2365
        %v2481 = vpack.c.bf16 %v2368, %v2367
        %v2482 = vpack.c.bf16 %v2370, %v2369
        %v2483 = vpack.c.bf16 %v2372, %v2371
        %v2484 = vpack.c.bf16 %v2374, %v2373
        %v2485 = vpack.c.bf16 %v2376, %v2375
        %v2486 = vpack.c.bf16 %v2378, %v2377
        %v2487 = vpack.c.bf16 %v2380, %v2379
        %v2488 = vpack.c.bf16 %v2382, %v2381
        %v2489 = vpack.c.bf16 %v2384, %v2383
        %v2490 = vpack.c.bf16 %v2386, %v2385
        %v2491 = vpack.c.bf16 %v2388, %v2387
        %v2492 = vpack.c.bf16 %v2390, %v2389
        %v2493 = vpack.c.bf16 %v2392, %v2391
        %v2494 = vpack.c.bf16 %v2394, %v2393
        %v2495 = vpack.c.bf16 %v2396, %v2395
        %v2496 = vpack.c.bf16 %v2398, %v2397
        %v2497 = vpack.c.bf16 %v2400, %v2399
        %v2498 = vpack.c.bf16 %v2402, %v2401
        %v2499 = vpack.c.bf16 %v2404, %v2403
        %v2500 = vpack.c.bf16 %v2406, %v2405
        %v2501 = vpack.c.bf16 %v2408, %v2407
        %v2502 = vpack.c.bf16 %v2410, %v2409
        %v2503 = vpack.c.bf16 %v2412, %v2411
        %v2504 = vpack.c.bf16 %v2414, %v2413
        %v2505 = vpack.c.bf16 %v2416, %v2415
        %v2506 = vpack.c.bf16 %v2418, %v2417
        %v2507 = vpack.c.bf16 %v2420, %v2419
        %v2508 = vpack.c.bf16 %v2422, %v2421
        %v2509 = vpack.c.bf16 %v2424, %v2423
        %v2510 = vpack.c.bf16 %v2426, %v2425
        %v2511 = vpack.c.bf16 %v2428, %v2427
        %v2512 = vpack.c.bf16 %v2430, %v2429
        %v2513 = vpack.c.bf16 %v2432, %v2431
        %v2514 = vpack.c.bf16 %v2434, %v2433
        %v2515 = vpack.c.bf16 %v2436, %v2435
        %v2516 = vpack.c.bf16 %v2438, %v2437
        %v2517 = vpack.c.bf16 %v2440, %v2439
        %v2518 = vpack.c.bf16 %v2442, %v2441
        %v2519 = vpack.c.bf16 %v2444, %v2443
        %v2520 = vpack.c.bf16 %v2446, %v2445
        %v2521 = vpack.c.bf16 %v2448, %v2447
        %v2522 = vpack.c.bf16 %v2450, %v2449
        %v2523 = vpack.c.bf16 %v2452, %v2451
        %v2524 = vpack.c.bf16 %v2454, %v2453
        %v2525 = vpack.c.bf16 %v2456, %v2455
        %v2526 = vpack.c.bf16 %v2458, %v2457
        %v2527 = vpack.c.bf16 %v2460, %v2459
        %v2528 = vpack.c.bf16 %v2462, %v2461
        %v2529 = vpack.c.bf16 %v2464, %v2463
        %v2530 = vpack.c.bf16 %v2466, %v2465
        %v2595 = vunpack.c.l.b16 %v2467
        %v2596 = vunpack.c.h.b16 %v2467
        %v2597 = vunpack.c.l.b16 %v2468
        %v2598 = vunpack.c.h.b16 %v2468
        %v2599 = vunpack.c.l.b16 %v2469
        %v2600 = vunpack.c.h.b16 %v2469
        %v2601 = vunpack.c.l.b16 %v2470
        %v2602 = vunpack.c.h.b16 %v2470
        %v2603 = vunpack.c.l.b16 %v2471
        %v2604 = vunpack.c.h.b16 %v2471
        %v2605 = vunpack.c.l.b16 %v2472
        %v2606 = vunpack.c.h.b16 %v2472
        %v2607 = vunpack.c.l.b16 %v2473
        %v2608 = vunpack.c.h.b16 %v2473
        %v2609 = vunpack.c.l.b16 %v2474
        %v2610 = vunpack.c.h.b16 %v2474
        %v2611 = vunpack.c.l.b16 %v2475
        %v2612 = vunpack.c.h.b16 %v2475
        %v2613 = vunpack.c.l.b16 %v2476
        %v2614 = vunpack.c.h.b16 %v2476
        %v2615 = vunpack.c.l.b16 %v2477
        %v2616 = vunpack.c.h.b16 %v2477
        %v2617 = vunpack.c.l.b16 %v2478
        %v2618 = vunpack.c.h.b16 %v2478
        %v2619 = vunpack.c.l.b16 %v2479
        %v2620 = vunpack.c.h.b16 %v2479
        %v2621 = vunpack.c.l.b16 %v2480
        %v2622 = vunpack.c.h.b16 %v2480
        %v2623 = vunpack.c.l.b16 %v2481
        %v2624 = vunpack.c.h.b16 %v2481
        %v2625 = vunpack.c.l.b16 %v2482
        %v2626 = vunpack.c.h.b16 %v2482
        %v2627 = vunpack.c.l.b16 %v2483
        %v2628 = vunpack.c.h.b16 %v2483
        %v2629 = vunpack.c.l.b16 %v2484
        %v2630 = vunpack.c.h.b16 %v2484
        %v2631 = vunpack.c.l.b16 %v2485
        %v2632 = vunpack.c.h.b16 %v2485
        %v2633 = vunpack.c.l.b16 %v2486
        %v2634 = vunpack.c.h.b16 %v2486
        %v2635 = vunpack.c.l.b16 %v2487
        %v2636 = vunpack.c.h.b16 %v2487
        %v2637 = vunpack.c.l.b16 %v2488
        %v2638 = vunpack.c.h.b16 %v2488
        %v2639 = vunpack.c.l.b16 %v2489
        %v2640 = vunpack.c.h.b16 %v2489
        %v2641 = vunpack.c.l.b16 %v2490
        %v2642 = vunpack.c.h.b16 %v2490
        %v2643 = vunpack.c.l.b16 %v2491
        %v2644 = vunpack.c.h.b16 %v2491
        %v2645 = vunpack.c.l.b16 %v2492
        %v2646 = vunpack.c.h.b16 %v2492
        %v2647 = vunpack.c.l.b16 %v2493
        %v2648 = vunpack.c.h.b16 %v2493
        %v2649 = vunpack.c.l.b16 %v2494
        %v2650 = vunpack.c.h.b16 %v2494
        %v2651 = vunpack.c.l.b16 %v2495
        %v2652 = vunpack.c.h.b16 %v2495
        %v2653 = vunpack.c.l.b16 %v2496
        %v2654 = vunpack.c.h.b16 %v2496
        %v2655 = vunpack.c.l.b16 %v2497
        %v2656 = vunpack.c.h.b16 %v2497
        %v2657 = vunpack.c.l.b16 %v2498
        %v2658 = vunpack.c.h.b16 %v2498
        %v2659 = vunpack.c.l.b16 %v2499
        %v2660 = vunpack.c.h.b16 %v2499
        %v2661 = vunpack.c.l.b16 %v2500
        %v2662 = vunpack.c.h.b16 %v2500
        %v2663 = vunpack.c.l.b16 %v2501
        %v2664 = vunpack.c.h.b16 %v2501
        %v2665 = vunpack.c.l.b16 %v2502
        %v2666 = vunpack.c.h.b16 %v2502
        %v2667 = vunpack.c.l.b16 %v2503
        %v2668 = vunpack.c.h.b16 %v2503
        %v2669 = vunpack.c.l.b16 %v2504
        %v2670 = vunpack.c.h.b16 %v2504
        %v2671 = vunpack.c.l.b16 %v2505
        %v2672 = vunpack.c.h.b16 %v2505
        %v2673 = vunpack.c.l.b16 %v2506
        %v2674 = vunpack.c.h.b16 %v2506
        %v2675 = vunpack.c.l.b16 %v2507
        %v2676 = vunpack.c.h.b16 %v2507
        %v2677 = vunpack.c.l.b16 %v2508
        %v2678 = vunpack.c.h.b16 %v2508
        %v2679 = vunpack.c.l.b16 %v2509
        %v2680 = vunpack.c.h.b16 %v2509
        %v2681 = vunpack.c.l.b16 %v2510
        %v2682 = vunpack.c.h.b16 %v2510
        %v2683 = vunpack.c.l.b16 %v2511
        %v2684 = vunpack.c.h.b16 %v2511
        %v2685 = vunpack.c.l.b16 %v2512
        %v2686 = vunpack.c.h.b16 %v2512
        %v2687 = vunpack.c.l.b16 %v2513
        %v2688 = vunpack.c.h.b16 %v2513
        %v2689 = vunpack.c.l.b16 %v2514
        %v2690 = vunpack.c.h.b16 %v2514
        %v2691 = vunpack.c.l.b16 %v2515
        %v2692 = vunpack.c.h.b16 %v2515
        %v2693 = vunpack.c.l.b16 %v2516
        %v2694 = vunpack.c.h.b16 %v2516
        %v2695 = vunpack.c.l.b16 %v2517
        %v2696 = vunpack.c.h.b16 %v2517
        %v2697 = vunpack.c.l.b16 %v2518
        %v2698 = vunpack.c.h.b16 %v2518
        %v2699 = vunpack.c.l.b16 %v2519
        %v2700 = vunpack.c.h.b16 %v2519
        %v2701 = vunpack.c.l.b16 %v2520
        %v2702 = vunpack.c.h.b16 %v2520
        %v2703 = vunpack.c.l.b16 %v2521
        %v2704 = vunpack.c.h.b16 %v2521
        %v2705 = vunpack.c.l.b16 %v2522
        %v2706 = vunpack.c.h.b16 %v2522
        %v2707 = vunpack.c.l.b16 %v2523
        %v2708 = vunpack.c.h.b16 %v2523
        %v2709 = vunpack.c.l.b16 %v2524
        %v2710 = vunpack.c.h.b16 %v2524
        %v2711 = vunpack.c.l.b16 %v2525
        %v2712 = vunpack.c.h.b16 %v2525
        %v2713 = vunpack.c.l.b16 %v2526
        %v2714 = vunpack.c.h.b16 %v2526
        %v2715 = vunpack.c.l.b16 %v2527
        %v2716 = vunpack.c.h.b16 %v2527
        %v2717 = vunpack.c.l.b16 %v2528
        %v2718 = vunpack.c.h.b16 %v2528
        %v2719 = vunpack.c.l.b16 %v2529
        %v2720 = vunpack.c.h.b16 %v2529
        %v2721 = vunpack.c.l.b16 %v2530
        %v2722 = vunpack.c.h.b16 %v2530
        %v2723 = vpack.c.b16 %v2595, %v2595
        %v2724 = vpack.c.b16 %v2596, %v2596
        %v2725 = vpack.c.b16 %v2597, %v2597
        %v2726 = vpack.c.b16 %v2598, %v2598
        %v2727 = vpack.c.b16 %v2599, %v2599
        %v2728 = vpack.c.b16 %v2600, %v2600
        %v2729 = vpack.c.b16 %v2601, %v2601
        %v2730 = vpack.c.b16 %v2602, %v2602
        %v2731 = vpack.c.b16 %v2603, %v2603
        %v2732 = vpack.c.b16 %v2604, %v2604
        %v2733 = vpack.c.b16 %v2605, %v2605
        %v2734 = vpack.c.b16 %v2606, %v2606
        %v2735 = vpack.c.b16 %v2607, %v2607
        %v2736 = vpack.c.b16 %v2608, %v2608
        %v2737 = vpack.c.b16 %v2609, %v2609
        %v2738 = vpack.c.b16 %v2610, %v2610
        %v2739 = vpack.c.b16 %v2611, %v2611
        %v2740 = vpack.c.b16 %v2612, %v2612
        %v2741 = vpack.c.b16 %v2613, %v2613
        %v2742 = vpack.c.b16 %v2614, %v2614
        %v2743 = vpack.c.b16 %v2615, %v2615
        %v2744 = vpack.c.b16 %v2616, %v2616
        %v2745 = vpack.c.b16 %v2617, %v2617
        %v2746 = vpack.c.b16 %v2618, %v2618
        %v2747 = vpack.c.b16 %v2619, %v2619
        %v2748 = vpack.c.b16 %v2620, %v2620
        %v2749 = vpack.c.b16 %v2621, %v2621
        %v2750 = vpack.c.b16 %v2622, %v2622
        %v2751 = vpack.c.b16 %v2623, %v2623
        %v2752 = vpack.c.b16 %v2624, %v2624
        %v2753 = vpack.c.b16 %v2625, %v2625
        %v2754 = vpack.c.b16 %v2626, %v2626
        %v2755 = vpack.c.b16 %v2627, %v2627
        %v2756 = vpack.c.b16 %v2628, %v2628
        %v2757 = vpack.c.b16 %v2629, %v2629
        %v2758 = vpack.c.b16 %v2630, %v2630
        %v2759 = vpack.c.b16 %v2631, %v2631
        %v2760 = vpack.c.b16 %v2632, %v2632
        %v2761 = vpack.c.b16 %v2633, %v2633
        %v2762 = vpack.c.b16 %v2634, %v2634
        %v2763 = vpack.c.b16 %v2635, %v2635
        %v2764 = vpack.c.b16 %v2636, %v2636
        %v2765 = vpack.c.b16 %v2637, %v2637
        %v2766 = vpack.c.b16 %v2638, %v2638
        %v2767 = vpack.c.b16 %v2639, %v2639
        %v2768 = vpack.c.b16 %v2640, %v2640
        %v2769 = vpack.c.b16 %v2641, %v2641
        %v2770 = vpack.c.b16 %v2642, %v2642
        %v2771 = vpack.c.b16 %v2643, %v2643
        %v2772 = vpack.c.b16 %v2644, %v2644
        %v2773 = vpack.c.b16 %v2645, %v2645
        %v2774 = vpack.c.b16 %v2646, %v2646
        %v2775 = vpack.c.b16 %v2647, %v2647
        %v2776 = vpack.c.b16 %v2648, %v2648
        %v2777 = vpack.c.b16 %v2649, %v2649
        %v2778 = vpack.c.b16 %v2650, %v2650
        %v2779 = vpack.c.b16 %v2651, %v2651
        %v2780 = vpack.c.b16 %v2652, %v2652
        %v2781 = vpack.c.b16 %v2653, %v2653
        %v2782 = vpack.c.b16 %v2654, %v2654
        %v2783 = vpack.c.b16 %v2655, %v2655
        %v2784 = vpack.c.b16 %v2656, %v2656
        %v2785 = vpack.c.b16 %v2657, %v2657
        %v2786 = vpack.c.b16 %v2658, %v2658
        %v2787 = vpack.c.b16 %v2659, %v2659
        %v2788 = vpack.c.b16 %v2660, %v2660
        %v2789 = vpack.c.b16 %v2661, %v2661
        %v2790 = vpack.c.b16 %v2662, %v2662
        %v2791 = vpack.c.b16 %v2663, %v2663
        %v2792 = vpack.c.b16 %v2664, %v2664
        %v2793 = vpack.c.b16 %v2665, %v2665
        %v2794 = vpack.c.b16 %v2666, %v2666
        %v2795 = vpack.c.b16 %v2667, %v2667
        %v2796 = vpack.c.b16 %v2668, %v2668
        %v2797 = vpack.c.b16 %v2669, %v2669
        %v2798 = vpack.c.b16 %v2670, %v2670
        %v2799 = vpack.c.b16 %v2671, %v2671
        %v2800 = vpack.c.b16 %v2672, %v2672
        %v2801 = vpack.c.b16 %v2673, %v2673
        %v2802 = vpack.c.b16 %v2674, %v2674
        %v2803 = vpack.c.b16 %v2675, %v2675
        %v2804 = vpack.c.b16 %v2676, %v2676
        %v2805 = vpack.c.b16 %v2677, %v2677
        %v2806 = vpack.c.b16 %v2678, %v2678
        %v2807 = vpack.c.b16 %v2679, %v2679
        %v2808 = vpack.c.b16 %v2680, %v2680
        %v2809 = vpack.c.b16 %v2681, %v2681
        %v2810 = vpack.c.b16 %v2682, %v2682
        %v2811 = vpack.c.b16 %v2683, %v2683
        %v2812 = vpack.c.b16 %v2684, %v2684
        %v2813 = vpack.c.b16 %v2685, %v2685
        %v2814 = vpack.c.b16 %v2686, %v2686
        %v2815 = vpack.c.b16 %v2687, %v2687
        %v2816 = vpack.c.b16 %v2688, %v2688
        %v2817 = vpack.c.b16 %v2689, %v2689
        %v2818 = vpack.c.b16 %v2690, %v2690
        %v2819 = vpack.c.b16 %v2691, %v2691
        %v2820 = vpack.c.b16 %v2692, %v2692
        %v2821 = vpack.c.b16 %v2693, %v2693
        %v2822 = vpack.c.b16 %v2694, %v2694
        %v2823 = vpack.c.b16 %v2695, %v2695
        %v2824 = vpack.c.b16 %v2696, %v2696
        %v2825 = vpack.c.b16 %v2697, %v2697
        %v2826 = vpack.c.b16 %v2698, %v2698
        %v2827 = vpack.c.b16 %v2699, %v2699
        %v2828 = vpack.c.b16 %v2700, %v2700
        %v2829 = vpack.c.b16 %v2701, %v2701
        %v2830 = vpack.c.b16 %v2702, %v2702
        %v2831 = vpack.c.b16 %v2703, %v2703
        %v2832 = vpack.c.b16 %v2704, %v2704
        %v2833 = vpack.c.b16 %v2705, %v2705
        %v2834 = vpack.c.b16 %v2706, %v2706
        %v2835 = vpack.c.b16 %v2707, %v2707
        %v2836 = vpack.c.b16 %v2708, %v2708
        %v2837 = vpack.c.b16 %v2709, %v2709
        %v2838 = vpack.c.b16 %v2710, %v2710
        %v2839 = vpack.c.b16 %v2711, %v2711
        %v2840 = vpack.c.b16 %v2712, %v2712
        %v2841 = vpack.c.b16 %v2713, %v2713
        %v2842 = vpack.c.b16 %v2714, %v2714
        %v2843 = vpack.c.b16 %v2715, %v2715
        %v2844 = vpack.c.b16 %v2716, %v2716
        %v2845 = vpack.c.b16 %v2717, %v2717
        %v2846 = vpack.c.b16 %v2718, %v2718
        %v2847 = vpack.c.b16 %v2719, %v2719
        %v2848 = vpack.c.b16 %v2720, %v2720
        %v2849 = vpack.c.b16 %v2721, %v2721
        %v2850 = vpack.c.b16 %v2722, %v2722
        %2979 = vst [vmem:[%s298] sm:$0xf] %v2723
        %2980 = vst [vmem:[%s298 + $0x4] sm:$0xf] %v2724
        %2981 = vst [vmem:[%s298 + $0x8] sm:$0xf] %v2725
        %2982 = vst [vmem:[%s298 + $0xc] sm:$0xf] %v2726
        %2983 = vst [vmem:[%s298 + $0x10] sm:$0xf] %v2727
        %2984 = vst [vmem:[%s298 + $0x14] sm:$0xf] %v2728
        %2985 = vst [vmem:[%s298 + $0x18] sm:$0xf] %v2729
        %2986 = vst [vmem:[%s298 + $0x1c] sm:$0xf] %v2730
        %2987 = vst [vmem:[%s298 + $0x20] sm:$0xf] %v2731
        %2988 = vst [vmem:[%s298 + $0x24] sm:$0xf] %v2732
        %2989 = vst [vmem:[%s298 + $0x28] sm:$0xf] %v2733
        %2990 = vst [vmem:[%s298 + $0x2c] sm:$0xf] %v2734
        %2991 = vst [vmem:[%s298 + $0x30] sm:$0xf] %v2735
        %2992 = vst [vmem:[%s298 + $0x34] sm:$0xf] %v2736
        %2993 = vst [vmem:[%s298 + $0x38] sm:$0xf] %v2737
        %2994 = vst [vmem:[%s298 + $0x3c] sm:$0xf] %v2738
        %2995 = vst [vmem:[%s298 + $0x40] sm:$0xf] %v2739
        %2996 = vst [vmem:[%s298 + $0x44] sm:$0xf] %v2740
        %2997 = vst [vmem:[%s298 + $0x48] sm:$0xf] %v2741
        %2998 = vst [vmem:[%s298 + $0x4c] sm:$0xf] %v2742
        %2999 = vst [vmem:[%s298 + $0x50] sm:$0xf] %v2743
        %3000 = vst [vmem:[%s298 + $0x54] sm:$0xf] %v2744
        %3001 = vst [vmem:[%s298 + $0x58] sm:$0xf] %v2745
        %3002 = vst [vmem:[%s298 + $0x5c] sm:$0xf] %v2746
        %3003 = vst [vmem:[%s298 + $0x60] sm:$0xf] %v2747
        %3004 = vst [vmem:[%s298 + $0x64] sm:$0xf] %v2748
        %3005 = vst [vmem:[%s298 + $0x68] sm:$0xf] %v2749
        %3006 = vst [vmem:[%s298 + $0x6c] sm:$0xf] %v2750
        %3007 = vst [vmem:[%s298 + $0x70] sm:$0xf] %v2751
        %3008 = vst [vmem:[%s298 + $0x74] sm:$0xf] %v2752
        %3009 = vst [vmem:[%s298 + $0x78] sm:$0xf] %v2753
        %3010 = vst [vmem:[%s298 + $0x7c] sm:$0xf] %v2754
        %3011 = vst [vmem:[%s298 + $0x80] sm:$0xf] %v2755
        %3012 = vst [vmem:[%s298 + $0x84] sm:$0xf] %v2756
        %3013 = vst [vmem:[%s298 + $0x88] sm:$0xf] %v2757
        %3014 = vst [vmem:[%s298 + $0x8c] sm:$0xf] %v2758
        %3015 = vst [vmem:[%s298 + $0x90] sm:$0xf] %v2759
        %3016 = vst [vmem:[%s298 + $0x94] sm:$0xf] %v2760
        %3017 = vst [vmem:[%s298 + $0x98] sm:$0xf] %v2761
        %3018 = vst [vmem:[%s298 + $0x9c] sm:$0xf] %v2762
        %3019 = vst [vmem:[%s298 + $0xa0] sm:$0xf] %v2763
        %3020 = vst [vmem:[%s298 + $0xa4] sm:$0xf] %v2764
        %3021 = vst [vmem:[%s298 + $0xa8] sm:$0xf] %v2765
        %3022 = vst [vmem:[%s298 + $0xac] sm:$0xf] %v2766
        %3023 = vst [vmem:[%s298 + $0xb0] sm:$0xf] %v2767
        %3024 = vst [vmem:[%s298 + $0xb4] sm:$0xf] %v2768
        %3025 = vst [vmem:[%s298 + $0xb8] sm:$0xf] %v2769
        %3026 = vst [vmem:[%s298 + $0xbc] sm:$0xf] %v2770
        %3027 = vst [vmem:[%s298 + $0xc0] sm:$0xf] %v2771
        %3028 = vst [vmem:[%s298 + $0xc4] sm:$0xf] %v2772
        %3029 = vst [vmem:[%s298 + $0xc8] sm:$0xf] %v2773
        %3030 = vst [vmem:[%s298 + $0xcc] sm:$0xf] %v2774
        %3031 = vst [vmem:[%s298 + $0xd0] sm:$0xf] %v2775
        %3032 = vst [vmem:[%s298 + $0xd4] sm:$0xf] %v2776
        %3033 = vst [vmem:[%s298 + $0xd8] sm:$0xf] %v2777
        %3034 = vst [vmem:[%s298 + $0xdc] sm:$0xf] %v2778
        %3035 = vst [vmem:[%s298 + $0xe0] sm:$0xf] %v2779
        %3036 = vst [vmem:[%s298 + $0xe4] sm:$0xf] %v2780
        %3037 = vst [vmem:[%s298 + $0xe8] sm:$0xf] %v2781
        %3038 = vst [vmem:[%s298 + $0xec] sm:$0xf] %v2782
        %3039 = vst [vmem:[%s298 + $0xf0] sm:$0xf] %v2783
        %3040 = vst [vmem:[%s298 + $0xf4] sm:$0xf] %v2784
        %3041 = vst [vmem:[%s298 + $0xf8] sm:$0xf] %v2785
        %3042 = vst [vmem:[%s298 + $0xfc] sm:$0xf] %v2786
        %3043 = vst [vmem:[%s298 + $0x100] sm:$0xf] %v2787
        %3044 = vst [vmem:[%s298 + $0x104] sm:$0xf] %v2788
        %3045 = vst [vmem:[%s298 + $0x108] sm:$0xf] %v2789
        %3046 = vst [vmem:[%s298 + $0x10c] sm:$0xf] %v2790
        %3047 = vst [vmem:[%s298 + $0x110] sm:$0xf] %v2791
        %3048 = vst [vmem:[%s298 + $0x114] sm:$0xf] %v2792
        %3049 = vst [vmem:[%s298 + $0x118] sm:$0xf] %v2793
        %3050 = vst [vmem:[%s298 + $0x11c] sm:$0xf] %v2794
        %3051 = vst [vmem:[%s298 + $0x120] sm:$0xf] %v2795
        %3052 = vst [vmem:[%s298 + $0x124] sm:$0xf] %v2796
        %3053 = vst [vmem:[%s298 + $0x128] sm:$0xf] %v2797
        %3054 = vst [vmem:[%s298 + $0x12c] sm:$0xf] %v2798
        %3055 = vst [vmem:[%s298 + $0x130] sm:$0xf] %v2799
        %3056 = vst [vmem:[%s298 + $0x134] sm:$0xf] %v2800
        %3057 = vst [vmem:[%s298 + $0x138] sm:$0xf] %v2801
        %3058 = vst [vmem:[%s298 + $0x13c] sm:$0xf] %v2802
        %3059 = vst [vmem:[%s298 + $0x140] sm:$0xf] %v2803
        %3060 = vst [vmem:[%s298 + $0x144] sm:$0xf] %v2804
        %3061 = vst [vmem:[%s298 + $0x148] sm:$0xf] %v2805
        %3062 = vst [vmem:[%s298 + $0x14c] sm:$0xf] %v2806
        %3063 = vst [vmem:[%s298 + $0x150] sm:$0xf] %v2807
        %3064 = vst [vmem:[%s298 + $0x154] sm:$0xf] %v2808
        %3065 = vst [vmem:[%s298 + $0x158] sm:$0xf] %v2809
        %3066 = vst [vmem:[%s298 + $0x15c] sm:$0xf] %v2810
        %3067 = vst [vmem:[%s298 + $0x160] sm:$0xf] %v2811
        %3068 = vst [vmem:[%s298 + $0x164] sm:$0xf] %v2812
        %3069 = vst [vmem:[%s298 + $0x168] sm:$0xf] %v2813
        %3070 = vst [vmem:[%s298 + $0x16c] sm:$0xf] %v2814
        %3071 = vst [vmem:[%s298 + $0x170] sm:$0xf] %v2815
        %3072 = vst [vmem:[%s298 + $0x174] sm:$0xf] %v2816
        %3073 = vst [vmem:[%s298 + $0x178] sm:$0xf] %v2817
        %3074 = vst [vmem:[%s298 + $0x17c] sm:$0xf] %v2818
        %3075 = vst [vmem:[%s298 + $0x180] sm:$0xf] %v2819
        %3076 = vst [vmem:[%s298 + $0x184] sm:$0xf] %v2820
        %3077 = vst [vmem:[%s298 + $0x188] sm:$0xf] %v2821
        %3078 = vst [vmem:[%s298 + $0x18c] sm:$0xf] %v2822
        %3079 = vst [vmem:[%s298 + $0x190] sm:$0xf] %v2823
        %3080 = vst [vmem:[%s298 + $0x194] sm:$0xf] %v2824
        %3081 = vst [vmem:[%s298 + $0x198] sm:$0xf] %v2825
        %3082 = vst [vmem:[%s298 + $0x19c] sm:$0xf] %v2826
        %3083 = vst [vmem:[%s298 + $0x1a0] sm:$0xf] %v2827
        %3084 = vst [vmem:[%s298 + $0x1a4] sm:$0xf] %v2828
        %3085 = vst [vmem:[%s298 + $0x1a8] sm:$0xf] %v2829
        %3086 = vst [vmem:[%s298 + $0x1ac] sm:$0xf] %v2830
        %3087 = vst [vmem:[%s298 + $0x1b0] sm:$0xf] %v2831
        %3088 = vst [vmem:[%s298 + $0x1b4] sm:$0xf] %v2832
        %3089 = vst [vmem:[%s298 + $0x1b8] sm:$0xf] %v2833
        %3090 = vst [vmem:[%s298 + $0x1bc] sm:$0xf] %v2834
        %3091 = vst [vmem:[%s298 + $0x1c0] sm:$0xf] %v2835
        %3092 = vst [vmem:[%s298 + $0x1c4] sm:$0xf] %v2836
        %3093 = vst [vmem:[%s298 + $0x1c8] sm:$0xf] %v2837
        %3094 = vst [vmem:[%s298 + $0x1cc] sm:$0xf] %v2838
        %3095 = vst [vmem:[%s298 + $0x1d0] sm:$0xf] %v2839
        %3096 = vst [vmem:[%s298 + $0x1d4] sm:$0xf] %v2840
        %3097 = vst [vmem:[%s298 + $0x1d8] sm:$0xf] %v2841
        %3098 = vst [vmem:[%s298 + $0x1dc] sm:$0xf] %v2842
        %3099 = vst [vmem:[%s298 + $0x1e0] sm:$0xf] %v2843
        %3100 = vst [vmem:[%s298 + $0x1e4] sm:$0xf] %v2844
        %3101 = vst [vmem:[%s298 + $0x1e8] sm:$0xf] %v2845
        %3102 = vst [vmem:[%s298 + $0x1ec] sm:$0xf] %v2846
        %3103 = vst [vmem:[%s298 + $0x1f0] sm:$0xf] %v2847
        %3104 = vst [vmem:[%s298 + $0x1f4] sm:$0xf] %v2848
        %3105 = vst [vmem:[%s298 + $0x1f8] sm:$0xf] %v2849
        %3106 = vst [vmem:[%s298 + $0x1fc] sm:$0xf] %v2850
      $region44: #{depth_lstm_forward.8} parent=35 // pred_fallthru
        _
      %s3107 = smul.u32 128, %s20
      %p3108 = scmp.lt.s32.totalorder %s3107, 3839
      %s3109 = scalar_select %p3108, %s3107, 3839
      %p3110 = scmp.lt.s32.totalorder %s21, 0
      %s3111 = scalar_select %p3110, %s21, 0
      %s3112 = sadd.s32 %s3111, %s3109
      %s3113 = smul.addr %s3112, 4
      %s3114 = scalar_lea.vmem %s4, %s3113
      // Predicated region
      $region45: #{depth_lstm_forward.8} parent=35 // pred_check
        %p3115 = pneg %p162
      $region46: #{depth_lstm_forward.8} parent=35 // pred_check_branch
        %3117 = sbr.rel (%p3115) target = $region48
      $region47: #{depth_lstm_forward.8} parent=35 // pred_region
        %s3118 = smul.u32 128, %s20
      $region48: #{depth_lstm_forward.8} parent=35 // pred_fallthru
        _
    $region36: #{depth_lstm_forward.8} parent=5 // pred_fallthru
      _
    %p3119 = scmp.le.s32.totalorder 2, %s10
    // Predicated region
    $region49: #{depth_lstm_forward.8} parent=5 // pred_check
      %p3120 = pneg %p3119
    $region50: #{depth_lstm_forward.8} parent=5 // pred_check_branch
      %3122 = sbr.rel (%p3120) target = $region52
    $region51: #{depth_lstm_forward.8} parent=5 // pred_region
      %s3123 = ssub.s32 %s10, 2
      // Predicated region
      $region53: #{depth_lstm_forward.8} parent=51 // pred_check
        %p3124 = pneg %p168
      $region54: #{depth_lstm_forward.8} parent=51 // pred_check_branch
        %3126 = sbr.rel (%p3124) target = $region56
      $region55: #{depth_lstm_forward.8} parent=51 // pred_region
        %s3127 = smul.u32 128, %s23
        %p3128 = scmp.lt.s32.totalorder %s3127, 3839
        %s3129 = scalar_select %p3128, %s3127, 3839
        %p3130 = scmp.lt.s32.totalorder %s24, 0
        %s3131 = scalar_select %p3130, %s24, 0
        %s3132 = sadd.s32 %s3131, %s3129
        %s3133 = smul.addr %s3132, 4
        %s3134 = scalar_lea.vmem %s4, %s3133
      $region56: #{depth_lstm_forward.8} parent=51 // pred_fallthru
        _
    $region52: #{depth_lstm_forward.8} parent=5 // pred_fallthru
      _
  $region6: #{depth_lstm_forward.8} parent=0 // loop_footer
    %s14 = sadd.s32 1, %s10
  $region7: #{depth_lstm_forward.8} parent=0 // loop_footer_branch
    %9 = sbr.rel target = $region3
  $region8: #{depth_lstm_forward.8} parent=0 // loop_exit
    _

// kernel: depth_lstm_forward.9
$region0: #{depth_lstm_forward.9}
  #allocation0 [shape = 'u32[]', space=smem, size = 0x4, offset = 0x4, fixed_abs, tag = 'smem constant byte address 0x4 - core index']
  #allocation1 [shape = 'u32[144,128]{1,0:T(1,128)}', space=vmem, size = 0x12000, scoped, tag = 'internal scratch']
  #allocation2 [shape = 'f32[1024,128]{1,0:T(8,128)}', space=vmem, size = 0x80000, scoped, tag = 'scratch operand']
  %s0 = inlined_call_operand.vmem [shape: bf16[8192,128], index: 0, kind: input, shape index: {}]
  %s1 = inlined_call_operand.vmem [shape: bf16[128,128], index: 1, kind: input, shape index: {}]
  %s2 = inlined_call_operand.vmem [shape: f32[1,128], index: 2, kind: input, shape index: {}]
  %s3 = inlined_call_operand.vmem [shape: f32[1,128], index: 3, kind: input, shape index: {}]
  %s4 = inlined_call_operand.vmem [shape: bf16[8192,128], index: 4, kind: output, shape index: {}]
  %s5 = sld [smem:[#allocation0]]
  $region57: #{depth_lstm_forward.9} parent=0
    _
  %s7 = ssub.s32 1, %s5
  %s8 = scalar_select 0, %s7, %s5
  loop: start=0, step=1, limit=10
  $region2: #{depth_lstm_forward.9} parent=0 // loop_pre_header
    _
  $region3: #{depth_lstm_forward.9} parent=0 // loop_header
    %s10 = sphi 0, %s14
    %p11 = scmp.ge.s32.totalorder %s10, 10
    %s17 = sphi 0, %s36
    %s18 = sphi 0, %s32
    %s19 = sphi 0, %s28
    %s20 = sphi 0, %s17
    %s21 = sphi 0, %s18
    %s22 = sphi 0, %s19
    %s23 = sphi 0, %s20
    %s24 = sphi 0, %s21
    %s25 = sphi 0, %s22
    %s41 = sphi 0, %s43
    %s44 = sphi 0, %s41
    %s45 = sphi 0, %s44
    %s61 = sphi 0, %s45
    %s69 = sphi 0, %s71
    %s72 = sphi 0, %s69
    %s73 = sphi 0, %s72
    %s89 = sphi 0, %s73
    %s95 = sphi 0, %s97
    %s98 = sphi 0, %s95
    %s99 = sphi 0, %s98
    %s115 = sphi 0, %s99
    %s121 = sphi 0, %s123
    %s124 = sphi 0, %s121
    %s125 = sphi 0, %s124
    %s141 = sphi 0, %s125
    %s149 = sphi 0, %s151
    %s152 = sphi 0, %s149
    %s153 = sphi 0, %s152
    %s169 = sphi 0, %s153
  $region4: #{depth_lstm_forward.9} parent=0 // loop_header_branch
    %13 = sbr.rel (%p11) target = $region8
  $region5: #{depth_lstm_forward.9} parent=0 // loop_body
    %s15 = ssub.s32 %s10, 1
    %s16 = ssub.s32 %s10, 2
    %s26 = sadd.s32 1, %s19
    %p27 = scmp.ge.s32.totalorder %s26, 1
    %s28 = scalar_select %p27, 0, %s26
    %s29 = sadd.s32 1, %s18
    %s30 = scalar_select %p27, %s29, %s18
    %p31 = scmp.ge.s32.totalorder %s30, 1
    %s32 = scalar_select %p31, 0, %s30
    %s33 = sadd.s32 1, %s17
    %s34 = scalar_select %p31, %s33, %s17
    %p35 = scmp.ge.s32.totalorder %s34, 8
    %s36 = scalar_select %p35, 0, %s34
    %s37 = ssub.s32 %s17, %s36
    %s38 = ssub.s32 %s19, %s28
    %s39 = sor.u32 %s37, %s38
    %p40 = scmp.eq.s32.totalorder %s39, 0
    %s42 = sadd.s32 %s41, 1
    %s43 = scalar_select %p40, %s41, %s42
    %p46 = pneg %p40
    %p47 = scmp.eq.s32.totalorder %s10, 7
    %p48 = por %p46, %p47
    %p49 = scmp.ne.s32.totalorder %s41, %s44
    %p50 = scmp.eq.s32.totalorder %s10, 0
    %p51 = por %p49, %p50
    %p52 = scmp.ne.s32.totalorder %s41, %s44
    %p53 = scmp.eq.s32.totalorder %s15, 7
    %p54 = por %p52, %p53
    %p55 = scmp.ne.s32.totalorder %s44, %s45
    %p56 = scmp.eq.s32.totalorder %s15, 0
    %p57 = por %p55, %p56
    %p58 = scmp.ne.s32.totalorder %s44, %s45
    %p59 = scmp.eq.s32.totalorder %s16, 7
    %p60 = por %p58, %p59
    %p62 = scmp.ne.s32.totalorder %s45, %s61
    %p63 = scmp.eq.s32.totalorder %s16, 0
    %p64 = por %p62, %p63
    %s65 = ssub.s32 %s19, %s28
    %s66 = ssub.s32 %s18, %s32
    %s67 = sor.u32 %s65, %s66
    %p68 = scmp.eq.s32.totalorder %s67, 0
    %s70 = sadd.s32 %s69, 1
    %s71 = scalar_select %p68, %s69, %s70
    %p74 = pneg %p68
    %p75 = scmp.eq.s32.totalorder %s10, 7
    %p76 = por %p74, %p75
    %p77 = scmp.ne.s32.totalorder %s69, %s72
    %p78 = scmp.eq.s32.totalorder %s10, 0
    %p79 = por %p77, %p78
    %p80 = scmp.ne.s32.totalorder %s69, %s72
    %p81 = scmp.eq.s32.totalorder %s15, 7
    %p82 = por %p80, %p81
    %p83 = scmp.ne.s32.totalorder %s72, %s73
    %p84 = scmp.eq.s32.totalorder %s15, 0
    %p85 = por %p83, %p84
    %p86 = scmp.ne.s32.totalorder %s72, %s73
    %p87 = scmp.eq.s32.totalorder %s16, 7
    %p88 = por %p86, %p87
    %p90 = scmp.ne.s32.totalorder %s73, %s89
    %p91 = scmp.eq.s32.totalorder %s16, 0
    %p92 = por %p90, %p91
    %s93 = ssub.s32 %s18, %s32
    %p94 = scmp.eq.s32.totalorder %s93, 0
    %s96 = sadd.s32 %s95, 1
    %s97 = scalar_select %p94, %s95, %s96
    %p100 = pneg %p94
    %p101 = scmp.eq.s32.totalorder %s10, 7
    %p102 = por %p100, %p101
    %p103 = scmp.ne.s32.totalorder %s95, %s98
    %p104 = scmp.eq.s32.totalorder %s10, 0
    %p105 = por %p103, %p104
    %p106 = scmp.ne.s32.totalorder %s95, %s98
    %p107 = scmp.eq.s32.totalorder %s15, 7
    %p108 = por %p106, %p107
    %p109 = scmp.ne.s32.totalorder %s98, %s99
    %p110 = scmp.eq.s32.totalorder %s15, 0
    %p111 = por %p109, %p110
    %p112 = scmp.ne.s32.totalorder %s98, %s99
    %p113 = scmp.eq.s32.totalorder %s16, 7
    %p114 = por %p112, %p113
    %p116 = scmp.ne.s32.totalorder %s99, %s115
    %p117 = scmp.eq.s32.totalorder %s16, 0
    %p118 = por %p116, %p117
    %s119 = ssub.s32 %s18, %s32
    %p120 = scmp.eq.s32.totalorder %s119, 0
    %s122 = sadd.s32 %s121, 1
    %s123 = scalar_select %p120, %s121, %s122
    %p126 = pneg %p120
    %p127 = scmp.eq.s32.totalorder %s10, 7
    %p128 = por %p126, %p127
    %p129 = scmp.ne.s32.totalorder %s121, %s124
    %p130 = scmp.eq.s32.totalorder %s10, 0
    %p131 = por %p129, %p130
    %p132 = scmp.ne.s32.totalorder %s121, %s124
    %p133 = scmp.eq.s32.totalorder %s15, 7
    %p134 = por %p132, %p133
    %p135 = scmp.ne.s32.totalorder %s124, %s125
    %p136 = scmp.eq.s32.totalorder %s15, 0
    %p137 = por %p135, %p136
    %p138 = scmp.ne.s32.totalorder %s124, %s125
    %p139 = scmp.eq.s32.totalorder %s16, 7
    %p140 = por %p138, %p139
    %p142 = scmp.ne.s32.totalorder %s125, %s141
    %p143 = scmp.eq.s32.totalorder %s16, 0
    %p144 = por %p142, %p143
    %s145 = ssub.s32 %s17, %s36
    %s146 = ssub.s32 %s18, %s32
    %s147 = sor.u32 %s145, %s146
    %p148 = scmp.eq.s32.totalorder %s147, 0
    %s150 = sadd.s32 %s149, 1
    %s151 = scalar_select %p148, %s149, %s150
    %p154 = pneg %p148
    %p155 = scmp.eq.s32.totalorder %s10, 7
    %p156 = por %p154, %p155
    %p157 = scmp.ne.s32.totalorder %s149, %s152
    %p158 = scmp.eq.s32.totalorder %s10, 0
    %p159 = por %p157, %p158
    %p160 = scmp.ne.s32.totalorder %s149, %s152
    %p161 = scmp.eq.s32.totalorder %s15, 7
    %p162 = por %p160, %p161
    %p163 = scmp.ne.s32.totalorder %s152, %s153
    %p164 = scmp.eq.s32.totalorder %s15, 0
    %p165 = por %p163, %p164
    %p166 = scmp.ne.s32.totalorder %s152, %s153
    %p167 = scmp.eq.s32.totalorder %s16, 7
    %p168 = por %p166, %p167
    %p170 = scmp.ne.s32.totalorder %s153, %s169
    %p171 = scmp.eq.s32.totalorder %s16, 0
    %p172 = por %p170, %p171
    %p173 = scmp.le.s32.totalorder 1, %s10
    %p174 = scmp.lt.s32.totalorder %s10, 9
    %p175 = pnand %p173, %p174
    %p176 = pneg %p175
    // Predicated region
    $region9: #{depth_lstm_forward.9} parent=5 // pred_check
      _
    $region10: #{depth_lstm_forward.9} parent=5 // pred_check_branch
      %178 = sbr.rel (%p175) target = $region12
    $region11: #{depth_lstm_forward.9} parent=5 // pred_region
      %s179 = ssub.s32 %s10, 1
      // Predicated region
      $region13: #{depth_lstm_forward.9} parent=11 // pred_check
        %p180 = pneg %p85
      $region14: #{depth_lstm_forward.9} parent=11 // pred_check_branch
        %182 = sbr.rel (%p180) target = $region16
      $region15: #{depth_lstm_forward.9} parent=11 // pred_region
        %s183 = smul.u32 16, %s22
        %p184 = scmp.lt.s32.totalorder %s183, 15
        %s185 = scalar_select %p184, %s183, 15
        %p186 = scmp.lt.s32.totalorder %s21, 0
        %s187 = scalar_select %p186, %s21, 0
        %s188 = sadd.s32 %s187, %s185
        %s189 = smul.addr %s188, 4
        %s190 = scalar_lea.vmem %s1, %s189
        %s191 = smul.u32 16, %s22
      $region16: #{depth_lstm_forward.9} parent=11 // pred_fallthru
        _
      // Predicated region
      $region17: #{depth_lstm_forward.9} parent=11 // pred_check
        %p192 = pneg %p111
      $region18: #{depth_lstm_forward.9} parent=11 // pred_check_branch
        %194 = sbr.rel (%p192) target = $region20
      $region19: #{depth_lstm_forward.9} parent=11 // pred_region
        %p195 = scmp.lt.s32.totalorder %s21, 0
        %s196 = scalar_select %p195, %s21, 0
        %s197 = scalar_lea.vmem %s2, %s196
      $region20: #{depth_lstm_forward.9} parent=11 // pred_fallthru
        _
      // Predicated region
      $region21: #{depth_lstm_forward.9} parent=11 // pred_check
        %p198 = pneg %p137
      $region22: #{depth_lstm_forward.9} parent=11 // pred_check_branch
        %200 = sbr.rel (%p198) target = $region24
      $region23: #{depth_lstm_forward.9} parent=11 // pred_region
        %p201 = scmp.lt.s32.totalorder %s21, 0
        %s202 = scalar_select %p201, %s21, 0
        %s203 = scalar_lea.vmem %s3, %s202
      $region24: #{depth_lstm_forward.9} parent=11 // pred_fallthru
        _
    $region12: #{depth_lstm_forward.9} parent=5 // pred_fallthru
      _
    %p204 = scmp.lt.s32.totalorder %s10, 8
    // Predicated region
    $region25: #{depth_lstm_forward.9} parent=5 // pred_check
      %p205 = pneg %p204
    $region26: #{depth_lstm_forward.9} parent=5 // pred_check_branch
      %207 = sbr.rel (%p205) target = $region28
    $region27: #{depth_lstm_forward.9} parent=5 // pred_region
      // Predicated region
      $region29: #{depth_lstm_forward.9} parent=27 // pred_check
        %p208 = pneg %p51
      $region30: #{depth_lstm_forward.9} parent=27 // pred_check_branch
        %210 = sbr.rel (%p208) target = $region32
      $region31: #{depth_lstm_forward.9} parent=27 // pred_region
        %s211 = smul.u32 128, %s17
        %p212 = scmp.lt.s32.totalorder %s211, 1023
        %s213 = scalar_select %p212, %s211, 1023
        %p214 = scmp.lt.s32.totalorder %s19, 0
        %s215 = scalar_select %p214, %s19, 0
        %s216 = sadd.s32 %s215, %s213
        %s217 = smul.addr %s216, 4
        %s218 = scalar_lea.vmem %s0, %s217
        %s219 = smul.u32 128, %s17
      $region32: #{depth_lstm_forward.9} parent=27 // pred_fallthru
        _
    $region28: #{depth_lstm_forward.9} parent=5 // pred_fallthru
      _
    %p220 = scmp.le.s32.totalorder 1, %s10
    %p221 = scmp.lt.s32.totalorder %s10, 9
    %p222 = pnand %p220, %p221
    %p223 = pneg %p222
    // Predicated region
    $region33: #{depth_lstm_forward.9} parent=5 // pred_check
      _
    $region34: #{depth_lstm_forward.9} parent=5 // pred_check_branch
      %225 = sbr.rel (%p222) target = $region36
    $region35: #{depth_lstm_forward.9} parent=5 // pred_region
      %s226 = ssub.s32 %s10, 1
      %s227 = smul.u32 128, %s20
      %p228 = scmp.lt.s32.totalorder %s227, 1023
      %s229 = scalar_select %p228, %s227, 1023
      %p230 = scmp.lt.s32.totalorder %s22, 0
      %s231 = scalar_select %p230, %s22, 0
      %s232 = sadd.s32 %s231, %s229
      %s233 = smul.addr %s232, 4
      %s234 = scalar_lea.vmem %s0, %s233
      %p235 = pneg %p57
      %p236 = pneg %p54
      %s237 = smul.u32 16, %s22
      %p238 = scmp.lt.s32.totalorder %s237, 15
      %s239 = scalar_select %p238, %s237, 15
      %p240 = scmp.lt.s32.totalorder %s21, 0
      %s241 = scalar_select %p240, %s21, 0
      %s242 = sadd.s32 %s241, %s239
      %s243 = smul.addr %s242, 4
      %s244 = scalar_lea.vmem %s1, %s243
      %p245 = pneg %p85
      %p246 = pneg %p82
      %p247 = scmp.lt.s32.totalorder %s21, 0
      %s248 = scalar_select %p247, %s21, 0
      %s249 = scalar_lea.vmem %s2, %s248
      %p250 = pneg %p111
      %p251 = pneg %p108
      %p252 = scmp.lt.s32.totalorder %s21, 0
      %s253 = scalar_select %p252, %s21, 0
      %s254 = scalar_lea.vmem %s3, %s253
      %p255 = pneg %p137
      %p256 = pneg %p134
      %p257 = pneg %p165
      %p258 = pneg %p162
      %s259 = smul.u32 128, %s20
      %p260 = scmp.lt.s32.totalorder %s259, 1023
      %s261 = scalar_select %p260, %s259, 1023
      %p262 = scmp.lt.s32.totalorder %s21, 0
      %s263 = scalar_select %p262, %s21, 0
      %s264 = sadd.s32 %s263, %s261
      %s265 = smul.addr %s264, 4
      %s266 = scalar_lea.vmem %s4, %s265
      %s267 = smul.u32 128, %s20
      %p268 = scmp.lt.s32.totalorder %s267, 1023
      %s269 = scalar_select %p268, %s267, 1023
      %p270 = scmp.lt.s32.totalorder %s22, 0
      %s271 = scalar_select %p270, %s22, 0
      %s272 = sadd.s32 %s271, %s269
      %s273 = smul.addr %s272, 4
      %s274 = scalar_lea.vmem %s0, %s273
      %s275 = smul.u32 128, %s20
      %s276 = smul.u32 16, %s22
      %p277 = scmp.lt.s32.totalorder %s276, 15
      %s278 = scalar_select %p277, %s276, 15
      %p279 = scmp.lt.s32.totalorder %s21, 0
      %s280 = scalar_select %p279, %s21, 0
      %s281 = sadd.s32 %s280, %s278
      %s282 = smul.addr %s281, 4
      %s283 = scalar_lea.vmem %s1, %s282
      %s284 = smul.u32 16, %s22
      %p285 = scmp.lt.s32.totalorder %s21, 0
      %s286 = scalar_select %p285, %s21, 0
      %s287 = scalar_lea.vmem %s2, %s286
      %p288 = scmp.lt.s32.totalorder %s21, 0
      %s289 = scalar_select %p288, %s21, 0
      %s290 = scalar_lea.vmem %s3, %s289
      %s291 = smul.u32 128, %s20
      %p292 = scmp.lt.s32.totalorder %s291, 1023
      %s293 = scalar_select %p292, %s291, 1023
      %p294 = scmp.lt.s32.totalorder %s21, 0
      %s295 = scalar_select %p294, %s21, 0
      %s296 = sadd.s32 %s295, %s293
      %s297 = smul.addr %s296, 4
      %s298 = scalar_lea.vmem %s4, %s297
      %s299 = smul.u32 128, %s20
      %p301 = scmp.eq.s32.totalorder %s22, 0
      // Predicated region
      $region37: #{depth_lstm_forward.9} parent=35 // pred_check
        %p302 = pneg %p301
      $region38: #{depth_lstm_forward.9} parent=35 // pred_check_branch
        %304 = sbr.rel (%p302) target = $region40
      $region39: #{depth_lstm_forward.9} parent=35 // pred_region
        %305 = vst [vmem:[#allocation2] sm:$0xff] 0.0
        %306 = vst [vmem:[#allocation2 + $0x8] sm:$0xff] 0.0
        %307 = vst [vmem:[#allocation2 + $0x10] sm:$0xff] 0.0
        %308 = vst [vmem:[#allocation2 + $0x18] sm:$0xff] 0.0
        %309 = vst [vmem:[#allocation2 + $0x20] sm:$0xff] 0.0
        %310 = vst [vmem:[#allocation2 + $0x28] sm:$0xff] 0.0
        %311 = vst [vmem:[#allocation2 + $0x30] sm:$0xff] 0.0
        %312 = vst [vmem:[#allocation2 + $0x38] sm:$0xff] 0.0
        %313 = vst [vmem:[#allocation2 + $0x40] sm:$0xff] 0.0
        %314 = vst [vmem:[#allocation2 + $0x48] sm:$0xff] 0.0
        %315 = vst [vmem:[#allocation2 + $0x50] sm:$0xff] 0.0
        %316 = vst [vmem:[#allocation2 + $0x58] sm:$0xff] 0.0
        %317 = vst [vmem:[#allocation2 + $0x60] sm:$0xff] 0.0
        %318 = vst [vmem:[#allocation2 + $0x68] sm:$0xff] 0.0
        %319 = vst [vmem:[#allocation2 + $0x70] sm:$0xff] 0.0
        %320 = vst [vmem:[#allocation2 + $0x78] sm:$0xff] 0.0
        %321 = vst [vmem:[#allocation2 + $0x80] sm:$0xff] 0.0
        %322 = vst [vmem:[#allocation2 + $0x88] sm:$0xff] 0.0
        %323 = vst [vmem:[#allocation2 + $0x90] sm:$0xff] 0.0
        %324 = vst [vmem:[#allocation2 + $0x98] sm:$0xff] 0.0
        %325 = vst [vmem:[#allocation2 + $0xa0] sm:$0xff] 0.0
        %326 = vst [vmem:[#allocation2 + $0xa8] sm:$0xff] 0.0
        %327 = vst [vmem:[#allocation2 + $0xb0] sm:$0xff] 0.0
        %328 = vst [vmem:[#allocation2 + $0xb8] sm:$0xff] 0.0
        %329 = vst [vmem:[#allocation2 + $0xc0] sm:$0xff] 0.0
        %330 = vst [vmem:[#allocation2 + $0xc8] sm:$0xff] 0.0
        %331 = vst [vmem:[#allocation2 + $0xd0] sm:$0xff] 0.0
        %332 = vst [vmem:[#allocation2 + $0xd8] sm:$0xff] 0.0
        %333 = vst [vmem:[#allocation2 + $0xe0] sm:$0xff] 0.0
        %334 = vst [vmem:[#allocation2 + $0xe8] sm:$0xff] 0.0
        %335 = vst [vmem:[#allocation2 + $0xf0] sm:$0xff] 0.0
        %336 = vst [vmem:[#allocation2 + $0xf8] sm:$0xff] 0.0
        %337 = vst [vmem:[#allocation2 + $0x100] sm:$0xff] 0.0
        %338 = vst [vmem:[#allocation2 + $0x108] sm:$0xff] 0.0
        %339 = vst [vmem:[#allocation2 + $0x110] sm:$0xff] 0.0
        %340 = vst [vmem:[#allocation2 + $0x118] sm:$0xff] 0.0
        %341 = vst [vmem:[#allocation2 + $0x120] sm:$0xff] 0.0
        %342 = vst [vmem:[#allocation2 + $0x128] sm:$0xff] 0.0
        %343 = vst [vmem:[#allocation2 + $0x130] sm:$0xff] 0.0
        %344 = vst [vmem:[#allocation2 + $0x138] sm:$0xff] 0.0
        %345 = vst [vmem:[#allocation2 + $0x140] sm:$0xff] 0.0
        %346 = vst [vmem:[#allocation2 + $0x148] sm:$0xff] 0.0
        %347 = vst [vmem:[#allocation2 + $0x150] sm:$0xff] 0.0
        %348 = vst [vmem:[#allocation2 + $0x158] sm:$0xff] 0.0
        %349 = vst [vmem:[#allocation2 + $0x160] sm:$0xff] 0.0
        %350 = vst [vmem:[#allocation2 + $0x168] sm:$0xff] 0.0
        %351 = vst [vmem:[#allocation2 + $0x170] sm:$0xff] 0.0
        %352 = vst [vmem:[#allocation2 + $0x178] sm:$0xff] 0.0
        %353 = vst [vmem:[#allocation2 + $0x180] sm:$0xff] 0.0
        %354 = vst [vmem:[#allocation2 + $0x188] sm:$0xff] 0.0
        %355 = vst [vmem:[#allocation2 + $0x190] sm:$0xff] 0.0
        %356 = vst [vmem:[#allocation2 + $0x198] sm:$0xff] 0.0
        %357 = vst [vmem:[#allocation2 + $0x1a0] sm:$0xff] 0.0
        %358 = vst [vmem:[#allocation2 + $0x1a8] sm:$0xff] 0.0
        %359 = vst [vmem:[#allocation2 + $0x1b0] sm:$0xff] 0.0
        %360 = vst [vmem:[#allocation2 + $0x1b8] sm:$0xff] 0.0
        %361 = vst [vmem:[#allocation2 + $0x1c0] sm:$0xff] 0.0
        %362 = vst [vmem:[#allocation2 + $0x1c8] sm:$0xff] 0.0
        %363 = vst [vmem:[#allocation2 + $0x1d0] sm:$0xff] 0.0
        %364 = vst [vmem:[#allocation2 + $0x1d8] sm:$0xff] 0.0
        %365 = vst [vmem:[#allocation2 + $0x1e0] sm:$0xff] 0.0
        %366 = vst [vmem:[#allocation2 + $0x1e8] sm:$0xff] 0.0
        %367 = vst [vmem:[#allocation2 + $0x1f0] sm:$0xff] 0.0
        %368 = vst [vmem:[#allocation2 + $0x1f8] sm:$0xff] 0.0
        %369 = vst [vmem:[#allocation2 + $0x200] sm:$0xff] 0.0
        %370 = vst [vmem:[#allocation2 + $0x208] sm:$0xff] 0.0
        %371 = vst [vmem:[#allocation2 + $0x210] sm:$0xff] 0.0
        %372 = vst [vmem:[#allocation2 + $0x218] sm:$0xff] 0.0
        %373 = vst [vmem:[#allocation2 + $0x220] sm:$0xff] 0.0
        %374 = vst [vmem:[#allocation2 + $0x228] sm:$0xff] 0.0
        %375 = vst [vmem:[#allocation2 + $0x230] sm:$0xff] 0.0
        %376 = vst [vmem:[#allocation2 + $0x238] sm:$0xff] 0.0
        %377 = vst [vmem:[#allocation2 + $0x240] sm:$0xff] 0.0
        %378 = vst [vmem:[#allocation2 + $0x248] sm:$0xff] 0.0
        %379 = vst [vmem:[#allocation2 + $0x250] sm:$0xff] 0.0
        %380 = vst [vmem:[#allocation2 + $0x258] sm:$0xff] 0.0
        %381 = vst [vmem:[#allocation2 + $0x260] sm:$0xff] 0.0
        %382 = vst [vmem:[#allocation2 + $0x268] sm:$0xff] 0.0
        %383 = vst [vmem:[#allocation2 + $0x270] sm:$0xff] 0.0
        %384 = vst [vmem:[#allocation2 + $0x278] sm:$0xff] 0.0
        %385 = vst [vmem:[#allocation2 + $0x280] sm:$0xff] 0.0
        %386 = vst [vmem:[#allocation2 + $0x288] sm:$0xff] 0.0
        %387 = vst [vmem:[#allocation2 + $0x290] sm:$0xff] 0.0
        %388 = vst [vmem:[#allocation2 + $0x298] sm:$0xff] 0.0
        %389 = vst [vmem:[#allocation2 + $0x2a0] sm:$0xff] 0.0
        %390 = vst [vmem:[#allocation2 + $0x2a8] sm:$0xff] 0.0
        %391 = vst [vmem:[#allocation2 + $0x2b0] sm:$0xff] 0.0
        %392 = vst [vmem:[#allocation2 + $0x2b8] sm:$0xff] 0.0
        %393 = vst [vmem:[#allocation2 + $0x2c0] sm:$0xff] 0.0
        %394 = vst [vmem:[#allocation2 + $0x2c8] sm:$0xff] 0.0
        %395 = vst [vmem:[#allocation2 + $0x2d0] sm:$0xff] 0.0
        %396 = vst [vmem:[#allocation2 + $0x2d8] sm:$0xff] 0.0
        %397 = vst [vmem:[#allocation2 + $0x2e0] sm:$0xff] 0.0
        %398 = vst [vmem:[#allocation2 + $0x2e8] sm:$0xff] 0.0
        %399 = vst [vmem:[#allocation2 + $0x2f0] sm:$0xff] 0.0
        %400 = vst [vmem:[#allocation2 + $0x2f8] sm:$0xff] 0.0
        %401 = vst [vmem:[#allocation2 + $0x300] sm:$0xff] 0.0
        %402 = vst [vmem:[#allocation2 + $0x308] sm:$0xff] 0.0
        %403 = vst [vmem:[#allocation2 + $0x310] sm:$0xff] 0.0
        %404 = vst [vmem:[#allocation2 + $0x318] sm:$0xff] 0.0
        %405 = vst [vmem:[#allocation2 + $0x320] sm:$0xff] 0.0
        %406 = vst [vmem:[#allocation2 + $0x328] sm:$0xff] 0.0
        %407 = vst [vmem:[#allocation2 + $0x330] sm:$0xff] 0.0
        %408 = vst [vmem:[#allocation2 + $0x338] sm:$0xff] 0.0
        %409 = vst [vmem:[#allocation2 + $0x340] sm:$0xff] 0.0
        %410 = vst [vmem:[#allocation2 + $0x348] sm:$0xff] 0.0
        %411 = vst [vmem:[#allocation2 + $0x350] sm:$0xff] 0.0
        %412 = vst [vmem:[#allocation2 + $0x358] sm:$0xff] 0.0
        %413 = vst [vmem:[#allocation2 + $0x360] sm:$0xff] 0.0
        %414 = vst [vmem:[#allocation2 + $0x368] sm:$0xff] 0.0
        %415 = vst [vmem:[#allocation2 + $0x370] sm:$0xff] 0.0
        %416 = vst [vmem:[#allocation2 + $0x378] sm:$0xff] 0.0
        %417 = vst [vmem:[#allocation2 + $0x380] sm:$0xff] 0.0
        %418 = vst [vmem:[#allocation2 + $0x388] sm:$0xff] 0.0
        %419 = vst [vmem:[#allocation2 + $0x390] sm:$0xff] 0.0
        %420 = vst [vmem:[#allocation2 + $0x398] sm:$0xff] 0.0
        %421 = vst [vmem:[#allocation2 + $0x3a0] sm:$0xff] 0.0
        %422 = vst [vmem:[#allocation2 + $0x3a8] sm:$0xff] 0.0
        %423 = vst [vmem:[#allocation2 + $0x3b0] sm:$0xff] 0.0
        %424 = vst [vmem:[#allocation2 + $0x3b8] sm:$0xff] 0.0
        %425 = vst [vmem:[#allocation2 + $0x3c0] sm:$0xff] 0.0
        %426 = vst [vmem:[#allocation2 + $0x3c8] sm:$0xff] 0.0
        %427 = vst [vmem:[#allocation2 + $0x3d0] sm:$0xff] 0.0
        %428 = vst [vmem:[#allocation2 + $0x3d8] sm:$0xff] 0.0
        %429 = vst [vmem:[#allocation2 + $0x3e0] sm:$0xff] 0.0
        %430 = vst [vmem:[#allocation2 + $0x3e8] sm:$0xff] 0.0
        %431 = vst [vmem:[#allocation2 + $0x3f0] sm:$0xff] 0.0
        %432 = vst [vmem:[#allocation2 + $0x3f8] sm:$0xff] 0.0
      $region40: #{depth_lstm_forward.9} parent=35 // pred_fallthru
        _
      %v433 = vld [vmem:[#allocation2] sm:$0xff]
      %v434 = vld [vmem:[#allocation2 + $0x8] sm:$0xff]
      %v435 = vld [vmem:[#allocation2 + $0x10] sm:$0xff]
      %v436 = vld [vmem:[#allocation2 + $0x18] sm:$0xff]
      %v437 = vld [vmem:[#allocation2 + $0x20] sm:$0xff]
      %v438 = vld [vmem:[#allocation2 + $0x28] sm:$0xff]
      %v439 = vld [vmem:[#allocation2 + $0x30] sm:$0xff]
      %v440 = vld [vmem:[#allocation2 + $0x38] sm:$0xff]
      %v441 = vld [vmem:[#allocation2 + $0x40] sm:$0xff]
      %v442 = vld [vmem:[#allocation2 + $0x48] sm:$0xff]
      %v443 = vld [vmem:[#allocation2 + $0x50] sm:$0xff]
      %v444 = vld [vmem:[#allocation2 + $0x58] sm:$0xff]
      %v445 = vld [vmem:[#allocation2 + $0x60] sm:$0xff]
      %v446 = vld [vmem:[#allocation2 + $0x68] sm:$0xff]
      %v447 = vld [vmem:[#allocation2 + $0x70] sm:$0xff]
      %v448 = vld [vmem:[#allocation2 + $0x78] sm:$0xff]
      %v449 = vld [vmem:[#allocation2 + $0x80] sm:$0xff]
      %v450 = vld [vmem:[#allocation2 + $0x88] sm:$0xff]
      %v451 = vld [vmem:[#allocation2 + $0x90] sm:$0xff]
      %v452 = vld [vmem:[#allocation2 + $0x98] sm:$0xff]
      %v453 = vld [vmem:[#allocation2 + $0xa0] sm:$0xff]
      %v454 = vld [vmem:[#allocation2 + $0xa8] sm:$0xff]
      %v455 = vld [vmem:[#allocation2 + $0xb0] sm:$0xff]
      %v456 = vld [vmem:[#allocation2 + $0xb8] sm:$0xff]
      %v457 = vld [vmem:[#allocation2 + $0xc0] sm:$0xff]
      %v458 = vld [vmem:[#allocation2 + $0xc8] sm:$0xff]
      %v459 = vld [vmem:[#allocation2 + $0xd0] sm:$0xff]
      %v460 = vld [vmem:[#allocation2 + $0xd8] sm:$0xff]
      %v461 = vld [vmem:[#allocation2 + $0xe0] sm:$0xff]
      %v462 = vld [vmem:[#allocation2 + $0xe8] sm:$0xff]
      %v463 = vld [vmem:[#allocation2 + $0xf0] sm:$0xff]
      %v464 = vld [vmem:[#allocation2 + $0xf8] sm:$0xff]
      %v465 = vld [vmem:[#allocation2 + $0x100] sm:$0xff]
      %v466 = vld [vmem:[#allocation2 + $0x108] sm:$0xff]
      %v467 = vld [vmem:[#allocation2 + $0x110] sm:$0xff]
      %v468 = vld [vmem:[#allocation2 + $0x118] sm:$0xff]
      %v469 = vld [vmem:[#allocation2 + $0x120] sm:$0xff]
      %v470 = vld [vmem:[#allocation2 + $0x128] sm:$0xff]
      %v471 = vld [vmem:[#allocation2 + $0x130] sm:$0xff]
      %v472 = vld [vmem:[#allocation2 + $0x138] sm:$0xff]
      %v473 = vld [vmem:[#allocation2 + $0x140] sm:$0xff]
      %v474 = vld [vmem:[#allocation2 + $0x148] sm:$0xff]
      %v475 = vld [vmem:[#allocation2 + $0x150] sm:$0xff]
      %v476 = vld [vmem:[#allocation2 + $0x158] sm:$0xff]
      %v477 = vld [vmem:[#allocation2 + $0x160] sm:$0xff]
      %v478 = vld [vmem:[#allocation2 + $0x168] sm:$0xff]
      %v479 = vld [vmem:[#allocation2 + $0x170] sm:$0xff]
      %v480 = vld [vmem:[#allocation2 + $0x178] sm:$0xff]
      %v481 = vld [vmem:[#allocation2 + $0x180] sm:$0xff]
      %v482 = vld [vmem:[#allocation2 + $0x188] sm:$0xff]
      %v483 = vld [vmem:[#allocation2 + $0x190] sm:$0xff]
      %v484 = vld [vmem:[#allocation2 + $0x198] sm:$0xff]
      %v485 = vld [vmem:[#allocation2 + $0x1a0] sm:$0xff]
      %v486 = vld [vmem:[#allocation2 + $0x1a8] sm:$0xff]
      %v487 = vld [vmem:[#allocation2 + $0x1b0] sm:$0xff]
      %v488 = vld [vmem:[#allocation2 + $0x1b8] sm:$0xff]
      %v489 = vld [vmem:[#allocation2 + $0x1c0] sm:$0xff]
      %v490 = vld [vmem:[#allocation2 + $0x1c8] sm:$0xff]
      %v491 = vld [vmem:[#allocation2 + $0x1d0] sm:$0xff]
      %v492 = vld [vmem:[#allocation2 + $0x1d8] sm:$0xff]
      %v493 = vld [vmem:[#allocation2 + $0x1e0] sm:$0xff]
      %v494 = vld [vmem:[#allocation2 + $0x1e8] sm:$0xff]
      %v495 = vld [vmem:[#allocation2 + $0x1f0] sm:$0xff]
      %v496 = vld [vmem:[#allocation2 + $0x1f8] sm:$0xff]
      %v497 = vld [vmem:[#allocation2 + $0x200] sm:$0xff]
      %v498 = vld [vmem:[#allocation2 + $0x208] sm:$0xff]
      %v499 = vld [vmem:[#allocation2 + $0x210] sm:$0xff]
      %v500 = vld [vmem:[#allocation2 + $0x218] sm:$0xff]
      %v501 = vld [vmem:[#allocation2 + $0x220] sm:$0xff]
      %v502 = vld [vmem:[#allocation2 + $0x228] sm:$0xff]
      %v503 = vld [vmem:[#allocation2 + $0x230] sm:$0xff]
      %v504 = vld [vmem:[#allocation2 + $0x238] sm:$0xff]
      %v505 = vld [vmem:[#allocation2 + $0x240] sm:$0xff]
      %v506 = vld [vmem:[#allocation2 + $0x248] sm:$0xff]
      %v507 = vld [vmem:[#allocation2 + $0x250] sm:$0xff]
      %v508 = vld [vmem:[#allocation2 + $0x258] sm:$0xff]
      %v509 = vld [vmem:[#allocation2 + $0x260] sm:$0xff]
      %v510 = vld [vmem:[#allocation2 + $0x268] sm:$0xff]
      %v511 = vld [vmem:[#allocation2 + $0x270] sm:$0xff]
      %v512 = vld [vmem:[#allocation2 + $0x278] sm:$0xff]
      %v513 = vld [vmem:[#allocation2 + $0x280] sm:$0xff]
      %v514 = vld [vmem:[#allocation2 + $0x288] sm:$0xff]
      %v515 = vld [vmem:[#allocation2 + $0x290] sm:$0xff]
      %v516 = vld [vmem:[#allocation2 + $0x298] sm:$0xff]
      %v517 = vld [vmem:[#allocation2 + $0x2a0] sm:$0xff]
      %v518 = vld [vmem:[#allocation2 + $0x2a8] sm:$0xff]
      %v519 = vld [vmem:[#allocation2 + $0x2b0] sm:$0xff]
      %v520 = vld [vmem:[#allocation2 + $0x2b8] sm:$0xff]
      %v521 = vld [vmem:[#allocation2 + $0x2c0] sm:$0xff]
      %v522 = vld [vmem:[#allocation2 + $0x2c8] sm:$0xff]
      %v523 = vld [vmem:[#allocation2 + $0x2d0] sm:$0xff]
      %v524 = vld [vmem:[#allocation2 + $0x2d8] sm:$0xff]
      %v525 = vld [vmem:[#allocation2 + $0x2e0] sm:$0xff]
      %v526 = vld [vmem:[#allocation2 + $0x2e8] sm:$0xff]
      %v527 = vld [vmem:[#allocation2 + $0x2f0] sm:$0xff]
      %v528 = vld [vmem:[#allocation2 + $0x2f8] sm:$0xff]
      %v529 = vld [vmem:[#allocation2 + $0x300] sm:$0xff]
      %v530 = vld [vmem:[#allocation2 + $0x308] sm:$0xff]
      %v531 = vld [vmem:[#allocation2 + $0x310] sm:$0xff]
      %v532 = vld [vmem:[#allocation2 + $0x318] sm:$0xff]
      %v533 = vld [vmem:[#allocation2 + $0x320] sm:$0xff]
      %v534 = vld [vmem:[#allocation2 + $0x328] sm:$0xff]
      %v535 = vld [vmem:[#allocation2 + $0x330] sm:$0xff]
      %v536 = vld [vmem:[#allocation2 + $0x338] sm:$0xff]
      %v537 = vld [vmem:[#allocation2 + $0x340] sm:$0xff]
      %v538 = vld [vmem:[#allocation2 + $0x348] sm:$0xff]
      %v539 = vld [vmem:[#allocation2 + $0x350] sm:$0xff]
      %v540 = vld [vmem:[#allocation2 + $0x358] sm:$0xff]
      %v541 = vld [vmem:[#allocation2 + $0x360] sm:$0xff]
      %v542 = vld [vmem:[#allocation2 + $0x368] sm:$0xff]
      %v543 = vld [vmem:[#allocation2 + $0x370] sm:$0xff]
      %v544 = vld [vmem:[#allocation2 + $0x378] sm:$0xff]
      %v545 = vld [vmem:[#allocation2 + $0x380] sm:$0xff]
      %v546 = vld [vmem:[#allocation2 + $0x388] sm:$0xff]
      %v547 = vld [vmem:[#allocation2 + $0x390] sm:$0xff]
      %v548 = vld [vmem:[#allocation2 + $0x398] sm:$0xff]
      %v549 = vld [vmem:[#allocation2 + $0x3a0] sm:$0xff]
      %v550 = vld [vmem:[#allocation2 + $0x3a8] sm:$0xff]
      %v551 = vld [vmem:[#allocation2 + $0x3b0] sm:$0xff]
      %v552 = vld [vmem:[#allocation2 + $0x3b8] sm:$0xff]
      %v553 = vld [vmem:[#allocation2 + $0x3c0] sm:$0xff]
      %v554 = vld [vmem:[#allocation2 + $0x3c8] sm:$0xff]
      %v555 = vld [vmem:[#allocation2 + $0x3d0] sm:$0xff]
      %v556 = vld [vmem:[#allocation2 + $0x3d8] sm:$0xff]
      %v557 = vld [vmem:[#allocation2 + $0x3e0] sm:$0xff]
      %v558 = vld [vmem:[#allocation2 + $0x3e8] sm:$0xff]
      %v559 = vld [vmem:[#allocation2 + $0x3f0] sm:$0xff]
      %v560 = vld [vmem:[#allocation2 + $0x3f8] sm:$0xff]
      %v561 = vld [vmem:[%s274] sm:$0xf]
      %v562 = vld [vmem:[%s274 + $0x4] sm:$0xf]
      %v563 = vld [vmem:[%s274 + $0x8] sm:$0xf]
      %v564 = vld [vmem:[%s274 + $0xc] sm:$0xf]
      %v565 = vld [vmem:[%s274 + $0x10] sm:$0xf]
      %v566 = vld [vmem:[%s274 + $0x14] sm:$0xf]
      %v567 = vld [vmem:[%s274 + $0x18] sm:$0xf]
      %v568 = vld [vmem:[%s274 + $0x1c] sm:$0xf]
      %v569 = vld [vmem:[%s274 + $0x20] sm:$0xf]
      %v570 = vld [vmem:[%s274 + $0x24] sm:$0xf]
      %v571 = vld [vmem:[%s274 + $0x28] sm:$0xf]
      %v572 = vld [vmem:[%s274 + $0x2c] sm:$0xf]
      %v573 = vld [vmem:[%s274 + $0x30] sm:$0xf]
      %v574 = vld [vmem:[%s274 + $0x34] sm:$0xf]
      %v575 = vld [vmem:[%s274 + $0x38] sm:$0xf]
      %v576 = vld [vmem:[%s274 + $0x3c] sm:$0xf]
      %v577 = vld [vmem:[%s274 + $0x40] sm:$0xf]
      %v578 = vld [vmem:[%s274 + $0x44] sm:$0xf]
      %v579 = vld [vmem:[%s274 + $0x48] sm:$0xf]
      %v580 = vld [vmem:[%s274 + $0x4c] sm:$0xf]
      %v581 = vld [vmem:[%s274 + $0x50] sm:$0xf]
      %v582 = vld [vmem:[%s274 + $0x54] sm:$0xf]
      %v583 = vld [vmem:[%s274 + $0x58] sm:$0xf]
      %v584 = vld [vmem:[%s274 + $0x5c] sm:$0xf]
      %v585 = vld [vmem:[%s274 + $0x60] sm:$0xf]
      %v586 = vld [vmem:[%s274 + $0x64] sm:$0xf]
      %v587 = vld [vmem:[%s274 + $0x68] sm:$0xf]
      %v588 = vld [vmem:[%s274 + $0x6c] sm:$0xf]
      %v589 = vld [vmem:[%s274 + $0x70] sm:$0xf]
      %v590 = vld [vmem:[%s274 + $0x74] sm:$0xf]
      %v591 = vld [vmem:[%s274 + $0x78] sm:$0xf]
      %v592 = vld [vmem:[%s274 + $0x7c] sm:$0xf]
      %v593 = vld [vmem:[%s274 + $0x80] sm:$0xf]
      %v594 = vld [vmem:[%s274 + $0x84] sm:$0xf]
      %v595 = vld [vmem:[%s274 + $0x88] sm:$0xf]
      %v596 = vld [vmem:[%s274 + $0x8c] sm:$0xf]
      %v597 = vld [vmem:[%s274 + $0x90] sm:$0xf]
      %v598 = vld [vmem:[%s274 + $0x94] sm:$0xf]
      %v599 = vld [vmem:[%s274 + $0x98] sm:$0xf]
      %v600 = vld [vmem:[%s274 + $0x9c] sm:$0xf]
      %v601 = vld [vmem:[%s274 + $0xa0] sm:$0xf]
      %v602 = vld [vmem:[%s274 + $0xa4] sm:$0xf]
      %v603 = vld [vmem:[%s274 + $0xa8] sm:$0xf]
      %v604 = vld [vmem:[%s274 + $0xac] sm:$0xf]
      %v605 = vld [vmem:[%s274 + $0xb0] sm:$0xf]
      %v606 = vld [vmem:[%s274 + $0xb4] sm:$0xf]
      %v607 = vld [vmem:[%s274 + $0xb8] sm:$0xf]
      %v608 = vld [vmem:[%s274 + $0xbc] sm:$0xf]
      %v609 = vld [vmem:[%s274 + $0xc0] sm:$0xf]
      %v610 = vld [vmem:[%s274 + $0xc4] sm:$0xf]
      %v611 = vld [vmem:[%s274 + $0xc8] sm:$0xf]
      %v612 = vld [vmem:[%s274 + $0xcc] sm:$0xf]
      %v613 = vld [vmem:[%s274 + $0xd0] sm:$0xf]
      %v614 = vld [vmem:[%s274 + $0xd4] sm:$0xf]
      %v615 = vld [vmem:[%s274 + $0xd8] sm:$0xf]
      %v616 = vld [vmem:[%s274 + $0xdc] sm:$0xf]
      %v617 = vld [vmem:[%s274 + $0xe0] sm:$0xf]
      %v618 = vld [vmem:[%s274 + $0xe4] sm:$0xf]
      %v619 = vld [vmem:[%s274 + $0xe8] sm:$0xf]
      %v620 = vld [vmem:[%s274 + $0xec] sm:$0xf]
      %v621 = vld [vmem:[%s274 + $0xf0] sm:$0xf]
      %v622 = vld [vmem:[%s274 + $0xf4] sm:$0xf]
      %v623 = vld [vmem:[%s274 + $0xf8] sm:$0xf]
      %v624 = vld [vmem:[%s274 + $0xfc] sm:$0xf]
      %v625 = vld [vmem:[%s274 + $0x100] sm:$0xf]
      %v626 = vld [vmem:[%s274 + $0x104] sm:$0xf]
      %v627 = vld [vmem:[%s274 + $0x108] sm:$0xf]
      %v628 = vld [vmem:[%s274 + $0x10c] sm:$0xf]
      %v629 = vld [vmem:[%s274 + $0x110] sm:$0xf]
      %v630 = vld [vmem:[%s274 + $0x114] sm:$0xf]
      %v631 = vld [vmem:[%s274 + $0x118] sm:$0xf]
      %v632 = vld [vmem:[%s274 + $0x11c] sm:$0xf]
      %v633 = vld [vmem:[%s274 + $0x120] sm:$0xf]
      %v634 = vld [vmem:[%s274 + $0x124] sm:$0xf]
      %v635 = vld [vmem:[%s274 + $0x128] sm:$0xf]
      %v636 = vld [vmem:[%s274 + $0x12c] sm:$0xf]
      %v637 = vld [vmem:[%s274 + $0x130] sm:$0xf]
      %v638 = vld [vmem:[%s274 + $0x134] sm:$0xf]
      %v639 = vld [vmem:[%s274 + $0x138] sm:$0xf]
      %v640 = vld [vmem:[%s274 + $0x13c] sm:$0xf]
      %v641 = vld [vmem:[%s274 + $0x140] sm:$0xf]
      %v642 = vld [vmem:[%s274 + $0x144] sm:$0xf]
      %v643 = vld [vmem:[%s274 + $0x148] sm:$0xf]
      %v644 = vld [vmem:[%s274 + $0x14c] sm:$0xf]
      %v645 = vld [vmem:[%s274 + $0x150] sm:$0xf]
      %v646 = vld [vmem:[%s274 + $0x154] sm:$0xf]
      %v647 = vld [vmem:[%s274 + $0x158] sm:$0xf]
      %v648 = vld [vmem:[%s274 + $0x15c] sm:$0xf]
      %v649 = vld [vmem:[%s274 + $0x160] sm:$0xf]
      %v650 = vld [vmem:[%s274 + $0x164] sm:$0xf]
      %v651 = vld [vmem:[%s274 + $0x168] sm:$0xf]
      %v652 = vld [vmem:[%s274 + $0x16c] sm:$0xf]
      %v653 = vld [vmem:[%s274 + $0x170] sm:$0xf]
      %v654 = vld [vmem:[%s274 + $0x174] sm:$0xf]
      %v655 = vld [vmem:[%s274 + $0x178] sm:$0xf]
      %v656 = vld [vmem:[%s274 + $0x17c] sm:$0xf]
      %v657 = vld [vmem:[%s274 + $0x180] sm:$0xf]
      %v658 = vld [vmem:[%s274 + $0x184] sm:$0xf]
      %v659 = vld [vmem:[%s274 + $0x188] sm:$0xf]
      %v660 = vld [vmem:[%s274 + $0x18c] sm:$0xf]
      %v661 = vld [vmem:[%s274 + $0x190] sm:$0xf]
      %v662 = vld [vmem:[%s274 + $0x194] sm:$0xf]
      %v663 = vld [vmem:[%s274 + $0x198] sm:$0xf]
      %v664 = vld [vmem:[%s274 + $0x19c] sm:$0xf]
      %v665 = vld [vmem:[%s274 + $0x1a0] sm:$0xf]
      %v666 = vld [vmem:[%s274 + $0x1a4] sm:$0xf]
      %v667 = vld [vmem:[%s274 + $0x1a8] sm:$0xf]
      %v668 = vld [vmem:[%s274 + $0x1ac] sm:$0xf]
      %v669 = vld [vmem:[%s274 + $0x1b0] sm:$0xf]
      %v670 = vld [vmem:[%s274 + $0x1b4] sm:$0xf]
      %v671 = vld [vmem:[%s274 + $0x1b8] sm:$0xf]
      %v672 = vld [vmem:[%s274 + $0x1bc] sm:$0xf]
      %v673 = vld [vmem:[%s274 + $0x1c0] sm:$0xf]
      %v674 = vld [vmem:[%s274 + $0x1c4] sm:$0xf]
      %v675 = vld [vmem:[%s274 + $0x1c8] sm:$0xf]
      %v676 = vld [vmem:[%s274 + $0x1cc] sm:$0xf]
      %v677 = vld [vmem:[%s274 + $0x1d0] sm:$0xf]
      %v678 = vld [vmem:[%s274 + $0x1d4] sm:$0xf]
      %v679 = vld [vmem:[%s274 + $0x1d8] sm:$0xf]
      %v680 = vld [vmem:[%s274 + $0x1dc] sm:$0xf]
      %v681 = vld [vmem:[%s274 + $0x1e0] sm:$0xf]
      %v682 = vld [vmem:[%s274 + $0x1e4] sm:$0xf]
      %v683 = vld [vmem:[%s274 + $0x1e8] sm:$0xf]
      %v684 = vld [vmem:[%s274 + $0x1ec] sm:$0xf]
      %v685 = vld [vmem:[%s274 + $0x1f0] sm:$0xf]
      %v686 = vld [vmem:[%s274 + $0x1f4] sm:$0xf]
      %v687 = vld [vmem:[%s274 + $0x1f8] sm:$0xf]
      %v688 = vld [vmem:[%s274 + $0x1fc] sm:$0xf]
      %v689 = vld [vmem:[%s283] sm:$0xf]
      %v690 = vld [vmem:[%s283 + $0x4] sm:$0xf]
      %v691 = vld [vmem:[%s283 + $0x8] sm:$0xf]
      %v692 = vld [vmem:[%s283 + $0xc] sm:$0xf]
      %v693 = vld [vmem:[%s283 + $0x10] sm:$0xf]
      %v694 = vld [vmem:[%s283 + $0x14] sm:$0xf]
      %v695 = vld [vmem:[%s283 + $0x18] sm:$0xf]
      %v696 = vld [vmem:[%s283 + $0x1c] sm:$0xf]
      %v697 = vld [vmem:[%s283 + $0x20] sm:$0xf]
      %v698 = vld [vmem:[%s283 + $0x24] sm:$0xf]
      %v699 = vld [vmem:[%s283 + $0x28] sm:$0xf]
      %v700 = vld [vmem:[%s283 + $0x2c] sm:$0xf]
      %v701 = vld [vmem:[%s283 + $0x30] sm:$0xf]
      %v702 = vld [vmem:[%s283 + $0x34] sm:$0xf]
      %v703 = vld [vmem:[%s283 + $0x38] sm:$0xf]
      %v704 = vld [vmem:[%s283 + $0x3c] sm:$0xf]
      %v833 = vunpack.c.l.b16 %v561
      %v834 = vunpack.c.l.b16 %v562
      %v835 = vunpack.c.l.b16 %v563
      %v836 = vunpack.c.l.b16 %v564
      %v837 = vunpack.c.l.b16 %v565
      %v838 = vunpack.c.l.b16 %v566
      %v839 = vunpack.c.l.b16 %v567
      %v840 = vunpack.c.l.b16 %v568
      %v841 = vunpack.c.l.b16 %v569
      %v842 = vunpack.c.l.b16 %v570
      %v843 = vunpack.c.l.b16 %v571
      %v844 = vunpack.c.l.b16 %v572
      %v845 = vunpack.c.l.b16 %v573
      %v846 = vunpack.c.l.b16 %v574
      %v847 = vunpack.c.l.b16 %v575
      %v848 = vunpack.c.l.b16 %v576
      %v849 = vunpack.c.l.b16 %v577
      %v850 = vunpack.c.l.b16 %v578
      %v851 = vunpack.c.l.b16 %v579
      %v852 = vunpack.c.l.b16 %v580
      %v853 = vunpack.c.l.b16 %v581
      %v854 = vunpack.c.l.b16 %v582
      %v855 = vunpack.c.l.b16 %v583
      %v856 = vunpack.c.l.b16 %v584
      %v857 = vunpack.c.l.b16 %v585
      %v858 = vunpack.c.l.b16 %v586
      %v859 = vunpack.c.l.b16 %v587
      %v860 = vunpack.c.l.b16 %v588
      %v861 = vunpack.c.l.b16 %v589
      %v862 = vunpack.c.l.b16 %v590
      %v863 = vunpack.c.l.b16 %v591
      %v864 = vunpack.c.l.b16 %v592
      %v865 = vunpack.c.l.b16 %v593
      %v866 = vunpack.c.l.b16 %v594
      %v867 = vunpack.c.l.b16 %v595
      %v868 = vunpack.c.l.b16 %v596
      %v869 = vunpack.c.l.b16 %v597
      %v870 = vunpack.c.l.b16 %v598
      %v871 = vunpack.c.l.b16 %v599
      %v872 = vunpack.c.l.b16 %v600
      %v873 = vunpack.c.l.b16 %v601
      %v874 = vunpack.c.l.b16 %v602
      %v875 = vunpack.c.l.b16 %v603
      %v876 = vunpack.c.l.b16 %v604
      %v877 = vunpack.c.l.b16 %v605
      %v878 = vunpack.c.l.b16 %v606
      %v879 = vunpack.c.l.b16 %v607
      %v880 = vunpack.c.l.b16 %v608
      %v881 = vunpack.c.l.b16 %v609
      %v882 = vunpack.c.l.b16 %v610
      %v883 = vunpack.c.l.b16 %v611
      %v884 = vunpack.c.l.b16 %v612
      %v885 = vunpack.c.l.b16 %v613
      %v886 = vunpack.c.l.b16 %v614
      %v887 = vunpack.c.l.b16 %v615
      %v888 = vunpack.c.l.b16 %v616
      %v889 = vunpack.c.l.b16 %v617
      %v890 = vunpack.c.l.b16 %v618
      %v891 = vunpack.c.l.b16 %v619
      %v892 = vunpack.c.l.b16 %v620
      %v893 = vunpack.c.l.b16 %v621
      %v894 = vunpack.c.l.b16 %v622
      %v895 = vunpack.c.l.b16 %v623
      %v896 = vunpack.c.l.b16 %v624
      %v897 = vunpack.c.l.b16 %v625
      %v898 = vunpack.c.l.b16 %v626
      %v899 = vunpack.c.l.b16 %v627
      %v900 = vunpack.c.l.b16 %v628
      %v901 = vunpack.c.l.b16 %v629
      %v902 = vunpack.c.l.b16 %v630
      %v903 = vunpack.c.l.b16 %v631
      %v904 = vunpack.c.l.b16 %v632
      %v905 = vunpack.c.l.b16 %v633
      %v906 = vunpack.c.l.b16 %v634
      %v907 = vunpack.c.l.b16 %v635
      %v908 = vunpack.c.l.b16 %v636
      %v909 = vunpack.c.l.b16 %v637
      %v910 = vunpack.c.l.b16 %v638
      %v911 = vunpack.c.l.b16 %v639
      %v912 = vunpack.c.l.b16 %v640
      %v913 = vunpack.c.l.b16 %v641
      %v914 = vunpack.c.l.b16 %v642
      %v915 = vunpack.c.l.b16 %v643
      %v916 = vunpack.c.l.b16 %v644
      %v917 = vunpack.c.l.b16 %v645
      %v918 = vunpack.c.l.b16 %v646
      %v919 = vunpack.c.l.b16 %v647
      %v920 = vunpack.c.l.b16 %v648
      %v921 = vunpack.c.l.b16 %v649
      %v922 = vunpack.c.l.b16 %v650
      %v923 = vunpack.c.l.b16 %v651
      %v924 = vunpack.c.l.b16 %v652
      %v925 = vunpack.c.l.b16 %v653
      %v926 = vunpack.c.l.b16 %v654
      %v927 = vunpack.c.l.b16 %v655
      %v928 = vunpack.c.l.b16 %v656
      %v929 = vunpack.c.l.b16 %v657
      %v930 = vunpack.c.l.b16 %v658
      %v931 = vunpack.c.l.b16 %v659
      %v932 = vunpack.c.l.b16 %v660
      %v933 = vunpack.c.l.b16 %v661
      %v934 = vunpack.c.l.b16 %v662
      %v935 = vunpack.c.l.b16 %v663
      %v936 = vunpack.c.l.b16 %v664
      %v937 = vunpack.c.l.b16 %v665
      %v938 = vunpack.c.l.b16 %v666
      %v939 = vunpack.c.l.b16 %v667
      %v940 = vunpack.c.l.b16 %v668
      %v941 = vunpack.c.l.b16 %v669
      %v942 = vunpack.c.l.b16 %v670
      %v943 = vunpack.c.l.b16 %v671
      %v944 = vunpack.c.l.b16 %v672
      %v945 = vunpack.c.l.b16 %v673
      %v946 = vunpack.c.l.b16 %v674
      %v947 = vunpack.c.l.b16 %v675
      %v948 = vunpack.c.l.b16 %v676
      %v949 = vunpack.c.l.b16 %v677
      %v950 = vunpack.c.l.b16 %v678
      %v951 = vunpack.c.l.b16 %v679
      %v952 = vunpack.c.l.b16 %v680
      %v953 = vunpack.c.l.b16 %v681
      %v954 = vunpack.c.l.b16 %v682
      %v955 = vunpack.c.l.b16 %v683
      %v956 = vunpack.c.l.b16 %v684
      %v957 = vunpack.c.l.b16 %v685
      %v958 = vunpack.c.l.b16 %v686
      %v959 = vunpack.c.l.b16 %v687
      %v960 = vunpack.c.l.b16 %v688
      %v961 = vpack.c.b16 %v834, %v833
      %v962 = vpack.c.b16 %v836, %v835
      %v963 = vpack.c.b16 %v838, %v837
      %v964 = vpack.c.b16 %v840, %v839
      %v965 = vpack.c.b16 %v842, %v841
      %v966 = vpack.c.b16 %v844, %v843
      %v967 = vpack.c.b16 %v846, %v845
      %v968 = vpack.c.b16 %v848, %v847
      %v969 = vpack.c.b16 %v850, %v849
      %v970 = vpack.c.b16 %v852, %v851
      %v971 = vpack.c.b16 %v854, %v853
      %v972 = vpack.c.b16 %v856, %v855
      %v973 = vpack.c.b16 %v858, %v857
      %v974 = vpack.c.b16 %v860, %v859
      %v975 = vpack.c.b16 %v862, %v861
      %v976 = vpack.c.b16 %v864, %v863
      %v977 = vpack.c.b16 %v866, %v865
      %v978 = vpack.c.b16 %v868, %v867
      %v979 = vpack.c.b16 %v870, %v869
      %v980 = vpack.c.b16 %v872, %v871
      %v981 = vpack.c.b16 %v874, %v873
      %v982 = vpack.c.b16 %v876, %v875
      %v983 = vpack.c.b16 %v878, %v877
      %v984 = vpack.c.b16 %v880, %v879
      %v985 = vpack.c.b16 %v882, %v881
      %v986 = vpack.c.b16 %v884, %v883
      %v987 = vpack.c.b16 %v886, %v885
      %v988 = vpack.c.b16 %v888, %v887
      %v989 = vpack.c.b16 %v890, %v889
      %v990 = vpack.c.b16 %v892, %v891
      %v991 = vpack.c.b16 %v894, %v893
      %v992 = vpack.c.b16 %v896, %v895
      %v993 = vpack.c.b16 %v898, %v897
      %v994 = vpack.c.b16 %v900, %v899
      %v995 = vpack.c.b16 %v902, %v901
      %v996 = vpack.c.b16 %v904, %v903
      %v997 = vpack.c.b16 %v906, %v905
      %v998 = vpack.c.b16 %v908, %v907
      %v999 = vpack.c.b16 %v910, %v909
      %v1000 = vpack.c.b16 %v912, %v911
      %v1001 = vpack.c.b16 %v914, %v913
      %v1002 = vpack.c.b16 %v916, %v915
      %v1003 = vpack.c.b16 %v918, %v917
      %v1004 = vpack.c.b16 %v920, %v919
      %v1005 = vpack.c.b16 %v922, %v921
      %v1006 = vpack.c.b16 %v924, %v923
      %v1007 = vpack.c.b16 %v926, %v925
      %v1008 = vpack.c.b16 %v928, %v927
      %v1009 = vpack.c.b16 %v930, %v929
      %v1010 = vpack.c.b16 %v932, %v931
      %v1011 = vpack.c.b16 %v934, %v933
      %v1012 = vpack.c.b16 %v936, %v935
      %v1013 = vpack.c.b16 %v938, %v937
      %v1014 = vpack.c.b16 %v940, %v939
      %v1015 = vpack.c.b16 %v942, %v941
      %v1016 = vpack.c.b16 %v944, %v943
      %v1017 = vpack.c.b16 %v946, %v945
      %v1018 = vpack.c.b16 %v948, %v947
      %v1019 = vpack.c.b16 %v950, %v949
      %v1020 = vpack.c.b16 %v952, %v951
      %v1021 = vpack.c.b16 %v954, %v953
      %v1022 = vpack.c.b16 %v956, %v955
      %v1023 = vpack.c.b16 %v958, %v957
      %v1024 = vpack.c.b16 %v960, %v959
      %v1105 = vunpack.c.l.b16 %v689
      %v1106 = vunpack.c.l.b16 %v690
      %v1107 = vunpack.c.l.b16 %v691
      %v1108 = vunpack.c.l.b16 %v692
      %v1109 = vunpack.c.l.b16 %v693
      %v1110 = vunpack.c.l.b16 %v694
      %v1111 = vunpack.c.l.b16 %v695
      %v1112 = vunpack.c.l.b16 %v696
      %v1113 = vunpack.c.l.b16 %v697
      %v1114 = vunpack.c.l.b16 %v698
      %v1115 = vunpack.c.l.b16 %v699
      %v1116 = vunpack.c.l.b16 %v700
      %v1117 = vunpack.c.l.b16 %v701
      %v1118 = vunpack.c.l.b16 %v702
      %v1119 = vunpack.c.l.b16 %v703
      %v1120 = vunpack.c.l.b16 %v704
      %v1121 = vpack.c.b16 %v1106, %v1105
      %v1122 = vpack.c.b16 %v1108, %v1107
      %v1123 = vpack.c.b16 %v1110, %v1109
      %v1124 = vpack.c.b16 %v1112, %v1111
      %v1125 = vpack.c.b16 %v1114, %v1113
      %v1126 = vpack.c.b16 %v1116, %v1115
      %v1127 = vpack.c.b16 %v1118, %v1117
      %v1128 = vpack.c.b16 %v1120, %v1119
      %1137 = vmatprep.subr.bf16.mxu0 0
      %1138 = vmatpush1.bf16.msra.mxu0 %v1121
      %1139 = vmatprep.subr.bf16.mxu0 0
      %1140 = vmatpush1.bf16.msra.mxu0 %v1122
      %1141 = vmatprep.subr.bf16.mxu0 0
      %1142 = vmatpush1.bf16.msra.mxu0 %v1123
      %1143 = vmatprep.subr.bf16.mxu0 0
      %1144 = vmatpush1.bf16.msra.mxu0 %v1124
      %1145 = vmatprep.subr.bf16.mxu0 0
      %1146 = vmatpush1.bf16.msra.mxu0 %v1125
      %1147 = vmatprep.subr.bf16.mxu0 0
      %1148 = vmatpush1.bf16.msra.mxu0 %v1126
      %1149 = vmatprep.subr.bf16.mxu0 0
      %1150 = vmatpush1.bf16.msra.mxu0 %v1127
      %1151 = vmatprep.subr.bf16.mxu0 0
      %1152 = vmatpush1.bf16.msra.mxu0 %v1128
      %1153 = vmatprep.subr.bf16.mxu0 0
      %1154 = vmatpush1.bf16.msra.mxu0 0
      %1155 = vmatprep.subr.bf16.mxu0 0
      %1156 = vmatpush1.bf16.msra.mxu0 0
      %1157 = vmatprep.subr.bf16.mxu0 0
      %1158 = vmatpush1.bf16.msra.mxu0 0
      %1159 = vmatprep.subr.bf16.mxu0 0
      %1160 = vmatpush1.bf16.msra.mxu0 0
      %1161 = vmatprep.subr.bf16.mxu0 0
      %1162 = vmatpush1.bf16.msra.mxu0 0
      %1163 = vmatprep.subr.bf16.mxu0 0
      %1164 = vmatpush1.bf16.msra.mxu0 0
      %1165 = vmatprep.subr.bf16.mxu0 0
      %1166 = vmatpush1.bf16.msra.mxu0 0
      %1167 = vmatprep.subr.bf16.mxu0 0
      %1168 = vmatpush1.bf16.msra.mxu0 0
      %1169 = vmatprep.mubr.bf16.mxu0 0
      %1170 = vmatmul.mubr.bf16.gmra.mrb[0].mxu0 %v961
      %v1171 = vpop.f32.mrb[0].mxu0
      %v1172 = vadd.f32 0.0, %v1171
      %v1173 = vpop.f32.mrb[0].mxu0
      %v1174 = vpop.f32.mrb[0].mxu0
      %v1175 = vadd.f32 0.0, %v1174
      %v1176 = vpop.f32.mrb[0].mxu0
      %1177 = vmatprep.mubr.bf16.mxu0 0
      %1178 = vmatmul.mubr.bf16.gmra.mrb[0].mxu0 %v962
      %v1179 = vpop.f32.mrb[0].mxu0
      %v1180 = vadd.f32 0.0, %v1179
      %v1181 = vpop.f32.mrb[0].mxu0
      %v1182 = vpop.f32.mrb[0].mxu0
      %v1183 = vadd.f32 0.0, %v1182
      %v1184 = vpop.f32.mrb[0].mxu0
      %1185 = vmatprep.mubr.bf16.mxu0 0
      %1186 = vmatmul.mubr.bf16.gmra.mrb[0].mxu0 %v963
      %v1187 = vpop.f32.mrb[0].mxu0
      %v1188 = vadd.f32 0.0, %v1187
      %v1189 = vpop.f32.mrb[0].mxu0
      %v1190 = vpop.f32.mrb[0].mxu0
      %v1191 = vadd.f32 0.0, %v1190
      %v1192 = vpop.f32.mrb[0].mxu0
      %1193 = vmatprep.mubr.bf16.mxu0 0
      %1194 = vmatmul.mubr.bf16.gmra.mrb[0].mxu0 %v964
      %v1195 = vpop.f32.mrb[0].mxu0
      %v1196 = vadd.f32 0.0, %v1195
      %v1197 = vpop.f32.mrb[0].mxu0
      %v1198 = vpop.f32.mrb[0].mxu0
      %v1199 = vadd.f32 0.0, %v1198
      %v1200 = vpop.f32.mrb[0].mxu0
      %1201 = vmatprep.mubr.bf16.mxu0 0
      %1202 = vmatmul.mubr.bf16.gmra.mrb[0].mxu0 %v965
      %v1203 = vpop.f32.mrb[0].mxu0
      %v1204 = vadd.f32 0.0, %v1203
      %v1205 = vpop.f32.mrb[0].mxu0
      %v1206 = vpop.f32.mrb[0].mxu0
      %v1207 = vadd.f32 0.0, %v1206
      %v1208 = vpop.f32.mrb[0].mxu0
      %1209 = vmatprep.mubr.bf16.mxu0 0
      %1210 = vmatmul.mubr.bf16.gmra.mrb[0].mxu0 %v966
      %v1211 = vpop.f32.mrb[0].mxu0
      %v1212 = vadd.f32 0.0, %v1211
      %v1213 = vpop.f32.mrb[0].mxu0
      %v1214 = vpop.f32.mrb[0].mxu0
      %v1215 = vadd.f32 0.0, %v1214
      %v1216 = vpop.f32.mrb[0].mxu0
      %1217 = vmatprep.mubr.bf16.mxu0 0
      %1218 = vmatmul.mubr.bf16.gmra.mrb[0].mxu0 %v967
      %v1219 = vpop.f32.mrb[0].mxu0
      %v1220 = vadd.f32 0.0, %v1219
      %v1221 = vpop.f32.mrb[0].mxu0
      %v1222 = vpop.f32.mrb[0].mxu0
      %v1223 = vadd.f32 0.0, %v1222
      %v1224 = vpop.f32.mrb[0].mxu0
      %1225 = vmatprep.mubr.bf16.mxu0 0
      %1226 = vmatmul.mubr.bf16.gmra.mrb[0].mxu0 %v968
      %v1227 = vpop.f32.mrb[0].mxu0
      %v1228 = vadd.f32 0.0, %v1227
      %v1229 = vpop.f32.mrb[0].mxu0
      %v1230 = vpop.f32.mrb[0].mxu0
      %v1231 = vadd.f32 0.0, %v1230
      %v1232 = vpop.f32.mrb[0].mxu0
      %1233 = vmatprep.mubr.bf16.mxu0 0
      %1234 = vmatmul.mubr.bf16.gmra.mrb[0].mxu0 %v969
      %v1235 = vpop.f32.mrb[0].mxu0
      %v1236 = vadd.f32 0.0, %v1235
      %v1237 = vpop.f32.mrb[0].mxu0
      %v1238 = vpop.f32.mrb[0].mxu0
      %v1239 = vadd.f32 0.0, %v1238
      %v1240 = vpop.f32.mrb[0].mxu0
      %1241 = vmatprep.mubr.bf16.mxu0 0
      %1242 = vmatmul.mubr.bf16.gmra.mrb[0].mxu0 %v970
      %v1243 = vpop.f32.mrb[0].mxu0
      %v1244 = vadd.f32 0.0, %v1243
      %v1245 = vpop.f32.mrb[0].mxu0
      %v1246 = vpop.f32.mrb[0].mxu0
      %v1247 = vadd.f32 0.0, %v1246
      %v1248 = vpop.f32.mrb[0].mxu0
      %1249 = vmatprep.mubr.bf16.mxu0 0
      %1250 = vmatmul.mubr.bf16.gmra.mrb[0].mxu0 %v971
      %v1251 = vpop.f32.mrb[0].mxu0
      %v1252 = vadd.f32 0.0, %v1251
      %v1253 = vpop.f32.mrb[0].mxu0
      %v1254 = vpop.f32.mrb[0].mxu0
      %v1255 = vadd.f32 0.0, %v1254
      %v1256 = vpop.f32.mrb[0].mxu0
      %1257 = vmatprep.mubr.bf16.mxu0 0
      %1258 = vmatmul.mubr.bf16.gmra.mrb[0].mxu0 %v972
      %v1259 = vpop.f32.mrb[0].mxu0
      %v1260 = vadd.f32 0.0, %v1259
      %v1261 = vpop.f32.mrb[0].mxu0
      %v1262 = vpop.f32.mrb[0].mxu0
      %v1263 = vadd.f32 0.0, %v1262
      %v1264 = vpop.f32.mrb[0].mxu0
      %1265 = vmatprep.mubr.bf16.mxu0 0
      %1266 = vmatmul.mubr.bf16.gmra.mrb[0].mxu0 %v973
      %v1267 = vpop.f32.mrb[0].mxu0
      %v1268 = vadd.f32 0.0, %v1267
      %v1269 = vpop.f32.mrb[0].mxu0
      %v1270 = vpop.f32.mrb[0].mxu0
      %v1271 = vadd.f32 0.0, %v1270
      %v1272 = vpop.f32.mrb[0].mxu0
      %1273 = vmatprep.mubr.bf16.mxu0 0
      %1274 = vmatmul.mubr.bf16.gmra.mrb[0].mxu0 %v974
      %v1275 = vpop.f32.mrb[0].mxu0
      %v1276 = vadd.f32 0.0, %v1275
      %v1277 = vpop.f32.mrb[0].mxu0
      %v1278 = vpop.f32.mrb[0].mxu0
      %v1279 = vadd.f32 0.0, %v1278
      %v1280 = vpop.f32.mrb[0].mxu0
      %1281 = vmatprep.mubr.bf16.mxu0 0
      %1282 = vmatmul.mubr.bf16.gmra.mrb[0].mxu0 %v975
      %v1283 = vpop.f32.mrb[0].mxu0
      %v1284 = vadd.f32 0.0, %v1283
      %v1285 = vpop.f32.mrb[0].mxu0
      %v1286 = vpop.f32.mrb[0].mxu0
      %v1287 = vadd.f32 0.0, %v1286
      %v1288 = vpop.f32.mrb[0].mxu0
      %1289 = vmatprep.mubr.bf16.mxu0 0
      %1290 = vmatmul.mubr.bf16.gmra.mrb[0].mxu0 %v976
      %v1291 = vpop.f32.mrb[0].mxu0
      %v1292 = vadd.f32 0.0, %v1291
      %v1293 = vpop.f32.mrb[0].mxu0
      %v1294 = vpop.f32.mrb[0].mxu0
      %v1295 = vadd.f32 0.0, %v1294
      %v1296 = vpop.f32.mrb[0].mxu0
      %1297 = vmatprep.mubr.bf16.mxu0 0
      %1298 = vmatmul.mubr.bf16.gmra.mrb[0].mxu0 %v977
      %v1299 = vpop.f32.mrb[0].mxu0
      %v1300 = vadd.f32 0.0, %v1299
      %v1301 = vpop.f32.mrb[0].mxu0
      %v1302 = vpop.f32.mrb[0].mxu0
      %v1303 = vadd.f32 0.0, %v1302
      %v1304 = vpop.f32.mrb[0].mxu0
      %1305 = vmatprep.mubr.bf16.mxu0 0
      %1306 = vmatmul.mubr.bf16.gmra.mrb[0].mxu0 %v978
      %v1307 = vpop.f32.mrb[0].mxu0
      %v1308 = vadd.f32 0.0, %v1307
      %v1309 = vpop.f32.mrb[0].mxu0
      %v1310 = vpop.f32.mrb[0].mxu0
      %v1311 = vadd.f32 0.0, %v1310
      %v1312 = vpop.f32.mrb[0].mxu0
      %1313 = vmatprep.mubr.bf16.mxu0 0
      %1314 = vmatmul.mubr.bf16.gmra.mrb[0].mxu0 %v979
      %v1315 = vpop.f32.mrb[0].mxu0
      %v1316 = vadd.f32 0.0, %v1315
      %v1317 = vpop.f32.mrb[0].mxu0
      %v1318 = vpop.f32.mrb[0].mxu0
      %v1319 = vadd.f32 0.0, %v1318
      %v1320 = vpop.f32.mrb[0].mxu0
      %1321 = vmatprep.mubr.bf16.mxu0 0
      %1322 = vmatmul.mubr.bf16.gmra.mrb[0].mxu0 %v980
      %v1323 = vpop.f32.mrb[0].mxu0
      %v1324 = vadd.f32 0.0, %v1323
      %v1325 = vpop.f32.mrb[0].mxu0
      %v1326 = vpop.f32.mrb[0].mxu0
      %v1327 = vadd.f32 0.0, %v1326
      %v1328 = vpop.f32.mrb[0].mxu0
      %1329 = vmatprep.mubr.bf16.mxu0 0
      %1330 = vmatmul.mubr.bf16.gmra.mrb[0].mxu0 %v981
      %v1331 = vpop.f32.mrb[0].mxu0
      %v1332 = vadd.f32 0.0, %v1331
      %v1333 = vpop.f32.mrb[0].mxu0
      %v1334 = vpop.f32.mrb[0].mxu0
      %v1335 = vadd.f32 0.0, %v1334
      %v1336 = vpop.f32.mrb[0].mxu0
      %1337 = vmatprep.mubr.bf16.mxu0 0
      %1338 = vmatmul.mubr.bf16.gmra.mrb[0].mxu0 %v982
      %v1339 = vpop.f32.mrb[0].mxu0
      %v1340 = vadd.f32 0.0, %v1339
      %v1341 = vpop.f32.mrb[0].mxu0
      %v1342 = vpop.f32.mrb[0].mxu0
      %v1343 = vadd.f32 0.0, %v1342
      %v1344 = vpop.f32.mrb[0].mxu0
      %1345 = vmatprep.mubr.bf16.mxu0 0
      %1346 = vmatmul.mubr.bf16.gmra.mrb[0].mxu0 %v983
      %v1347 = vpop.f32.mrb[0].mxu0
      %v1348 = vadd.f32 0.0, %v1347
      %v1349 = vpop.f32.mrb[0].mxu0
      %v1350 = vpop.f32.mrb[0].mxu0
      %v1351 = vadd.f32 0.0, %v1350
      %v1352 = vpop.f32.mrb[0].mxu0
      %1353 = vmatprep.mubr.bf16.mxu0 0
      %1354 = vmatmul.mubr.bf16.gmra.mrb[0].mxu0 %v984
      %v1355 = vpop.f32.mrb[0].mxu0
      %v1356 = vadd.f32 0.0, %v1355
      %v1357 = vpop.f32.mrb[0].mxu0
      %v1358 = vpop.f32.mrb[0].mxu0
      %v1359 = vadd.f32 0.0, %v1358
      %v1360 = vpop.f32.mrb[0].mxu0
      %1361 = vmatprep.mubr.bf16.mxu0 0
      %1362 = vmatmul.mubr.bf16.gmra.mrb[0].mxu0 %v985
      %v1363 = vpop.f32.mrb[0].mxu0
      %v1364 = vadd.f32 0.0, %v1363
      %v1365 = vpop.f32.mrb[0].mxu0
      %v1366 = vpop.f32.mrb[0].mxu0
      %v1367 = vadd.f32 0.0, %v1366
      %v1368 = vpop.f32.mrb[0].mxu0
      %1369 = vmatprep.mubr.bf16.mxu0 0
      %1370 = vmatmul.mubr.bf16.gmra.mrb[0].mxu0 %v986
      %v1371 = vpop.f32.mrb[0].mxu0
      %v1372 = vadd.f32 0.0, %v1371
      %v1373 = vpop.f32.mrb[0].mxu0
      %v1374 = vpop.f32.mrb[0].mxu0
      %v1375 = vadd.f32 0.0, %v1374
      %v1376 = vpop.f32.mrb[0].mxu0
      %1377 = vmatprep.mubr.bf16.mxu0 0
      %1378 = vmatmul.mubr.bf16.gmra.mrb[0].mxu0 %v987
      %v1379 = vpop.f32.mrb[0].mxu0
      %v1380 = vadd.f32 0.0, %v1379
      %v1381 = vpop.f32.mrb[0].mxu0
      %v1382 = vpop.f32.mrb[0].mxu0
      %v1383 = vadd.f32 0.0, %v1382
      %v1384 = vpop.f32.mrb[0].mxu0
      %1385 = vmatprep.mubr.bf16.mxu0 0
      %1386 = vmatmul.mubr.bf16.gmra.mrb[0].mxu0 %v988
      %v1387 = vpop.f32.mrb[0].mxu0
      %v1388 = vadd.f32 0.0, %v1387
      %v1389 = vpop.f32.mrb[0].mxu0
      %v1390 = vpop.f32.mrb[0].mxu0
      %v1391 = vadd.f32 0.0, %v1390
      %v1392 = vpop.f32.mrb[0].mxu0
      %1393 = vmatprep.mubr.bf16.mxu0 0
      %1394 = vmatmul.mubr.bf16.gmra.mrb[0].mxu0 %v989
      %v1395 = vpop.f32.mrb[0].mxu0
      %v1396 = vadd.f32 0.0, %v1395
      %v1397 = vpop.f32.mrb[0].mxu0
      %v1398 = vpop.f32.mrb[0].mxu0
      %v1399 = vadd.f32 0.0, %v1398
      %v1400 = vpop.f32.mrb[0].mxu0
      %1401 = vmatprep.mubr.bf16.mxu0 0
      %1402 = vmatmul.mubr.bf16.gmra.mrb[0].mxu0 %v990
      %v1403 = vpop.f32.mrb[0].mxu0
      %v1404 = vadd.f32 0.0, %v1403
      %v1405 = vpop.f32.mrb[0].mxu0
      %v1406 = vpop.f32.mrb[0].mxu0
      %v1407 = vadd.f32 0.0, %v1406
      %v1408 = vpop.f32.mrb[0].mxu0
      %1409 = vmatprep.mubr.bf16.mxu0 0
      %1410 = vmatmul.mubr.bf16.gmra.mrb[0].mxu0 %v991
      %v1411 = vpop.f32.mrb[0].mxu0
      %v1412 = vadd.f32 0.0, %v1411
      %v1413 = vpop.f32.mrb[0].mxu0
      %v1414 = vpop.f32.mrb[0].mxu0
      %v1415 = vadd.f32 0.0, %v1414
      %v1416 = vpop.f32.mrb[0].mxu0
      %1417 = vmatprep.mubr.bf16.mxu0 0
      %1418 = vmatmul.mubr.bf16.gmra.mrb[0].mxu0 %v992
      %v1419 = vpop.f32.mrb[0].mxu0
      %v1420 = vadd.f32 0.0, %v1419
      %v1421 = vpop.f32.mrb[0].mxu0
      %v1422 = vpop.f32.mrb[0].mxu0
      %v1423 = vadd.f32 0.0, %v1422
      %v1424 = vpop.f32.mrb[0].mxu0
      %1425 = vmatprep.mubr.bf16.mxu0 0
      %1426 = vmatmul.mubr.bf16.gmra.mrb[0].mxu0 %v993
      %v1427 = vpop.f32.mrb[0].mxu0
      %v1428 = vadd.f32 0.0, %v1427
      %v1429 = vpop.f32.mrb[0].mxu0
      %v1430 = vpop.f32.mrb[0].mxu0
      %v1431 = vadd.f32 0.0, %v1430
      %v1432 = vpop.f32.mrb[0].mxu0
      %1433 = vmatprep.mubr.bf16.mxu0 0
      %1434 = vmatmul.mubr.bf16.gmra.mrb[0].mxu0 %v994
      %v1435 = vpop.f32.mrb[0].mxu0
      %v1436 = vadd.f32 0.0, %v1435
      %v1437 = vpop.f32.mrb[0].mxu0
      %v1438 = vpop.f32.mrb[0].mxu0
      %v1439 = vadd.f32 0.0, %v1438
      %v1440 = vpop.f32.mrb[0].mxu0
      %1441 = vmatprep.mubr.bf16.mxu0 0
      %1442 = vmatmul.mubr.bf16.gmra.mrb[0].mxu0 %v995
      %v1443 = vpop.f32.mrb[0].mxu0
      %v1444 = vadd.f32 0.0, %v1443
      %v1445 = vpop.f32.mrb[0].mxu0
      %v1446 = vpop.f32.mrb[0].mxu0
      %v1447 = vadd.f32 0.0, %v1446
      %v1448 = vpop.f32.mrb[0].mxu0
      %1449 = vmatprep.mubr.bf16.mxu0 0
      %1450 = vmatmul.mubr.bf16.gmra.mrb[0].mxu0 %v996
      %v1451 = vpop.f32.mrb[0].mxu0
      %v1452 = vadd.f32 0.0, %v1451
      %v1453 = vpop.f32.mrb[0].mxu0
      %v1454 = vpop.f32.mrb[0].mxu0
      %v1455 = vadd.f32 0.0, %v1454
      %v1456 = vpop.f32.mrb[0].mxu0
      %1457 = vmatprep.mubr.bf16.mxu0 0
      %1458 = vmatmul.mubr.bf16.gmra.mrb[0].mxu0 %v997
      %v1459 = vpop.f32.mrb[0].mxu0
      %v1460 = vadd.f32 0.0, %v1459
      %v1461 = vpop.f32.mrb[0].mxu0
      %v1462 = vpop.f32.mrb[0].mxu0
      %v1463 = vadd.f32 0.0, %v1462
      %v1464 = vpop.f32.mrb[0].mxu0
      %1465 = vmatprep.mubr.bf16.mxu0 0
      %1466 = vmatmul.mubr.bf16.gmra.mrb[0].mxu0 %v998
      %v1467 = vpop.f32.mrb[0].mxu0
      %v1468 = vadd.f32 0.0, %v1467
      %v1469 = vpop.f32.mrb[0].mxu0
      %v1470 = vpop.f32.mrb[0].mxu0
      %v1471 = vadd.f32 0.0, %v1470
      %v1472 = vpop.f32.mrb[0].mxu0
      %1473 = vmatprep.mubr.bf16.mxu0 0
      %1474 = vmatmul.mubr.bf16.gmra.mrb[0].mxu0 %v999
      %v1475 = vpop.f32.mrb[0].mxu0
      %v1476 = vadd.f32 0.0, %v1475
      %v1477 = vpop.f32.mrb[0].mxu0
      %v1478 = vpop.f32.mrb[0].mxu0
      %v1479 = vadd.f32 0.0, %v1478
      %v1480 = vpop.f32.mrb[0].mxu0
      %1481 = vmatprep.mubr.bf16.mxu0 0
      %1482 = vmatmul.mubr.bf16.gmra.mrb[0].mxu0 %v1000
      %v1483 = vpop.f32.mrb[0].mxu0
      %v1484 = vadd.f32 0.0, %v1483
      %v1485 = vpop.f32.mrb[0].mxu0
      %v1486 = vpop.f32.mrb[0].mxu0
      %v1487 = vadd.f32 0.0, %v1486
      %v1488 = vpop.f32.mrb[0].mxu0
      %1489 = vmatprep.mubr.bf16.mxu0 0
      %1490 = vmatmul.mubr.bf16.gmra.mrb[0].mxu0 %v1001
      %v1491 = vpop.f32.mrb[0].mxu0
      %v1492 = vadd.f32 0.0, %v1491
      %v1493 = vpop.f32.mrb[0].mxu0
      %v1494 = vpop.f32.mrb[0].mxu0
      %v1495 = vadd.f32 0.0, %v1494
      %v1496 = vpop.f32.mrb[0].mxu0
      %1497 = vmatprep.mubr.bf16.mxu0 0
      %1498 = vmatmul.mubr.bf16.gmra.mrb[0].mxu0 %v1002
      %v1499 = vpop.f32.mrb[0].mxu0
      %v1500 = vadd.f32 0.0, %v1499
      %v1501 = vpop.f32.mrb[0].mxu0
      %v1502 = vpop.f32.mrb[0].mxu0
      %v1503 = vadd.f32 0.0, %v1502
      %v1504 = vpop.f32.mrb[0].mxu0
      %1505 = vmatprep.mubr.bf16.mxu0 0
      %1506 = vmatmul.mubr.bf16.gmra.mrb[0].mxu0 %v1003
      %v1507 = vpop.f32.mrb[0].mxu0
      %v1508 = vadd.f32 0.0, %v1507
      %v1509 = vpop.f32.mrb[0].mxu0
      %v1510 = vpop.f32.mrb[0].mxu0
      %v1511 = vadd.f32 0.0, %v1510
      %v1512 = vpop.f32.mrb[0].mxu0
      %1513 = vmatprep.mubr.bf16.mxu0 0
      %1514 = vmatmul.mubr.bf16.gmra.mrb[0].mxu0 %v1004
      %v1515 = vpop.f32.mrb[0].mxu0
      %v1516 = vadd.f32 0.0, %v1515
      %v1517 = vpop.f32.mrb[0].mxu0
      %v1518 = vpop.f32.mrb[0].mxu0
      %v1519 = vadd.f32 0.0, %v1518
      %v1520 = vpop.f32.mrb[0].mxu0
      %1521 = vmatprep.mubr.bf16.mxu0 0
      %1522 = vmatmul.mubr.bf16.gmra.mrb[0].mxu0 %v1005
      %v1523 = vpop.f32.mrb[0].mxu0
      %v1524 = vadd.f32 0.0, %v1523
      %v1525 = vpop.f32.mrb[0].mxu0
      %v1526 = vpop.f32.mrb[0].mxu0
      %v1527 = vadd.f32 0.0, %v1526
      %v1528 = vpop.f32.mrb[0].mxu0
      %1529 = vmatprep.mubr.bf16.mxu0 0
      %1530 = vmatmul.mubr.bf16.gmra.mrb[0].mxu0 %v1006
      %v1531 = vpop.f32.mrb[0].mxu0
      %v1532 = vadd.f32 0.0, %v1531
      %v1533 = vpop.f32.mrb[0].mxu0
      %v1534 = vpop.f32.mrb[0].mxu0
      %v1535 = vadd.f32 0.0, %v1534
      %v1536 = vpop.f32.mrb[0].mxu0
      %1537 = vmatprep.mubr.bf16.mxu0 0
      %1538 = vmatmul.mubr.bf16.gmra.mrb[0].mxu0 %v1007
      %v1539 = vpop.f32.mrb[0].mxu0
      %v1540 = vadd.f32 0.0, %v1539
      %v1541 = vpop.f32.mrb[0].mxu0
      %v1542 = vpop.f32.mrb[0].mxu0
      %v1543 = vadd.f32 0.0, %v1542
      %v1544 = vpop.f32.mrb[0].mxu0
      %1545 = vmatprep.mubr.bf16.mxu0 0
      %1546 = vmatmul.mubr.bf16.gmra.mrb[0].mxu0 %v1008
      %v1547 = vpop.f32.mrb[0].mxu0
      %v1548 = vadd.f32 0.0, %v1547
      %v1549 = vpop.f32.mrb[0].mxu0
      %v1550 = vpop.f32.mrb[0].mxu0
      %v1551 = vadd.f32 0.0, %v1550
      %v1552 = vpop.f32.mrb[0].mxu0
      %1553 = vmatprep.mubr.bf16.mxu0 0
      %1554 = vmatmul.mubr.bf16.gmra.mrb[0].mxu0 %v1009
      %v1555 = vpop.f32.mrb[0].mxu0
      %v1556 = vadd.f32 0.0, %v1555
      %v1557 = vpop.f32.mrb[0].mxu0
      %v1558 = vpop.f32.mrb[0].mxu0
      %v1559 = vadd.f32 0.0, %v1558
      %v1560 = vpop.f32.mrb[0].mxu0
      %1561 = vmatprep.mubr.bf16.mxu0 0
      %1562 = vmatmul.mubr.bf16.gmra.mrb[0].mxu0 %v1010
      %v1563 = vpop.f32.mrb[0].mxu0
      %v1564 = vadd.f32 0.0, %v1563
      %v1565 = vpop.f32.mrb[0].mxu0
      %v1566 = vpop.f32.mrb[0].mxu0
      %v1567 = vadd.f32 0.0, %v1566
      %v1568 = vpop.f32.mrb[0].mxu0
      %1569 = vmatprep.mubr.bf16.mxu0 0
      %1570 = vmatmul.mubr.bf16.gmra.mrb[0].mxu0 %v1011
      %v1571 = vpop.f32.mrb[0].mxu0
      %v1572 = vadd.f32 0.0, %v1571
      %v1573 = vpop.f32.mrb[0].mxu0
      %v1574 = vpop.f32.mrb[0].mxu0
      %v1575 = vadd.f32 0.0, %v1574
      %v1576 = vpop.f32.mrb[0].mxu0
      %1577 = vmatprep.mubr.bf16.mxu0 0
      %1578 = vmatmul.mubr.bf16.gmra.mrb[0].mxu0 %v1012
      %v1579 = vpop.f32.mrb[0].mxu0
      %v1580 = vadd.f32 0.0, %v1579
      %v1581 = vpop.f32.mrb[0].mxu0
      %v1582 = vpop.f32.mrb[0].mxu0
      %v1583 = vadd.f32 0.0, %v1582
      %v1584 = vpop.f32.mrb[0].mxu0
      %1585 = vmatprep.mubr.bf16.mxu0 0
      %1586 = vmatmul.mubr.bf16.gmra.mrb[0].mxu0 %v1013
      %v1587 = vpop.f32.mrb[0].mxu0
      %v1588 = vadd.f32 0.0, %v1587
      %v1589 = vpop.f32.mrb[0].mxu0
      %v1590 = vpop.f32.mrb[0].mxu0
      %v1591 = vadd.f32 0.0, %v1590
      %v1592 = vpop.f32.mrb[0].mxu0
      %1593 = vmatprep.mubr.bf16.mxu0 0
      %1594 = vmatmul.mubr.bf16.gmra.mrb[0].mxu0 %v1014
      %v1595 = vpop.f32.mrb[0].mxu0
      %v1596 = vadd.f32 0.0, %v1595
      %v1597 = vpop.f32.mrb[0].mxu0
      %v1598 = vpop.f32.mrb[0].mxu0
      %v1599 = vadd.f32 0.0, %v1598
      %v1600 = vpop.f32.mrb[0].mxu0
      %1601 = vmatprep.mubr.bf16.mxu0 0
      %1602 = vmatmul.mubr.bf16.gmra.mrb[0].mxu0 %v1015
      %v1603 = vpop.f32.mrb[0].mxu0
      %v1604 = vadd.f32 0.0, %v1603
      %v1605 = vpop.f32.mrb[0].mxu0
      %v1606 = vpop.f32.mrb[0].mxu0
      %v1607 = vadd.f32 0.0, %v1606
      %v1608 = vpop.f32.mrb[0].mxu0
      %1609 = vmatprep.mubr.bf16.mxu0 0
      %1610 = vmatmul.mubr.bf16.gmra.mrb[0].mxu0 %v1016
      %v1611 = vpop.f32.mrb[0].mxu0
      %v1612 = vadd.f32 0.0, %v1611
      %v1613 = vpop.f32.mrb[0].mxu0
      %v1614 = vpop.f32.mrb[0].mxu0
      %v1615 = vadd.f32 0.0, %v1614
      %v1616 = vpop.f32.mrb[0].mxu0
      %1617 = vmatprep.mubr.bf16.mxu0 0
      %1618 = vmatmul.mubr.bf16.gmra.mrb[0].mxu0 %v1017
      %v1619 = vpop.f32.mrb[0].mxu0
      %v1620 = vadd.f32 0.0, %v1619
      %v1621 = vpop.f32.mrb[0].mxu0
      %v1622 = vpop.f32.mrb[0].mxu0
      %v1623 = vadd.f32 0.0, %v1622
      %v1624 = vpop.f32.mrb[0].mxu0
      %1625 = vmatprep.mubr.bf16.mxu0 0
      %1626 = vmatmul.mubr.bf16.gmra.mrb[0].mxu0 %v1018
      %v1627 = vpop.f32.mrb[0].mxu0
      %v1628 = vadd.f32 0.0, %v1627
      %v1629 = vpop.f32.mrb[0].mxu0
      %v1630 = vpop.f32.mrb[0].mxu0
      %v1631 = vadd.f32 0.0, %v1630
      %v1632 = vpop.f32.mrb[0].mxu0
      %1633 = vmatprep.mubr.bf16.mxu0 0
      %1634 = vmatmul.mubr.bf16.gmra.mrb[0].mxu0 %v1019
      %v1635 = vpop.f32.mrb[0].mxu0
      %v1636 = vadd.f32 0.0, %v1635
      %v1637 = vpop.f32.mrb[0].mxu0
      %v1638 = vpop.f32.mrb[0].mxu0
      %v1639 = vadd.f32 0.0, %v1638
      %v1640 = vpop.f32.mrb[0].mxu0
      %1641 = vmatprep.mubr.bf16.mxu0 0
      %1642 = vmatmul.mubr.bf16.gmra.mrb[0].mxu0 %v1020
      %v1643 = vpop.f32.mrb[0].mxu0
      %v1644 = vadd.f32 0.0, %v1643
      %v1645 = vpop.f32.mrb[0].mxu0
      %v1646 = vpop.f32.mrb[0].mxu0
      %v1647 = vadd.f32 0.0, %v1646
      %v1648 = vpop.f32.mrb[0].mxu0
      %1649 = vmatprep.mubr.bf16.mxu0 0
      %1650 = vmatmul.mubr.bf16.gmra.mrb[0].mxu0 %v1021
      %v1651 = vpop.f32.mrb[0].mxu0
      %v1652 = vadd.f32 0.0, %v1651
      %v1653 = vpop.f32.mrb[0].mxu0
      %v1654 = vpop.f32.mrb[0].mxu0
      %v1655 = vadd.f32 0.0, %v1654
      %v1656 = vpop.f32.mrb[0].mxu0
      %1657 = vmatprep.mubr.bf16.mxu0 0
      %1658 = vmatmul.mubr.bf16.gmra.mrb[0].mxu0 %v1022
      %v1659 = vpop.f32.mrb[0].mxu0
      %v1660 = vadd.f32 0.0, %v1659
      %v1661 = vpop.f32.mrb[0].mxu0
      %v1662 = vpop.f32.mrb[0].mxu0
      %v1663 = vadd.f32 0.0, %v1662
      %v1664 = vpop.f32.mrb[0].mxu0
      %1665 = vmatprep.mubr.bf16.mxu0 0
      %1666 = vmatmul.mubr.bf16.gmra.mrb[0].mxu0 %v1023
      %v1667 = vpop.f32.mrb[0].mxu0
      %v1668 = vadd.f32 0.0, %v1667
      %v1669 = vpop.f32.mrb[0].mxu0
      %v1670 = vpop.f32.mrb[0].mxu0
      %v1671 = vadd.f32 0.0, %v1670
      %v1672 = vpop.f32.mrb[0].mxu0
      %1673 = vmatprep.mubr.bf16.mxu0 0
      %1674 = vmatmul.mubr.bf16.gmra.mrb[0].mxu0 %v1024
      %v1675 = vpop.f32.mrb[0].mxu0
      %v1676 = vadd.f32 0.0, %v1675
      %v1677 = vpop.f32.mrb[0].mxu0
      %v1678 = vpop.f32.mrb[0].mxu0
      %v1679 = vadd.f32 0.0, %v1678
      %v1680 = vpop.f32.mrb[0].mxu0
      %1681 = vdwg.mxu0
      %v1682 = vadd.f32 %v433, %v1172
      %v1683 = vadd.f32 %v434, %v1175
      %v1684 = vadd.f32 %v435, %v1180
      %v1685 = vadd.f32 %v436, %v1183
      %v1686 = vadd.f32 %v437, %v1188
      %v1687 = vadd.f32 %v438, %v1191
      %v1688 = vadd.f32 %v439, %v1196
      %v1689 = vadd.f32 %v440, %v1199
      %v1690 = vadd.f32 %v441, %v1204
      %v1691 = vadd.f32 %v442, %v1207
      %v1692 = vadd.f32 %v443, %v1212
      %v1693 = vadd.f32 %v444, %v1215
      %v1694 = vadd.f32 %v445, %v1220
      %v1695 = vadd.f32 %v446, %v1223
      %v1696 = vadd.f32 %v447, %v1228
      %v1697 = vadd.f32 %v448, %v1231
      %v1698 = vadd.f32 %v449, %v1236
      %v1699 = vadd.f32 %v450, %v1239
      %v1700 = vadd.f32 %v451, %v1244
      %v1701 = vadd.f32 %v452, %v1247
      %v1702 = vadd.f32 %v453, %v1252
      %v1703 = vadd.f32 %v454, %v1255
      %v1704 = vadd.f32 %v455, %v1260
      %v1705 = vadd.f32 %v456, %v1263
      %v1706 = vadd.f32 %v457, %v1268
      %v1707 = vadd.f32 %v458, %v1271
      %v1708 = vadd.f32 %v459, %v1276
      %v1709 = vadd.f32 %v460, %v1279
      %v1710 = vadd.f32 %v461, %v1284
      %v1711 = vadd.f32 %v462, %v1287
      %v1712 = vadd.f32 %v463, %v1292
      %v1713 = vadd.f32 %v464, %v1295
      %v1714 = vadd.f32 %v465, %v1300
      %v1715 = vadd.f32 %v466, %v1303
      %v1716 = vadd.f32 %v467, %v1308
      %v1717 = vadd.f32 %v468, %v1311
      %v1718 = vadd.f32 %v469, %v1316
      %v1719 = vadd.f32 %v470, %v1319
      %v1720 = vadd.f32 %v471, %v1324
      %v1721 = vadd.f32 %v472, %v1327
      %v1722 = vadd.f32 %v473, %v1332
      %v1723 = vadd.f32 %v474, %v1335
      %v1724 = vadd.f32 %v475, %v1340
      %v1725 = vadd.f32 %v476, %v1343
      %v1726 = vadd.f32 %v477, %v1348
      %v1727 = vadd.f32 %v478, %v1351
      %v1728 = vadd.f32 %v479, %v1356
      %v1729 = vadd.f32 %v480, %v1359
      %v1730 = vadd.f32 %v481, %v1364
      %v1731 = vadd.f32 %v482, %v1367
      %v1732 = vadd.f32 %v483, %v1372
      %v1733 = vadd.f32 %v484, %v1375
      %v1734 = vadd.f32 %v485, %v1380
      %v1735 = vadd.f32 %v486, %v1383
      %v1736 = vadd.f32 %v487, %v1388
      %v1737 = vadd.f32 %v488, %v1391
      %v1738 = vadd.f32 %v489, %v1396
      %v1739 = vadd.f32 %v490, %v1399
      %v1740 = vadd.f32 %v491, %v1404
      %v1741 = vadd.f32 %v492, %v1407
      %v1742 = vadd.f32 %v493, %v1412
      %v1743 = vadd.f32 %v494, %v1415
      %v1744 = vadd.f32 %v495, %v1420
      %v1745 = vadd.f32 %v496, %v1423
      %v1746 = vadd.f32 %v497, %v1428
      %v1747 = vadd.f32 %v498, %v1431
      %v1748 = vadd.f32 %v499, %v1436
      %v1749 = vadd.f32 %v500, %v1439
      %v1750 = vadd.f32 %v501, %v1444
      %v1751 = vadd.f32 %v502, %v1447
      %v1752 = vadd.f32 %v503, %v1452
      %v1753 = vadd.f32 %v504, %v1455
      %v1754 = vadd.f32 %v505, %v1460
      %v1755 = vadd.f32 %v506, %v1463
      %v1756 = vadd.f32 %v507, %v1468
      %v1757 = vadd.f32 %v508, %v1471
      %v1758 = vadd.f32 %v509, %v1476
      %v1759 = vadd.f32 %v510, %v1479
      %v1760 = vadd.f32 %v511, %v1484
      %v1761 = vadd.f32 %v512, %v1487
      %v1762 = vadd.f32 %v513, %v1492
      %v1763 = vadd.f32 %v514, %v1495
      %v1764 = vadd.f32 %v515, %v1500
      %v1765 = vadd.f32 %v516, %v1503
      %v1766 = vadd.f32 %v517, %v1508
      %v1767 = vadd.f32 %v518, %v1511
      %v1768 = vadd.f32 %v519, %v1516
      %v1769 = vadd.f32 %v520, %v1519
      %v1770 = vadd.f32 %v521, %v1524
      %v1771 = vadd.f32 %v522, %v1527
      %v1772 = vadd.f32 %v523, %v1532
      %v1773 = vadd.f32 %v524, %v1535
      %v1774 = vadd.f32 %v525, %v1540
      %v1775 = vadd.f32 %v526, %v1543
      %v1776 = vadd.f32 %v527, %v1548
      %v1777 = vadd.f32 %v528, %v1551
      %v1778 = vadd.f32 %v529, %v1556
      %v1779 = vadd.f32 %v530, %v1559
      %v1780 = vadd.f32 %v531, %v1564
      %v1781 = vadd.f32 %v532, %v1567
      %v1782 = vadd.f32 %v533, %v1572
      %v1783 = vadd.f32 %v534, %v1575
      %v1784 = vadd.f32 %v535, %v1580
      %v1785 = vadd.f32 %v536, %v1583
      %v1786 = vadd.f32 %v537, %v1588
      %v1787 = vadd.f32 %v538, %v1591
      %v1788 = vadd.f32 %v539, %v1596
      %v1789 = vadd.f32 %v540, %v1599
      %v1790 = vadd.f32 %v541, %v1604
      %v1791 = vadd.f32 %v542, %v1607
      %v1792 = vadd.f32 %v543, %v1612
      %v1793 = vadd.f32 %v544, %v1615
      %v1794 = vadd.f32 %v545, %v1620
      %v1795 = vadd.f32 %v546, %v1623
      %v1796 = vadd.f32 %v547, %v1628
      %v1797 = vadd.f32 %v548, %v1631
      %v1798 = vadd.f32 %v549, %v1636
      %v1799 = vadd.f32 %v550, %v1639
      %v1800 = vadd.f32 %v551, %v1644
      %v1801 = vadd.f32 %v552, %v1647
      %v1802 = vadd.f32 %v553, %v1652
      %v1803 = vadd.f32 %v554, %v1655
      %v1804 = vadd.f32 %v555, %v1660
      %v1805 = vadd.f32 %v556, %v1663
      %v1806 = vadd.f32 %v557, %v1668
      %v1807 = vadd.f32 %v558, %v1671
      %v1808 = vadd.f32 %v559, %v1676
      %v1809 = vadd.f32 %v560, %v1679
      %1810 = vst [vmem:[#allocation2] sm:$0xff] %v1682
      %1811 = vst [vmem:[#allocation2 + $0x8] sm:$0xff] %v1683
      %1812 = vst [vmem:[#allocation2 + $0x10] sm:$0xff] %v1684
      %1813 = vst [vmem:[#allocation2 + $0x18] sm:$0xff] %v1685
      %1814 = vst [vmem:[#allocation2 + $0x20] sm:$0xff] %v1686
      %1815 = vst [vmem:[#allocation2 + $0x28] sm:$0xff] %v1687
      %1816 = vst [vmem:[#allocation2 + $0x30] sm:$0xff] %v1688
      %1817 = vst [vmem:[#allocation2 + $0x38] sm:$0xff] %v1689
      %1818 = vst [vmem:[#allocation2 + $0x40] sm:$0xff] %v1690
      %1819 = vst [vmem:[#allocation2 + $0x48] sm:$0xff] %v1691
      %1820 = vst [vmem:[#allocation2 + $0x50] sm:$0xff] %v1692
      %1821 = vst [vmem:[#allocation2 + $0x58] sm:$0xff] %v1693
      %1822 = vst [vmem:[#allocation2 + $0x60] sm:$0xff] %v1694
      %1823 = vst [vmem:[#allocation2 + $0x68] sm:$0xff] %v1695
      %1824 = vst [vmem:[#allocation2 + $0x70] sm:$0xff] %v1696
      %1825 = vst [vmem:[#allocation2 + $0x78] sm:$0xff] %v1697
      %1826 = vst [vmem:[#allocation2 + $0x80] sm:$0xff] %v1698
      %1827 = vst [vmem:[#allocation2 + $0x88] sm:$0xff] %v1699
      %1828 = vst [vmem:[#allocation2 + $0x90] sm:$0xff] %v1700
      %1829 = vst [vmem:[#allocation2 + $0x98] sm:$0xff] %v1701
      %1830 = vst [vmem:[#allocation2 + $0xa0] sm:$0xff] %v1702
      %1831 = vst [vmem:[#allocation2 + $0xa8] sm:$0xff] %v1703
      %1832 = vst [vmem:[#allocation2 + $0xb0] sm:$0xff] %v1704
      %1833 = vst [vmem:[#allocation2 + $0xb8] sm:$0xff] %v1705
      %1834 = vst [vmem:[#allocation2 + $0xc0] sm:$0xff] %v1706
      %1835 = vst [vmem:[#allocation2 + $0xc8] sm:$0xff] %v1707
      %1836 = vst [vmem:[#allocation2 + $0xd0] sm:$0xff] %v1708
      %1837 = vst [vmem:[#allocation2 + $0xd8] sm:$0xff] %v1709
      %1838 = vst [vmem:[#allocation2 + $0xe0] sm:$0xff] %v1710
      %1839 = vst [vmem:[#allocation2 + $0xe8] sm:$0xff] %v1711
      %1840 = vst [vmem:[#allocation2 + $0xf0] sm:$0xff] %v1712
      %1841 = vst [vmem:[#allocation2 + $0xf8] sm:$0xff] %v1713
      %1842 = vst [vmem:[#allocation2 + $0x100] sm:$0xff] %v1714
      %1843 = vst [vmem:[#allocation2 + $0x108] sm:$0xff] %v1715
      %1844 = vst [vmem:[#allocation2 + $0x110] sm:$0xff] %v1716
      %1845 = vst [vmem:[#allocation2 + $0x118] sm:$0xff] %v1717
      %1846 = vst [vmem:[#allocation2 + $0x120] sm:$0xff] %v1718
      %1847 = vst [vmem:[#allocation2 + $0x128] sm:$0xff] %v1719
      %1848 = vst [vmem:[#allocation2 + $0x130] sm:$0xff] %v1720
      %1849 = vst [vmem:[#allocation2 + $0x138] sm:$0xff] %v1721
      %1850 = vst [vmem:[#allocation2 + $0x140] sm:$0xff] %v1722
      %1851 = vst [vmem:[#allocation2 + $0x148] sm:$0xff] %v1723
      %1852 = vst [vmem:[#allocation2 + $0x150] sm:$0xff] %v1724
      %1853 = vst [vmem:[#allocation2 + $0x158] sm:$0xff] %v1725
      %1854 = vst [vmem:[#allocation2 + $0x160] sm:$0xff] %v1726
      %1855 = vst [vmem:[#allocation2 + $0x168] sm:$0xff] %v1727
      %1856 = vst [vmem:[#allocation2 + $0x170] sm:$0xff] %v1728
      %1857 = vst [vmem:[#allocation2 + $0x178] sm:$0xff] %v1729
      %1858 = vst [vmem:[#allocation2 + $0x180] sm:$0xff] %v1730
      %1859 = vst [vmem:[#allocation2 + $0x188] sm:$0xff] %v1731
      %1860 = vst [vmem:[#allocation2 + $0x190] sm:$0xff] %v1732
      %1861 = vst [vmem:[#allocation2 + $0x198] sm:$0xff] %v1733
      %1862 = vst [vmem:[#allocation2 + $0x1a0] sm:$0xff] %v1734
      %1863 = vst [vmem:[#allocation2 + $0x1a8] sm:$0xff] %v1735
      %1864 = vst [vmem:[#allocation2 + $0x1b0] sm:$0xff] %v1736
      %1865 = vst [vmem:[#allocation2 + $0x1b8] sm:$0xff] %v1737
      %1866 = vst [vmem:[#allocation2 + $0x1c0] sm:$0xff] %v1738
      %1867 = vst [vmem:[#allocation2 + $0x1c8] sm:$0xff] %v1739
      %1868 = vst [vmem:[#allocation2 + $0x1d0] sm:$0xff] %v1740
      %1869 = vst [vmem:[#allocation2 + $0x1d8] sm:$0xff] %v1741
      %1870 = vst [vmem:[#allocation2 + $0x1e0] sm:$0xff] %v1742
      %1871 = vst [vmem:[#allocation2 + $0x1e8] sm:$0xff] %v1743
      %1872 = vst [vmem:[#allocation2 + $0x1f0] sm:$0xff] %v1744
      %1873 = vst [vmem:[#allocation2 + $0x1f8] sm:$0xff] %v1745
      %1874 = vst [vmem:[#allocation2 + $0x200] sm:$0xff] %v1746
      %1875 = vst [vmem:[#allocation2 + $0x208] sm:$0xff] %v1747
      %1876 = vst [vmem:[#allocation2 + $0x210] sm:$0xff] %v1748
      %1877 = vst [vmem:[#allocation2 + $0x218] sm:$0xff] %v1749
      %1878 = vst [vmem:[#allocation2 + $0x220] sm:$0xff] %v1750
      %1879 = vst [vmem:[#allocation2 + $0x228] sm:$0xff] %v1751
      %1880 = vst [vmem:[#allocation2 + $0x230] sm:$0xff] %v1752
      %1881 = vst [vmem:[#allocation2 + $0x238] sm:$0xff] %v1753
      %1882 = vst [vmem:[#allocation2 + $0x240] sm:$0xff] %v1754
      %1883 = vst [vmem:[#allocation2 + $0x248] sm:$0xff] %v1755
      %1884 = vst [vmem:[#allocation2 + $0x250] sm:$0xff] %v1756
      %1885 = vst [vmem:[#allocation2 + $0x258] sm:$0xff] %v1757
      %1886 = vst [vmem:[#allocation2 + $0x260] sm:$0xff] %v1758
      %1887 = vst [vmem:[#allocation2 + $0x268] sm:$0xff] %v1759
      %1888 = vst [vmem:[#allocation2 + $0x270] sm:$0xff] %v1760
      %1889 = vst [vmem:[#allocation2 + $0x278] sm:$0xff] %v1761
      %1890 = vst [vmem:[#allocation2 + $0x280] sm:$0xff] %v1762
      %1891 = vst [vmem:[#allocation2 + $0x288] sm:$0xff] %v1763
      %1892 = vst [vmem:[#allocation2 + $0x290] sm:$0xff] %v1764
      %1893 = vst [vmem:[#allocation2 + $0x298] sm:$0xff] %v1765
      %1894 = vst [vmem:[#allocation2 + $0x2a0] sm:$0xff] %v1766
      %1895 = vst [vmem:[#allocation2 + $0x2a8] sm:$0xff] %v1767
      %1896 = vst [vmem:[#allocation2 + $0x2b0] sm:$0xff] %v1768
      %1897 = vst [vmem:[#allocation2 + $0x2b8] sm:$0xff] %v1769
      %1898 = vst [vmem:[#allocation2 + $0x2c0] sm:$0xff] %v1770
      %1899 = vst [vmem:[#allocation2 + $0x2c8] sm:$0xff] %v1771
      %1900 = vst [vmem:[#allocation2 + $0x2d0] sm:$0xff] %v1772
      %1901 = vst [vmem:[#allocation2 + $0x2d8] sm:$0xff] %v1773
      %1902 = vst [vmem:[#allocation2 + $0x2e0] sm:$0xff] %v1774
      %1903 = vst [vmem:[#allocation2 + $0x2e8] sm:$0xff] %v1775
      %1904 = vst [vmem:[#allocation2 + $0x2f0] sm:$0xff] %v1776
      %1905 = vst [vmem:[#allocation2 + $0x2f8] sm:$0xff] %v1777
      %1906 = vst [vmem:[#allocation2 + $0x300] sm:$0xff] %v1778
      %1907 = vst [vmem:[#allocation2 + $0x308] sm:$0xff] %v1779
      %1908 = vst [vmem:[#allocation2 + $0x310] sm:$0xff] %v1780
      %1909 = vst [vmem:[#allocation2 + $0x318] sm:$0xff] %v1781
      %1910 = vst [vmem:[#allocation2 + $0x320] sm:$0xff] %v1782
      %1911 = vst [vmem:[#allocation2 + $0x328] sm:$0xff] %v1783
      %1912 = vst [vmem:[#allocation2 + $0x330] sm:$0xff] %v1784
      %1913 = vst [vmem:[#allocation2 + $0x338] sm:$0xff] %v1785
      %1914 = vst [vmem:[#allocation2 + $0x340] sm:$0xff] %v1786
      %1915 = vst [vmem:[#allocation2 + $0x348] sm:$0xff] %v1787
      %1916 = vst [vmem:[#allocation2 + $0x350] sm:$0xff] %v1788
      %1917 = vst [vmem:[#allocation2 + $0x358] sm:$0xff] %v1789
      %1918 = vst [vmem:[#allocation2 + $0x360] sm:$0xff] %v1790
      %1919 = vst [vmem:[#allocation2 + $0x368] sm:$0xff] %v1791
      %1920 = vst [vmem:[#allocation2 + $0x370] sm:$0xff] %v1792
      %1921 = vst [vmem:[#allocation2 + $0x378] sm:$0xff] %v1793
      %1922 = vst [vmem:[#allocation2 + $0x380] sm:$0xff] %v1794
      %1923 = vst [vmem:[#allocation2 + $0x388] sm:$0xff] %v1795
      %1924 = vst [vmem:[#allocation2 + $0x390] sm:$0xff] %v1796
      %1925 = vst [vmem:[#allocation2 + $0x398] sm:$0xff] %v1797
      %1926 = vst [vmem:[#allocation2 + $0x3a0] sm:$0xff] %v1798
      %1927 = vst [vmem:[#allocation2 + $0x3a8] sm:$0xff] %v1799
      %1928 = vst [vmem:[#allocation2 + $0x3b0] sm:$0xff] %v1800
      %1929 = vst [vmem:[#allocation2 + $0x3b8] sm:$0xff] %v1801
      %1930 = vst [vmem:[#allocation2 + $0x3c0] sm:$0xff] %v1802
      %1931 = vst [vmem:[#allocation2 + $0x3c8] sm:$0xff] %v1803
      %1932 = vst [vmem:[#allocation2 + $0x3d0] sm:$0xff] %v1804
      %1933 = vst [vmem:[#allocation2 + $0x3d8] sm:$0xff] %v1805
      %1934 = vst [vmem:[#allocation2 + $0x3e0] sm:$0xff] %v1806
      %1935 = vst [vmem:[#allocation2 + $0x3e8] sm:$0xff] %v1807
      %1936 = vst [vmem:[#allocation2 + $0x3f0] sm:$0xff] %v1808
      %1937 = vst [vmem:[#allocation2 + $0x3f8] sm:$0xff] %v1809
      // Predicated region
      $region41: #{depth_lstm_forward.9} parent=35 // pred_check
        %p1938 = pneg %p301
      $region42: #{depth_lstm_forward.9} parent=35 // pred_check_branch
        %1940 = sbr.rel (%p1938) target = $region44
      $region43: #{depth_lstm_forward.9} parent=35 // pred_region
        %v1941 = vld [vmem:[#allocation2] sm:$0xff]
        %v1942 = vld [vmem:[#allocation2 + $0x8] sm:$0xff]
        %v1943 = vld [vmem:[#allocation2 + $0x10] sm:$0xff]
        %v1944 = vld [vmem:[#allocation2 + $0x18] sm:$0xff]
        %v1945 = vld [vmem:[#allocation2 + $0x20] sm:$0xff]
        %v1946 = vld [vmem:[#allocation2 + $0x28] sm:$0xff]
        %v1947 = vld [vmem:[#allocation2 + $0x30] sm:$0xff]
        %v1948 = vld [vmem:[#allocation2 + $0x38] sm:$0xff]
        %v1949 = vld [vmem:[#allocation2 + $0x40] sm:$0xff]
        %v1950 = vld [vmem:[#allocation2 + $0x48] sm:$0xff]
        %v1951 = vld [vmem:[#allocation2 + $0x50] sm:$0xff]
        %v1952 = vld [vmem:[#allocation2 + $0x58] sm:$0xff]
        %v1953 = vld [vmem:[#allocation2 + $0x60] sm:$0xff]
        %v1954 = vld [vmem:[#allocation2 + $0x68] sm:$0xff]
        %v1955 = vld [vmem:[#allocation2 + $0x70] sm:$0xff]
        %v1956 = vld [vmem:[#allocation2 + $0x78] sm:$0xff]
        %v1957 = vld [vmem:[#allocation2 + $0x80] sm:$0xff]
        %v1958 = vld [vmem:[#allocation2 + $0x88] sm:$0xff]
        %v1959 = vld [vmem:[#allocation2 + $0x90] sm:$0xff]
        %v1960 = vld [vmem:[#allocation2 + $0x98] sm:$0xff]
        %v1961 = vld [vmem:[#allocation2 + $0xa0] sm:$0xff]
        %v1962 = vld [vmem:[#allocation2 + $0xa8] sm:$0xff]
        %v1963 = vld [vmem:[#allocation2 + $0xb0] sm:$0xff]
        %v1964 = vld [vmem:[#allocation2 + $0xb8] sm:$0xff]
        %v1965 = vld [vmem:[#allocation2 + $0xc0] sm:$0xff]
        %v1966 = vld [vmem:[#allocation2 + $0xc8] sm:$0xff]
        %v1967 = vld [vmem:[#allocation2 + $0xd0] sm:$0xff]
        %v1968 = vld [vmem:[#allocation2 + $0xd8] sm:$0xff]
        %v1969 = vld [vmem:[#allocation2 + $0xe0] sm:$0xff]
        %v1970 = vld [vmem:[#allocation2 + $0xe8] sm:$0xff]
        %v1971 = vld [vmem:[#allocation2 + $0xf0] sm:$0xff]
        %v1972 = vld [vmem:[#allocation2 + $0xf8] sm:$0xff]
        %v1973 = vld [vmem:[#allocation2 + $0x100] sm:$0xff]
        %v1974 = vld [vmem:[#allocation2 + $0x108] sm:$0xff]
        %v1975 = vld [vmem:[#allocation2 + $0x110] sm:$0xff]
        %v1976 = vld [vmem:[#allocation2 + $0x118] sm:$0xff]
        %v1977 = vld [vmem:[#allocation2 + $0x120] sm:$0xff]
        %v1978 = vld [vmem:[#allocation2 + $0x128] sm:$0xff]
        %v1979 = vld [vmem:[#allocation2 + $0x130] sm:$0xff]
        %v1980 = vld [vmem:[#allocation2 + $0x138] sm:$0xff]
        %v1981 = vld [vmem:[#allocation2 + $0x140] sm:$0xff]
        %v1982 = vld [vmem:[#allocation2 + $0x148] sm:$0xff]
        %v1983 = vld [vmem:[#allocation2 + $0x150] sm:$0xff]
        %v1984 = vld [vmem:[#allocation2 + $0x158] sm:$0xff]
        %v1985 = vld [vmem:[#allocation2 + $0x160] sm:$0xff]
        %v1986 = vld [vmem:[#allocation2 + $0x168] sm:$0xff]
        %v1987 = vld [vmem:[#allocation2 + $0x170] sm:$0xff]
        %v1988 = vld [vmem:[#allocation2 + $0x178] sm:$0xff]
        %v1989 = vld [vmem:[#allocation2 + $0x180] sm:$0xff]
        %v1990 = vld [vmem:[#allocation2 + $0x188] sm:$0xff]
        %v1991 = vld [vmem:[#allocation2 + $0x190] sm:$0xff]
        %v1992 = vld [vmem:[#allocation2 + $0x198] sm:$0xff]
        %v1993 = vld [vmem:[#allocation2 + $0x1a0] sm:$0xff]
        %v1994 = vld [vmem:[#allocation2 + $0x1a8] sm:$0xff]
        %v1995 = vld [vmem:[#allocation2 + $0x1b0] sm:$0xff]
        %v1996 = vld [vmem:[#allocation2 + $0x1b8] sm:$0xff]
        %v1997 = vld [vmem:[#allocation2 + $0x1c0] sm:$0xff]
        %v1998 = vld [vmem:[#allocation2 + $0x1c8] sm:$0xff]
        %v1999 = vld [vmem:[#allocation2 + $0x1d0] sm:$0xff]
        %v2000 = vld [vmem:[#allocation2 + $0x1d8] sm:$0xff]
        %v2001 = vld [vmem:[#allocation2 + $0x1e0] sm:$0xff]
        %v2002 = vld [vmem:[#allocation2 + $0x1e8] sm:$0xff]
        %v2003 = vld [vmem:[#allocation2 + $0x1f0] sm:$0xff]
        %v2004 = vld [vmem:[#allocation2 + $0x1f8] sm:$0xff]
        %v2005 = vld [vmem:[#allocation2 + $0x200] sm:$0xff]
        %v2006 = vld [vmem:[#allocation2 + $0x208] sm:$0xff]
        %v2007 = vld [vmem:[#allocation2 + $0x210] sm:$0xff]
        %v2008 = vld [vmem:[#allocation2 + $0x218] sm:$0xff]
        %v2009 = vld [vmem:[#allocation2 + $0x220] sm:$0xff]
        %v2010 = vld [vmem:[#allocation2 + $0x228] sm:$0xff]
        %v2011 = vld [vmem:[#allocation2 + $0x230] sm:$0xff]
        %v2012 = vld [vmem:[#allocation2 + $0x238] sm:$0xff]
        %v2013 = vld [vmem:[#allocation2 + $0x240] sm:$0xff]
        %v2014 = vld [vmem:[#allocation2 + $0x248] sm:$0xff]
        %v2015 = vld [vmem:[#allocation2 + $0x250] sm:$0xff]
        %v2016 = vld [vmem:[#allocation2 + $0x258] sm:$0xff]
        %v2017 = vld [vmem:[#allocation2 + $0x260] sm:$0xff]
        %v2018 = vld [vmem:[#allocation2 + $0x268] sm:$0xff]
        %v2019 = vld [vmem:[#allocation2 + $0x270] sm:$0xff]
        %v2020 = vld [vmem:[#allocation2 + $0x278] sm:$0xff]
        %v2021 = vld [vmem:[#allocation2 + $0x280] sm:$0xff]
        %v2022 = vld [vmem:[#allocation2 + $0x288] sm:$0xff]
        %v2023 = vld [vmem:[#allocation2 + $0x290] sm:$0xff]
        %v2024 = vld [vmem:[#allocation2 + $0x298] sm:$0xff]
        %v2025 = vld [vmem:[#allocation2 + $0x2a0] sm:$0xff]
        %v2026 = vld [vmem:[#allocation2 + $0x2a8] sm:$0xff]
        %v2027 = vld [vmem:[#allocation2 + $0x2b0] sm:$0xff]
        %v2028 = vld [vmem:[#allocation2 + $0x2b8] sm:$0xff]
        %v2029 = vld [vmem:[#allocation2 + $0x2c0] sm:$0xff]
        %v2030 = vld [vmem:[#allocation2 + $0x2c8] sm:$0xff]
        %v2031 = vld [vmem:[#allocation2 + $0x2d0] sm:$0xff]
        %v2032 = vld [vmem:[#allocation2 + $0x2d8] sm:$0xff]
        %v2033 = vld [vmem:[#allocation2 + $0x2e0] sm:$0xff]
        %v2034 = vld [vmem:[#allocation2 + $0x2e8] sm:$0xff]
        %v2035 = vld [vmem:[#allocation2 + $0x2f0] sm:$0xff]
        %v2036 = vld [vmem:[#allocation2 + $0x2f8] sm:$0xff]
        %v2037 = vld [vmem:[#allocation2 + $0x300] sm:$0xff]
        %v2038 = vld [vmem:[#allocation2 + $0x308] sm:$0xff]
        %v2039 = vld [vmem:[#allocation2 + $0x310] sm:$0xff]
        %v2040 = vld [vmem:[#allocation2 + $0x318] sm:$0xff]
        %v2041 = vld [vmem:[#allocation2 + $0x320] sm:$0xff]
        %v2042 = vld [vmem:[#allocation2 + $0x328] sm:$0xff]
        %v2043 = vld [vmem:[#allocation2 + $0x330] sm:$0xff]
        %v2044 = vld [vmem:[#allocation2 + $0x338] sm:$0xff]
        %v2045 = vld [vmem:[#allocation2 + $0x340] sm:$0xff]
        %v2046 = vld [vmem:[#allocation2 + $0x348] sm:$0xff]
        %v2047 = vld [vmem:[#allocation2 + $0x350] sm:$0xff]
        %v2048 = vld [vmem:[#allocation2 + $0x358] sm:$0xff]
        %v2049 = vld [vmem:[#allocation2 + $0x360] sm:$0xff]
        %v2050 = vld [vmem:[#allocation2 + $0x368] sm:$0xff]
        %v2051 = vld [vmem:[#allocation2 + $0x370] sm:$0xff]
        %v2052 = vld [vmem:[#allocation2 + $0x378] sm:$0xff]
        %v2053 = vld [vmem:[#allocation2 + $0x380] sm:$0xff]
        %v2054 = vld [vmem:[#allocation2 + $0x388] sm:$0xff]
        %v2055 = vld [vmem:[#allocation2 + $0x390] sm:$0xff]
        %v2056 = vld [vmem:[#allocation2 + $0x398] sm:$0xff]
        %v2057 = vld [vmem:[#allocation2 + $0x3a0] sm:$0xff]
        %v2058 = vld [vmem:[#allocation2 + $0x3a8] sm:$0xff]
        %v2059 = vld [vmem:[#allocation2 + $0x3b0] sm:$0xff]
        %v2060 = vld [vmem:[#allocation2 + $0x3b8] sm:$0xff]
        %v2061 = vld [vmem:[#allocation2 + $0x3c0] sm:$0xff]
        %v2062 = vld [vmem:[#allocation2 + $0x3c8] sm:$0xff]
        %v2063 = vld [vmem:[#allocation2 + $0x3d0] sm:$0xff]
        %v2064 = vld [vmem:[#allocation2 + $0x3d8] sm:$0xff]
        %v2065 = vld [vmem:[#allocation2 + $0x3e0] sm:$0xff]
        %v2066 = vld [vmem:[#allocation2 + $0x3e8] sm:$0xff]
        %v2067 = vld [vmem:[#allocation2 + $0x3f0] sm:$0xff]
        %v2068 = vld [vmem:[#allocation2 + $0x3f8] sm:$0xff]
        %v2069 = vld [vmem:[%s287] sm:$0x1]
        %v2071 = vlaneseq
        %v2072 = vshrl.u32 %v2071, 7
        %v2073 = vsub.s32 0, %v2072
        %v2074 = vrot.slane %v2069, %v2073
        %v2076 = vmul.f32 %v1941, %v2074
        %v2077 = vmul.f32 %v1942, %v2074
        %v2078 = vmul.f32 %v1943, %v2074
        %v2079 = vmul.f32 %v1944, %v2074
        %v2080 = vmul.f32 %v1945, %v2074
        %v2081 = vmul.f32 %v1946, %v2074
        %v2082 = vmul.f32 %v1947, %v2074
        %v2083 = vmul.f32 %v1948, %v2074
        %v2084 = vmul.f32 %v1949, %v2074
        %v2085 = vmul.f32 %v1950, %v2074
        %v2086 = vmul.f32 %v1951, %v2074
        %v2087 = vmul.f32 %v1952, %v2074
        %v2088 = vmul.f32 %v1953, %v2074
        %v2089 = vmul.f32 %v1954, %v2074
        %v2090 = vmul.f32 %v1955, %v2074
        %v2091 = vmul.f32 %v1956, %v2074
        %v2092 = vmul.f32 %v1957, %v2074
        %v2093 = vmul.f32 %v1958, %v2074
        %v2094 = vmul.f32 %v1959, %v2074
        %v2095 = vmul.f32 %v1960, %v2074
        %v2096 = vmul.f32 %v1961, %v2074
        %v2097 = vmul.f32 %v1962, %v2074
        %v2098 = vmul.f32 %v1963, %v2074
        %v2099 = vmul.f32 %v1964, %v2074
        %v2100 = vmul.f32 %v1965, %v2074
        %v2101 = vmul.f32 %v1966, %v2074
        %v2102 = vmul.f32 %v1967, %v2074
        %v2103 = vmul.f32 %v1968, %v2074
        %v2104 = vmul.f32 %v1969, %v2074
        %v2105 = vmul.f32 %v1970, %v2074
        %v2106 = vmul.f32 %v1971, %v2074
        %v2107 = vmul.f32 %v1972, %v2074
        %v2108 = vmul.f32 %v1973, %v2074
        %v2109 = vmul.f32 %v1974, %v2074
        %v2110 = vmul.f32 %v1975, %v2074
        %v2111 = vmul.f32 %v1976, %v2074
        %v2112 = vmul.f32 %v1977, %v2074
        %v2113 = vmul.f32 %v1978, %v2074
        %v2114 = vmul.f32 %v1979, %v2074
        %v2115 = vmul.f32 %v1980, %v2074
        %v2116 = vmul.f32 %v1981, %v2074
        %v2117 = vmul.f32 %v1982, %v2074
        %v2118 = vmul.f32 %v1983, %v2074
        %v2119 = vmul.f32 %v1984, %v2074
        %v2120 = vmul.f32 %v1985, %v2074
        %v2121 = vmul.f32 %v1986, %v2074
        %v2122 = vmul.f32 %v1987, %v2074
        %v2123 = vmul.f32 %v1988, %v2074
        %v2124 = vmul.f32 %v1989, %v2074
        %v2125 = vmul.f32 %v1990, %v2074
        %v2126 = vmul.f32 %v1991, %v2074
        %v2127 = vmul.f32 %v1992, %v2074
        %v2128 = vmul.f32 %v1993, %v2074
        %v2129 = vmul.f32 %v1994, %v2074
        %v2130 = vmul.f32 %v1995, %v2074
        %v2131 = vmul.f32 %v1996, %v2074
        %v2132 = vmul.f32 %v1997, %v2074
        %v2133 = vmul.f32 %v1998, %v2074
        %v2134 = vmul.f32 %v1999, %v2074
        %v2135 = vmul.f32 %v2000, %v2074
        %v2136 = vmul.f32 %v2001, %v2074
        %v2137 = vmul.f32 %v2002, %v2074
        %v2138 = vmul.f32 %v2003, %v2074
        %v2139 = vmul.f32 %v2004, %v2074
        %v2140 = vmul.f32 %v2005, %v2074
        %v2141 = vmul.f32 %v2006, %v2074
        %v2142 = vmul.f32 %v2007, %v2074
        %v2143 = vmul.f32 %v2008, %v2074
        %v2144 = vmul.f32 %v2009, %v2074
        %v2145 = vmul.f32 %v2010, %v2074
        %v2146 = vmul.f32 %v2011, %v2074
        %v2147 = vmul.f32 %v2012, %v2074
        %v2148 = vmul.f32 %v2013, %v2074
        %v2149 = vmul.f32 %v2014, %v2074
        %v2150 = vmul.f32 %v2015, %v2074
        %v2151 = vmul.f32 %v2016, %v2074
        %v2152 = vmul.f32 %v2017, %v2074
        %v2153 = vmul.f32 %v2018, %v2074
        %v2154 = vmul.f32 %v2019, %v2074
        %v2155 = vmul.f32 %v2020, %v2074
        %v2156 = vmul.f32 %v2021, %v2074
        %v2157 = vmul.f32 %v2022, %v2074
        %v2158 = vmul.f32 %v2023, %v2074
        %v2159 = vmul.f32 %v2024, %v2074
        %v2160 = vmul.f32 %v2025, %v2074
        %v2161 = vmul.f32 %v2026, %v2074
        %v2162 = vmul.f32 %v2027, %v2074
        %v2163 = vmul.f32 %v2028, %v2074
        %v2164 = vmul.f32 %v2029, %v2074
        %v2165 = vmul.f32 %v2030, %v2074
        %v2166 = vmul.f32 %v2031, %v2074
        %v2167 = vmul.f32 %v2032, %v2074
        %v2168 = vmul.f32 %v2033, %v2074
        %v2169 = vmul.f32 %v2034, %v2074
        %v2170 = vmul.f32 %v2035, %v2074
        %v2171 = vmul.f32 %v2036, %v2074
        %v2172 = vmul.f32 %v2037, %v2074
        %v2173 = vmul.f32 %v2038, %v2074
        %v2174 = vmul.f32 %v2039, %v2074
        %v2175 = vmul.f32 %v2040, %v2074
        %v2176 = vmul.f32 %v2041, %v2074
        %v2177 = vmul.f32 %v2042, %v2074
        %v2178 = vmul.f32 %v2043, %v2074
        %v2179 = vmul.f32 %v2044, %v2074
        %v2180 = vmul.f32 %v2045, %v2074
        %v2181 = vmul.f32 %v2046, %v2074
        %v2182 = vmul.f32 %v2047, %v2074
        %v2183 = vmul.f32 %v2048, %v2074
        %v2184 = vmul.f32 %v2049, %v2074
        %v2185 = vmul.f32 %v2050, %v2074
        %v2186 = vmul.f32 %v2051, %v2074
        %v2187 = vmul.f32 %v2052, %v2074
        %v2188 = vmul.f32 %v2053, %v2074
        %v2189 = vmul.f32 %v2054, %v2074
        %v2190 = vmul.f32 %v2055, %v2074
        %v2191 = vmul.f32 %v2056, %v2074
        %v2192 = vmul.f32 %v2057, %v2074
        %v2193 = vmul.f32 %v2058, %v2074
        %v2194 = vmul.f32 %v2059, %v2074
        %v2195 = vmul.f32 %v2060, %v2074
        %v2196 = vmul.f32 %v2061, %v2074
        %v2197 = vmul.f32 %v2062, %v2074
        %v2198 = vmul.f32 %v2063, %v2074
        %v2199 = vmul.f32 %v2064, %v2074
        %v2200 = vmul.f32 %v2065, %v2074
        %v2201 = vmul.f32 %v2066, %v2074
        %v2202 = vmul.f32 %v2067, %v2074
        %v2203 = vmul.f32 %v2068, %v2074
        %v2204 = vld [vmem:[%s290] sm:$0x1]
        %v2206 = vlaneseq
        %v2207 = vshrl.u32 %v2206, 7
        %v2208 = vsub.s32 0, %v2207
        %v2209 = vrot.slane %v2204, %v2208
        %v2211 = vadd.f32 %v2076, %v2209
        %v2212 = vadd.f32 %v2077, %v2209
        %v2213 = vadd.f32 %v2078, %v2209
        %v2214 = vadd.f32 %v2079, %v2209
        %v2215 = vadd.f32 %v2080, %v2209
        %v2216 = vadd.f32 %v2081, %v2209
        %v2217 = vadd.f32 %v2082, %v2209
        %v2218 = vadd.f32 %v2083, %v2209
        %v2219 = vadd.f32 %v2084, %v2209
        %v2220 = vadd.f32 %v2085, %v2209
        %v2221 = vadd.f32 %v2086, %v2209
        %v2222 = vadd.f32 %v2087, %v2209
        %v2223 = vadd.f32 %v2088, %v2209
        %v2224 = vadd.f32 %v2089, %v2209
        %v2225 = vadd.f32 %v2090, %v2209
        %v2226 = vadd.f32 %v2091, %v2209
        %v2227 = vadd.f32 %v2092, %v2209
        %v2228 = vadd.f32 %v2093, %v2209
        %v2229 = vadd.f32 %v2094, %v2209
        %v2230 = vadd.f32 %v2095, %v2209
        %v2231 = vadd.f32 %v2096, %v2209
        %v2232 = vadd.f32 %v2097, %v2209
        %v2233 = vadd.f32 %v2098, %v2209
        %v2234 = vadd.f32 %v2099, %v2209
        %v2235 = vadd.f32 %v2100, %v2209
        %v2236 = vadd.f32 %v2101, %v2209
        %v2237 = vadd.f32 %v2102, %v2209
        %v2238 = vadd.f32 %v2103, %v2209
        %v2239 = vadd.f32 %v2104, %v2209
        %v2240 = vadd.f32 %v2105, %v2209
        %v2241 = vadd.f32 %v2106, %v2209
        %v2242 = vadd.f32 %v2107, %v2209
        %v2243 = vadd.f32 %v2108, %v2209
        %v2244 = vadd.f32 %v2109, %v2209
        %v2245 = vadd.f32 %v2110, %v2209
        %v2246 = vadd.f32 %v2111, %v2209
        %v2247 = vadd.f32 %v2112, %v2209
        %v2248 = vadd.f32 %v2113, %v2209
        %v2249 = vadd.f32 %v2114, %v2209
        %v2250 = vadd.f32 %v2115, %v2209
        %v2251 = vadd.f32 %v2116, %v2209
        %v2252 = vadd.f32 %v2117, %v2209
        %v2253 = vadd.f32 %v2118, %v2209
        %v2254 = vadd.f32 %v2119, %v2209
        %v2255 = vadd.f32 %v2120, %v2209
        %v2256 = vadd.f32 %v2121, %v2209
        %v2257 = vadd.f32 %v2122, %v2209
        %v2258 = vadd.f32 %v2123, %v2209
        %v2259 = vadd.f32 %v2124, %v2209
        %v2260 = vadd.f32 %v2125, %v2209
        %v2261 = vadd.f32 %v2126, %v2209
        %v2262 = vadd.f32 %v2127, %v2209
        %v2263 = vadd.f32 %v2128, %v2209
        %v2264 = vadd.f32 %v2129, %v2209
        %v2265 = vadd.f32 %v2130, %v2209
        %v2266 = vadd.f32 %v2131, %v2209
        %v2267 = vadd.f32 %v2132, %v2209
        %v2268 = vadd.f32 %v2133, %v2209
        %v2269 = vadd.f32 %v2134, %v2209
        %v2270 = vadd.f32 %v2135, %v2209
        %v2271 = vadd.f32 %v2136, %v2209
        %v2272 = vadd.f32 %v2137, %v2209
        %v2273 = vadd.f32 %v2138, %v2209
        %v2274 = vadd.f32 %v2139, %v2209
        %v2275 = vadd.f32 %v2140, %v2209
        %v2276 = vadd.f32 %v2141, %v2209
        %v2277 = vadd.f32 %v2142, %v2209
        %v2278 = vadd.f32 %v2143, %v2209
        %v2279 = vadd.f32 %v2144, %v2209
        %v2280 = vadd.f32 %v2145, %v2209
        %v2281 = vadd.f32 %v2146, %v2209
        %v2282 = vadd.f32 %v2147, %v2209
        %v2283 = vadd.f32 %v2148, %v2209
        %v2284 = vadd.f32 %v2149, %v2209
        %v2285 = vadd.f32 %v2150, %v2209
        %v2286 = vadd.f32 %v2151, %v2209
        %v2287 = vadd.f32 %v2152, %v2209
        %v2288 = vadd.f32 %v2153, %v2209
        %v2289 = vadd.f32 %v2154, %v2209
        %v2290 = vadd.f32 %v2155, %v2209
        %v2291 = vadd.f32 %v2156, %v2209
        %v2292 = vadd.f32 %v2157, %v2209
        %v2293 = vadd.f32 %v2158, %v2209
        %v2294 = vadd.f32 %v2159, %v2209
        %v2295 = vadd.f32 %v2160, %v2209
        %v2296 = vadd.f32 %v2161, %v2209
        %v2297 = vadd.f32 %v2162, %v2209
        %v2298 = vadd.f32 %v2163, %v2209
        %v2299 = vadd.f32 %v2164, %v2209
        %v2300 = vadd.f32 %v2165, %v2209
        %v2301 = vadd.f32 %v2166, %v2209
        %v2302 = vadd.f32 %v2167, %v2209
        %v2303 = vadd.f32 %v2168, %v2209
        %v2304 = vadd.f32 %v2169, %v2209
        %v2305 = vadd.f32 %v2170, %v2209
        %v2306 = vadd.f32 %v2171, %v2209
        %v2307 = vadd.f32 %v2172, %v2209
        %v2308 = vadd.f32 %v2173, %v2209
        %v2309 = vadd.f32 %v2174, %v2209
        %v2310 = vadd.f32 %v2175, %v2209
        %v2311 = vadd.f32 %v2176, %v2209
        %v2312 = vadd.f32 %v2177, %v2209
        %v2313 = vadd.f32 %v2178, %v2209
        %v2314 = vadd.f32 %v2179, %v2209
        %v2315 = vadd.f32 %v2180, %v2209
        %v2316 = vadd.f32 %v2181, %v2209
        %v2317 = vadd.f32 %v2182, %v2209
        %v2318 = vadd.f32 %v2183, %v2209
        %v2319 = vadd.f32 %v2184, %v2209
        %v2320 = vadd.f32 %v2185, %v2209
        %v2321 = vadd.f32 %v2186, %v2209
        %v2322 = vadd.f32 %v2187, %v2209
        %v2323 = vadd.f32 %v2188, %v2209
        %v2324 = vadd.f32 %v2189, %v2209
        %v2325 = vadd.f32 %v2190, %v2209
        %v2326 = vadd.f32 %v2191, %v2209
        %v2327 = vadd.f32 %v2192, %v2209
        %v2328 = vadd.f32 %v2193, %v2209
        %v2329 = vadd.f32 %v2194, %v2209
        %v2330 = vadd.f32 %v2195, %v2209
        %v2331 = vadd.f32 %v2196, %v2209
        %v2332 = vadd.f32 %v2197, %v2209
        %v2333 = vadd.f32 %v2198, %v2209
        %v2334 = vadd.f32 %v2199, %v2209
        %v2335 = vadd.f32 %v2200, %v2209
        %v2336 = vadd.f32 %v2201, %v2209
        %v2337 = vadd.f32 %v2202, %v2209
        %v2338 = vadd.f32 %v2203, %v2209
        %v2339 = vmax.f32 %v2211, 0.0
        %v2340 = vmax.f32 %v2212, 0.0
        %v2341 = vmax.f32 %v2213, 0.0
        %v2342 = vmax.f32 %v2214, 0.0
        %v2343 = vmax.f32 %v2215, 0.0
        %v2344 = vmax.f32 %v2216, 0.0
        %v2345 = vmax.f32 %v2217, 0.0
        %v2346 = vmax.f32 %v2218, 0.0
        %v2347 = vmax.f32 %v2219, 0.0
        %v2348 = vmax.f32 %v2220, 0.0
        %v2349 = vmax.f32 %v2221, 0.0
        %v2350 = vmax.f32 %v2222, 0.0
        %v2351 = vmax.f32 %v2223, 0.0
        %v2352 = vmax.f32 %v2224, 0.0
        %v2353 = vmax.f32 %v2225, 0.0
        %v2354 = vmax.f32 %v2226, 0.0
        %v2355 = vmax.f32 %v2227, 0.0
        %v2356 = vmax.f32 %v2228, 0.0
        %v2357 = vmax.f32 %v2229, 0.0
        %v2358 = vmax.f32 %v2230, 0.0
        %v2359 = vmax.f32 %v2231, 0.0
        %v2360 = vmax.f32 %v2232, 0.0
        %v2361 = vmax.f32 %v2233, 0.0
        %v2362 = vmax.f32 %v2234, 0.0
        %v2363 = vmax.f32 %v2235, 0.0
        %v2364 = vmax.f32 %v2236, 0.0
        %v2365 = vmax.f32 %v2237, 0.0
        %v2366 = vmax.f32 %v2238, 0.0
        %v2367 = vmax.f32 %v2239, 0.0
        %v2368 = vmax.f32 %v2240, 0.0
        %v2369 = vmax.f32 %v2241, 0.0
        %v2370 = vmax.f32 %v2242, 0.0
        %v2371 = vmax.f32 %v2243, 0.0
        %v2372 = vmax.f32 %v2244, 0.0
        %v2373 = vmax.f32 %v2245, 0.0
        %v2374 = vmax.f32 %v2246, 0.0
        %v2375 = vmax.f32 %v2247, 0.0
        %v2376 = vmax.f32 %v2248, 0.0
        %v2377 = vmax.f32 %v2249, 0.0
        %v2378 = vmax.f32 %v2250, 0.0
        %v2379 = vmax.f32 %v2251, 0.0
        %v2380 = vmax.f32 %v2252, 0.0
        %v2381 = vmax.f32 %v2253, 0.0
        %v2382 = vmax.f32 %v2254, 0.0
        %v2383 = vmax.f32 %v2255, 0.0
        %v2384 = vmax.f32 %v2256, 0.0
        %v2385 = vmax.f32 %v2257, 0.0
        %v2386 = vmax.f32 %v2258, 0.0
        %v2387 = vmax.f32 %v2259, 0.0
        %v2388 = vmax.f32 %v2260, 0.0
        %v2389 = vmax.f32 %v2261, 0.0
        %v2390 = vmax.f32 %v2262, 0.0
        %v2391 = vmax.f32 %v2263, 0.0
        %v2392 = vmax.f32 %v2264, 0.0
        %v2393 = vmax.f32 %v2265, 0.0
        %v2394 = vmax.f32 %v2266, 0.0
        %v2395 = vmax.f32 %v2267, 0.0
        %v2396 = vmax.f32 %v2268, 0.0
        %v2397 = vmax.f32 %v2269, 0.0
        %v2398 = vmax.f32 %v2270, 0.0
        %v2399 = vmax.f32 %v2271, 0.0
        %v2400 = vmax.f32 %v2272, 0.0
        %v2401 = vmax.f32 %v2273, 0.0
        %v2402 = vmax.f32 %v2274, 0.0
        %v2403 = vmax.f32 %v2275, 0.0
        %v2404 = vmax.f32 %v2276, 0.0
        %v2405 = vmax.f32 %v2277, 0.0
        %v2406 = vmax.f32 %v2278, 0.0
        %v2407 = vmax.f32 %v2279, 0.0
        %v2408 = vmax.f32 %v2280, 0.0
        %v2409 = vmax.f32 %v2281, 0.0
        %v2410 = vmax.f32 %v2282, 0.0
        %v2411 = vmax.f32 %v2283, 0.0
        %v2412 = vmax.f32 %v2284, 0.0
        %v2413 = vmax.f32 %v2285, 0.0
        %v2414 = vmax.f32 %v2286, 0.0
        %v2415 = vmax.f32 %v2287, 0.0
        %v2416 = vmax.f32 %v2288, 0.0
        %v2417 = vmax.f32 %v2289, 0.0
        %v2418 = vmax.f32 %v2290, 0.0
        %v2419 = vmax.f32 %v2291, 0.0
        %v2420 = vmax.f32 %v2292, 0.0
        %v2421 = vmax.f32 %v2293, 0.0
        %v2422 = vmax.f32 %v2294, 0.0
        %v2423 = vmax.f32 %v2295, 0.0
        %v2424 = vmax.f32 %v2296, 0.0
        %v2425 = vmax.f32 %v2297, 0.0
        %v2426 = vmax.f32 %v2298, 0.0
        %v2427 = vmax.f32 %v2299, 0.0
        %v2428 = vmax.f32 %v2300, 0.0
        %v2429 = vmax.f32 %v2301, 0.0
        %v2430 = vmax.f32 %v2302, 0.0
        %v2431 = vmax.f32 %v2303, 0.0
        %v2432 = vmax.f32 %v2304, 0.0
        %v2433 = vmax.f32 %v2305, 0.0
        %v2434 = vmax.f32 %v2306, 0.0
        %v2435 = vmax.f32 %v2307, 0.0
        %v2436 = vmax.f32 %v2308, 0.0
        %v2437 = vmax.f32 %v2309, 0.0
        %v2438 = vmax.f32 %v2310, 0.0
        %v2439 = vmax.f32 %v2311, 0.0
        %v2440 = vmax.f32 %v2312, 0.0
        %v2441 = vmax.f32 %v2313, 0.0
        %v2442 = vmax.f32 %v2314, 0.0
        %v2443 = vmax.f32 %v2315, 0.0
        %v2444 = vmax.f32 %v2316, 0.0
        %v2445 = vmax.f32 %v2317, 0.0
        %v2446 = vmax.f32 %v2318, 0.0
        %v2447 = vmax.f32 %v2319, 0.0
        %v2448 = vmax.f32 %v2320, 0.0
        %v2449 = vmax.f32 %v2321, 0.0
        %v2450 = vmax.f32 %v2322, 0.0
        %v2451 = vmax.f32 %v2323, 0.0
        %v2452 = vmax.f32 %v2324, 0.0
        %v2453 = vmax.f32 %v2325, 0.0
        %v2454 = vmax.f32 %v2326, 0.0
        %v2455 = vmax.f32 %v2327, 0.0
        %v2456 = vmax.f32 %v2328, 0.0
        %v2457 = vmax.f32 %v2329, 0.0
        %v2458 = vmax.f32 %v2330, 0.0
        %v2459 = vmax.f32 %v2331, 0.0
        %v2460 = vmax.f32 %v2332, 0.0
        %v2461 = vmax.f32 %v2333, 0.0
        %v2462 = vmax.f32 %v2334, 0.0
        %v2463 = vmax.f32 %v2335, 0.0
        %v2464 = vmax.f32 %v2336, 0.0
        %v2465 = vmax.f32 %v2337, 0.0
        %v2466 = vmax.f32 %v2338, 0.0
        %v2467 = vpack.c.bf16 %v2340, %v2339
        %v2468 = vpack.c.bf16 %v2342, %v2341
        %v2469 = vpack.c.bf16 %v2344, %v2343
        %v2470 = vpack.c.bf16 %v2346, %v2345
        %v2471 = vpack.c.bf16 %v2348, %v2347
        %v2472 = vpack.c.bf16 %v2350, %v2349
        %v2473 = vpack.c.bf16 %v2352, %v2351
        %v2474 = vpack.c.bf16 %v2354, %v2353
        %v2475 = vpack.c.bf16 %v2356, %v2355
        %v2476 = vpack.c.bf16 %v2358, %v2357
        %v2477 = vpack.c.bf16 %v2360, %v2359
        %v2478 = vpack.c.bf16 %v2362, %v2361
        %v2479 = vpack.c.bf16 %v2364, %v2363
        %v2480 = vpack.c.bf16 %v2366, %v2365
        %v2481 = vpack.c.bf16 %v2368, %v2367
        %v2482 = vpack.c.bf16 %v2370, %v2369
        %v2483 = vpack.c.bf16 %v2372, %v2371
        %v2484 = vpack.c.bf16 %v2374, %v2373
        %v2485 = vpack.c.bf16 %v2376, %v2375
        %v2486 = vpack.c.bf16 %v2378, %v2377
        %v2487 = vpack.c.bf16 %v2380, %v2379
        %v2488 = vpack.c.bf16 %v2382, %v2381
        %v2489 = vpack.c.bf16 %v2384, %v2383
        %v2490 = vpack.c.bf16 %v2386, %v2385
        %v2491 = vpack.c.bf16 %v2388, %v2387
        %v2492 = vpack.c.bf16 %v2390, %v2389
        %v2493 = vpack.c.bf16 %v2392, %v2391
        %v2494 = vpack.c.bf16 %v2394, %v2393
        %v2495 = vpack.c.bf16 %v2396, %v2395
        %v2496 = vpack.c.bf16 %v2398, %v2397
        %v2497 = vpack.c.bf16 %v2400, %v2399
        %v2498 = vpack.c.bf16 %v2402, %v2401
        %v2499 = vpack.c.bf16 %v2404, %v2403
        %v2500 = vpack.c.bf16 %v2406, %v2405
        %v2501 = vpack.c.bf16 %v2408, %v2407
        %v2502 = vpack.c.bf16 %v2410, %v2409
        %v2503 = vpack.c.bf16 %v2412, %v2411
        %v2504 = vpack.c.bf16 %v2414, %v2413
        %v2505 = vpack.c.bf16 %v2416, %v2415
        %v2506 = vpack.c.bf16 %v2418, %v2417
        %v2507 = vpack.c.bf16 %v2420, %v2419
        %v2508 = vpack.c.bf16 %v2422, %v2421
        %v2509 = vpack.c.bf16 %v2424, %v2423
        %v2510 = vpack.c.bf16 %v2426, %v2425
        %v2511 = vpack.c.bf16 %v2428, %v2427
        %v2512 = vpack.c.bf16 %v2430, %v2429
        %v2513 = vpack.c.bf16 %v2432, %v2431
        %v2514 = vpack.c.bf16 %v2434, %v2433
        %v2515 = vpack.c.bf16 %v2436, %v2435
        %v2516 = vpack.c.bf16 %v2438, %v2437
        %v2517 = vpack.c.bf16 %v2440, %v2439
        %v2518 = vpack.c.bf16 %v2442, %v2441
        %v2519 = vpack.c.bf16 %v2444, %v2443
        %v2520 = vpack.c.bf16 %v2446, %v2445
        %v2521 = vpack.c.bf16 %v2448, %v2447
        %v2522 = vpack.c.bf16 %v2450, %v2449
        %v2523 = vpack.c.bf16 %v2452, %v2451
        %v2524 = vpack.c.bf16 %v2454, %v2453
        %v2525 = vpack.c.bf16 %v2456, %v2455
        %v2526 = vpack.c.bf16 %v2458, %v2457
        %v2527 = vpack.c.bf16 %v2460, %v2459
        %v2528 = vpack.c.bf16 %v2462, %v2461
        %v2529 = vpack.c.bf16 %v2464, %v2463
        %v2530 = vpack.c.bf16 %v2466, %v2465
        %v2595 = vunpack.c.l.b16 %v2467
        %v2596 = vunpack.c.h.b16 %v2467
        %v2597 = vunpack.c.l.b16 %v2468
        %v2598 = vunpack.c.h.b16 %v2468
        %v2599 = vunpack.c.l.b16 %v2469
        %v2600 = vunpack.c.h.b16 %v2469
        %v2601 = vunpack.c.l.b16 %v2470
        %v2602 = vunpack.c.h.b16 %v2470
        %v2603 = vunpack.c.l.b16 %v2471
        %v2604 = vunpack.c.h.b16 %v2471
        %v2605 = vunpack.c.l.b16 %v2472
        %v2606 = vunpack.c.h.b16 %v2472
        %v2607 = vunpack.c.l.b16 %v2473
        %v2608 = vunpack.c.h.b16 %v2473
        %v2609 = vunpack.c.l.b16 %v2474
        %v2610 = vunpack.c.h.b16 %v2474
        %v2611 = vunpack.c.l.b16 %v2475
        %v2612 = vunpack.c.h.b16 %v2475
        %v2613 = vunpack.c.l.b16 %v2476
        %v2614 = vunpack.c.h.b16 %v2476
        %v2615 = vunpack.c.l.b16 %v2477
        %v2616 = vunpack.c.h.b16 %v2477
        %v2617 = vunpack.c.l.b16 %v2478
        %v2618 = vunpack.c.h.b16 %v2478
        %v2619 = vunpack.c.l.b16 %v2479
        %v2620 = vunpack.c.h.b16 %v2479
        %v2621 = vunpack.c.l.b16 %v2480
        %v2622 = vunpack.c.h.b16 %v2480
        %v2623 = vunpack.c.l.b16 %v2481
        %v2624 = vunpack.c.h.b16 %v2481
        %v2625 = vunpack.c.l.b16 %v2482
        %v2626 = vunpack.c.h.b16 %v2482
        %v2627 = vunpack.c.l.b16 %v2483
        %v2628 = vunpack.c.h.b16 %v2483
        %v2629 = vunpack.c.l.b16 %v2484
        %v2630 = vunpack.c.h.b16 %v2484
        %v2631 = vunpack.c.l.b16 %v2485
        %v2632 = vunpack.c.h.b16 %v2485
        %v2633 = vunpack.c.l.b16 %v2486
        %v2634 = vunpack.c.h.b16 %v2486
        %v2635 = vunpack.c.l.b16 %v2487
        %v2636 = vunpack.c.h.b16 %v2487
        %v2637 = vunpack.c.l.b16 %v2488
        %v2638 = vunpack.c.h.b16 %v2488
        %v2639 = vunpack.c.l.b16 %v2489
        %v2640 = vunpack.c.h.b16 %v2489
        %v2641 = vunpack.c.l.b16 %v2490
        %v2642 = vunpack.c.h.b16 %v2490
        %v2643 = vunpack.c.l.b16 %v2491
        %v2644 = vunpack.c.h.b16 %v2491
        %v2645 = vunpack.c.l.b16 %v2492
        %v2646 = vunpack.c.h.b16 %v2492
        %v2647 = vunpack.c.l.b16 %v2493
        %v2648 = vunpack.c.h.b16 %v2493
        %v2649 = vunpack.c.l.b16 %v2494
        %v2650 = vunpack.c.h.b16 %v2494
        %v2651 = vunpack.c.l.b16 %v2495
        %v2652 = vunpack.c.h.b16 %v2495
        %v2653 = vunpack.c.l.b16 %v2496
        %v2654 = vunpack.c.h.b16 %v2496
        %v2655 = vunpack.c.l.b16 %v2497
        %v2656 = vunpack.c.h.b16 %v2497
        %v2657 = vunpack.c.l.b16 %v2498
        %v2658 = vunpack.c.h.b16 %v2498
        %v2659 = vunpack.c.l.b16 %v2499
        %v2660 = vunpack.c.h.b16 %v2499
        %v2661 = vunpack.c.l.b16 %v2500
        %v2662 = vunpack.c.h.b16 %v2500
        %v2663 = vunpack.c.l.b16 %v2501
        %v2664 = vunpack.c.h.b16 %v2501
        %v2665 = vunpack.c.l.b16 %v2502
        %v2666 = vunpack.c.h.b16 %v2502
        %v2667 = vunpack.c.l.b16 %v2503
        %v2668 = vunpack.c.h.b16 %v2503
        %v2669 = vunpack.c.l.b16 %v2504
        %v2670 = vunpack.c.h.b16 %v2504
        %v2671 = vunpack.c.l.b16 %v2505
        %v2672 = vunpack.c.h.b16 %v2505
        %v2673 = vunpack.c.l.b16 %v2506
        %v2674 = vunpack.c.h.b16 %v2506
        %v2675 = vunpack.c.l.b16 %v2507
        %v2676 = vunpack.c.h.b16 %v2507
        %v2677 = vunpack.c.l.b16 %v2508
        %v2678 = vunpack.c.h.b16 %v2508
        %v2679 = vunpack.c.l.b16 %v2509
        %v2680 = vunpack.c.h.b16 %v2509
        %v2681 = vunpack.c.l.b16 %v2510
        %v2682 = vunpack.c.h.b16 %v2510
        %v2683 = vunpack.c.l.b16 %v2511
        %v2684 = vunpack.c.h.b16 %v2511
        %v2685 = vunpack.c.l.b16 %v2512
        %v2686 = vunpack.c.h.b16 %v2512
        %v2687 = vunpack.c.l.b16 %v2513
        %v2688 = vunpack.c.h.b16 %v2513
        %v2689 = vunpack.c.l.b16 %v2514
        %v2690 = vunpack.c.h.b16 %v2514
        %v2691 = vunpack.c.l.b16 %v2515
        %v2692 = vunpack.c.h.b16 %v2515
        %v2693 = vunpack.c.l.b16 %v2516
        %v2694 = vunpack.c.h.b16 %v2516
        %v2695 = vunpack.c.l.b16 %v2517
        %v2696 = vunpack.c.h.b16 %v2517
        %v2697 = vunpack.c.l.b16 %v2518
        %v2698 = vunpack.c.h.b16 %v2518
        %v2699 = vunpack.c.l.b16 %v2519
        %v2700 = vunpack.c.h.b16 %v2519
        %v2701 = vunpack.c.l.b16 %v2520
        %v2702 = vunpack.c.h.b16 %v2520
        %v2703 = vunpack.c.l.b16 %v2521
        %v2704 = vunpack.c.h.b16 %v2521
        %v2705 = vunpack.c.l.b16 %v2522
        %v2706 = vunpack.c.h.b16 %v2522
        %v2707 = vunpack.c.l.b16 %v2523
        %v2708 = vunpack.c.h.b16 %v2523
        %v2709 = vunpack.c.l.b16 %v2524
        %v2710 = vunpack.c.h.b16 %v2524
        %v2711 = vunpack.c.l.b16 %v2525
        %v2712 = vunpack.c.h.b16 %v2525
        %v2713 = vunpack.c.l.b16 %v2526
        %v2714 = vunpack.c.h.b16 %v2526
        %v2715 = vunpack.c.l.b16 %v2527
        %v2716 = vunpack.c.h.b16 %v2527
        %v2717 = vunpack.c.l.b16 %v2528
        %v2718 = vunpack.c.h.b16 %v2528
        %v2719 = vunpack.c.l.b16 %v2529
        %v2720 = vunpack.c.h.b16 %v2529
        %v2721 = vunpack.c.l.b16 %v2530
        %v2722 = vunpack.c.h.b16 %v2530
        %v2723 = vpack.c.b16 %v2595, %v2595
        %v2724 = vpack.c.b16 %v2596, %v2596
        %v2725 = vpack.c.b16 %v2597, %v2597
        %v2726 = vpack.c.b16 %v2598, %v2598
        %v2727 = vpack.c.b16 %v2599, %v2599
        %v2728 = vpack.c.b16 %v2600, %v2600
        %v2729 = vpack.c.b16 %v2601, %v2601
        %v2730 = vpack.c.b16 %v2602, %v2602
        %v2731 = vpack.c.b16 %v2603, %v2603
        %v2732 = vpack.c.b16 %v2604, %v2604
        %v2733 = vpack.c.b16 %v2605, %v2605
        %v2734 = vpack.c.b16 %v2606, %v2606
        %v2735 = vpack.c.b16 %v2607, %v2607
        %v2736 = vpack.c.b16 %v2608, %v2608
        %v2737 = vpack.c.b16 %v2609, %v2609
        %v2738 = vpack.c.b16 %v2610, %v2610
        %v2739 = vpack.c.b16 %v2611, %v2611
        %v2740 = vpack.c.b16 %v2612, %v2612
        %v2741 = vpack.c.b16 %v2613, %v2613
        %v2742 = vpack.c.b16 %v2614, %v2614
        %v2743 = vpack.c.b16 %v2615, %v2615
        %v2744 = vpack.c.b16 %v2616, %v2616
        %v2745 = vpack.c.b16 %v2617, %v2617
        %v2746 = vpack.c.b16 %v2618, %v2618
        %v2747 = vpack.c.b16 %v2619, %v2619
        %v2748 = vpack.c.b16 %v2620, %v2620
        %v2749 = vpack.c.b16 %v2621, %v2621
        %v2750 = vpack.c.b16 %v2622, %v2622
        %v2751 = vpack.c.b16 %v2623, %v2623
        %v2752 = vpack.c.b16 %v2624, %v2624
        %v2753 = vpack.c.b16 %v2625, %v2625
        %v2754 = vpack.c.b16 %v2626, %v2626
        %v2755 = vpack.c.b16 %v2627, %v2627
        %v2756 = vpack.c.b16 %v2628, %v2628
        %v2757 = vpack.c.b16 %v2629, %v2629
        %v2758 = vpack.c.b16 %v2630, %v2630
        %v2759 = vpack.c.b16 %v2631, %v2631
        %v2760 = vpack.c.b16 %v2632, %v2632
        %v2761 = vpack.c.b16 %v2633, %v2633
        %v2762 = vpack.c.b16 %v2634, %v2634
        %v2763 = vpack.c.b16 %v2635, %v2635
        %v2764 = vpack.c.b16 %v2636, %v2636
        %v2765 = vpack.c.b16 %v2637, %v2637
        %v2766 = vpack.c.b16 %v2638, %v2638
        %v2767 = vpack.c.b16 %v2639, %v2639
        %v2768 = vpack.c.b16 %v2640, %v2640
        %v2769 = vpack.c.b16 %v2641, %v2641
        %v2770 = vpack.c.b16 %v2642, %v2642
        %v2771 = vpack.c.b16 %v2643, %v2643
        %v2772 = vpack.c.b16 %v2644, %v2644
        %v2773 = vpack.c.b16 %v2645, %v2645
        %v2774 = vpack.c.b16 %v2646, %v2646
        %v2775 = vpack.c.b16 %v2647, %v2647
        %v2776 = vpack.c.b16 %v2648, %v2648
        %v2777 = vpack.c.b16 %v2649, %v2649
        %v2778 = vpack.c.b16 %v2650, %v2650
        %v2779 = vpack.c.b16 %v2651, %v2651
        %v2780 = vpack.c.b16 %v2652, %v2652
        %v2781 = vpack.c.b16 %v2653, %v2653
        %v2782 = vpack.c.b16 %v2654, %v2654
        %v2783 = vpack.c.b16 %v2655, %v2655
        %v2784 = vpack.c.b16 %v2656, %v2656
        %v2785 = vpack.c.b16 %v2657, %v2657
        %v2786 = vpack.c.b16 %v2658, %v2658
        %v2787 = vpack.c.b16 %v2659, %v2659
        %v2788 = vpack.c.b16 %v2660, %v2660
        %v2789 = vpack.c.b16 %v2661, %v2661
        %v2790 = vpack.c.b16 %v2662, %v2662
        %v2791 = vpack.c.b16 %v2663, %v2663
        %v2792 = vpack.c.b16 %v2664, %v2664
        %v2793 = vpack.c.b16 %v2665, %v2665
        %v2794 = vpack.c.b16 %v2666, %v2666
        %v2795 = vpack.c.b16 %v2667, %v2667
        %v2796 = vpack.c.b16 %v2668, %v2668
        %v2797 = vpack.c.b16 %v2669, %v2669
        %v2798 = vpack.c.b16 %v2670, %v2670
        %v2799 = vpack.c.b16 %v2671, %v2671
        %v2800 = vpack.c.b16 %v2672, %v2672
        %v2801 = vpack.c.b16 %v2673, %v2673
        %v2802 = vpack.c.b16 %v2674, %v2674
        %v2803 = vpack.c.b16 %v2675, %v2675
        %v2804 = vpack.c.b16 %v2676, %v2676
        %v2805 = vpack.c.b16 %v2677, %v2677
        %v2806 = vpack.c.b16 %v2678, %v2678
        %v2807 = vpack.c.b16 %v2679, %v2679
        %v2808 = vpack.c.b16 %v2680, %v2680
        %v2809 = vpack.c.b16 %v2681, %v2681
        %v2810 = vpack.c.b16 %v2682, %v2682
        %v2811 = vpack.c.b16 %v2683, %v2683
        %v2812 = vpack.c.b16 %v2684, %v2684
        %v2813 = vpack.c.b16 %v2685, %v2685
        %v2814 = vpack.c.b16 %v2686, %v2686
        %v2815 = vpack.c.b16 %v2687, %v2687
        %v2816 = vpack.c.b16 %v2688, %v2688
        %v2817 = vpack.c.b16 %v2689, %v2689
        %v2818 = vpack.c.b16 %v2690, %v2690
        %v2819 = vpack.c.b16 %v2691, %v2691
        %v2820 = vpack.c.b16 %v2692, %v2692
        %v2821 = vpack.c.b16 %v2693, %v2693
        %v2822 = vpack.c.b16 %v2694, %v2694
        %v2823 = vpack.c.b16 %v2695, %v2695
        %v2824 = vpack.c.b16 %v2696, %v2696
        %v2825 = vpack.c.b16 %v2697, %v2697
        %v2826 = vpack.c.b16 %v2698, %v2698
        %v2827 = vpack.c.b16 %v2699, %v2699
        %v2828 = vpack.c.b16 %v2700, %v2700
        %v2829 = vpack.c.b16 %v2701, %v2701
        %v2830 = vpack.c.b16 %v2702, %v2702
        %v2831 = vpack.c.b16 %v2703, %v2703
        %v2832 = vpack.c.b16 %v2704, %v2704
        %v2833 = vpack.c.b16 %v2705, %v2705
        %v2834 = vpack.c.b16 %v2706, %v2706
        %v2835 = vpack.c.b16 %v2707, %v2707
        %v2836 = vpack.c.b16 %v2708, %v2708
        %v2837 = vpack.c.b16 %v2709, %v2709
        %v2838 = vpack.c.b16 %v2710, %v2710
        %v2839 = vpack.c.b16 %v2711, %v2711
        %v2840 = vpack.c.b16 %v2712, %v2712
        %v2841 = vpack.c.b16 %v2713, %v2713
        %v2842 = vpack.c.b16 %v2714, %v2714
        %v2843 = vpack.c.b16 %v2715, %v2715
        %v2844 = vpack.c.b16 %v2716, %v2716
        %v2845 = vpack.c.b16 %v2717, %v2717
        %v2846 = vpack.c.b16 %v2718, %v2718
        %v2847 = vpack.c.b16 %v2719, %v2719
        %v2848 = vpack.c.b16 %v2720, %v2720
        %v2849 = vpack.c.b16 %v2721, %v2721
        %v2850 = vpack.c.b16 %v2722, %v2722
        %2979 = vst [vmem:[%s298] sm:$0xf] %v2723
        %2980 = vst [vmem:[%s298 + $0x4] sm:$0xf] %v2724
        %2981 = vst [vmem:[%s298 + $0x8] sm:$0xf] %v2725
        %2982 = vst [vmem:[%s298 + $0xc] sm:$0xf] %v2726
        %2983 = vst [vmem:[%s298 + $0x10] sm:$0xf] %v2727
        %2984 = vst [vmem:[%s298 + $0x14] sm:$0xf] %v2728
        %2985 = vst [vmem:[%s298 + $0x18] sm:$0xf] %v2729
        %2986 = vst [vmem:[%s298 + $0x1c] sm:$0xf] %v2730
        %2987 = vst [vmem:[%s298 + $0x20] sm:$0xf] %v2731
        %2988 = vst [vmem:[%s298 + $0x24] sm:$0xf] %v2732
        %2989 = vst [vmem:[%s298 + $0x28] sm:$0xf] %v2733
        %2990 = vst [vmem:[%s298 + $0x2c] sm:$0xf] %v2734
        %2991 = vst [vmem:[%s298 + $0x30] sm:$0xf] %v2735
        %2992 = vst [vmem:[%s298 + $0x34] sm:$0xf] %v2736
        %2993 = vst [vmem:[%s298 + $0x38] sm:$0xf] %v2737
        %2994 = vst [vmem:[%s298 + $0x3c] sm:$0xf] %v2738
        %2995 = vst [vmem:[%s298 + $0x40] sm:$0xf] %v2739
        %2996 = vst [vmem:[%s298 + $0x44] sm:$0xf] %v2740
        %2997 = vst [vmem:[%s298 + $0x48] sm:$0xf] %v2741
        %2998 = vst [vmem:[%s298 + $0x4c] sm:$0xf] %v2742
        %2999 = vst [vmem:[%s298 + $0x50] sm:$0xf] %v2743
        %3000 = vst [vmem:[%s298 + $0x54] sm:$0xf] %v2744
        %3001 = vst [vmem:[%s298 + $0x58] sm:$0xf] %v2745
        %3002 = vst [vmem:[%s298 + $0x5c] sm:$0xf] %v2746
        %3003 = vst [vmem:[%s298 + $0x60] sm:$0xf] %v2747
        %3004 = vst [vmem:[%s298 + $0x64] sm:$0xf] %v2748
        %3005 = vst [vmem:[%s298 + $0x68] sm:$0xf] %v2749
        %3006 = vst [vmem:[%s298 + $0x6c] sm:$0xf] %v2750
        %3007 = vst [vmem:[%s298 + $0x70] sm:$0xf] %v2751
        %3008 = vst [vmem:[%s298 + $0x74] sm:$0xf] %v2752
        %3009 = vst [vmem:[%s298 + $0x78] sm:$0xf] %v2753
        %3010 = vst [vmem:[%s298 + $0x7c] sm:$0xf] %v2754
        %3011 = vst [vmem:[%s298 + $0x80] sm:$0xf] %v2755
        %3012 = vst [vmem:[%s298 + $0x84] sm:$0xf] %v2756
        %3013 = vst [vmem:[%s298 + $0x88] sm:$0xf] %v2757
        %3014 = vst [vmem:[%s298 + $0x8c] sm:$0xf] %v2758
        %3015 = vst [vmem:[%s298 + $0x90] sm:$0xf] %v2759
        %3016 = vst [vmem:[%s298 + $0x94] sm:$0xf] %v2760
        %3017 = vst [vmem:[%s298 + $0x98] sm:$0xf] %v2761
        %3018 = vst [vmem:[%s298 + $0x9c] sm:$0xf] %v2762
        %3019 = vst [vmem:[%s298 + $0xa0] sm:$0xf] %v2763
        %3020 = vst [vmem:[%s298 + $0xa4] sm:$0xf] %v2764
        %3021 = vst [vmem:[%s298 + $0xa8] sm:$0xf] %v2765
        %3022 = vst [vmem:[%s298 + $0xac] sm:$0xf] %v2766
        %3023 = vst [vmem:[%s298 + $0xb0] sm:$0xf] %v2767
        %3024 = vst [vmem:[%s298 + $0xb4] sm:$0xf] %v2768
        %3025 = vst [vmem:[%s298 + $0xb8] sm:$0xf] %v2769
        %3026 = vst [vmem:[%s298 + $0xbc] sm:$0xf] %v2770
        %3027 = vst [vmem:[%s298 + $0xc0] sm:$0xf] %v2771
        %3028 = vst [vmem:[%s298 + $0xc4] sm:$0xf] %v2772
        %3029 = vst [vmem:[%s298 + $0xc8] sm:$0xf] %v2773
        %3030 = vst [vmem:[%s298 + $0xcc] sm:$0xf] %v2774
        %3031 = vst [vmem:[%s298 + $0xd0] sm:$0xf] %v2775
        %3032 = vst [vmem:[%s298 + $0xd4] sm:$0xf] %v2776
        %3033 = vst [vmem:[%s298 + $0xd8] sm:$0xf] %v2777
        %3034 = vst [vmem:[%s298 + $0xdc] sm:$0xf] %v2778
        %3035 = vst [vmem:[%s298 + $0xe0] sm:$0xf] %v2779
        %3036 = vst [vmem:[%s298 + $0xe4] sm:$0xf] %v2780
        %3037 = vst [vmem:[%s298 + $0xe8] sm:$0xf] %v2781
        %3038 = vst [vmem:[%s298 + $0xec] sm:$0xf] %v2782
        %3039 = vst [vmem:[%s298 + $0xf0] sm:$0xf] %v2783
        %3040 = vst [vmem:[%s298 + $0xf4] sm:$0xf] %v2784
        %3041 = vst [vmem:[%s298 + $0xf8] sm:$0xf] %v2785
        %3042 = vst [vmem:[%s298 + $0xfc] sm:$0xf] %v2786
        %3043 = vst [vmem:[%s298 + $0x100] sm:$0xf] %v2787
        %3044 = vst [vmem:[%s298 + $0x104] sm:$0xf] %v2788
        %3045 = vst [vmem:[%s298 + $0x108] sm:$0xf] %v2789
        %3046 = vst [vmem:[%s298 + $0x10c] sm:$0xf] %v2790
        %3047 = vst [vmem:[%s298 + $0x110] sm:$0xf] %v2791
        %3048 = vst [vmem:[%s298 + $0x114] sm:$0xf] %v2792
        %3049 = vst [vmem:[%s298 + $0x118] sm:$0xf] %v2793
        %3050 = vst [vmem:[%s298 + $0x11c] sm:$0xf] %v2794
        %3051 = vst [vmem:[%s298 + $0x120] sm:$0xf] %v2795
        %3052 = vst [vmem:[%s298 + $0x124] sm:$0xf] %v2796
        %3053 = vst [vmem:[%s298 + $0x128] sm:$0xf] %v2797
        %3054 = vst [vmem:[%s298 + $0x12c] sm:$0xf] %v2798
        %3055 = vst [vmem:[%s298 + $0x130] sm:$0xf] %v2799
        %3056 = vst [vmem:[%s298 + $0x134] sm:$0xf] %v2800
        %3057 = vst [vmem:[%s298 + $0x138] sm:$0xf] %v2801
        %3058 = vst [vmem:[%s298 + $0x13c] sm:$0xf] %v2802
        %3059 = vst [vmem:[%s298 + $0x140] sm:$0xf] %v2803
        %3060 = vst [vmem:[%s298 + $0x144] sm:$0xf] %v2804
        %3061 = vst [vmem:[%s298 + $0x148] sm:$0xf] %v2805
        %3062 = vst [vmem:[%s298 + $0x14c] sm:$0xf] %v2806
        %3063 = vst [vmem:[%s298 + $0x150] sm:$0xf] %v2807
        %3064 = vst [vmem:[%s298 + $0x154] sm:$0xf] %v2808
        %3065 = vst [vmem:[%s298 + $0x158] sm:$0xf] %v2809
        %3066 = vst [vmem:[%s298 + $0x15c] sm:$0xf] %v2810
        %3067 = vst [vmem:[%s298 + $0x160] sm:$0xf] %v2811
        %3068 = vst [vmem:[%s298 + $0x164] sm:$0xf] %v2812
        %3069 = vst [vmem:[%s298 + $0x168] sm:$0xf] %v2813
        %3070 = vst [vmem:[%s298 + $0x16c] sm:$0xf] %v2814
        %3071 = vst [vmem:[%s298 + $0x170] sm:$0xf] %v2815
        %3072 = vst [vmem:[%s298 + $0x174] sm:$0xf] %v2816
        %3073 = vst [vmem:[%s298 + $0x178] sm:$0xf] %v2817
        %3074 = vst [vmem:[%s298 + $0x17c] sm:$0xf] %v2818
        %3075 = vst [vmem:[%s298 + $0x180] sm:$0xf] %v2819
        %3076 = vst [vmem:[%s298 + $0x184] sm:$0xf] %v2820
        %3077 = vst [vmem:[%s298 + $0x188] sm:$0xf] %v2821
        %3078 = vst [vmem:[%s298 + $0x18c] sm:$0xf] %v2822
        %3079 = vst [vmem:[%s298 + $0x190] sm:$0xf] %v2823
        %3080 = vst [vmem:[%s298 + $0x194] sm:$0xf] %v2824
        %3081 = vst [vmem:[%s298 + $0x198] sm:$0xf] %v2825
        %3082 = vst [vmem:[%s298 + $0x19c] sm:$0xf] %v2826
        %3083 = vst [vmem:[%s298 + $0x1a0] sm:$0xf] %v2827
        %3084 = vst [vmem:[%s298 + $0x1a4] sm:$0xf] %v2828
        %3085 = vst [vmem:[%s298 + $0x1a8] sm:$0xf] %v2829
        %3086 = vst [vmem:[%s298 + $0x1ac] sm:$0xf] %v2830
        %3087 = vst [vmem:[%s298 + $0x1b0] sm:$0xf] %v2831
        %3088 = vst [vmem:[%s298 + $0x1b4] sm:$0xf] %v2832
        %3089 = vst [vmem:[%s298 + $0x1b8] sm:$0xf] %v2833
        %3090 = vst [vmem:[%s298 + $0x1bc] sm:$0xf] %v2834
        %3091 = vst [vmem:[%s298 + $0x1c0] sm:$0xf] %v2835
        %3092 = vst [vmem:[%s298 + $0x1c4] sm:$0xf] %v2836
        %3093 = vst [vmem:[%s298 + $0x1c8] sm:$0xf] %v2837
        %3094 = vst [vmem:[%s298 + $0x1cc] sm:$0xf] %v2838
        %3095 = vst [vmem:[%s298 + $0x1d0] sm:$0xf] %v2839
        %3096 = vst [vmem:[%s298 + $0x1d4] sm:$0xf] %v2840
        %3097 = vst [vmem:[%s298 + $0x1d8] sm:$0xf] %v2841
        %3098 = vst [vmem:[%s298 + $0x1dc] sm:$0xf] %v2842
        %3099 = vst [vmem:[%s298 + $0x1e0] sm:$0xf] %v2843
        %3100 = vst [vmem:[%s298 + $0x1e4] sm:$0xf] %v2844
        %3101 = vst [vmem:[%s298 + $0x1e8] sm:$0xf] %v2845
        %3102 = vst [vmem:[%s298 + $0x1ec] sm:$0xf] %v2846
        %3103 = vst [vmem:[%s298 + $0x1f0] sm:$0xf] %v2847
        %3104 = vst [vmem:[%s298 + $0x1f4] sm:$0xf] %v2848
        %3105 = vst [vmem:[%s298 + $0x1f8] sm:$0xf] %v2849
        %3106 = vst [vmem:[%s298 + $0x1fc] sm:$0xf] %v2850
      $region44: #{depth_lstm_forward.9} parent=35 // pred_fallthru
        _
      %s3107 = smul.u32 128, %s20
      %p3108 = scmp.lt.s32.totalorder %s3107, 1023
      %s3109 = scalar_select %p3108, %s3107, 1023
      %p3110 = scmp.lt.s32.totalorder %s21, 0
      %s3111 = scalar_select %p3110, %s21, 0
      %s3112 = sadd.s32 %s3111, %s3109
      %s3113 = smul.addr %s3112, 4
      %s3114 = scalar_lea.vmem %s4, %s3113
      // Predicated region
      $region45: #{depth_lstm_forward.9} parent=35 // pred_check
        %p3115 = pneg %p162
      $region46: #{depth_lstm_forward.9} parent=35 // pred_check_branch
        %3117 = sbr.rel (%p3115) target = $region48
      $region47: #{depth_lstm_forward.9} parent=35 // pred_region
        %s3118 = smul.u32 128, %s20
      $region48: #{depth_lstm_forward.9} parent=35 // pred_fallthru
        _
    $region36: #{depth_lstm_forward.9} parent=5 // pred_fallthru
      _
    %p3119 = scmp.le.s32.totalorder 2, %s10
    // Predicated region
    $region49: #{depth_lstm_forward.9} parent=5 // pred_check
      %p3120 = pneg %p3119
    $region50: #{depth_lstm_forward.9} parent=5 // pred_check_branch
      %3122 = sbr.rel (%p3120) target = $region52
    $region51: #{depth_lstm_forward.9} parent=5 // pred_region
      %s3123 = ssub.s32 %s10, 2
      // Predicated region
      $region53: #{depth_lstm_forward.9} parent=51 // pred_check
        %p3124 = pneg %p168
      $region54: #{depth_lstm_forward.9} parent=51 // pred_check_branch
        %3126 = sbr.rel (%p3124) target = $region56
      $region55: #{depth_lstm_forward.9} parent=51 // pred_region
        %s3127 = smul.u32 128, %s23
        %p3128 = scmp.lt.s32.totalorder %s3127, 1023
        %s3129 = scalar_select %p3128, %s3127, 1023
        %p3130 = scmp.lt.s32.totalorder %s24, 0
        %s3131 = scalar_select %p3130, %s24, 0
        %s3132 = sadd.s32 %s3131, %s3129
        %s3133 = smul.addr %s3132, 4
        %s3134 = scalar_lea.vmem %s4, %s3133
      $region56: #{depth_lstm_forward.9} parent=51 // pred_fallthru
        _
    $region52: #{depth_lstm_forward.9} parent=5 // pred_fallthru
      _
  $region6: #{depth_lstm_forward.9} parent=0 // loop_footer
    %s14 = sadd.s32 1, %s10
  $region7: #{depth_lstm_forward.9} parent=0 // loop_footer_branch
    %9 = sbr.rel target = $region3
  $region8: #{depth_lstm_forward.9} parent=0 // loop_exit
    _

// kernel: depth_lstm_forward.10
$region0: #{depth_lstm_forward.10}
  #allocation0 [shape = 'u32[]', space=smem, size = 0x4, offset = 0x4, fixed_abs, tag = 'smem constant byte address 0x4 - core index']
  #allocation1 [shape = 'u32[144,128]{1,0:T(1,128)}', space=vmem, size = 0x12000, scoped, tag = 'internal scratch']
  #allocation2 [shape = 'f32[1024,128]{1,0:T(8,128)}', space=vmem, size = 0x80000, scoped, tag = 'scratch operand']
  %s0 = inlined_call_operand.vmem [shape: bf16[2048,128], index: 0, kind: input, shape index: {}]
  %s1 = inlined_call_operand.vmem [shape: bf16[128,128], index: 1, kind: input, shape index: {}]
  %s2 = inlined_call_operand.vmem [shape: f32[1,128], index: 2, kind: input, shape index: {}]
  %s3 = inlined_call_operand.vmem [shape: f32[1,128], index: 3, kind: input, shape index: {}]
  %s4 = inlined_call_operand.vmem [shape: bf16[2048,128], index: 4, kind: output, shape index: {}]
  %s5 = sld [smem:[#allocation0]]
  $region57: #{depth_lstm_forward.10} parent=0
    _
  %s7 = ssub.s32 1, %s5
  %s8 = scalar_select 0, %s7, %s5
  loop: start=0, step=1, limit=4
  $region2: #{depth_lstm_forward.10} parent=0 // loop_pre_header
    _
  $region3: #{depth_lstm_forward.10} parent=0 // loop_header
    %s10 = sphi 0, %s14
    %p11 = scmp.ge.s32.totalorder %s10, 4
    %s17 = sphi 0, %s36
    %s18 = sphi 0, %s32
    %s19 = sphi 0, %s28
    %s20 = sphi 0, %s17
    %s21 = sphi 0, %s18
    %s22 = sphi 0, %s19
    %s23 = sphi 0, %s20
    %s24 = sphi 0, %s21
    %s25 = sphi 0, %s22
    %s41 = sphi 0, %s43
    %s44 = sphi 0, %s41
    %s45 = sphi 0, %s44
    %s61 = sphi 0, %s45
    %s69 = sphi 0, %s71
    %s72 = sphi 0, %s69
    %s73 = sphi 0, %s72
    %s89 = sphi 0, %s73
    %s95 = sphi 0, %s97
    %s98 = sphi 0, %s95
    %s99 = sphi 0, %s98
    %s115 = sphi 0, %s99
    %s121 = sphi 0, %s123
    %s124 = sphi 0, %s121
    %s125 = sphi 0, %s124
    %s141 = sphi 0, %s125
    %s149 = sphi 0, %s151
    %s152 = sphi 0, %s149
    %s153 = sphi 0, %s152
    %s169 = sphi 0, %s153
  $region4: #{depth_lstm_forward.10} parent=0 // loop_header_branch
    %13 = sbr.rel (%p11) target = $region8
  $region5: #{depth_lstm_forward.10} parent=0 // loop_body
    %s15 = ssub.s32 %s10, 1
    %s16 = ssub.s32 %s10, 2
    %s26 = sadd.s32 1, %s19
    %p27 = scmp.ge.s32.totalorder %s26, 1
    %s28 = scalar_select %p27, 0, %s26
    %s29 = sadd.s32 1, %s18
    %s30 = scalar_select %p27, %s29, %s18
    %p31 = scmp.ge.s32.totalorder %s30, 1
    %s32 = scalar_select %p31, 0, %s30
    %s33 = sadd.s32 1, %s17
    %s34 = scalar_select %p31, %s33, %s17
    %p35 = scmp.ge.s32.totalorder %s34, 2
    %s36 = scalar_select %p35, 0, %s34
    %s37 = ssub.s32 %s17, %s36
    %s38 = ssub.s32 %s19, %s28
    %s39 = sor.u32 %s37, %s38
    %p40 = scmp.eq.s32.totalorder %s39, 0
    %s42 = sadd.s32 %s41, 1
    %s43 = scalar_select %p40, %s41, %s42
    %p46 = pneg %p40
    %p47 = scmp.eq.s32.totalorder %s10, 1
    %p48 = por %p46, %p47
    %p49 = scmp.ne.s32.totalorder %s41, %s44
    %p50 = scmp.eq.s32.totalorder %s10, 0
    %p51 = por %p49, %p50
    %p52 = scmp.ne.s32.totalorder %s41, %s44
    %p53 = scmp.eq.s32.totalorder %s15, 1
    %p54 = por %p52, %p53
    %p55 = scmp.ne.s32.totalorder %s44, %s45
    %p56 = scmp.eq.s32.totalorder %s15, 0
    %p57 = por %p55, %p56
    %p58 = scmp.ne.s32.totalorder %s44, %s45
    %p59 = scmp.eq.s32.totalorder %s16, 1
    %p60 = por %p58, %p59
    %p62 = scmp.ne.s32.totalorder %s45, %s61
    %p63 = scmp.eq.s32.totalorder %s16, 0
    %p64 = por %p62, %p63
    %s65 = ssub.s32 %s19, %s28
    %s66 = ssub.s32 %s18, %s32
    %s67 = sor.u32 %s65, %s66
    %p68 = scmp.eq.s32.totalorder %s67, 0
    %s70 = sadd.s32 %s69, 1
    %s71 = scalar_select %p68, %s69, %s70
    %p74 = pneg %p68
    %p75 = scmp.eq.s32.totalorder %s10, 1
    %p76 = por %p74, %p75
    %p77 = scmp.ne.s32.totalorder %s69, %s72
    %p78 = scmp.eq.s32.totalorder %s10, 0
    %p79 = por %p77, %p78
    %p80 = scmp.ne.s32.totalorder %s69, %s72
    %p81 = scmp.eq.s32.totalorder %s15, 1
    %p82 = por %p80, %p81
    %p83 = scmp.ne.s32.totalorder %s72, %s73
    %p84 = scmp.eq.s32.totalorder %s15, 0
    %p85 = por %p83, %p84
    %p86 = scmp.ne.s32.totalorder %s72, %s73
    %p87 = scmp.eq.s32.totalorder %s16, 1
    %p88 = por %p86, %p87
    %p90 = scmp.ne.s32.totalorder %s73, %s89
    %p91 = scmp.eq.s32.totalorder %s16, 0
    %p92 = por %p90, %p91
    %s93 = ssub.s32 %s18, %s32
    %p94 = scmp.eq.s32.totalorder %s93, 0
    %s96 = sadd.s32 %s95, 1
    %s97 = scalar_select %p94, %s95, %s96
    %p100 = pneg %p94
    %p101 = scmp.eq.s32.totalorder %s10, 1
    %p102 = por %p100, %p101
    %p103 = scmp.ne.s32.totalorder %s95, %s98
    %p104 = scmp.eq.s32.totalorder %s10, 0
    %p105 = por %p103, %p104
    %p106 = scmp.ne.s32.totalorder %s95, %s98
    %p107 = scmp.eq.s32.totalorder %s15, 1
    %p108 = por %p106, %p107
    %p109 = scmp.ne.s32.totalorder %s98, %s99
    %p110 = scmp.eq.s32.totalorder %s15, 0
    %p111 = por %p109, %p110
    %p112 = scmp.ne.s32.totalorder %s98, %s99
    %p113 = scmp.eq.s32.totalorder %s16, 1
    %p114 = por %p112, %p113
    %p116 = scmp.ne.s32.totalorder %s99, %s115
    %p117 = scmp.eq.s32.totalorder %s16, 0
    %p118 = por %p116, %p117
    %s119 = ssub.s32 %s18, %s32
    %p120 = scmp.eq.s32.totalorder %s119, 0
    %s122 = sadd.s32 %s121, 1
    %s123 = scalar_select %p120, %s121, %s122
    %p126 = pneg %p120
    %p127 = scmp.eq.s32.totalorder %s10, 1
    %p128 = por %p126, %p127
    %p129 = scmp.ne.s32.totalorder %s121, %s124
    %p130 = scmp.eq.s32.totalorder %s10, 0
    %p131 = por %p129, %p130
    %p132 = scmp.ne.s32.totalorder %s121, %s124
    %p133 = scmp.eq.s32.totalorder %s15, 1
    %p134 = por %p132, %p133
    %p135 = scmp.ne.s32.totalorder %s124, %s125
    %p136 = scmp.eq.s32.totalorder %s15, 0
    %p137 = por %p135, %p136
    %p138 = scmp.ne.s32.totalorder %s124, %s125
    %p139 = scmp.eq.s32.totalorder %s16, 1
    %p140 = por %p138, %p139
    %p142 = scmp.ne.s32.totalorder %s125, %s141
    %p143 = scmp.eq.s32.totalorder %s16, 0
    %p144 = por %p142, %p143
    %s145 = ssub.s32 %s17, %s36
    %s146 = ssub.s32 %s18, %s32
    %s147 = sor.u32 %s145, %s146
    %p148 = scmp.eq.s32.totalorder %s147, 0
    %s150 = sadd.s32 %s149, 1
    %s151 = scalar_select %p148, %s149, %s150
    %p154 = pneg %p148
    %p155 = scmp.eq.s32.totalorder %s10, 1
    %p156 = por %p154, %p155
    %p157 = scmp.ne.s32.totalorder %s149, %s152
    %p158 = scmp.eq.s32.totalorder %s10, 0
    %p159 = por %p157, %p158
    %p160 = scmp.ne.s32.totalorder %s149, %s152
    %p161 = scmp.eq.s32.totalorder %s15, 1
    %p162 = por %p160, %p161
    %p163 = scmp.ne.s32.totalorder %s152, %s153
    %p164 = scmp.eq.s32.totalorder %s15, 0
    %p165 = por %p163, %p164
    %p166 = scmp.ne.s32.totalorder %s152, %s153
    %p167 = scmp.eq.s32.totalorder %s16, 1
    %p168 = por %p166, %p167
    %p170 = scmp.ne.s32.totalorder %s153, %s169
    %p171 = scmp.eq.s32.totalorder %s16, 0
    %p172 = por %p170, %p171
    %p173 = scmp.le.s32.totalorder 1, %s10
    %p174 = scmp.lt.s32.totalorder %s10, 3
    %p175 = pnand %p173, %p174
    %p176 = pneg %p175
    // Predicated region
    $region9: #{depth_lstm_forward.10} parent=5 // pred_check
      _
    $region10: #{depth_lstm_forward.10} parent=5 // pred_check_branch
      %178 = sbr.rel (%p175) target = $region12
    $region11: #{depth_lstm_forward.10} parent=5 // pred_region
      %s179 = ssub.s32 %s10, 1
      // Predicated region
      $region13: #{depth_lstm_forward.10} parent=11 // pred_check
        %p180 = pneg %p85
      $region14: #{depth_lstm_forward.10} parent=11 // pred_check_branch
        %182 = sbr.rel (%p180) target = $region16
      $region15: #{depth_lstm_forward.10} parent=11 // pred_region
        %s183 = smul.u32 16, %s22
        %p184 = scmp.lt.s32.totalorder %s183, 15
        %s185 = scalar_select %p184, %s183, 15
        %p186 = scmp.lt.s32.totalorder %s21, 0
        %s187 = scalar_select %p186, %s21, 0
        %s188 = sadd.s32 %s187, %s185
        %s189 = smul.addr %s188, 4
        %s190 = scalar_lea.vmem %s1, %s189
        %s191 = smul.u32 16, %s22
      $region16: #{depth_lstm_forward.10} parent=11 // pred_fallthru
        _
      // Predicated region
      $region17: #{depth_lstm_forward.10} parent=11 // pred_check
        %p192 = pneg %p111
      $region18: #{depth_lstm_forward.10} parent=11 // pred_check_branch
        %194 = sbr.rel (%p192) target = $region20
      $region19: #{depth_lstm_forward.10} parent=11 // pred_region
        %p195 = scmp.lt.s32.totalorder %s21, 0
        %s196 = scalar_select %p195, %s21, 0
        %s197 = scalar_lea.vmem %s2, %s196
      $region20: #{depth_lstm_forward.10} parent=11 // pred_fallthru
        _
      // Predicated region
      $region21: #{depth_lstm_forward.10} parent=11 // pred_check
        %p198 = pneg %p137
      $region22: #{depth_lstm_forward.10} parent=11 // pred_check_branch
        %200 = sbr.rel (%p198) target = $region24
      $region23: #{depth_lstm_forward.10} parent=11 // pred_region
        %p201 = scmp.lt.s32.totalorder %s21, 0
        %s202 = scalar_select %p201, %s21, 0
        %s203 = scalar_lea.vmem %s3, %s202
      $region24: #{depth_lstm_forward.10} parent=11 // pred_fallthru
        _
    $region12: #{depth_lstm_forward.10} parent=5 // pred_fallthru
      _
    %p204 = scmp.lt.s32.totalorder %s10, 2
    // Predicated region
    $region25: #{depth_lstm_forward.10} parent=5 // pred_check
      %p205 = pneg %p204
    $region26: #{depth_lstm_forward.10} parent=5 // pred_check_branch
      %207 = sbr.rel (%p205) target = $region28
    $region27: #{depth_lstm_forward.10} parent=5 // pred_region
      // Predicated region
      $region29: #{depth_lstm_forward.10} parent=27 // pred_check
        %p208 = pneg %p51
      $region30: #{depth_lstm_forward.10} parent=27 // pred_check_branch
        %210 = sbr.rel (%p208) target = $region32
      $region31: #{depth_lstm_forward.10} parent=27 // pred_region
        %s211 = smul.u32 128, %s17
        %p212 = scmp.lt.s32.totalorder %s211, 255
        %s213 = scalar_select %p212, %s211, 255
        %p214 = scmp.lt.s32.totalorder %s19, 0
        %s215 = scalar_select %p214, %s19, 0
        %s216 = sadd.s32 %s215, %s213
        %s217 = smul.addr %s216, 4
        %s218 = scalar_lea.vmem %s0, %s217
        %s219 = smul.u32 128, %s17
      $region32: #{depth_lstm_forward.10} parent=27 // pred_fallthru
        _
    $region28: #{depth_lstm_forward.10} parent=5 // pred_fallthru
      _
    %p220 = scmp.le.s32.totalorder 1, %s10
    %p221 = scmp.lt.s32.totalorder %s10, 3
    %p222 = pnand %p220, %p221
    %p223 = pneg %p222
    // Predicated region
    $region33: #{depth_lstm_forward.10} parent=5 // pred_check
      _
    $region34: #{depth_lstm_forward.10} parent=5 // pred_check_branch
      %225 = sbr.rel (%p222) target = $region36
    $region35: #{depth_lstm_forward.10} parent=5 // pred_region
      %s226 = ssub.s32 %s10, 1
      %s227 = smul.u32 128, %s20
      %p228 = scmp.lt.s32.totalorder %s227, 255
      %s229 = scalar_select %p228, %s227, 255
      %p230 = scmp.lt.s32.totalorder %s22, 0
      %s231 = scalar_select %p230, %s22, 0
      %s232 = sadd.s32 %s231, %s229
      %s233 = smul.addr %s232, 4
      %s234 = scalar_lea.vmem %s0, %s233
      %p235 = pneg %p57
      %p236 = pneg %p54
      %s237 = smul.u32 16, %s22
      %p238 = scmp.lt.s32.totalorder %s237, 15
      %s239 = scalar_select %p238, %s237, 15
      %p240 = scmp.lt.s32.totalorder %s21, 0
      %s241 = scalar_select %p240, %s21, 0
      %s242 = sadd.s32 %s241, %s239
      %s243 = smul.addr %s242, 4
      %s244 = scalar_lea.vmem %s1, %s243
      %p245 = pneg %p85
      %p246 = pneg %p82
      %p247 = scmp.lt.s32.totalorder %s21, 0
      %s248 = scalar_select %p247, %s21, 0
      %s249 = scalar_lea.vmem %s2, %s248
      %p250 = pneg %p111
      %p251 = pneg %p108
      %p252 = scmp.lt.s32.totalorder %s21, 0
      %s253 = scalar_select %p252, %s21, 0
      %s254 = scalar_lea.vmem %s3, %s253
      %p255 = pneg %p137
      %p256 = pneg %p134
      %p257 = pneg %p165
      %p258 = pneg %p162
      %s259 = smul.u32 128, %s20
      %p260 = scmp.lt.s32.totalorder %s259, 255
      %s261 = scalar_select %p260, %s259, 255
      %p262 = scmp.lt.s32.totalorder %s21, 0
      %s263 = scalar_select %p262, %s21, 0
      %s264 = sadd.s32 %s263, %s261
      %s265 = smul.addr %s264, 4
      %s266 = scalar_lea.vmem %s4, %s265
      %s267 = smul.u32 128, %s20
      %p268 = scmp.lt.s32.totalorder %s267, 255
      %s269 = scalar_select %p268, %s267, 255
      %p270 = scmp.lt.s32.totalorder %s22, 0
      %s271 = scalar_select %p270, %s22, 0
      %s272 = sadd.s32 %s271, %s269
      %s273 = smul.addr %s272, 4
      %s274 = scalar_lea.vmem %s0, %s273
      %s275 = smul.u32 128, %s20
      %s276 = smul.u32 16, %s22
      %p277 = scmp.lt.s32.totalorder %s276, 15
      %s278 = scalar_select %p277, %s276, 15
      %p279 = scmp.lt.s32.totalorder %s21, 0
      %s280 = scalar_select %p279, %s21, 0
      %s281 = sadd.s32 %s280, %s278
      %s282 = smul.addr %s281, 4
      %s283 = scalar_lea.vmem %s1, %s282
      %s284 = smul.u32 16, %s22
      %p285 = scmp.lt.s32.totalorder %s21, 0
      %s286 = scalar_select %p285, %s21, 0
      %s287 = scalar_lea.vmem %s2, %s286
      %p288 = scmp.lt.s32.totalorder %s21, 0
      %s289 = scalar_select %p288, %s21, 0
      %s290 = scalar_lea.vmem %s3, %s289
      %s291 = smul.u32 128, %s20
      %p292 = scmp.lt.s32.totalorder %s291, 255
      %s293 = scalar_select %p292, %s291, 255
      %p294 = scmp.lt.s32.totalorder %s21, 0
      %s295 = scalar_select %p294, %s21, 0
      %s296 = sadd.s32 %s295, %s293
      %s297 = smul.addr %s296, 4
      %s298 = scalar_lea.vmem %s4, %s297
      %s299 = smul.u32 128, %s20
      %p301 = scmp.eq.s32.totalorder %s22, 0
      // Predicated region
      $region37: #{depth_lstm_forward.10} parent=35 // pred_check
        %p302 = pneg %p301
      $region38: #{depth_lstm_forward.10} parent=35 // pred_check_branch
        %304 = sbr.rel (%p302) target = $region40
      $region39: #{depth_lstm_forward.10} parent=35 // pred_region
        %305 = vst [vmem:[#allocation2] sm:$0xff] 0.0
        %306 = vst [vmem:[#allocation2 + $0x8] sm:$0xff] 0.0
        %307 = vst [vmem:[#allocation2 + $0x10] sm:$0xff] 0.0
        %308 = vst [vmem:[#allocation2 + $0x18] sm:$0xff] 0.0
        %309 = vst [vmem:[#allocation2 + $0x20] sm:$0xff] 0.0
        %310 = vst [vmem:[#allocation2 + $0x28] sm:$0xff] 0.0
        %311 = vst [vmem:[#allocation2 + $0x30] sm:$0xff] 0.0
        %312 = vst [vmem:[#allocation2 + $0x38] sm:$0xff] 0.0
        %313 = vst [vmem:[#allocation2 + $0x40] sm:$0xff] 0.0
        %314 = vst [vmem:[#allocation2 + $0x48] sm:$0xff] 0.0
        %315 = vst [vmem:[#allocation2 + $0x50] sm:$0xff] 0.0
        %316 = vst [vmem:[#allocation2 + $0x58] sm:$0xff] 0.0
        %317 = vst [vmem:[#allocation2 + $0x60] sm:$0xff] 0.0
        %318 = vst [vmem:[#allocation2 + $0x68] sm:$0xff] 0.0
        %319 = vst [vmem:[#allocation2 + $0x70] sm:$0xff] 0.0
        %320 = vst [vmem:[#allocation2 + $0x78] sm:$0xff] 0.0
        %321 = vst [vmem:[#allocation2 + $0x80] sm:$0xff] 0.0
        %322 = vst [vmem:[#allocation2 + $0x88] sm:$0xff] 0.0
        %323 = vst [vmem:[#allocation2 + $0x90] sm:$0xff] 0.0
        %324 = vst [vmem:[#allocation2 + $0x98] sm:$0xff] 0.0
        %325 = vst [vmem:[#allocation2 + $0xa0] sm:$0xff] 0.0
        %326 = vst [vmem:[#allocation2 + $0xa8] sm:$0xff] 0.0
        %327 = vst [vmem:[#allocation2 + $0xb0] sm:$0xff] 0.0
        %328 = vst [vmem:[#allocation2 + $0xb8] sm:$0xff] 0.0
        %329 = vst [vmem:[#allocation2 + $0xc0] sm:$0xff] 0.0
        %330 = vst [vmem:[#allocation2 + $0xc8] sm:$0xff] 0.0
        %331 = vst [vmem:[#allocation2 + $0xd0] sm:$0xff] 0.0
        %332 = vst [vmem:[#allocation2 + $0xd8] sm:$0xff] 0.0
        %333 = vst [vmem:[#allocation2 + $0xe0] sm:$0xff] 0.0
        %334 = vst [vmem:[#allocation2 + $0xe8] sm:$0xff] 0.0
        %335 = vst [vmem:[#allocation2 + $0xf0] sm:$0xff] 0.0
        %336 = vst [vmem:[#allocation2 + $0xf8] sm:$0xff] 0.0
        %337 = vst [vmem:[#allocation2 + $0x100] sm:$0xff] 0.0
        %338 = vst [vmem:[#allocation2 + $0x108] sm:$0xff] 0.0
        %339 = vst [vmem:[#allocation2 + $0x110] sm:$0xff] 0.0
        %340 = vst [vmem:[#allocation2 + $0x118] sm:$0xff] 0.0
        %341 = vst [vmem:[#allocation2 + $0x120] sm:$0xff] 0.0
        %342 = vst [vmem:[#allocation2 + $0x128] sm:$0xff] 0.0
        %343 = vst [vmem:[#allocation2 + $0x130] sm:$0xff] 0.0
        %344 = vst [vmem:[#allocation2 + $0x138] sm:$0xff] 0.0
        %345 = vst [vmem:[#allocation2 + $0x140] sm:$0xff] 0.0
        %346 = vst [vmem:[#allocation2 + $0x148] sm:$0xff] 0.0
        %347 = vst [vmem:[#allocation2 + $0x150] sm:$0xff] 0.0
        %348 = vst [vmem:[#allocation2 + $0x158] sm:$0xff] 0.0
        %349 = vst [vmem:[#allocation2 + $0x160] sm:$0xff] 0.0
        %350 = vst [vmem:[#allocation2 + $0x168] sm:$0xff] 0.0
        %351 = vst [vmem:[#allocation2 + $0x170] sm:$0xff] 0.0
        %352 = vst [vmem:[#allocation2 + $0x178] sm:$0xff] 0.0
        %353 = vst [vmem:[#allocation2 + $0x180] sm:$0xff] 0.0
        %354 = vst [vmem:[#allocation2 + $0x188] sm:$0xff] 0.0
        %355 = vst [vmem:[#allocation2 + $0x190] sm:$0xff] 0.0
        %356 = vst [vmem:[#allocation2 + $0x198] sm:$0xff] 0.0
        %357 = vst [vmem:[#allocation2 + $0x1a0] sm:$0xff] 0.0
        %358 = vst [vmem:[#allocation2 + $0x1a8] sm:$0xff] 0.0
        %359 = vst [vmem:[#allocation2 + $0x1b0] sm:$0xff] 0.0
        %360 = vst [vmem:[#allocation2 + $0x1b8] sm:$0xff] 0.0
        %361 = vst [vmem:[#allocation2 + $0x1c0] sm:$0xff] 0.0
        %362 = vst [vmem:[#allocation2 + $0x1c8] sm:$0xff] 0.0
        %363 = vst [vmem:[#allocation2 + $0x1d0] sm:$0xff] 0.0
        %364 = vst [vmem:[#allocation2 + $0x1d8] sm:$0xff] 0.0
        %365 = vst [vmem:[#allocation2 + $0x1e0] sm:$0xff] 0.0
        %366 = vst [vmem:[#allocation2 + $0x1e8] sm:$0xff] 0.0
        %367 = vst [vmem:[#allocation2 + $0x1f0] sm:$0xff] 0.0
        %368 = vst [vmem:[#allocation2 + $0x1f8] sm:$0xff] 0.0
        %369 = vst [vmem:[#allocation2 + $0x200] sm:$0xff] 0.0
        %370 = vst [vmem:[#allocation2 + $0x208] sm:$0xff] 0.0
        %371 = vst [vmem:[#allocation2 + $0x210] sm:$0xff] 0.0
        %372 = vst [vmem:[#allocation2 + $0x218] sm:$0xff] 0.0
        %373 = vst [vmem:[#allocation2 + $0x220] sm:$0xff] 0.0
        %374 = vst [vmem:[#allocation2 + $0x228] sm:$0xff] 0.0
        %375 = vst [vmem:[#allocation2 + $0x230] sm:$0xff] 0.0
        %376 = vst [vmem:[#allocation2 + $0x238] sm:$0xff] 0.0
        %377 = vst [vmem:[#allocation2 + $0x240] sm:$0xff] 0.0
        %378 = vst [vmem:[#allocation2 + $0x248] sm:$0xff] 0.0
        %379 = vst [vmem:[#allocation2 + $0x250] sm:$0xff] 0.0
        %380 = vst [vmem:[#allocation2 + $0x258] sm:$0xff] 0.0
        %381 = vst [vmem:[#allocation2 + $0x260] sm:$0xff] 0.0
        %382 = vst [vmem:[#allocation2 + $0x268] sm:$0xff] 0.0
        %383 = vst [vmem:[#allocation2 + $0x270] sm:$0xff] 0.0
        %384 = vst [vmem:[#allocation2 + $0x278] sm:$0xff] 0.0
        %385 = vst [vmem:[#allocation2 + $0x280] sm:$0xff] 0.0
        %386 = vst [vmem:[#allocation2 + $0x288] sm:$0xff] 0.0
        %387 = vst [vmem:[#allocation2 + $0x290] sm:$0xff] 0.0
        %388 = vst [vmem:[#allocation2 + $0x298] sm:$0xff] 0.0
        %389 = vst [vmem:[#allocation2 + $0x2a0] sm:$0xff] 0.0
        %390 = vst [vmem:[#allocation2 + $0x2a8] sm:$0xff] 0.0
        %391 = vst [vmem:[#allocation2 + $0x2b0] sm:$0xff] 0.0
        %392 = vst [vmem:[#allocation2 + $0x2b8] sm:$0xff] 0.0
        %393 = vst [vmem:[#allocation2 + $0x2c0] sm:$0xff] 0.0
        %394 = vst [vmem:[#allocation2 + $0x2c8] sm:$0xff] 0.0
        %395 = vst [vmem:[#allocation2 + $0x2d0] sm:$0xff] 0.0
        %396 = vst [vmem:[#allocation2 + $0x2d8] sm:$0xff] 0.0
        %397 = vst [vmem:[#allocation2 + $0x2e0] sm:$0xff] 0.0
        %398 = vst [vmem:[#allocation2 + $0x2e8] sm:$0xff] 0.0
        %399 = vst [vmem:[#allocation2 + $0x2f0] sm:$0xff] 0.0
        %400 = vst [vmem:[#allocation2 + $0x2f8] sm:$0xff] 0.0
        %401 = vst [vmem:[#allocation2 + $0x300] sm:$0xff] 0.0
        %402 = vst [vmem:[#allocation2 + $0x308] sm:$0xff] 0.0
        %403 = vst [vmem:[#allocation2 + $0x310] sm:$0xff] 0.0
        %404 = vst [vmem:[#allocation2 + $0x318] sm:$0xff] 0.0
        %405 = vst [vmem:[#allocation2 + $0x320] sm:$0xff] 0.0
        %406 = vst [vmem:[#allocation2 + $0x328] sm:$0xff] 0.0
        %407 = vst [vmem:[#allocation2 + $0x330] sm:$0xff] 0.0
        %408 = vst [vmem:[#allocation2 + $0x338] sm:$0xff] 0.0
        %409 = vst [vmem:[#allocation2 + $0x340] sm:$0xff] 0.0
        %410 = vst [vmem:[#allocation2 + $0x348] sm:$0xff] 0.0
        %411 = vst [vmem:[#allocation2 + $0x350] sm:$0xff] 0.0
        %412 = vst [vmem:[#allocation2 + $0x358] sm:$0xff] 0.0
        %413 = vst [vmem:[#allocation2 + $0x360] sm:$0xff] 0.0
        %414 = vst [vmem:[#allocation2 + $0x368] sm:$0xff] 0.0
        %415 = vst [vmem:[#allocation2 + $0x370] sm:$0xff] 0.0
        %416 = vst [vmem:[#allocation2 + $0x378] sm:$0xff] 0.0
        %417 = vst [vmem:[#allocation2 + $0x380] sm:$0xff] 0.0
        %418 = vst [vmem:[#allocation2 + $0x388] sm:$0xff] 0.0
        %419 = vst [vmem:[#allocation2 + $0x390] sm:$0xff] 0.0
        %420 = vst [vmem:[#allocation2 + $0x398] sm:$0xff] 0.0
        %421 = vst [vmem:[#allocation2 + $0x3a0] sm:$0xff] 0.0
        %422 = vst [vmem:[#allocation2 + $0x3a8] sm:$0xff] 0.0
        %423 = vst [vmem:[#allocation2 + $0x3b0] sm:$0xff] 0.0
        %424 = vst [vmem:[#allocation2 + $0x3b8] sm:$0xff] 0.0
        %425 = vst [vmem:[#allocation2 + $0x3c0] sm:$0xff] 0.0
        %426 = vst [vmem:[#allocation2 + $0x3c8] sm:$0xff] 0.0
        %427 = vst [vmem:[#allocation2 + $0x3d0] sm:$0xff] 0.0
        %428 = vst [vmem:[#allocation2 + $0x3d8] sm:$0xff] 0.0
        %429 = vst [vmem:[#allocation2 + $0x3e0] sm:$0xff] 0.0
        %430 = vst [vmem:[#allocation2 + $0x3e8] sm:$0xff] 0.0
        %431 = vst [vmem:[#allocation2 + $0x3f0] sm:$0xff] 0.0
        %432 = vst [vmem:[#allocation2 + $0x3f8] sm:$0xff] 0.0
      $region40: #{depth_lstm_forward.10} parent=35 // pred_fallthru
        _
      %v433 = vld [vmem:[#allocation2] sm:$0xff]
      %v434 = vld [vmem:[#allocation2 + $0x8] sm:$0xff]
      %v435 = vld [vmem:[#allocation2 + $0x10] sm:$0xff]
      %v436 = vld [vmem:[#allocation2 + $0x18] sm:$0xff]
      %v437 = vld [vmem:[#allocation2 + $0x20] sm:$0xff]
      %v438 = vld [vmem:[#allocation2 + $0x28] sm:$0xff]
      %v439 = vld [vmem:[#allocation2 + $0x30] sm:$0xff]
      %v440 = vld [vmem:[#allocation2 + $0x38] sm:$0xff]
      %v441 = vld [vmem:[#allocation2 + $0x40] sm:$0xff]
      %v442 = vld [vmem:[#allocation2 + $0x48] sm:$0xff]
      %v443 = vld [vmem:[#allocation2 + $0x50] sm:$0xff]
      %v444 = vld [vmem:[#allocation2 + $0x58] sm:$0xff]
      %v445 = vld [vmem:[#allocation2 + $0x60] sm:$0xff]
      %v446 = vld [vmem:[#allocation2 + $0x68] sm:$0xff]
      %v447 = vld [vmem:[#allocation2 + $0x70] sm:$0xff]
      %v448 = vld [vmem:[#allocation2 + $0x78] sm:$0xff]
      %v449 = vld [vmem:[#allocation2 + $0x80] sm:$0xff]
      %v450 = vld [vmem:[#allocation2 + $0x88] sm:$0xff]
      %v451 = vld [vmem:[#allocation2 + $0x90] sm:$0xff]
      %v452 = vld [vmem:[#allocation2 + $0x98] sm:$0xff]
      %v453 = vld [vmem:[#allocation2 + $0xa0] sm:$0xff]
      %v454 = vld [vmem:[#allocation2 + $0xa8] sm:$0xff]
      %v455 = vld [vmem:[#allocation2 + $0xb0] sm:$0xff]
      %v456 = vld [vmem:[#allocation2 + $0xb8] sm:$0xff]
      %v457 = vld [vmem:[#allocation2 + $0xc0] sm:$0xff]
      %v458 = vld [vmem:[#allocation2 + $0xc8] sm:$0xff]
      %v459 = vld [vmem:[#allocation2 + $0xd0] sm:$0xff]
      %v460 = vld [vmem:[#allocation2 + $0xd8] sm:$0xff]
      %v461 = vld [vmem:[#allocation2 + $0xe0] sm:$0xff]
      %v462 = vld [vmem:[#allocation2 + $0xe8] sm:$0xff]
      %v463 = vld [vmem:[#allocation2 + $0xf0] sm:$0xff]
      %v464 = vld [vmem:[#allocation2 + $0xf8] sm:$0xff]
      %v465 = vld [vmem:[#allocation2 + $0x100] sm:$0xff]
      %v466 = vld [vmem:[#allocation2 + $0x108] sm:$0xff]
      %v467 = vld [vmem:[#allocation2 + $0x110] sm:$0xff]
      %v468 = vld [vmem:[#allocation2 + $0x118] sm:$0xff]
      %v469 = vld [vmem:[#allocation2 + $0x120] sm:$0xff]
      %v470 = vld [vmem:[#allocation2 + $0x128] sm:$0xff]
      %v471 = vld [vmem:[#allocation2 + $0x130] sm:$0xff]
      %v472 = vld [vmem:[#allocation2 + $0x138] sm:$0xff]
      %v473 = vld [vmem:[#allocation2 + $0x140] sm:$0xff]
      %v474 = vld [vmem:[#allocation2 + $0x148] sm:$0xff]
      %v475 = vld [vmem:[#allocation2 + $0x150] sm:$0xff]
      %v476 = vld [vmem:[#allocation2 + $0x158] sm:$0xff]
      %v477 = vld [vmem:[#allocation2 + $0x160] sm:$0xff]
      %v478 = vld [vmem:[#allocation2 + $0x168] sm:$0xff]
      %v479 = vld [vmem:[#allocation2 + $0x170] sm:$0xff]
      %v480 = vld [vmem:[#allocation2 + $0x178] sm:$0xff]
      %v481 = vld [vmem:[#allocation2 + $0x180] sm:$0xff]
      %v482 = vld [vmem:[#allocation2 + $0x188] sm:$0xff]
      %v483 = vld [vmem:[#allocation2 + $0x190] sm:$0xff]
      %v484 = vld [vmem:[#allocation2 + $0x198] sm:$0xff]
      %v485 = vld [vmem:[#allocation2 + $0x1a0] sm:$0xff]
      %v486 = vld [vmem:[#allocation2 + $0x1a8] sm:$0xff]
      %v487 = vld [vmem:[#allocation2 + $0x1b0] sm:$0xff]
      %v488 = vld [vmem:[#allocation2 + $0x1b8] sm:$0xff]
      %v489 = vld [vmem:[#allocation2 + $0x1c0] sm:$0xff]
      %v490 = vld [vmem:[#allocation2 + $0x1c8] sm:$0xff]
      %v491 = vld [vmem:[#allocation2 + $0x1d0] sm:$0xff]
      %v492 = vld [vmem:[#allocation2 + $0x1d8] sm:$0xff]
      %v493 = vld [vmem:[#allocation2 + $0x1e0] sm:$0xff]
      %v494 = vld [vmem:[#allocation2 + $0x1e8] sm:$0xff]
      %v495 = vld [vmem:[#allocation2 + $0x1f0] sm:$0xff]
      %v496 = vld [vmem:[#allocation2 + $0x1f8] sm:$0xff]
      %v497 = vld [vmem:[#allocation2 + $0x200] sm:$0xff]
      %v498 = vld [vmem:[#allocation2 + $0x208] sm:$0xff]
      %v499 = vld [vmem:[#allocation2 + $0x210] sm:$0xff]
      %v500 = vld [vmem:[#allocation2 + $0x218] sm:$0xff]
      %v501 = vld [vmem:[#allocation2 + $0x220] sm:$0xff]
      %v502 = vld [vmem:[#allocation2 + $0x228] sm:$0xff]
      %v503 = vld [vmem:[#allocation2 + $0x230] sm:$0xff]
      %v504 = vld [vmem:[#allocation2 + $0x238] sm:$0xff]
      %v505 = vld [vmem:[#allocation2 + $0x240] sm:$0xff]
      %v506 = vld [vmem:[#allocation2 + $0x248] sm:$0xff]
      %v507 = vld [vmem:[#allocation2 + $0x250] sm:$0xff]
      %v508 = vld [vmem:[#allocation2 + $0x258] sm:$0xff]
      %v509 = vld [vmem:[#allocation2 + $0x260] sm:$0xff]
      %v510 = vld [vmem:[#allocation2 + $0x268] sm:$0xff]
      %v511 = vld [vmem:[#allocation2 + $0x270] sm:$0xff]
      %v512 = vld [vmem:[#allocation2 + $0x278] sm:$0xff]
      %v513 = vld [vmem:[#allocation2 + $0x280] sm:$0xff]
      %v514 = vld [vmem:[#allocation2 + $0x288] sm:$0xff]
      %v515 = vld [vmem:[#allocation2 + $0x290] sm:$0xff]
      %v516 = vld [vmem:[#allocation2 + $0x298] sm:$0xff]
      %v517 = vld [vmem:[#allocation2 + $0x2a0] sm:$0xff]
      %v518 = vld [vmem:[#allocation2 + $0x2a8] sm:$0xff]
      %v519 = vld [vmem:[#allocation2 + $0x2b0] sm:$0xff]
      %v520 = vld [vmem:[#allocation2 + $0x2b8] sm:$0xff]
      %v521 = vld [vmem:[#allocation2 + $0x2c0] sm:$0xff]
      %v522 = vld [vmem:[#allocation2 + $0x2c8] sm:$0xff]
      %v523 = vld [vmem:[#allocation2 + $0x2d0] sm:$0xff]
      %v524 = vld [vmem:[#allocation2 + $0x2d8] sm:$0xff]
      %v525 = vld [vmem:[#allocation2 + $0x2e0] sm:$0xff]
      %v526 = vld [vmem:[#allocation2 + $0x2e8] sm:$0xff]
      %v527 = vld [vmem:[#allocation2 + $0x2f0] sm:$0xff]
      %v528 = vld [vmem:[#allocation2 + $0x2f8] sm:$0xff]
      %v529 = vld [vmem:[#allocation2 + $0x300] sm:$0xff]
      %v530 = vld [vmem:[#allocation2 + $0x308] sm:$0xff]
      %v531 = vld [vmem:[#allocation2 + $0x310] sm:$0xff]
      %v532 = vld [vmem:[#allocation2 + $0x318] sm:$0xff]
      %v533 = vld [vmem:[#allocation2 + $0x320] sm:$0xff]
      %v534 = vld [vmem:[#allocation2 + $0x328] sm:$0xff]
      %v535 = vld [vmem:[#allocation2 + $0x330] sm:$0xff]
      %v536 = vld [vmem:[#allocation2 + $0x338] sm:$0xff]
      %v537 = vld [vmem:[#allocation2 + $0x340] sm:$0xff]
      %v538 = vld [vmem:[#allocation2 + $0x348] sm:$0xff]
      %v539 = vld [vmem:[#allocation2 + $0x350] sm:$0xff]
      %v540 = vld [vmem:[#allocation2 + $0x358] sm:$0xff]
      %v541 = vld [vmem:[#allocation2 + $0x360] sm:$0xff]
      %v542 = vld [vmem:[#allocation2 + $0x368] sm:$0xff]
      %v543 = vld [vmem:[#allocation2 + $0x370] sm:$0xff]
      %v544 = vld [vmem:[#allocation2 + $0x378] sm:$0xff]
      %v545 = vld [vmem:[#allocation2 + $0x380] sm:$0xff]
      %v546 = vld [vmem:[#allocation2 + $0x388] sm:$0xff]
      %v547 = vld [vmem:[#allocation2 + $0x390] sm:$0xff]
      %v548 = vld [vmem:[#allocation2 + $0x398] sm:$0xff]
      %v549 = vld [vmem:[#allocation2 + $0x3a0] sm:$0xff]
      %v550 = vld [vmem:[#allocation2 + $0x3a8] sm:$0xff]
      %v551 = vld [vmem:[#allocation2 + $0x3b0] sm:$0xff]
      %v552 = vld [vmem:[#allocation2 + $0x3b8] sm:$0xff]
      %v553 = vld [vmem:[#allocation2 + $0x3c0] sm:$0xff]
      %v554 = vld [vmem:[#allocation2 + $0x3c8] sm:$0xff]
      %v555 = vld [vmem:[#allocation2 + $0x3d0] sm:$0xff]
      %v556 = vld [vmem:[#allocation2 + $0x3d8] sm:$0xff]
      %v557 = vld [vmem:[#allocation2 + $0x3e0] sm:$0xff]
      %v558 = vld [vmem:[#allocation2 + $0x3e8] sm:$0xff]
      %v559 = vld [vmem:[#allocation2 + $0x3f0] sm:$0xff]
      %v560 = vld [vmem:[#allocation2 + $0x3f8] sm:$0xff]
      %v561 = vld [vmem:[%s274] sm:$0xf]
      %v562 = vld [vmem:[%s274 + $0x4] sm:$0xf]
      %v563 = vld [vmem:[%s274 + $0x8] sm:$0xf]
      %v564 = vld [vmem:[%s274 + $0xc] sm:$0xf]
      %v565 = vld [vmem:[%s274 + $0x10] sm:$0xf]
      %v566 = vld [vmem:[%s274 + $0x14] sm:$0xf]
      %v567 = vld [vmem:[%s274 + $0x18] sm:$0xf]
      %v568 = vld [vmem:[%s274 + $0x1c] sm:$0xf]
      %v569 = vld [vmem:[%s274 + $0x20] sm:$0xf]
      %v570 = vld [vmem:[%s274 + $0x24] sm:$0xf]
      %v571 = vld [vmem:[%s274 + $0x28] sm:$0xf]
      %v572 = vld [vmem:[%s274 + $0x2c] sm:$0xf]
      %v573 = vld [vmem:[%s274 + $0x30] sm:$0xf]
      %v574 = vld [vmem:[%s274 + $0x34] sm:$0xf]
      %v575 = vld [vmem:[%s274 + $0x38] sm:$0xf]
      %v576 = vld [vmem:[%s274 + $0x3c] sm:$0xf]
      %v577 = vld [vmem:[%s274 + $0x40] sm:$0xf]
      %v578 = vld [vmem:[%s274 + $0x44] sm:$0xf]
      %v579 = vld [vmem:[%s274 + $0x48] sm:$0xf]
      %v580 = vld [vmem:[%s274 + $0x4c] sm:$0xf]
      %v581 = vld [vmem:[%s274 + $0x50] sm:$0xf]
      %v582 = vld [vmem:[%s274 + $0x54] sm:$0xf]
      %v583 = vld [vmem:[%s274 + $0x58] sm:$0xf]
      %v584 = vld [vmem:[%s274 + $0x5c] sm:$0xf]
      %v585 = vld [vmem:[%s274 + $0x60] sm:$0xf]
      %v586 = vld [vmem:[%s274 + $0x64] sm:$0xf]
      %v587 = vld [vmem:[%s274 + $0x68] sm:$0xf]
      %v588 = vld [vmem:[%s274 + $0x6c] sm:$0xf]
      %v589 = vld [vmem:[%s274 + $0x70] sm:$0xf]
      %v590 = vld [vmem:[%s274 + $0x74] sm:$0xf]
      %v591 = vld [vmem:[%s274 + $0x78] sm:$0xf]
      %v592 = vld [vmem:[%s274 + $0x7c] sm:$0xf]
      %v593 = vld [vmem:[%s274 + $0x80] sm:$0xf]
      %v594 = vld [vmem:[%s274 + $0x84] sm:$0xf]
      %v595 = vld [vmem:[%s274 + $0x88] sm:$0xf]
      %v596 = vld [vmem:[%s274 + $0x8c] sm:$0xf]
      %v597 = vld [vmem:[%s274 + $0x90] sm:$0xf]
      %v598 = vld [vmem:[%s274 + $0x94] sm:$0xf]
      %v599 = vld [vmem:[%s274 + $0x98] sm:$0xf]
      %v600 = vld [vmem:[%s274 + $0x9c] sm:$0xf]
      %v601 = vld [vmem:[%s274 + $0xa0] sm:$0xf]
      %v602 = vld [vmem:[%s274 + $0xa4] sm:$0xf]
      %v603 = vld [vmem:[%s274 + $0xa8] sm:$0xf]
      %v604 = vld [vmem:[%s274 + $0xac] sm:$0xf]
      %v605 = vld [vmem:[%s274 + $0xb0] sm:$0xf]
      %v606 = vld [vmem:[%s274 + $0xb4] sm:$0xf]
      %v607 = vld [vmem:[%s274 + $0xb8] sm:$0xf]
      %v608 = vld [vmem:[%s274 + $0xbc] sm:$0xf]
      %v609 = vld [vmem:[%s274 + $0xc0] sm:$0xf]
      %v610 = vld [vmem:[%s274 + $0xc4] sm:$0xf]
      %v611 = vld [vmem:[%s274 + $0xc8] sm:$0xf]
      %v612 = vld [vmem:[%s274 + $0xcc] sm:$0xf]
      %v613 = vld [vmem:[%s274 + $0xd0] sm:$0xf]
      %v614 = vld [vmem:[%s274 + $0xd4] sm:$0xf]
      %v615 = vld [vmem:[%s274 + $0xd8] sm:$0xf]
      %v616 = vld [vmem:[%s274 + $0xdc] sm:$0xf]
      %v617 = vld [vmem:[%s274 + $0xe0] sm:$0xf]
      %v618 = vld [vmem:[%s274 + $0xe4] sm:$0xf]
      %v619 = vld [vmem:[%s274 + $0xe8] sm:$0xf]
      %v620 = vld [vmem:[%s274 + $0xec] sm:$0xf]
      %v621 = vld [vmem:[%s274 + $0xf0] sm:$0xf]
      %v622 = vld [vmem:[%s274 + $0xf4] sm:$0xf]
      %v623 = vld [vmem:[%s274 + $0xf8] sm:$0xf]
      %v624 = vld [vmem:[%s274 + $0xfc] sm:$0xf]
      %v625 = vld [vmem:[%s274 + $0x100] sm:$0xf]
      %v626 = vld [vmem:[%s274 + $0x104] sm:$0xf]
      %v627 = vld [vmem:[%s274 + $0x108] sm:$0xf]
      %v628 = vld [vmem:[%s274 + $0x10c] sm:$0xf]
      %v629 = vld [vmem:[%s274 + $0x110] sm:$0xf]
      %v630 = vld [vmem:[%s274 + $0x114] sm:$0xf]
      %v631 = vld [vmem:[%s274 + $0x118] sm:$0xf]
      %v632 = vld [vmem:[%s274 + $0x11c] sm:$0xf]
      %v633 = vld [vmem:[%s274 + $0x120] sm:$0xf]
      %v634 = vld [vmem:[%s274 + $0x124] sm:$0xf]
      %v635 = vld [vmem:[%s274 + $0x128] sm:$0xf]
      %v636 = vld [vmem:[%s274 + $0x12c] sm:$0xf]
      %v637 = vld [vmem:[%s274 + $0x130] sm:$0xf]
      %v638 = vld [vmem:[%s274 + $0x134] sm:$0xf]
      %v639 = vld [vmem:[%s274 + $0x138] sm:$0xf]
      %v640 = vld [vmem:[%s274 + $0x13c] sm:$0xf]
      %v641 = vld [vmem:[%s274 + $0x140] sm:$0xf]
      %v642 = vld [vmem:[%s274 + $0x144] sm:$0xf]
      %v643 = vld [vmem:[%s274 + $0x148] sm:$0xf]
      %v644 = vld [vmem:[%s274 + $0x14c] sm:$0xf]
      %v645 = vld [vmem:[%s274 + $0x150] sm:$0xf]
      %v646 = vld [vmem:[%s274 + $0x154] sm:$0xf]
      %v647 = vld [vmem:[%s274 + $0x158] sm:$0xf]
      %v648 = vld [vmem:[%s274 + $0x15c] sm:$0xf]
      %v649 = vld [vmem:[%s274 + $0x160] sm:$0xf]
      %v650 = vld [vmem:[%s274 + $0x164] sm:$0xf]
      %v651 = vld [vmem:[%s274 + $0x168] sm:$0xf]
      %v652 = vld [vmem:[%s274 + $0x16c] sm:$0xf]
      %v653 = vld [vmem:[%s274 + $0x170] sm:$0xf]
      %v654 = vld [vmem:[%s274 + $0x174] sm:$0xf]
      %v655 = vld [vmem:[%s274 + $0x178] sm:$0xf]
      %v656 = vld [vmem:[%s274 + $0x17c] sm:$0xf]
      %v657 = vld [vmem:[%s274 + $0x180] sm:$0xf]
      %v658 = vld [vmem:[%s274 + $0x184] sm:$0xf]
      %v659 = vld [vmem:[%s274 + $0x188] sm:$0xf]
      %v660 = vld [vmem:[%s274 + $0x18c] sm:$0xf]
      %v661 = vld [vmem:[%s274 + $0x190] sm:$0xf]
      %v662 = vld [vmem:[%s274 + $0x194] sm:$0xf]
      %v663 = vld [vmem:[%s274 + $0x198] sm:$0xf]
      %v664 = vld [vmem:[%s274 + $0x19c] sm:$0xf]
      %v665 = vld [vmem:[%s274 + $0x1a0] sm:$0xf]
      %v666 = vld [vmem:[%s274 + $0x1a4] sm:$0xf]
      %v667 = vld [vmem:[%s274 + $0x1a8] sm:$0xf]
      %v668 = vld [vmem:[%s274 + $0x1ac] sm:$0xf]
      %v669 = vld [vmem:[%s274 + $0x1b0] sm:$0xf]
      %v670 = vld [vmem:[%s274 + $0x1b4] sm:$0xf]
      %v671 = vld [vmem:[%s274 + $0x1b8] sm:$0xf]
      %v672 = vld [vmem:[%s274 + $0x1bc] sm:$0xf]
      %v673 = vld [vmem:[%s274 + $0x1c0] sm:$0xf]
      %v674 = vld [vmem:[%s274 + $0x1c4] sm:$0xf]
      %v675 = vld [vmem:[%s274 + $0x1c8] sm:$0xf]
      %v676 = vld [vmem:[%s274 + $0x1cc] sm:$0xf]
      %v677 = vld [vmem:[%s274 + $0x1d0] sm:$0xf]
      %v678 = vld [vmem:[%s274 + $0x1d4] sm:$0xf]
      %v679 = vld [vmem:[%s274 + $0x1d8] sm:$0xf]
      %v680 = vld [vmem:[%s274 + $0x1dc] sm:$0xf]
      %v681 = vld [vmem:[%s274 + $0x1e0] sm:$0xf]
      %v682 = vld [vmem:[%s274 + $0x1e4] sm:$0xf]
      %v683 = vld [vmem:[%s274 + $0x1e8] sm:$0xf]
      %v684 = vld [vmem:[%s274 + $0x1ec] sm:$0xf]
      %v685 = vld [vmem:[%s274 + $0x1f0] sm:$0xf]
      %v686 = vld [vmem:[%s274 + $0x1f4] sm:$0xf]
      %v687 = vld [vmem:[%s274 + $0x1f8] sm:$0xf]
      %v688 = vld [vmem:[%s274 + $0x1fc] sm:$0xf]
      %v689 = vld [vmem:[%s283] sm:$0xf]
      %v690 = vld [vmem:[%s283 + $0x4] sm:$0xf]
      %v691 = vld [vmem:[%s283 + $0x8] sm:$0xf]
      %v692 = vld [vmem:[%s283 + $0xc] sm:$0xf]
      %v693 = vld [vmem:[%s283 + $0x10] sm:$0xf]
      %v694 = vld [vmem:[%s283 + $0x14] sm:$0xf]
      %v695 = vld [vmem:[%s283 + $0x18] sm:$0xf]
      %v696 = vld [vmem:[%s283 + $0x1c] sm:$0xf]
      %v697 = vld [vmem:[%s283 + $0x20] sm:$0xf]
      %v698 = vld [vmem:[%s283 + $0x24] sm:$0xf]
      %v699 = vld [vmem:[%s283 + $0x28] sm:$0xf]
      %v700 = vld [vmem:[%s283 + $0x2c] sm:$0xf]
      %v701 = vld [vmem:[%s283 + $0x30] sm:$0xf]
      %v702 = vld [vmem:[%s283 + $0x34] sm:$0xf]
      %v703 = vld [vmem:[%s283 + $0x38] sm:$0xf]
      %v704 = vld [vmem:[%s283 + $0x3c] sm:$0xf]
      %v833 = vunpack.c.l.b16 %v561
      %v834 = vunpack.c.l.b16 %v562
      %v835 = vunpack.c.l.b16 %v563
      %v836 = vunpack.c.l.b16 %v564
      %v837 = vunpack.c.l.b16 %v565
      %v838 = vunpack.c.l.b16 %v566
      %v839 = vunpack.c.l.b16 %v567
      %v840 = vunpack.c.l.b16 %v568
      %v841 = vunpack.c.l.b16 %v569
      %v842 = vunpack.c.l.b16 %v570
      %v843 = vunpack.c.l.b16 %v571
      %v844 = vunpack.c.l.b16 %v572
      %v845 = vunpack.c.l.b16 %v573
      %v846 = vunpack.c.l.b16 %v574
      %v847 = vunpack.c.l.b16 %v575
      %v848 = vunpack.c.l.b16 %v576
      %v849 = vunpack.c.l.b16 %v577
      %v850 = vunpack.c.l.b16 %v578
      %v851 = vunpack.c.l.b16 %v579
      %v852 = vunpack.c.l.b16 %v580
      %v853 = vunpack.c.l.b16 %v581
      %v854 = vunpack.c.l.b16 %v582
      %v855 = vunpack.c.l.b16 %v583
      %v856 = vunpack.c.l.b16 %v584
      %v857 = vunpack.c.l.b16 %v585
      %v858 = vunpack.c.l.b16 %v586
      %v859 = vunpack.c.l.b16 %v587
      %v860 = vunpack.c.l.b16 %v588
      %v861 = vunpack.c.l.b16 %v589
      %v862 = vunpack.c.l.b16 %v590
      %v863 = vunpack.c.l.b16 %v591
      %v864 = vunpack.c.l.b16 %v592
      %v865 = vunpack.c.l.b16 %v593
      %v866 = vunpack.c.l.b16 %v594
      %v867 = vunpack.c.l.b16 %v595
      %v868 = vunpack.c.l.b16 %v596
      %v869 = vunpack.c.l.b16 %v597
      %v870 = vunpack.c.l.b16 %v598
      %v871 = vunpack.c.l.b16 %v599
      %v872 = vunpack.c.l.b16 %v600
      %v873 = vunpack.c.l.b16 %v601
      %v874 = vunpack.c.l.b16 %v602
      %v875 = vunpack.c.l.b16 %v603
      %v876 = vunpack.c.l.b16 %v604
      %v877 = vunpack.c.l.b16 %v605
      %v878 = vunpack.c.l.b16 %v606
      %v879 = vunpack.c.l.b16 %v607
      %v880 = vunpack.c.l.b16 %v608
      %v881 = vunpack.c.l.b16 %v609
      %v882 = vunpack.c.l.b16 %v610
      %v883 = vunpack.c.l.b16 %v611
      %v884 = vunpack.c.l.b16 %v612
      %v885 = vunpack.c.l.b16 %v613
      %v886 = vunpack.c.l.b16 %v614
      %v887 = vunpack.c.l.b16 %v615
      %v888 = vunpack.c.l.b16 %v616
      %v889 = vunpack.c.l.b16 %v617
      %v890 = vunpack.c.l.b16 %v618
      %v891 = vunpack.c.l.b16 %v619
      %v892 = vunpack.c.l.b16 %v620
      %v893 = vunpack.c.l.b16 %v621
      %v894 = vunpack.c.l.b16 %v622
      %v895 = vunpack.c.l.b16 %v623
      %v896 = vunpack.c.l.b16 %v624
      %v897 = vunpack.c.l.b16 %v625
      %v898 = vunpack.c.l.b16 %v626
      %v899 = vunpack.c.l.b16 %v627
      %v900 = vunpack.c.l.b16 %v628
      %v901 = vunpack.c.l.b16 %v629
      %v902 = vunpack.c.l.b16 %v630
      %v903 = vunpack.c.l.b16 %v631
      %v904 = vunpack.c.l.b16 %v632
      %v905 = vunpack.c.l.b16 %v633
      %v906 = vunpack.c.l.b16 %v634
      %v907 = vunpack.c.l.b16 %v635
      %v908 = vunpack.c.l.b16 %v636
      %v909 = vunpack.c.l.b16 %v637
      %v910 = vunpack.c.l.b16 %v638
      %v911 = vunpack.c.l.b16 %v639
      %v912 = vunpack.c.l.b16 %v640
      %v913 = vunpack.c.l.b16 %v641
      %v914 = vunpack.c.l.b16 %v642
      %v915 = vunpack.c.l.b16 %v643
      %v916 = vunpack.c.l.b16 %v644
      %v917 = vunpack.c.l.b16 %v645
      %v918 = vunpack.c.l.b16 %v646
      %v919 = vunpack.c.l.b16 %v647
      %v920 = vunpack.c.l.b16 %v648
      %v921 = vunpack.c.l.b16 %v649
      %v922 = vunpack.c.l.b16 %v650
      %v923 = vunpack.c.l.b16 %v651
      %v924 = vunpack.c.l.b16 %v652
      %v925 = vunpack.c.l.b16 %v653
      %v926 = vunpack.c.l.b16 %v654
      %v927 = vunpack.c.l.b16 %v655
      %v928 = vunpack.c.l.b16 %v656
      %v929 = vunpack.c.l.b16 %v657
      %v930 = vunpack.c.l.b16 %v658
      %v931 = vunpack.c.l.b16 %v659
      %v932 = vunpack.c.l.b16 %v660
      %v933 = vunpack.c.l.b16 %v661
      %v934 = vunpack.c.l.b16 %v662
      %v935 = vunpack.c.l.b16 %v663
      %v936 = vunpack.c.l.b16 %v664
      %v937 = vunpack.c.l.b16 %v665
      %v938 = vunpack.c.l.b16 %v666
      %v939 = vunpack.c.l.b16 %v667
      %v940 = vunpack.c.l.b16 %v668
      %v941 = vunpack.c.l.b16 %v669
      %v942 = vunpack.c.l.b16 %v670
      %v943 = vunpack.c.l.b16 %v671
      %v944 = vunpack.c.l.b16 %v672
      %v945 = vunpack.c.l.b16 %v673
      %v946 = vunpack.c.l.b16 %v674
      %v947 = vunpack.c.l.b16 %v675
      %v948 = vunpack.c.l.b16 %v676
      %v949 = vunpack.c.l.b16 %v677
      %v950 = vunpack.c.l.b16 %v678
      %v951 = vunpack.c.l.b16 %v679
      %v952 = vunpack.c.l.b16 %v680
      %v953 = vunpack.c.l.b16 %v681
      %v954 = vunpack.c.l.b16 %v682
      %v955 = vunpack.c.l.b16 %v683
      %v956 = vunpack.c.l.b16 %v684
      %v957 = vunpack.c.l.b16 %v685
      %v958 = vunpack.c.l.b16 %v686
      %v959 = vunpack.c.l.b16 %v687
      %v960 = vunpack.c.l.b16 %v688
      %v961 = vpack.c.b16 %v834, %v833
      %v962 = vpack.c.b16 %v836, %v835
      %v963 = vpack.c.b16 %v838, %v837
      %v964 = vpack.c.b16 %v840, %v839
      %v965 = vpack.c.b16 %v842, %v841
      %v966 = vpack.c.b16 %v844, %v843
      %v967 = vpack.c.b16 %v846, %v845
      %v968 = vpack.c.b16 %v848, %v847
      %v969 = vpack.c.b16 %v850, %v849
      %v970 = vpack.c.b16 %v852, %v851
      %v971 = vpack.c.b16 %v854, %v853
      %v972 = vpack.c.b16 %v856, %v855
      %v973 = vpack.c.b16 %v858, %v857
      %v974 = vpack.c.b16 %v860, %v859
      %v975 = vpack.c.b16 %v862, %v861
      %v976 = vpack.c.b16 %v864, %v863
      %v977 = vpack.c.b16 %v866, %v865
      %v978 = vpack.c.b16 %v868, %v867
      %v979 = vpack.c.b16 %v870, %v869
      %v980 = vpack.c.b16 %v872, %v871
      %v981 = vpack.c.b16 %v874, %v873
      %v982 = vpack.c.b16 %v876, %v875
      %v983 = vpack.c.b16 %v878, %v877
      %v984 = vpack.c.b16 %v880, %v879
      %v985 = vpack.c.b16 %v882, %v881
      %v986 = vpack.c.b16 %v884, %v883
      %v987 = vpack.c.b16 %v886, %v885
      %v988 = vpack.c.b16 %v888, %v887
      %v989 = vpack.c.b16 %v890, %v889
      %v990 = vpack.c.b16 %v892, %v891
      %v991 = vpack.c.b16 %v894, %v893
      %v992 = vpack.c.b16 %v896, %v895
      %v993 = vpack.c.b16 %v898, %v897
      %v994 = vpack.c.b16 %v900, %v899
      %v995 = vpack.c.b16 %v902, %v901
      %v996 = vpack.c.b16 %v904, %v903
      %v997 = vpack.c.b16 %v906, %v905
      %v998 = vpack.c.b16 %v908, %v907
      %v999 = vpack.c.b16 %v910, %v909
      %v1000 = vpack.c.b16 %v912, %v911
      %v1001 = vpack.c.b16 %v914, %v913
      %v1002 = vpack.c.b16 %v916, %v915
      %v1003 = vpack.c.b16 %v918, %v917
      %v1004 = vpack.c.b16 %v920, %v919
      %v1005 = vpack.c.b16 %v922, %v921
      %v1006 = vpack.c.b16 %v924, %v923
      %v1007 = vpack.c.b16 %v926, %v925
      %v1008 = vpack.c.b16 %v928, %v927
      %v1009 = vpack.c.b16 %v930, %v929
      %v1010 = vpack.c.b16 %v932, %v931
      %v1011 = vpack.c.b16 %v934, %v933
      %v1012 = vpack.c.b16 %v936, %v935
      %v1013 = vpack.c.b16 %v938, %v937
      %v1014 = vpack.c.b16 %v940, %v939
      %v1015 = vpack.c.b16 %v942, %v941
      %v1016 = vpack.c.b16 %v944, %v943
      %v1017 = vpack.c.b16 %v946, %v945
      %v1018 = vpack.c.b16 %v948, %v947
      %v1019 = vpack.c.b16 %v950, %v949
      %v1020 = vpack.c.b16 %v952, %v951
      %v1021 = vpack.c.b16 %v954, %v953
      %v1022 = vpack.c.b16 %v956, %v955
      %v1023 = vpack.c.b16 %v958, %v957
      %v1024 = vpack.c.b16 %v960, %v959
      %v1105 = vunpack.c.l.b16 %v689
      %v1106 = vunpack.c.l.b16 %v690
      %v1107 = vunpack.c.l.b16 %v691
      %v1108 = vunpack.c.l.b16 %v692
      %v1109 = vunpack.c.l.b16 %v693
      %v1110 = vunpack.c.l.b16 %v694
      %v1111 = vunpack.c.l.b16 %v695
      %v1112 = vunpack.c.l.b16 %v696
      %v1113 = vunpack.c.l.b16 %v697
      %v1114 = vunpack.c.l.b16 %v698
      %v1115 = vunpack.c.l.b16 %v699
      %v1116 = vunpack.c.l.b16 %v700
      %v1117 = vunpack.c.l.b16 %v701
      %v1118 = vunpack.c.l.b16 %v702
      %v1119 = vunpack.c.l.b16 %v703
      %v1120 = vunpack.c.l.b16 %v704
      %v1121 = vpack.c.b16 %v1106, %v1105
      %v1122 = vpack.c.b16 %v1108, %v1107
      %v1123 = vpack.c.b16 %v1110, %v1109
      %v1124 = vpack.c.b16 %v1112, %v1111
      %v1125 = vpack.c.b16 %v1114, %v1113
      %v1126 = vpack.c.b16 %v1116, %v1115
      %v1127 = vpack.c.b16 %v1118, %v1117
      %v1128 = vpack.c.b16 %v1120, %v1119
      %1137 = vmatprep.subr.bf16.mxu0 0
      %1138 = vmatpush1.bf16.msra.mxu0 %v1121
      %1139 = vmatprep.subr.bf16.mxu0 0
      %1140 = vmatpush1.bf16.msra.mxu0 %v1122
      %1141 = vmatprep.subr.bf16.mxu0 0
      %1142 = vmatpush1.bf16.msra.mxu0 %v1123
      %1143 = vmatprep.subr.bf16.mxu0 0
      %1144 = vmatpush1.bf16.msra.mxu0 %v1124
      %1145 = vmatprep.subr.bf16.mxu0 0
      %1146 = vmatpush1.bf16.msra.mxu0 %v1125
      %1147 = vmatprep.subr.bf16.mxu0 0
      %1148 = vmatpush1.bf16.msra.mxu0 %v1126
      %1149 = vmatprep.subr.bf16.mxu0 0
      %1150 = vmatpush1.bf16.msra.mxu0 %v1127
      %1151 = vmatprep.subr.bf16.mxu0 0
      %1152 = vmatpush1.bf16.msra.mxu0 %v1128
      %1153 = vmatprep.subr.bf16.mxu0 0
      %1154 = vmatpush1.bf16.msra.mxu0 0
      %1155 = vmatprep.subr.bf16.mxu0 0
      %1156 = vmatpush1.bf16.msra.mxu0 0
      %1157 = vmatprep.subr.bf16.mxu0 0
      %1158 = vmatpush1.bf16.msra.mxu0 0
      %1159 = vmatprep.subr.bf16.mxu0 0
      %1160 = vmatpush1.bf16.msra.mxu0 0
      %1161 = vmatprep.subr.bf16.mxu0 0
      %1162 = vmatpush1.bf16.msra.mxu0 0
      %1163 = vmatprep.subr.bf16.mxu0 0
      %1164 = vmatpush1.bf16.msra.mxu0 0
      %1165 = vmatprep.subr.bf16.mxu0 0
      %1166 = vmatpush1.bf16.msra.mxu0 0
      %1167 = vmatprep.subr.bf16.mxu0 0
      %1168 = vmatpush1.bf16.msra.mxu0 0
      %1169 = vmatprep.mubr.bf16.mxu0 0
      %1170 = vmatmul.mubr.bf16.gmra.mrb[0].mxu0 %v961
      %v1171 = vpop.f32.mrb[0].mxu0
      %v1172 = vadd.f32 0.0, %v1171
      %v1173 = vpop.f32.mrb[0].mxu0
      %v1174 = vpop.f32.mrb[0].mxu0
      %v1175 = vadd.f32 0.0, %v1174
      %v1176 = vpop.f32.mrb[0].mxu0
      %1177 = vmatprep.mubr.bf16.mxu0 0
      %1178 = vmatmul.mubr.bf16.gmra.mrb[0].mxu0 %v962
      %v1179 = vpop.f32.mrb[0].mxu0
      %v1180 = vadd.f32 0.0, %v1179
      %v1181 = vpop.f32.mrb[0].mxu0
      %v1182 = vpop.f32.mrb[0].mxu0
      %v1183 = vadd.f32 0.0, %v1182
      %v1184 = vpop.f32.mrb[0].mxu0
      %1185 = vmatprep.mubr.bf16.mxu0 0
      %1186 = vmatmul.mubr.bf16.gmra.mrb[0].mxu0 %v963
      %v1187 = vpop.f32.mrb[0].mxu0
      %v1188 = vadd.f32 0.0, %v1187
      %v1189 = vpop.f32.mrb[0].mxu0
      %v1190 = vpop.f32.mrb[0].mxu0
      %v1191 = vadd.f32 0.0, %v1190
      %v1192 = vpop.f32.mrb[0].mxu0
      %1193 = vmatprep.mubr.bf16.mxu0 0
      %1194 = vmatmul.mubr.bf16.gmra.mrb[0].mxu0 %v964
      %v1195 = vpop.f32.mrb[0].mxu0
      %v1196 = vadd.f32 0.0, %v1195
      %v1197 = vpop.f32.mrb[0].mxu0
      %v1198 = vpop.f32.mrb[0].mxu0
      %v1199 = vadd.f32 0.0, %v1198
      %v1200 = vpop.f32.mrb[0].mxu0
      %1201 = vmatprep.mubr.bf16.mxu0 0
      %1202 = vmatmul.mubr.bf16.gmra.mrb[0].mxu0 %v965
      %v1203 = vpop.f32.mrb[0].mxu0
      %v1204 = vadd.f32 0.0, %v1203
      %v1205 = vpop.f32.mrb[0].mxu0
      %v1206 = vpop.f32.mrb[0].mxu0
      %v1207 = vadd.f32 0.0, %v1206
      %v1208 = vpop.f32.mrb[0].mxu0
      %1209 = vmatprep.mubr.bf16.mxu0 0
      %1210 = vmatmul.mubr.bf16.gmra.mrb[0].mxu0 %v966
      %v1211 = vpop.f32.mrb[0].mxu0
      %v1212 = vadd.f32 0.0, %v1211
      %v1213 = vpop.f32.mrb[0].mxu0
      %v1214 = vpop.f32.mrb[0].mxu0
      %v1215 = vadd.f32 0.0, %v1214
      %v1216 = vpop.f32.mrb[0].mxu0
      %1217 = vmatprep.mubr.bf16.mxu0 0
      %1218 = vmatmul.mubr.bf16.gmra.mrb[0].mxu0 %v967
      %v1219 = vpop.f32.mrb[0].mxu0
      %v1220 = vadd.f32 0.0, %v1219
      %v1221 = vpop.f32.mrb[0].mxu0
      %v1222 = vpop.f32.mrb[0].mxu0
      %v1223 = vadd.f32 0.0, %v1222
      %v1224 = vpop.f32.mrb[0].mxu0
      %1225 = vmatprep.mubr.bf16.mxu0 0
      %1226 = vmatmul.mubr.bf16.gmra.mrb[0].mxu0 %v968
      %v1227 = vpop.f32.mrb[0].mxu0
      %v1228 = vadd.f32 0.0, %v1227
      %v1229 = vpop.f32.mrb[0].mxu0
      %v1230 = vpop.f32.mrb[0].mxu0
      %v1231 = vadd.f32 0.0, %v1230
      %v1232 = vpop.f32.mrb[0].mxu0
      %1233 = vmatprep.mubr.bf16.mxu0 0
      %1234 = vmatmul.mubr.bf16.gmra.mrb[0].mxu0 %v969
      %v1235 = vpop.f32.mrb[0].mxu0
      %v1236 = vadd.f32 0.0, %v1235
      %v1237 = vpop.f32.mrb[0].mxu0
      %v1238 = vpop.f32.mrb[0].mxu0
      %v1239 = vadd.f32 0.0, %v1238
      %v1240 = vpop.f32.mrb[0].mxu0
      %1241 = vmatprep.mubr.bf16.mxu0 0
      %1242 = vmatmul.mubr.bf16.gmra.mrb[0].mxu0 %v970
      %v1243 = vpop.f32.mrb[0].mxu0
      %v1244 = vadd.f32 0.0, %v1243
      %v1245 = vpop.f32.mrb[0].mxu0
      %v1246 = vpop.f32.mrb[0].mxu0
      %v1247 = vadd.f32 0.0, %v1246
      %v1248 = vpop.f32.mrb[0].mxu0
      %1249 = vmatprep.mubr.bf16.mxu0 0
      %1250 = vmatmul.mubr.bf16.gmra.mrb[0].mxu0 %v971
      %v1251 = vpop.f32.mrb[0].mxu0
      %v1252 = vadd.f32 0.0, %v1251
      %v1253 = vpop.f32.mrb[0].mxu0
      %v1254 = vpop.f32.mrb[0].mxu0
      %v1255 = vadd.f32 0.0, %v1254
      %v1256 = vpop.f32.mrb[0].mxu0
      %1257 = vmatprep.mubr.bf16.mxu0 0
      %1258 = vmatmul.mubr.bf16.gmra.mrb[0].mxu0 %v972
      %v1259 = vpop.f32.mrb[0].mxu0
      %v1260 = vadd.f32 0.0, %v1259
      %v1261 = vpop.f32.mrb[0].mxu0
      %v1262 = vpop.f32.mrb[0].mxu0
      %v1263 = vadd.f32 0.0, %v1262
      %v1264 = vpop.f32.mrb[0].mxu0
      %1265 = vmatprep.mubr.bf16.mxu0 0
      %1266 = vmatmul.mubr.bf16.gmra.mrb[0].mxu0 %v973
      %v1267 = vpop.f32.mrb[0].mxu0
      %v1268 = vadd.f32 0.0, %v1267
      %v1269 = vpop.f32.mrb[0].mxu0
      %v1270 = vpop.f32.mrb[0].mxu0
      %v1271 = vadd.f32 0.0, %v1270
      %v1272 = vpop.f32.mrb[0].mxu0
      %1273 = vmatprep.mubr.bf16.mxu0 0
      %1274 = vmatmul.mubr.bf16.gmra.mrb[0].mxu0 %v974
      %v1275 = vpop.f32.mrb[0].mxu0
      %v1276 = vadd.f32 0.0, %v1275
      %v1277 = vpop.f32.mrb[0].mxu0
      %v1278 = vpop.f32.mrb[0].mxu0
      %v1279 = vadd.f32 0.0, %v1278
      %v1280 = vpop.f32.mrb[0].mxu0
      %1281 = vmatprep.mubr.bf16.mxu0 0
      %1282 = vmatmul.mubr.bf16.gmra.mrb[0].mxu0 %v975
      %v1283 = vpop.f32.mrb[0].mxu0
      %v1284 = vadd.f32 0.0, %v1283
      %v1285 = vpop.f32.mrb[0].mxu0
      %v1286 = vpop.f32.mrb[0].mxu0
      %v1287 = vadd.f32 0.0, %v1286
      %v1288 = vpop.f32.mrb[0].mxu0
      %1289 = vmatprep.mubr.bf16.mxu0 0
      %1290 = vmatmul.mubr.bf16.gmra.mrb[0].mxu0 %v976
      %v1291 = vpop.f32.mrb[0].mxu0
      %v1292 = vadd.f32 0.0, %v1291
      %v1293 = vpop.f32.mrb[0].mxu0
      %v1294 = vpop.f32.mrb[0].mxu0
      %v1295 = vadd.f32 0.0, %v1294
      %v1296 = vpop.f32.mrb[0].mxu0
      %1297 = vmatprep.mubr.bf16.mxu0 0
      %1298 = vmatmul.mubr.bf16.gmra.mrb[0].mxu0 %v977
      %v1299 = vpop.f32.mrb[0].mxu0
      %v1300 = vadd.f32 0.0, %v1299
      %v1301 = vpop.f32.mrb[0].mxu0
      %v1302 = vpop.f32.mrb[0].mxu0
      %v1303 = vadd.f32 0.0, %v1302
      %v1304 = vpop.f32.mrb[0].mxu0
      %1305 = vmatprep.mubr.bf16.mxu0 0
      %1306 = vmatmul.mubr.bf16.gmra.mrb[0].mxu0 %v978
      %v1307 = vpop.f32.mrb[0].mxu0
      %v1308 = vadd.f32 0.0, %v1307
      %v1309 = vpop.f32.mrb[0].mxu0
      %v1310 = vpop.f32.mrb[0].mxu0
      %v1311 = vadd.f32 0.0, %v1310
      %v1312 = vpop.f32.mrb[0].mxu0
      %1313 = vmatprep.mubr.bf16.mxu0 0
      %1314 = vmatmul.mubr.bf16.gmra.mrb[0].mxu0 %v979
      %v1315 = vpop.f32.mrb[0].mxu0
      %v1316 = vadd.f32 0.0, %v1315
      %v1317 = vpop.f32.mrb[0].mxu0
      %v1318 = vpop.f32.mrb[0].mxu0
      %v1319 = vadd.f32 0.0, %v1318
      %v1320 = vpop.f32.mrb[0].mxu0
      %1321 = vmatprep.mubr.bf16.mxu0 0
      %1322 = vmatmul.mubr.bf16.gmra.mrb[0].mxu0 %v980
      %v1323 = vpop.f32.mrb[0].mxu0
      %v1324 = vadd.f32 0.0, %v1323
      %v1325 = vpop.f32.mrb[0].mxu0
      %v1326 = vpop.f32.mrb[0].mxu0
      %v1327 = vadd.f32 0.0, %v1326
      %v1328 = vpop.f32.mrb[0].mxu0
      %1329 = vmatprep.mubr.bf16.mxu0 0
      %1330 = vmatmul.mubr.bf16.gmra.mrb[0].mxu0 %v981
      %v1331 = vpop.f32.mrb[0].mxu0
      %v1332 = vadd.f32 0.0, %v1331
      %v1333 = vpop.f32.mrb[0].mxu0
      %v1334 = vpop.f32.mrb[0].mxu0
      %v1335 = vadd.f32 0.0, %v1334
      %v1336 = vpop.f32.mrb[0].mxu0
      %1337 = vmatprep.mubr.bf16.mxu0 0
      %1338 = vmatmul.mubr.bf16.gmra.mrb[0].mxu0 %v982
      %v1339 = vpop.f32.mrb[0].mxu0
      %v1340 = vadd.f32 0.0, %v1339
      %v1341 = vpop.f32.mrb[0].mxu0
      %v1342 = vpop.f32.mrb[0].mxu0
      %v1343 = vadd.f32 0.0, %v1342
      %v1344 = vpop.f32.mrb[0].mxu0
      %1345 = vmatprep.mubr.bf16.mxu0 0
      %1346 = vmatmul.mubr.bf16.gmra.mrb[0].mxu0 %v983
      %v1347 = vpop.f32.mrb[0].mxu0
      %v1348 = vadd.f32 0.0, %v1347
      %v1349 = vpop.f32.mrb[0].mxu0
      %v1350 = vpop.f32.mrb[0].mxu0
      %v1351 = vadd.f32 0.0, %v1350
      %v1352 = vpop.f32.mrb[0].mxu0
      %1353 = vmatprep.mubr.bf16.mxu0 0
      %1354 = vmatmul.mubr.bf16.gmra.mrb[0].mxu0 %v984
      %v1355 = vpop.f32.mrb[0].mxu0
      %v1356 = vadd.f32 0.0, %v1355
      %v1357 = vpop.f32.mrb[0].mxu0
      %v1358 = vpop.f32.mrb[0].mxu0
      %v1359 = vadd.f32 0.0, %v1358
      %v1360 = vpop.f32.mrb[0].mxu0
      %1361 = vmatprep.mubr.bf16.mxu0 0
      %1362 = vmatmul.mubr.bf16.gmra.mrb[0].mxu0 %v985
      %v1363 = vpop.f32.mrb[0].mxu0
      %v1364 = vadd.f32 0.0, %v1363
      %v1365 = vpop.f32.mrb[0].mxu0
      %v1366 = vpop.f32.mrb[0].mxu0
      %v1367 = vadd.f32 0.0, %v1366
      %v1368 = vpop.f32.mrb[0].mxu0
      %1369 = vmatprep.mubr.bf16.mxu0 0
      %1370 = vmatmul.mubr.bf16.gmra.mrb[0].mxu0 %v986
      %v1371 = vpop.f32.mrb[0].mxu0
      %v1372 = vadd.f32 0.0, %v1371
      %v1373 = vpop.f32.mrb[0].mxu0
      %v1374 = vpop.f32.mrb[0].mxu0
      %v1375 = vadd.f32 0.0, %v1374
      %v1376 = vpop.f32.mrb[0].mxu0
      %1377 = vmatprep.mubr.bf16.mxu0 0
      %1378 = vmatmul.mubr.bf16.gmra.mrb[0].mxu0 %v987
      %v1379 = vpop.f32.mrb[0].mxu0
      %v1380 = vadd.f32 0.0, %v1379
      %v1381 = vpop.f32.mrb[0].mxu0
      %v1382 = vpop.f32.mrb[0].mxu0
      %v1383 = vadd.f32 0.0, %v1382
      %v1384 = vpop.f32.mrb[0].mxu0
      %1385 = vmatprep.mubr.bf16.mxu0 0
      %1386 = vmatmul.mubr.bf16.gmra.mrb[0].mxu0 %v988
      %v1387 = vpop.f32.mrb[0].mxu0
      %v1388 = vadd.f32 0.0, %v1387
      %v1389 = vpop.f32.mrb[0].mxu0
      %v1390 = vpop.f32.mrb[0].mxu0
      %v1391 = vadd.f32 0.0, %v1390
      %v1392 = vpop.f32.mrb[0].mxu0
      %1393 = vmatprep.mubr.bf16.mxu0 0
      %1394 = vmatmul.mubr.bf16.gmra.mrb[0].mxu0 %v989
      %v1395 = vpop.f32.mrb[0].mxu0
      %v1396 = vadd.f32 0.0, %v1395
      %v1397 = vpop.f32.mrb[0].mxu0
      %v1398 = vpop.f32.mrb[0].mxu0
      %v1399 = vadd.f32 0.0, %v1398
      %v1400 = vpop.f32.mrb[0].mxu0
      %1401 = vmatprep.mubr.bf16.mxu0 0
      %1402 = vmatmul.mubr.bf16.gmra.mrb[0].mxu0 %v990
      %v1403 = vpop.f32.mrb[0].mxu0
      %v1404 = vadd.f32 0.0, %v1403
      %v1405 = vpop.f32.mrb[0].mxu0
      %v1406 = vpop.f32.mrb[0].mxu0
      %v1407 = vadd.f32 0.0, %v1406
      %v1408 = vpop.f32.mrb[0].mxu0
      %1409 = vmatprep.mubr.bf16.mxu0 0
      %1410 = vmatmul.mubr.bf16.gmra.mrb[0].mxu0 %v991
      %v1411 = vpop.f32.mrb[0].mxu0
      %v1412 = vadd.f32 0.0, %v1411
      %v1413 = vpop.f32.mrb[0].mxu0
      %v1414 = vpop.f32.mrb[0].mxu0
      %v1415 = vadd.f32 0.0, %v1414
      %v1416 = vpop.f32.mrb[0].mxu0
      %1417 = vmatprep.mubr.bf16.mxu0 0
      %1418 = vmatmul.mubr.bf16.gmra.mrb[0].mxu0 %v992
      %v1419 = vpop.f32.mrb[0].mxu0
      %v1420 = vadd.f32 0.0, %v1419
      %v1421 = vpop.f32.mrb[0].mxu0
      %v1422 = vpop.f32.mrb[0].mxu0
      %v1423 = vadd.f32 0.0, %v1422
      %v1424 = vpop.f32.mrb[0].mxu0
      %1425 = vmatprep.mubr.bf16.mxu0 0
      %1426 = vmatmul.mubr.bf16.gmra.mrb[0].mxu0 %v993
      %v1427 = vpop.f32.mrb[0].mxu0
      %v1428 = vadd.f32 0.0, %v1427
      %v1429 = vpop.f32.mrb[0].mxu0
      %v1430 = vpop.f32.mrb[0].mxu0
      %v1431 = vadd.f32 0.0, %v1430
      %v1432 = vpop.f32.mrb[0].mxu0
      %1433 = vmatprep.mubr.bf16.mxu0 0
      %1434 = vmatmul.mubr.bf16.gmra.mrb[0].mxu0 %v994
      %v1435 = vpop.f32.mrb[0].mxu0
      %v1436 = vadd.f32 0.0, %v1435
      %v1437 = vpop.f32.mrb[0].mxu0
      %v1438 = vpop.f32.mrb[0].mxu0
      %v1439 = vadd.f32 0.0, %v1438
      %v1440 = vpop.f32.mrb[0].mxu0
      %1441 = vmatprep.mubr.bf16.mxu0 0
      %1442 = vmatmul.mubr.bf16.gmra.mrb[0].mxu0 %v995
      %v1443 = vpop.f32.mrb[0].mxu0
      %v1444 = vadd.f32 0.0, %v1443
      %v1445 = vpop.f32.mrb[0].mxu0
      %v1446 = vpop.f32.mrb[0].mxu0
      %v1447 = vadd.f32 0.0, %v1446
      %v1448 = vpop.f32.mrb[0].mxu0
      %1449 = vmatprep.mubr.bf16.mxu0 0
      %1450 = vmatmul.mubr.bf16.gmra.mrb[0].mxu0 %v996
      %v1451 = vpop.f32.mrb[0].mxu0
      %v1452 = vadd.f32 0.0, %v1451
      %v1453 = vpop.f32.mrb[0].mxu0
      %v1454 = vpop.f32.mrb[0].mxu0
      %v1455 = vadd.f32 0.0, %v1454
      %v1456 = vpop.f32.mrb[0].mxu0
      %1457 = vmatprep.mubr.bf16.mxu0 0
      %1458 = vmatmul.mubr.bf16.gmra.mrb[0].mxu0 %v997
      %v1459 = vpop.f32.mrb[0].mxu0
      %v1460 = vadd.f32 0.0, %v1459
      %v1461 = vpop.f32.mrb[0].mxu0
      %v1462 = vpop.f32.mrb[0].mxu0
      %v1463 = vadd.f32 0.0, %v1462
      %v1464 = vpop.f32.mrb[0].mxu0
      %1465 = vmatprep.mubr.bf16.mxu0 0
      %1466 = vmatmul.mubr.bf16.gmra.mrb[0].mxu0 %v998
      %v1467 = vpop.f32.mrb[0].mxu0
      %v1468 = vadd.f32 0.0, %v1467
      %v1469 = vpop.f32.mrb[0].mxu0
      %v1470 = vpop.f32.mrb[0].mxu0
      %v1471 = vadd.f32 0.0, %v1470
      %v1472 = vpop.f32.mrb[0].mxu0
      %1473 = vmatprep.mubr.bf16.mxu0 0
      %1474 = vmatmul.mubr.bf16.gmra.mrb[0].mxu0 %v999
      %v1475 = vpop.f32.mrb[0].mxu0
      %v1476 = vadd.f32 0.0, %v1475
      %v1477 = vpop.f32.mrb[0].mxu0
      %v1478 = vpop.f32.mrb[0].mxu0
      %v1479 = vadd.f32 0.0, %v1478
      %v1480 = vpop.f32.mrb[0].mxu0
      %1481 = vmatprep.mubr.bf16.mxu0 0
      %1482 = vmatmul.mubr.bf16.gmra.mrb[0].mxu0 %v1000
      %v1483 = vpop.f32.mrb[0].mxu0
      %v1484 = vadd.f32 0.0, %v1483
      %v1485 = vpop.f32.mrb[0].mxu0
      %v1486 = vpop.f32.mrb[0].mxu0
      %v1487 = vadd.f32 0.0, %v1486
      %v1488 = vpop.f32.mrb[0].mxu0
      %1489 = vmatprep.mubr.bf16.mxu0 0
      %1490 = vmatmul.mubr.bf16.gmra.mrb[0].mxu0 %v1001
      %v1491 = vpop.f32.mrb[0].mxu0
      %v1492 = vadd.f32 0.0, %v1491
      %v1493 = vpop.f32.mrb[0].mxu0
      %v1494 = vpop.f32.mrb[0].mxu0
      %v1495 = vadd.f32 0.0, %v1494
      %v1496 = vpop.f32.mrb[0].mxu0
      %1497 = vmatprep.mubr.bf16.mxu0 0
      %1498 = vmatmul.mubr.bf16.gmra.mrb[0].mxu0 %v1002
      %v1499 = vpop.f32.mrb[0].mxu0
      %v1500 = vadd.f32 0.0, %v1499
      %v1501 = vpop.f32.mrb[0].mxu0
      %v1502 = vpop.f32.mrb[0].mxu0
      %v1503 = vadd.f32 0.0, %v1502
      %v1504 = vpop.f32.mrb[0].mxu0
      %1505 = vmatprep.mubr.bf16.mxu0 0
      %1506 = vmatmul.mubr.bf16.gmra.mrb[0].mxu0 %v1003
      %v1507 = vpop.f32.mrb[0].mxu0
      %v1508 = vadd.f32 0.0, %v1507
      %v1509 = vpop.f32.mrb[0].mxu0
      %v1510 = vpop.f32.mrb[0].mxu0
      %v1511 = vadd.f32 0.0, %v1510
      %v1512 = vpop.f32.mrb[0].mxu0
      %1513 = vmatprep.mubr.bf16.mxu0 0
      %1514 = vmatmul.mubr.bf16.gmra.mrb[0].mxu0 %v1004
      %v1515 = vpop.f32.mrb[0].mxu0
      %v1516 = vadd.f32 0.0, %v1515
      %v1517 = vpop.f32.mrb[0].mxu0
      %v1518 = vpop.f32.mrb[0].mxu0
      %v1519 = vadd.f32 0.0, %v1518
      %v1520 = vpop.f32.mrb[0].mxu0
      %1521 = vmatprep.mubr.bf16.mxu0 0
      %1522 = vmatmul.mubr.bf16.gmra.mrb[0].mxu0 %v1005
      %v1523 = vpop.f32.mrb[0].mxu0
      %v1524 = vadd.f32 0.0, %v1523
      %v1525 = vpop.f32.mrb[0].mxu0
      %v1526 = vpop.f32.mrb[0].mxu0
      %v1527 = vadd.f32 0.0, %v1526
      %v1528 = vpop.f32.mrb[0].mxu0
      %1529 = vmatprep.mubr.bf16.mxu0 0
      %1530 = vmatmul.mubr.bf16.gmra.mrb[0].mxu0 %v1006
      %v1531 = vpop.f32.mrb[0].mxu0
      %v1532 = vadd.f32 0.0, %v1531
      %v1533 = vpop.f32.mrb[0].mxu0
      %v1534 = vpop.f32.mrb[0].mxu0
      %v1535 = vadd.f32 0.0, %v1534
      %v1536 = vpop.f32.mrb[0].mxu0
      %1537 = vmatprep.mubr.bf16.mxu0 0
      %1538 = vmatmul.mubr.bf16.gmra.mrb[0].mxu0 %v1007
      %v1539 = vpop.f32.mrb[0].mxu0
      %v1540 = vadd.f32 0.0, %v1539
      %v1541 = vpop.f32.mrb[0].mxu0
      %v1542 = vpop.f32.mrb[0].mxu0
      %v1543 = vadd.f32 0.0, %v1542
      %v1544 = vpop.f32.mrb[0].mxu0
      %1545 = vmatprep.mubr.bf16.mxu0 0
      %1546 = vmatmul.mubr.bf16.gmra.mrb[0].mxu0 %v1008
      %v1547 = vpop.f32.mrb[0].mxu0
      %v1548 = vadd.f32 0.0, %v1547
      %v1549 = vpop.f32.mrb[0].mxu0
      %v1550 = vpop.f32.mrb[0].mxu0
      %v1551 = vadd.f32 0.0, %v1550
      %v1552 = vpop.f32.mrb[0].mxu0
      %1553 = vmatprep.mubr.bf16.mxu0 0
      %1554 = vmatmul.mubr.bf16.gmra.mrb[0].mxu0 %v1009
      %v1555 = vpop.f32.mrb[0].mxu0
      %v1556 = vadd.f32 0.0, %v1555
      %v1557 = vpop.f32.mrb[0].mxu0
      %v1558 = vpop.f32.mrb[0].mxu0
      %v1559 = vadd.f32 0.0, %v1558
      %v1560 = vpop.f32.mrb[0].mxu0
      %1561 = vmatprep.mubr.bf16.mxu0 0
      %1562 = vmatmul.mubr.bf16.gmra.mrb[0].mxu0 %v1010
      %v1563 = vpop.f32.mrb[0].mxu0
      %v1564 = vadd.f32 0.0, %v1563
      %v1565 = vpop.f32.mrb[0].mxu0
      %v1566 = vpop.f32.mrb[0].mxu0
      %v1567 = vadd.f32 0.0, %v1566
      %v1568 = vpop.f32.mrb[0].mxu0
      %1569 = vmatprep.mubr.bf16.mxu0 0
      %1570 = vmatmul.mubr.bf16.gmra.mrb[0].mxu0 %v1011
      %v1571 = vpop.f32.mrb[0].mxu0
      %v1572 = vadd.f32 0.0, %v1571
      %v1573 = vpop.f32.mrb[0].mxu0
      %v1574 = vpop.f32.mrb[0].mxu0
      %v1575 = vadd.f32 0.0, %v1574
      %v1576 = vpop.f32.mrb[0].mxu0
      %1577 = vmatprep.mubr.bf16.mxu0 0
      %1578 = vmatmul.mubr.bf16.gmra.mrb[0].mxu0 %v1012
      %v1579 = vpop.f32.mrb[0].mxu0
      %v1580 = vadd.f32 0.0, %v1579
      %v1581 = vpop.f32.mrb[0].mxu0
      %v1582 = vpop.f32.mrb[0].mxu0
      %v1583 = vadd.f32 0.0, %v1582
      %v1584 = vpop.f32.mrb[0].mxu0
      %1585 = vmatprep.mubr.bf16.mxu0 0
      %1586 = vmatmul.mubr.bf16.gmra.mrb[0].mxu0 %v1013
      %v1587 = vpop.f32.mrb[0].mxu0
      %v1588 = vadd.f32 0.0, %v1587
      %v1589 = vpop.f32.mrb[0].mxu0
      %v1590 = vpop.f32.mrb[0].mxu0
      %v1591 = vadd.f32 0.0, %v1590
      %v1592 = vpop.f32.mrb[0].mxu0
      %1593 = vmatprep.mubr.bf16.mxu0 0
      %1594 = vmatmul.mubr.bf16.gmra.mrb[0].mxu0 %v1014
      %v1595 = vpop.f32.mrb[0].mxu0
      %v1596 = vadd.f32 0.0, %v1595
      %v1597 = vpop.f32.mrb[0].mxu0
      %v1598 = vpop.f32.mrb[0].mxu0
      %v1599 = vadd.f32 0.0, %v1598
      %v1600 = vpop.f32.mrb[0].mxu0
      %1601 = vmatprep.mubr.bf16.mxu0 0
      %1602 = vmatmul.mubr.bf16.gmra.mrb[0].mxu0 %v1015
      %v1603 = vpop.f32.mrb[0].mxu0
      %v1604 = vadd.f32 0.0, %v1603
      %v1605 = vpop.f32.mrb[0].mxu0
      %v1606 = vpop.f32.mrb[0].mxu0
      %v1607 = vadd.f32 0.0, %v1606
      %v1608 = vpop.f32.mrb[0].mxu0
      %1609 = vmatprep.mubr.bf16.mxu0 0
      %1610 = vmatmul.mubr.bf16.gmra.mrb[0].mxu0 %v1016
      %v1611 = vpop.f32.mrb[0].mxu0
      %v1612 = vadd.f32 0.0, %v1611
      %v1613 = vpop.f32.mrb[0].mxu0
      %v1614 = vpop.f32.mrb[0].mxu0
      %v1615 = vadd.f32 0.0, %v1614
      %v1616 = vpop.f32.mrb[0].mxu0
      %1617 = vmatprep.mubr.bf16.mxu0 0
      %1618 = vmatmul.mubr.bf16.gmra.mrb[0].mxu0 %v1017
      %v1619 = vpop.f32.mrb[0].mxu0
      %v1620 = vadd.f32 0.0, %v1619
      %v1621 = vpop.f32.mrb[0].mxu0
      %v1622 = vpop.f32.mrb[0].mxu0
      %v1623 = vadd.f32 0.0, %v1622
      %v1624 = vpop.f32.mrb[0].mxu0
      %1625 = vmatprep.mubr.bf16.mxu0 0
      %1626 = vmatmul.mubr.bf16.gmra.mrb[0].mxu0 %v1018
      %v1627 = vpop.f32.mrb[0].mxu0
      %v1628 = vadd.f32 0.0, %v1627
      %v1629 = vpop.f32.mrb[0].mxu0
      %v1630 = vpop.f32.mrb[0].mxu0
      %v1631 = vadd.f32 0.0, %v1630
      %v1632 = vpop.f32.mrb[0].mxu0
      %1633 = vmatprep.mubr.bf16.mxu0 0
      %1634 = vmatmul.mubr.bf16.gmra.mrb[0].mxu0 %v1019
      %v1635 = vpop.f32.mrb[0].mxu0
      %v1636 = vadd.f32 0.0, %v1635
      %v1637 = vpop.f32.mrb[0].mxu0
      %v1638 = vpop.f32.mrb[0].mxu0
      %v1639 = vadd.f32 0.0, %v1638
      %v1640 = vpop.f32.mrb[0].mxu0
      %1641 = vmatprep.mubr.bf16.mxu0 0
      %1642 = vmatmul.mubr.bf16.gmra.mrb[0].mxu0 %v1020
      %v1643 = vpop.f32.mrb[0].mxu0
      %v1644 = vadd.f32 0.0, %v1643
      %v1645 = vpop.f32.mrb[0].mxu0
      %v1646 = vpop.f32.mrb[0].mxu0
      %v1647 = vadd.f32 0.0, %v1646
      %v1648 = vpop.f32.mrb[0].mxu0
      %1649 = vmatprep.mubr.bf16.mxu0 0
      %1650 = vmatmul.mubr.bf16.gmra.mrb[0].mxu0 %v1021
      %v1651 = vpop.f32.mrb[0].mxu0
      %v1652 = vadd.f32 0.0, %v1651
      %v1653 = vpop.f32.mrb[0].mxu0
      %v1654 = vpop.f32.mrb[0].mxu0
      %v1655 = vadd.f32 0.0, %v1654
      %v1656 = vpop.f32.mrb[0].mxu0
      %1657 = vmatprep.mubr.bf16.mxu0 0
      %1658 = vmatmul.mubr.bf16.gmra.mrb[0].mxu0 %v1022
      %v1659 = vpop.f32.mrb[0].mxu0
      %v1660 = vadd.f32 0.0, %v1659
      %v1661 = vpop.f32.mrb[0].mxu0
      %v1662 = vpop.f32.mrb[0].mxu0
      %v1663 = vadd.f32 0.0, %v1662
      %v1664 = vpop.f32.mrb[0].mxu0
      %1665 = vmatprep.mubr.bf16.mxu0 0
      %1666 = vmatmul.mubr.bf16.gmra.mrb[0].mxu0 %v1023
      %v1667 = vpop.f32.mrb[0].mxu0
      %v1668 = vadd.f32 0.0, %v1667
      %v1669 = vpop.f32.mrb[0].mxu0
      %v1670 = vpop.f32.mrb[0].mxu0
      %v1671 = vadd.f32 0.0, %v1670
      %v1672 = vpop.f32.mrb[0].mxu0
      %1673 = vmatprep.mubr.bf16.mxu0 0
      %1674 = vmatmul.mubr.bf16.gmra.mrb[0].mxu0 %v1024
      %v1675 = vpop.f32.mrb[0].mxu0
      %v1676 = vadd.f32 0.0, %v1675
      %v1677 = vpop.f32.mrb[0].mxu0
      %v1678 = vpop.f32.mrb[0].mxu0
      %v1679 = vadd.f32 0.0, %v1678
      %v1680 = vpop.f32.mrb[0].mxu0
      %1681 = vdwg.mxu0
      %v1682 = vadd.f32 %v433, %v1172
      %v1683 = vadd.f32 %v434, %v1175
      %v1684 = vadd.f32 %v435, %v1180
      %v1685 = vadd.f32 %v436, %v1183
      %v1686 = vadd.f32 %v437, %v1188
      %v1687 = vadd.f32 %v438, %v1191
      %v1688 = vadd.f32 %v439, %v1196
      %v1689 = vadd.f32 %v440, %v1199
      %v1690 = vadd.f32 %v441, %v1204
      %v1691 = vadd.f32 %v442, %v1207
      %v1692 = vadd.f32 %v443, %v1212
      %v1693 = vadd.f32 %v444, %v1215
      %v1694 = vadd.f32 %v445, %v1220
      %v1695 = vadd.f32 %v446, %v1223
      %v1696 = vadd.f32 %v447, %v1228
      %v1697 = vadd.f32 %v448, %v1231
      %v1698 = vadd.f32 %v449, %v1236
      %v1699 = vadd.f32 %v450, %v1239
      %v1700 = vadd.f32 %v451, %v1244
      %v1701 = vadd.f32 %v452, %v1247
      %v1702 = vadd.f32 %v453, %v1252
      %v1703 = vadd.f32 %v454, %v1255
      %v1704 = vadd.f32 %v455, %v1260
      %v1705 = vadd.f32 %v456, %v1263
      %v1706 = vadd.f32 %v457, %v1268
      %v1707 = vadd.f32 %v458, %v1271
      %v1708 = vadd.f32 %v459, %v1276
      %v1709 = vadd.f32 %v460, %v1279
      %v1710 = vadd.f32 %v461, %v1284
      %v1711 = vadd.f32 %v462, %v1287
      %v1712 = vadd.f32 %v463, %v1292
      %v1713 = vadd.f32 %v464, %v1295
      %v1714 = vadd.f32 %v465, %v1300
      %v1715 = vadd.f32 %v466, %v1303
      %v1716 = vadd.f32 %v467, %v1308
      %v1717 = vadd.f32 %v468, %v1311
      %v1718 = vadd.f32 %v469, %v1316
      %v1719 = vadd.f32 %v470, %v1319
      %v1720 = vadd.f32 %v471, %v1324
      %v1721 = vadd.f32 %v472, %v1327
      %v1722 = vadd.f32 %v473, %v1332
      %v1723 = vadd.f32 %v474, %v1335
      %v1724 = vadd.f32 %v475, %v1340
      %v1725 = vadd.f32 %v476, %v1343
      %v1726 = vadd.f32 %v477, %v1348
      %v1727 = vadd.f32 %v478, %v1351
      %v1728 = vadd.f32 %v479, %v1356
      %v1729 = vadd.f32 %v480, %v1359
      %v1730 = vadd.f32 %v481, %v1364
      %v1731 = vadd.f32 %v482, %v1367
      %v1732 = vadd.f32 %v483, %v1372
      %v1733 = vadd.f32 %v484, %v1375
      %v1734 = vadd.f32 %v485, %v1380
      %v1735 = vadd.f32 %v486, %v1383
      %v1736 = vadd.f32 %v487, %v1388
      %v1737 = vadd.f32 %v488, %v1391
      %v1738 = vadd.f32 %v489, %v1396
      %v1739 = vadd.f32 %v490, %v1399
      %v1740 = vadd.f32 %v491, %v1404
      %v1741 = vadd.f32 %v492, %v1407
      %v1742 = vadd.f32 %v493, %v1412
      %v1743 = vadd.f32 %v494, %v1415
      %v1744 = vadd.f32 %v495, %v1420
      %v1745 = vadd.f32 %v496, %v1423
      %v1746 = vadd.f32 %v497, %v1428
      %v1747 = vadd.f32 %v498, %v1431
      %v1748 = vadd.f32 %v499, %v1436
      %v1749 = vadd.f32 %v500, %v1439
      %v1750 = vadd.f32 %v501, %v1444
      %v1751 = vadd.f32 %v502, %v1447
      %v1752 = vadd.f32 %v503, %v1452
      %v1753 = vadd.f32 %v504, %v1455
      %v1754 = vadd.f32 %v505, %v1460
      %v1755 = vadd.f32 %v506, %v1463
      %v1756 = vadd.f32 %v507, %v1468
      %v1757 = vadd.f32 %v508, %v1471
      %v1758 = vadd.f32 %v509, %v1476
      %v1759 = vadd.f32 %v510, %v1479
      %v1760 = vadd.f32 %v511, %v1484
      %v1761 = vadd.f32 %v512, %v1487
      %v1762 = vadd.f32 %v513, %v1492
      %v1763 = vadd.f32 %v514, %v1495
      %v1764 = vadd.f32 %v515, %v1500
      %v1765 = vadd.f32 %v516, %v1503
      %v1766 = vadd.f32 %v517, %v1508
      %v1767 = vadd.f32 %v518, %v1511
      %v1768 = vadd.f32 %v519, %v1516
      %v1769 = vadd.f32 %v520, %v1519
      %v1770 = vadd.f32 %v521, %v1524
      %v1771 = vadd.f32 %v522, %v1527
      %v1772 = vadd.f32 %v523, %v1532
      %v1773 = vadd.f32 %v524, %v1535
      %v1774 = vadd.f32 %v525, %v1540
      %v1775 = vadd.f32 %v526, %v1543
      %v1776 = vadd.f32 %v527, %v1548
      %v1777 = vadd.f32 %v528, %v1551
      %v1778 = vadd.f32 %v529, %v1556
      %v1779 = vadd.f32 %v530, %v1559
      %v1780 = vadd.f32 %v531, %v1564
      %v1781 = vadd.f32 %v532, %v1567
      %v1782 = vadd.f32 %v533, %v1572
      %v1783 = vadd.f32 %v534, %v1575
      %v1784 = vadd.f32 %v535, %v1580
      %v1785 = vadd.f32 %v536, %v1583
      %v1786 = vadd.f32 %v537, %v1588
      %v1787 = vadd.f32 %v538, %v1591
      %v1788 = vadd.f32 %v539, %v1596
      %v1789 = vadd.f32 %v540, %v1599
      %v1790 = vadd.f32 %v541, %v1604
      %v1791 = vadd.f32 %v542, %v1607
      %v1792 = vadd.f32 %v543, %v1612
      %v1793 = vadd.f32 %v544, %v1615
      %v1794 = vadd.f32 %v545, %v1620
      %v1795 = vadd.f32 %v546, %v1623
      %v1796 = vadd.f32 %v547, %v1628
      %v1797 = vadd.f32 %v548, %v1631
      %v1798 = vadd.f32 %v549, %v1636
      %v1799 = vadd.f32 %v550, %v1639
      %v1800 = vadd.f32 %v551, %v1644
      %v1801 = vadd.f32 %v552, %v1647
      %v1802 = vadd.f32 %v553, %v1652
      %v1803 = vadd.f32 %v554, %v1655
      %v1804 = vadd.f32 %v555, %v1660
      %v1805 = vadd.f32 %v556, %v1663
      %v1806 = vadd.f32 %v557, %v1668
      %v1807 = vadd.f32 %v558, %v1671
      %v1808 = vadd.f32 %v559, %v1676
      %v1809 = vadd.f32 %v560, %v1679
      %1810 = vst [vmem:[#allocation2] sm:$0xff] %v1682
      %1811 = vst [vmem:[#allocation2 + $0x8] sm:$0xff] %v1683
      %1812 = vst [vmem:[#allocation2 + $0x10] sm:$0xff] %v1684
      %1813 = vst [vmem:[#allocation2 + $0x18] sm:$0xff] %v1685
      %1814 = vst [vmem:[#allocation2 + $0x20] sm:$0xff] %v1686
      %1815 = vst [vmem:[#allocation2 + $0x28] sm:$0xff] %v1687
      %1816 = vst [vmem:[#allocation2 + $0x30] sm:$0xff] %v1688
      %1817 = vst [vmem:[#allocation2 + $0x38] sm:$0xff] %v1689
      %1818 = vst [vmem:[#allocation2 + $0x40] sm:$0xff] %v1690
      %1819 = vst [vmem:[#allocation2 + $0x48] sm:$0xff] %v1691
      %1820 = vst [vmem:[#allocation2 + $0x50] sm:$0xff] %v1692
      %1821 = vst [vmem:[#allocation2 + $0x58] sm:$0xff] %v1693
      %1822 = vst [vmem:[#allocation2 + $0x60] sm:$0xff] %v1694
      %1823 = vst [vmem:[#allocation2 + $0x68] sm:$0xff] %v1695
      %1824 = vst [vmem:[#allocation2 + $0x70] sm:$0xff] %v1696
      %1825 = vst [vmem:[#allocation2 + $0x78] sm:$0xff] %v1697
      %1826 = vst [vmem:[#allocation2 + $0x80] sm:$0xff] %v1698
      %1827 = vst [vmem:[#allocation2 + $0x88] sm:$0xff] %v1699
      %1828 = vst [vmem:[#allocation2 + $0x90] sm:$0xff] %v1700
      %1829 = vst [vmem:[#allocation2 + $0x98] sm:$0xff] %v1701
      %1830 = vst [vmem:[#allocation2 + $0xa0] sm:$0xff] %v1702
      %1831 = vst [vmem:[#allocation2 + $0xa8] sm:$0xff] %v1703
      %1832 = vst [vmem:[#allocation2 + $0xb0] sm:$0xff] %v1704
      %1833 = vst [vmem:[#allocation2 + $0xb8] sm:$0xff] %v1705
      %1834 = vst [vmem:[#allocation2 + $0xc0] sm:$0xff] %v1706
      %1835 = vst [vmem:[#allocation2 + $0xc8] sm:$0xff] %v1707
      %1836 = vst [vmem:[#allocation2 + $0xd0] sm:$0xff] %v1708
      %1837 = vst [vmem:[#allocation2 + $0xd8] sm:$0xff] %v1709
      %1838 = vst [vmem:[#allocation2 + $0xe0] sm:$0xff] %v1710
      %1839 = vst [vmem:[#allocation2 + $0xe8] sm:$0xff] %v1711
      %1840 = vst [vmem:[#allocation2 + $0xf0] sm:$0xff] %v1712
      %1841 = vst [vmem:[#allocation2 + $0xf8] sm:$0xff] %v1713
      %1842 = vst [vmem:[#allocation2 + $0x100] sm:$0xff] %v1714
      %1843 = vst [vmem:[#allocation2 + $0x108] sm:$0xff] %v1715
      %1844 = vst [vmem:[#allocation2 + $0x110] sm:$0xff] %v1716
      %1845 = vst [vmem:[#allocation2 + $0x118] sm:$0xff] %v1717
      %1846 = vst [vmem:[#allocation2 + $0x120] sm:$0xff] %v1718
      %1847 = vst [vmem:[#allocation2 + $0x128] sm:$0xff] %v1719
      %1848 = vst [vmem:[#allocation2 + $0x130] sm:$0xff] %v1720
      %1849 = vst [vmem:[#allocation2 + $0x138] sm:$0xff] %v1721
      %1850 = vst [vmem:[#allocation2 + $0x140] sm:$0xff] %v1722
      %1851 = vst [vmem:[#allocation2 + $0x148] sm:$0xff] %v1723
      %1852 = vst [vmem:[#allocation2 + $0x150] sm:$0xff] %v1724
      %1853 = vst [vmem:[#allocation2 + $0x158] sm:$0xff] %v1725
      %1854 = vst [vmem:[#allocation2 + $0x160] sm:$0xff] %v1726
      %1855 = vst [vmem:[#allocation2 + $0x168] sm:$0xff] %v1727
      %1856 = vst [vmem:[#allocation2 + $0x170] sm:$0xff] %v1728
      %1857 = vst [vmem:[#allocation2 + $0x178] sm:$0xff] %v1729
      %1858 = vst [vmem:[#allocation2 + $0x180] sm:$0xff] %v1730
      %1859 = vst [vmem:[#allocation2 + $0x188] sm:$0xff] %v1731
      %1860 = vst [vmem:[#allocation2 + $0x190] sm:$0xff] %v1732
      %1861 = vst [vmem:[#allocation2 + $0x198] sm:$0xff] %v1733
      %1862 = vst [vmem:[#allocation2 + $0x1a0] sm:$0xff] %v1734
      %1863 = vst [vmem:[#allocation2 + $0x1a8] sm:$0xff] %v1735
      %1864 = vst [vmem:[#allocation2 + $0x1b0] sm:$0xff] %v1736
      %1865 = vst [vmem:[#allocation2 + $0x1b8] sm:$0xff] %v1737
      %1866 = vst [vmem:[#allocation2 + $0x1c0] sm:$0xff] %v1738
      %1867 = vst [vmem:[#allocation2 + $0x1c8] sm:$0xff] %v1739
      %1868 = vst [vmem:[#allocation2 + $0x1d0] sm:$0xff] %v1740
      %1869 = vst [vmem:[#allocation2 + $0x1d8] sm:$0xff] %v1741
      %1870 = vst [vmem:[#allocation2 + $0x1e0] sm:$0xff] %v1742
      %1871 = vst [vmem:[#allocation2 + $0x1e8] sm:$0xff] %v1743
      %1872 = vst [vmem:[#allocation2 + $0x1f0] sm:$0xff] %v1744
      %1873 = vst [vmem:[#allocation2 + $0x1f8] sm:$0xff] %v1745
      %1874 = vst [vmem:[#allocation2 + $0x200] sm:$0xff] %v1746
      %1875 = vst [vmem:[#allocation2 + $0x208] sm:$0xff] %v1747
      %1876 = vst [vmem:[#allocation2 + $0x210] sm:$0xff] %v1748
      %1877 = vst [vmem:[#allocation2 + $0x218] sm:$0xff] %v1749
      %1878 = vst [vmem:[#allocation2 + $0x220] sm:$0xff] %v1750
      %1879 = vst [vmem:[#allocation2 + $0x228] sm:$0xff] %v1751
      %1880 = vst [vmem:[#allocation2 + $0x230] sm:$0xff] %v1752
      %1881 = vst [vmem:[#allocation2 + $0x238] sm:$0xff] %v1753
      %1882 = vst [vmem:[#allocation2 + $0x240] sm:$0xff] %v1754
      %1883 = vst [vmem:[#allocation2 + $0x248] sm:$0xff] %v1755
      %1884 = vst [vmem:[#allocation2 + $0x250] sm:$0xff] %v1756
      %1885 = vst [vmem:[#allocation2 + $0x258] sm:$0xff] %v1757
      %1886 = vst [vmem:[#allocation2 + $0x260] sm:$0xff] %v1758
      %1887 = vst [vmem:[#allocation2 + $0x268] sm:$0xff] %v1759
      %1888 = vst [vmem:[#allocation2 + $0x270] sm:$0xff] %v1760
      %1889 = vst [vmem:[#allocation2 + $0x278] sm:$0xff] %v1761
      %1890 = vst [vmem:[#allocation2 + $0x280] sm:$0xff] %v1762
      %1891 = vst [vmem:[#allocation2 + $0x288] sm:$0xff] %v1763
      %1892 = vst [vmem:[#allocation2 + $0x290] sm:$0xff] %v1764
      %1893 = vst [vmem:[#allocation2 + $0x298] sm:$0xff] %v1765
      %1894 = vst [vmem:[#allocation2 + $0x2a0] sm:$0xff] %v1766
      %1895 = vst [vmem:[#allocation2 + $0x2a8] sm:$0xff] %v1767
      %1896 = vst [vmem:[#allocation2 + $0x2b0] sm:$0xff] %v1768
      %1897 = vst [vmem:[#allocation2 + $0x2b8] sm:$0xff] %v1769
      %1898 = vst [vmem:[#allocation2 + $0x2c0] sm:$0xff] %v1770
      %1899 = vst [vmem:[#allocation2 + $0x2c8] sm:$0xff] %v1771
      %1900 = vst [vmem:[#allocation2 + $0x2d0] sm:$0xff] %v1772
      %1901 = vst [vmem:[#allocation2 + $0x2d8] sm:$0xff] %v1773
      %1902 = vst [vmem:[#allocation2 + $0x2e0] sm:$0xff] %v1774
      %1903 = vst [vmem:[#allocation2 + $0x2e8] sm:$0xff] %v1775
      %1904 = vst [vmem:[#allocation2 + $0x2f0] sm:$0xff] %v1776
      %1905 = vst [vmem:[#allocation2 + $0x2f8] sm:$0xff] %v1777
      %1906 = vst [vmem:[#allocation2 + $0x300] sm:$0xff] %v1778
      %1907 = vst [vmem:[#allocation2 + $0x308] sm:$0xff] %v1779
      %1908 = vst [vmem:[#allocation2 + $0x310] sm:$0xff] %v1780
      %1909 = vst [vmem:[#allocation2 + $0x318] sm:$0xff] %v1781
      %1910 = vst [vmem:[#allocation2 + $0x320] sm:$0xff] %v1782
      %1911 = vst [vmem:[#allocation2 + $0x328] sm:$0xff] %v1783
      %1912 = vst [vmem:[#allocation2 + $0x330] sm:$0xff] %v1784
      %1913 = vst [vmem:[#allocation2 + $0x338] sm:$0xff] %v1785
      %1914 = vst [vmem:[#allocation2 + $0x340] sm:$0xff] %v1786
      %1915 = vst [vmem:[#allocation2 + $0x348] sm:$0xff] %v1787
      %1916 = vst [vmem:[#allocation2 + $0x350] sm:$0xff] %v1788
      %1917 = vst [vmem:[#allocation2 + $0x358] sm:$0xff] %v1789
      %1918 = vst [vmem:[#allocation2 + $0x360] sm:$0xff] %v1790
      %1919 = vst [vmem:[#allocation2 + $0x368] sm:$0xff] %v1791
      %1920 = vst [vmem:[#allocation2 + $0x370] sm:$0xff] %v1792
      %1921 = vst [vmem:[#allocation2 + $0x378] sm:$0xff] %v1793
      %1922 = vst [vmem:[#allocation2 + $0x380] sm:$0xff] %v1794
      %1923 = vst [vmem:[#allocation2 + $0x388] sm:$0xff] %v1795
      %1924 = vst [vmem:[#allocation2 + $0x390] sm:$0xff] %v1796
      %1925 = vst [vmem:[#allocation2 + $0x398] sm:$0xff] %v1797
      %1926 = vst [vmem:[#allocation2 + $0x3a0] sm:$0xff] %v1798
      %1927 = vst [vmem:[#allocation2 + $0x3a8] sm:$0xff] %v1799
      %1928 = vst [vmem:[#allocation2 + $0x3b0] sm:$0xff] %v1800
      %1929 = vst [vmem:[#allocation2 + $0x3b8] sm:$0xff] %v1801
      %1930 = vst [vmem:[#allocation2 + $0x3c0] sm:$0xff] %v1802
      %1931 = vst [vmem:[#allocation2 + $0x3c8] sm:$0xff] %v1803
      %1932 = vst [vmem:[#allocation2 + $0x3d0] sm:$0xff] %v1804
      %1933 = vst [vmem:[#allocation2 + $0x3d8] sm:$0xff] %v1805
      %1934 = vst [vmem:[#allocation2 + $0x3e0] sm:$0xff] %v1806
      %1935 = vst [vmem:[#allocation2 + $0x3e8] sm:$0xff] %v1807
      %1936 = vst [vmem:[#allocation2 + $0x3f0] sm:$0xff] %v1808
      %1937 = vst [vmem:[#allocation2 + $0x3f8] sm:$0xff] %v1809
      // Predicated region
      $region41: #{depth_lstm_forward.10} parent=35 // pred_check
        %p1938 = pneg %p301
      $region42: #{depth_lstm_forward.10} parent=35 // pred_check_branch
        %1940 = sbr.rel (%p1938) target = $region44
      $region43: #{depth_lstm_forward.10} parent=35 // pred_region
        %v1941 = vld [vmem:[#allocation2] sm:$0xff]
        %v1942 = vld [vmem:[#allocation2 + $0x8] sm:$0xff]
        %v1943 = vld [vmem:[#allocation2 + $0x10] sm:$0xff]
        %v1944 = vld [vmem:[#allocation2 + $0x18] sm:$0xff]
        %v1945 = vld [vmem:[#allocation2 + $0x20] sm:$0xff]
        %v1946 = vld [vmem:[#allocation2 + $0x28] sm:$0xff]
        %v1947 = vld [vmem:[#allocation2 + $0x30] sm:$0xff]
        %v1948 = vld [vmem:[#allocation2 + $0x38] sm:$0xff]
        %v1949 = vld [vmem:[#allocation2 + $0x40] sm:$0xff]
        %v1950 = vld [vmem:[#allocation2 + $0x48] sm:$0xff]
        %v1951 = vld [vmem:[#allocation2 + $0x50] sm:$0xff]
        %v1952 = vld [vmem:[#allocation2 + $0x58] sm:$0xff]
        %v1953 = vld [vmem:[#allocation2 + $0x60] sm:$0xff]
        %v1954 = vld [vmem:[#allocation2 + $0x68] sm:$0xff]
        %v1955 = vld [vmem:[#allocation2 + $0x70] sm:$0xff]
        %v1956 = vld [vmem:[#allocation2 + $0x78] sm:$0xff]
        %v1957 = vld [vmem:[#allocation2 + $0x80] sm:$0xff]
        %v1958 = vld [vmem:[#allocation2 + $0x88] sm:$0xff]
        %v1959 = vld [vmem:[#allocation2 + $0x90] sm:$0xff]
        %v1960 = vld [vmem:[#allocation2 + $0x98] sm:$0xff]
        %v1961 = vld [vmem:[#allocation2 + $0xa0] sm:$0xff]
        %v1962 = vld [vmem:[#allocation2 + $0xa8] sm:$0xff]
        %v1963 = vld [vmem:[#allocation2 + $0xb0] sm:$0xff]
        %v1964 = vld [vmem:[#allocation2 + $0xb8] sm:$0xff]
        %v1965 = vld [vmem:[#allocation2 + $0xc0] sm:$0xff]
        %v1966 = vld [vmem:[#allocation2 + $0xc8] sm:$0xff]
        %v1967 = vld [vmem:[#allocation2 + $0xd0] sm:$0xff]
        %v1968 = vld [vmem:[#allocation2 + $0xd8] sm:$0xff]
        %v1969 = vld [vmem:[#allocation2 + $0xe0] sm:$0xff]
        %v1970 = vld [vmem:[#allocation2 + $0xe8] sm:$0xff]
        %v1971 = vld [vmem:[#allocation2 + $0xf0] sm:$0xff]
        %v1972 = vld [vmem:[#allocation2 + $0xf8] sm:$0xff]
        %v1973 = vld [vmem:[#allocation2 + $0x100] sm:$0xff]
        %v1974 = vld [vmem:[#allocation2 + $0x108] sm:$0xff]
        %v1975 = vld [vmem:[#allocation2 + $0x110] sm:$0xff]
        %v1976 = vld [vmem:[#allocation2 + $0x118] sm:$0xff]
        %v1977 = vld [vmem:[#allocation2 + $0x120] sm:$0xff]
        %v1978 = vld [vmem:[#allocation2 + $0x128] sm:$0xff]
        %v1979 = vld [vmem:[#allocation2 + $0x130] sm:$0xff]
        %v1980 = vld [vmem:[#allocation2 + $0x138] sm:$0xff]
        %v1981 = vld [vmem:[#allocation2 + $0x140] sm:$0xff]
        %v1982 = vld [vmem:[#allocation2 + $0x148] sm:$0xff]
        %v1983 = vld [vmem:[#allocation2 + $0x150] sm:$0xff]
        %v1984 = vld [vmem:[#allocation2 + $0x158] sm:$0xff]
        %v1985 = vld [vmem:[#allocation2 + $0x160] sm:$0xff]
        %v1986 = vld [vmem:[#allocation2 + $0x168] sm:$0xff]
        %v1987 = vld [vmem:[#allocation2 + $0x170] sm:$0xff]
        %v1988 = vld [vmem:[#allocation2 + $0x178] sm:$0xff]
        %v1989 = vld [vmem:[#allocation2 + $0x180] sm:$0xff]
        %v1990 = vld [vmem:[#allocation2 + $0x188] sm:$0xff]
        %v1991 = vld [vmem:[#allocation2 + $0x190] sm:$0xff]
        %v1992 = vld [vmem:[#allocation2 + $0x198] sm:$0xff]
        %v1993 = vld [vmem:[#allocation2 + $0x1a0] sm:$0xff]
        %v1994 = vld [vmem:[#allocation2 + $0x1a8] sm:$0xff]
        %v1995 = vld [vmem:[#allocation2 + $0x1b0] sm:$0xff]
        %v1996 = vld [vmem:[#allocation2 + $0x1b8] sm:$0xff]
        %v1997 = vld [vmem:[#allocation2 + $0x1c0] sm:$0xff]
        %v1998 = vld [vmem:[#allocation2 + $0x1c8] sm:$0xff]
        %v1999 = vld [vmem:[#allocation2 + $0x1d0] sm:$0xff]
        %v2000 = vld [vmem:[#allocation2 + $0x1d8] sm:$0xff]
        %v2001 = vld [vmem:[#allocation2 + $0x1e0] sm:$0xff]
        %v2002 = vld [vmem:[#allocation2 + $0x1e8] sm:$0xff]
        %v2003 = vld [vmem:[#allocation2 + $0x1f0] sm:$0xff]
        %v2004 = vld [vmem:[#allocation2 + $0x1f8] sm:$0xff]
        %v2005 = vld [vmem:[#allocation2 + $0x200] sm:$0xff]
        %v2006 = vld [vmem:[#allocation2 + $0x208] sm:$0xff]
        %v2007 = vld [vmem:[#allocation2 + $0x210] sm:$0xff]
        %v2008 = vld [vmem:[#allocation2 + $0x218] sm:$0xff]
        %v2009 = vld [vmem:[#allocation2 + $0x220] sm:$0xff]
        %v2010 = vld [vmem:[#allocation2 + $0x228] sm:$0xff]
        %v2011 = vld [vmem:[#allocation2 + $0x230] sm:$0xff]
        %v2012 = vld [vmem:[#allocation2 + $0x238] sm:$0xff]
        %v2013 = vld [vmem:[#allocation2 + $0x240] sm:$0xff]
        %v2014 = vld [vmem:[#allocation2 + $0x248] sm:$0xff]
        %v2015 = vld [vmem:[#allocation2 + $0x250] sm:$0xff]
        %v2016 = vld [vmem:[#allocation2 + $0x258] sm:$0xff]
        %v2017 = vld [vmem:[#allocation2 + $0x260] sm:$0xff]
        %v2018 = vld [vmem:[#allocation2 + $0x268] sm:$0xff]
        %v2019 = vld [vmem:[#allocation2 + $0x270] sm:$0xff]
        %v2020 = vld [vmem:[#allocation2 + $0x278] sm:$0xff]
        %v2021 = vld [vmem:[#allocation2 + $0x280] sm:$0xff]
        %v2022 = vld [vmem:[#allocation2 + $0x288] sm:$0xff]
        %v2023 = vld [vmem:[#allocation2 + $0x290] sm:$0xff]
        %v2024 = vld [vmem:[#allocation2 + $0x298] sm:$0xff]
        %v2025 = vld [vmem:[#allocation2 + $0x2a0] sm:$0xff]
        %v2026 = vld [vmem:[#allocation2 + $0x2a8] sm:$0xff]
        %v2027 = vld [vmem:[#allocation2 + $0x2b0] sm:$0xff]
        %v2028 = vld [vmem:[#allocation2 + $0x2b8] sm:$0xff]
        %v2029 = vld [vmem:[#allocation2 + $0x2c0] sm:$0xff]
        %v2030 = vld [vmem:[#allocation2 + $0x2c8] sm:$0xff]
        %v2031 = vld [vmem:[#allocation2 + $0x2d0] sm:$0xff]
        %v2032 = vld [vmem:[#allocation2 + $0x2d8] sm:$0xff]
        %v2033 = vld [vmem:[#allocation2 + $0x2e0] sm:$0xff]
        %v2034 = vld [vmem:[#allocation2 + $0x2e8] sm:$0xff]
        %v2035 = vld [vmem:[#allocation2 + $0x2f0] sm:$0xff]
        %v2036 = vld [vmem:[#allocation2 + $0x2f8] sm:$0xff]
        %v2037 = vld [vmem:[#allocation2 + $0x300] sm:$0xff]
        %v2038 = vld [vmem:[#allocation2 + $0x308] sm:$0xff]
        %v2039 = vld [vmem:[#allocation2 + $0x310] sm:$0xff]
        %v2040 = vld [vmem:[#allocation2 + $0x318] sm:$0xff]
        %v2041 = vld [vmem:[#allocation2 + $0x320] sm:$0xff]
        %v2042 = vld [vmem:[#allocation2 + $0x328] sm:$0xff]
        %v2043 = vld [vmem:[#allocation2 + $0x330] sm:$0xff]
        %v2044 = vld [vmem:[#allocation2 + $0x338] sm:$0xff]
        %v2045 = vld [vmem:[#allocation2 + $0x340] sm:$0xff]
        %v2046 = vld [vmem:[#allocation2 + $0x348] sm:$0xff]
        %v2047 = vld [vmem:[#allocation2 + $0x350] sm:$0xff]
        %v2048 = vld [vmem:[#allocation2 + $0x358] sm:$0xff]
        %v2049 = vld [vmem:[#allocation2 + $0x360] sm:$0xff]
        %v2050 = vld [vmem:[#allocation2 + $0x368] sm:$0xff]
        %v2051 = vld [vmem:[#allocation2 + $0x370] sm:$0xff]
        %v2052 = vld [vmem:[#allocation2 + $0x378] sm:$0xff]
        %v2053 = vld [vmem:[#allocation2 + $0x380] sm:$0xff]
        %v2054 = vld [vmem:[#allocation2 + $0x388] sm:$0xff]
        %v2055 = vld [vmem:[#allocation2 + $0x390] sm:$0xff]
        %v2056 = vld [vmem:[#allocation2 + $0x398] sm:$0xff]
        %v2057 = vld [vmem:[#allocation2 + $0x3a0] sm:$0xff]
        %v2058 = vld [vmem:[#allocation2 + $0x3a8] sm:$0xff]
        %v2059 = vld [vmem:[#allocation2 + $0x3b0] sm:$0xff]
        %v2060 = vld [vmem:[#allocation2 + $0x3b8] sm:$0xff]
        %v2061 = vld [vmem:[#allocation2 + $0x3c0] sm:$0xff]
        %v2062 = vld [vmem:[#allocation2 + $0x3c8] sm:$0xff]
        %v2063 = vld [vmem:[#allocation2 + $0x3d0] sm:$0xff]
        %v2064 = vld [vmem:[#allocation2 + $0x3d8] sm:$0xff]
        %v2065 = vld [vmem:[#allocation2 + $0x3e0] sm:$0xff]
        %v2066 = vld [vmem:[#allocation2 + $0x3e8] sm:$0xff]
        %v2067 = vld [vmem:[#allocation2 + $0x3f0] sm:$0xff]
        %v2068 = vld [vmem:[#allocation2 + $0x3f8] sm:$0xff]
        %v2069 = vld [vmem:[%s287] sm:$0x1]
        %v2071 = vlaneseq
        %v2072 = vshrl.u32 %v2071, 7
        %v2073 = vsub.s32 0, %v2072
        %v2074 = vrot.slane %v2069, %v2073
        %v2076 = vmul.f32 %v1941, %v2074
        %v2077 = vmul.f32 %v1942, %v2074
        %v2078 = vmul.f32 %v1943, %v2074
        %v2079 = vmul.f32 %v1944, %v2074
        %v2080 = vmul.f32 %v1945, %v2074
        %v2081 = vmul.f32 %v1946, %v2074
        %v2082 = vmul.f32 %v1947, %v2074
        %v2083 = vmul.f32 %v1948, %v2074
        %v2084 = vmul.f32 %v1949, %v2074
        %v2085 = vmul.f32 %v1950, %v2074
        %v2086 = vmul.f32 %v1951, %v2074
        %v2087 = vmul.f32 %v1952, %v2074
        %v2088 = vmul.f32 %v1953, %v2074
        %v2089 = vmul.f32 %v1954, %v2074
        %v2090 = vmul.f32 %v1955, %v2074
        %v2091 = vmul.f32 %v1956, %v2074
        %v2092 = vmul.f32 %v1957, %v2074
        %v2093 = vmul.f32 %v1958, %v2074
        %v2094 = vmul.f32 %v1959, %v2074
        %v2095 = vmul.f32 %v1960, %v2074
        %v2096 = vmul.f32 %v1961, %v2074
        %v2097 = vmul.f32 %v1962, %v2074
        %v2098 = vmul.f32 %v1963, %v2074
        %v2099 = vmul.f32 %v1964, %v2074
        %v2100 = vmul.f32 %v1965, %v2074
        %v2101 = vmul.f32 %v1966, %v2074
        %v2102 = vmul.f32 %v1967, %v2074
        %v2103 = vmul.f32 %v1968, %v2074
        %v2104 = vmul.f32 %v1969, %v2074
        %v2105 = vmul.f32 %v1970, %v2074
        %v2106 = vmul.f32 %v1971, %v2074
        %v2107 = vmul.f32 %v1972, %v2074
        %v2108 = vmul.f32 %v1973, %v2074
        %v2109 = vmul.f32 %v1974, %v2074
        %v2110 = vmul.f32 %v1975, %v2074
        %v2111 = vmul.f32 %v1976, %v2074
        %v2112 = vmul.f32 %v1977, %v2074
        %v2113 = vmul.f32 %v1978, %v2074
        %v2114 = vmul.f32 %v1979, %v2074
        %v2115 = vmul.f32 %v1980, %v2074
        %v2116 = vmul.f32 %v1981, %v2074
        %v2117 = vmul.f32 %v1982, %v2074
        %v2118 = vmul.f32 %v1983, %v2074
        %v2119 = vmul.f32 %v1984, %v2074
        %v2120 = vmul.f32 %v1985, %v2074
        %v2121 = vmul.f32 %v1986, %v2074
        %v2122 = vmul.f32 %v1987, %v2074
        %v2123 = vmul.f32 %v1988, %v2074
        %v2124 = vmul.f32 %v1989, %v2074
        %v2125 = vmul.f32 %v1990, %v2074
        %v2126 = vmul.f32 %v1991, %v2074
        %v2127 = vmul.f32 %v1992, %v2074
        %v2128 = vmul.f32 %v1993, %v2074
        %v2129 = vmul.f32 %v1994, %v2074
        %v2130 = vmul.f32 %v1995, %v2074
        %v2131 = vmul.f32 %v1996, %v2074
        %v2132 = vmul.f32 %v1997, %v2074
        %v2133 = vmul.f32 %v1998, %v2074
        %v2134 = vmul.f32 %v1999, %v2074
        %v2135 = vmul.f32 %v2000, %v2074
        %v2136 = vmul.f32 %v2001, %v2074
        %v2137 = vmul.f32 %v2002, %v2074
        %v2138 = vmul.f32 %v2003, %v2074
        %v2139 = vmul.f32 %v2004, %v2074
        %v2140 = vmul.f32 %v2005, %v2074
        %v2141 = vmul.f32 %v2006, %v2074
        %v2142 = vmul.f32 %v2007, %v2074
        %v2143 = vmul.f32 %v2008, %v2074
        %v2144 = vmul.f32 %v2009, %v2074
        %v2145 = vmul.f32 %v2010, %v2074
        %v2146 = vmul.f32 %v2011, %v2074
        %v2147 = vmul.f32 %v2012, %v2074
        %v2148 = vmul.f32 %v2013, %v2074
        %v2149 = vmul.f32 %v2014, %v2074
        %v2150 = vmul.f32 %v2015, %v2074
        %v2151 = vmul.f32 %v2016, %v2074
        %v2152 = vmul.f32 %v2017, %v2074
        %v2153 = vmul.f32 %v2018, %v2074
        %v2154 = vmul.f32 %v2019, %v2074
        %v2155 = vmul.f32 %v2020, %v2074
        %v2156 = vmul.f32 %v2021, %v2074
        %v2157 = vmul.f32 %v2022, %v2074
        %v2158 = vmul.f32 %v2023, %v2074
        %v2159 = vmul.f32 %v2024, %v2074
        %v2160 = vmul.f32 %v2025, %v2074
        %v2161 = vmul.f32 %v2026, %v2074
        %v2162 = vmul.f32 %v2027, %v2074
        %v2163 = vmul.f32 %v2028, %v2074
        %v2164 = vmul.f32 %v2029, %v2074
        %v2165 = vmul.f32 %v2030, %v2074
        %v2166 = vmul.f32 %v2031, %v2074
        %v2167 = vmul.f32 %v2032, %v2074
        %v2168 = vmul.f32 %v2033, %v2074
        %v2169 = vmul.f32 %v2034, %v2074
        %v2170 = vmul.f32 %v2035, %v2074
        %v2171 = vmul.f32 %v2036, %v2074
        %v2172 = vmul.f32 %v2037, %v2074
        %v2173 = vmul.f32 %v2038, %v2074
        %v2174 = vmul.f32 %v2039, %v2074
        %v2175 = vmul.f32 %v2040, %v2074
        %v2176 = vmul.f32 %v2041, %v2074
        %v2177 = vmul.f32 %v2042, %v2074
        %v2178 = vmul.f32 %v2043, %v2074
        %v2179 = vmul.f32 %v2044, %v2074
        %v2180 = vmul.f32 %v2045, %v2074
        %v2181 = vmul.f32 %v2046, %v2074
        %v2182 = vmul.f32 %v2047, %v2074
        %v2183 = vmul.f32 %v2048, %v2074
        %v2184 = vmul.f32 %v2049, %v2074
        %v2185 = vmul.f32 %v2050, %v2074
        %v2186 = vmul.f32 %v2051, %v2074
        %v2187 = vmul.f32 %v2052, %v2074
        %v2188 = vmul.f32 %v2053, %v2074
        %v2189 = vmul.f32 %v2054, %v2074
        %v2190 = vmul.f32 %v2055, %v2074
        %v2191 = vmul.f32 %v2056, %v2074
        %v2192 = vmul.f32 %v2057, %v2074
        %v2193 = vmul.f32 %v2058, %v2074
        %v2194 = vmul.f32 %v2059, %v2074
        %v2195 = vmul.f32 %v2060, %v2074
        %v2196 = vmul.f32 %v2061, %v2074
        %v2197 = vmul.f32 %v2062, %v2074
        %v2198 = vmul.f32 %v2063, %v2074
        %v2199 = vmul.f32 %v2064, %v2074
        %v2200 = vmul.f32 %v2065, %v2074
        %v2201 = vmul.f32 %v2066, %v2074
        %v2202 = vmul.f32 %v2067, %v2074
        %v2203 = vmul.f32 %v2068, %v2074
        %v2204 = vld [vmem:[%s290] sm:$0x1]
        %v2206 = vlaneseq
        %v2207 = vshrl.u32 %v2206, 7
        %v2208 = vsub.s32 0, %v2207
        %v2209 = vrot.slane %v2204, %v2208
        %v2211 = vadd.f32 %v2076, %v2209
        %v2212 = vadd.f32 %v2077, %v2209
        %v2213 = vadd.f32 %v2078, %v2209
        %v2214 = vadd.f32 %v2079, %v2209
        %v2215 = vadd.f32 %v2080, %v2209
        %v2216 = vadd.f32 %v2081, %v2209
        %v2217 = vadd.f32 %v2082, %v2209
        %v2218 = vadd.f32 %v2083, %v2209
        %v2219 = vadd.f32 %v2084, %v2209
        %v2220 = vadd.f32 %v2085, %v2209
        %v2221 = vadd.f32 %v2086, %v2209
        %v2222 = vadd.f32 %v2087, %v2209
        %v2223 = vadd.f32 %v2088, %v2209
        %v2224 = vadd.f32 %v2089, %v2209
        %v2225 = vadd.f32 %v2090, %v2209
        %v2226 = vadd.f32 %v2091, %v2209
        %v2227 = vadd.f32 %v2092, %v2209
        %v2228 = vadd.f32 %v2093, %v2209
        %v2229 = vadd.f32 %v2094, %v2209
        %v2230 = vadd.f32 %v2095, %v2209
        %v2231 = vadd.f32 %v2096, %v2209
        %v2232 = vadd.f32 %v2097, %v2209
        %v2233 = vadd.f32 %v2098, %v2209
        %v2234 = vadd.f32 %v2099, %v2209
        %v2235 = vadd.f32 %v2100, %v2209
        %v2236 = vadd.f32 %v2101, %v2209
        %v2237 = vadd.f32 %v2102, %v2209
        %v2238 = vadd.f32 %v2103, %v2209
        %v2239 = vadd.f32 %v2104, %v2209
        %v2240 = vadd.f32 %v2105, %v2209
        %v2241 = vadd.f32 %v2106, %v2209
        %v2242 = vadd.f32 %v2107, %v2209
        %v2243 = vadd.f32 %v2108, %v2209
        %v2244 = vadd.f32 %v2109, %v2209
        %v2245 = vadd.f32 %v2110, %v2209
        %v2246 = vadd.f32 %v2111, %v2209
        %v2247 = vadd.f32 %v2112, %v2209
        %v2248 = vadd.f32 %v2113, %v2209
        %v2249 = vadd.f32 %v2114, %v2209
        %v2250 = vadd.f32 %v2115, %v2209
        %v2251 = vadd.f32 %v2116, %v2209
        %v2252 = vadd.f32 %v2117, %v2209
        %v2253 = vadd.f32 %v2118, %v2209
        %v2254 = vadd.f32 %v2119, %v2209
        %v2255 = vadd.f32 %v2120, %v2209
        %v2256 = vadd.f32 %v2121, %v2209
        %v2257 = vadd.f32 %v2122, %v2209
        %v2258 = vadd.f32 %v2123, %v2209
        %v2259 = vadd.f32 %v2124, %v2209
        %v2260 = vadd.f32 %v2125, %v2209
        %v2261 = vadd.f32 %v2126, %v2209
        %v2262 = vadd.f32 %v2127, %v2209
        %v2263 = vadd.f32 %v2128, %v2209
        %v2264 = vadd.f32 %v2129, %v2209
        %v2265 = vadd.f32 %v2130, %v2209
        %v2266 = vadd.f32 %v2131, %v2209
        %v2267 = vadd.f32 %v2132, %v2209
        %v2268 = vadd.f32 %v2133, %v2209
        %v2269 = vadd.f32 %v2134, %v2209
        %v2270 = vadd.f32 %v2135, %v2209
        %v2271 = vadd.f32 %v2136, %v2209
        %v2272 = vadd.f32 %v2137, %v2209
        %v2273 = vadd.f32 %v2138, %v2209
        %v2274 = vadd.f32 %v2139, %v2209
        %v2275 = vadd.f32 %v2140, %v2209
        %v2276 = vadd.f32 %v2141, %v2209
        %v2277 = vadd.f32 %v2142, %v2209
        %v2278 = vadd.f32 %v2143, %v2209
        %v2279 = vadd.f32 %v2144, %v2209
        %v2280 = vadd.f32 %v2145, %v2209
        %v2281 = vadd.f32 %v2146, %v2209
        %v2282 = vadd.f32 %v2147, %v2209
        %v2283 = vadd.f32 %v2148, %v2209
        %v2284 = vadd.f32 %v2149, %v2209
        %v2285 = vadd.f32 %v2150, %v2209
        %v2286 = vadd.f32 %v2151, %v2209
        %v2287 = vadd.f32 %v2152, %v2209
        %v2288 = vadd.f32 %v2153, %v2209
        %v2289 = vadd.f32 %v2154, %v2209
        %v2290 = vadd.f32 %v2155, %v2209
        %v2291 = vadd.f32 %v2156, %v2209
        %v2292 = vadd.f32 %v2157, %v2209
        %v2293 = vadd.f32 %v2158, %v2209
        %v2294 = vadd.f32 %v2159, %v2209
        %v2295 = vadd.f32 %v2160, %v2209
        %v2296 = vadd.f32 %v2161, %v2209
        %v2297 = vadd.f32 %v2162, %v2209
        %v2298 = vadd.f32 %v2163, %v2209
        %v2299 = vadd.f32 %v2164, %v2209
        %v2300 = vadd.f32 %v2165, %v2209
        %v2301 = vadd.f32 %v2166, %v2209
        %v2302 = vadd.f32 %v2167, %v2209
        %v2303 = vadd.f32 %v2168, %v2209
        %v2304 = vadd.f32 %v2169, %v2209
        %v2305 = vadd.f32 %v2170, %v2209
        %v2306 = vadd.f32 %v2171, %v2209
        %v2307 = vadd.f32 %v2172, %v2209
        %v2308 = vadd.f32 %v2173, %v2209
        %v2309 = vadd.f32 %v2174, %v2209
        %v2310 = vadd.f32 %v2175, %v2209
        %v2311 = vadd.f32 %v2176, %v2209
        %v2312 = vadd.f32 %v2177, %v2209
        %v2313 = vadd.f32 %v2178, %v2209
        %v2314 = vadd.f32 %v2179, %v2209
        %v2315 = vadd.f32 %v2180, %v2209
        %v2316 = vadd.f32 %v2181, %v2209
        %v2317 = vadd.f32 %v2182, %v2209
        %v2318 = vadd.f32 %v2183, %v2209
        %v2319 = vadd.f32 %v2184, %v2209
        %v2320 = vadd.f32 %v2185, %v2209
        %v2321 = vadd.f32 %v2186, %v2209
        %v2322 = vadd.f32 %v2187, %v2209
        %v2323 = vadd.f32 %v2188, %v2209
        %v2324 = vadd.f32 %v2189, %v2209
        %v2325 = vadd.f32 %v2190, %v2209
        %v2326 = vadd.f32 %v2191, %v2209
        %v2327 = vadd.f32 %v2192, %v2209
        %v2328 = vadd.f32 %v2193, %v2209
        %v2329 = vadd.f32 %v2194, %v2209
        %v2330 = vadd.f32 %v2195, %v2209
        %v2331 = vadd.f32 %v2196, %v2209
        %v2332 = vadd.f32 %v2197, %v2209
        %v2333 = vadd.f32 %v2198, %v2209
        %v2334 = vadd.f32 %v2199, %v2209
        %v2335 = vadd.f32 %v2200, %v2209
        %v2336 = vadd.f32 %v2201, %v2209
        %v2337 = vadd.f32 %v2202, %v2209
        %v2338 = vadd.f32 %v2203, %v2209
        %v2339 = vmax.f32 %v2211, 0.0
        %v2340 = vmax.f32 %v2212, 0.0
        %v2341 = vmax.f32 %v2213, 0.0
        %v2342 = vmax.f32 %v2214, 0.0
        %v2343 = vmax.f32 %v2215, 0.0
        %v2344 = vmax.f32 %v2216, 0.0
        %v2345 = vmax.f32 %v2217, 0.0
        %v2346 = vmax.f32 %v2218, 0.0
        %v2347 = vmax.f32 %v2219, 0.0
        %v2348 = vmax.f32 %v2220, 0.0
        %v2349 = vmax.f32 %v2221, 0.0
        %v2350 = vmax.f32 %v2222, 0.0
        %v2351 = vmax.f32 %v2223, 0.0
        %v2352 = vmax.f32 %v2224, 0.0
        %v2353 = vmax.f32 %v2225, 0.0
        %v2354 = vmax.f32 %v2226, 0.0
        %v2355 = vmax.f32 %v2227, 0.0
        %v2356 = vmax.f32 %v2228, 0.0
        %v2357 = vmax.f32 %v2229, 0.0
        %v2358 = vmax.f32 %v2230, 0.0
        %v2359 = vmax.f32 %v2231, 0.0
        %v2360 = vmax.f32 %v2232, 0.0
        %v2361 = vmax.f32 %v2233, 0.0
        %v2362 = vmax.f32 %v2234, 0.0
        %v2363 = vmax.f32 %v2235, 0.0
        %v2364 = vmax.f32 %v2236, 0.0
        %v2365 = vmax.f32 %v2237, 0.0
        %v2366 = vmax.f32 %v2238, 0.0
        %v2367 = vmax.f32 %v2239, 0.0
        %v2368 = vmax.f32 %v2240, 0.0
        %v2369 = vmax.f32 %v2241, 0.0
        %v2370 = vmax.f32 %v2242, 0.0
        %v2371 = vmax.f32 %v2243, 0.0
        %v2372 = vmax.f32 %v2244, 0.0
        %v2373 = vmax.f32 %v2245, 0.0
        %v2374 = vmax.f32 %v2246, 0.0
        %v2375 = vmax.f32 %v2247, 0.0
        %v2376 = vmax.f32 %v2248, 0.0
        %v2377 = vmax.f32 %v2249, 0.0
        %v2378 = vmax.f32 %v2250, 0.0
        %v2379 = vmax.f32 %v2251, 0.0
        %v2380 = vmax.f32 %v2252, 0.0
        %v2381 = vmax.f32 %v2253, 0.0
        %v2382 = vmax.f32 %v2254, 0.0
        %v2383 = vmax.f32 %v2255, 0.0
        %v2384 = vmax.f32 %v2256, 0.0
        %v2385 = vmax.f32 %v2257, 0.0
        %v2386 = vmax.f32 %v2258, 0.0
        %v2387 = vmax.f32 %v2259, 0.0
        %v2388 = vmax.f32 %v2260, 0.0
        %v2389 = vmax.f32 %v2261, 0.0
        %v2390 = vmax.f32 %v2262, 0.0
        %v2391 = vmax.f32 %v2263, 0.0
        %v2392 = vmax.f32 %v2264, 0.0
        %v2393 = vmax.f32 %v2265, 0.0
        %v2394 = vmax.f32 %v2266, 0.0
        %v2395 = vmax.f32 %v2267, 0.0
        %v2396 = vmax.f32 %v2268, 0.0
        %v2397 = vmax.f32 %v2269, 0.0
        %v2398 = vmax.f32 %v2270, 0.0
        %v2399 = vmax.f32 %v2271, 0.0
        %v2400 = vmax.f32 %v2272, 0.0
        %v2401 = vmax.f32 %v2273, 0.0
        %v2402 = vmax.f32 %v2274, 0.0
        %v2403 = vmax.f32 %v2275, 0.0
        %v2404 = vmax.f32 %v2276, 0.0
        %v2405 = vmax.f32 %v2277, 0.0
        %v2406 = vmax.f32 %v2278, 0.0
        %v2407 = vmax.f32 %v2279, 0.0
        %v2408 = vmax.f32 %v2280, 0.0
        %v2409 = vmax.f32 %v2281, 0.0
        %v2410 = vmax.f32 %v2282, 0.0
        %v2411 = vmax.f32 %v2283, 0.0
        %v2412 = vmax.f32 %v2284, 0.0
        %v2413 = vmax.f32 %v2285, 0.0
        %v2414 = vmax.f32 %v2286, 0.0
        %v2415 = vmax.f32 %v2287, 0.0
        %v2416 = vmax.f32 %v2288, 0.0
        %v2417 = vmax.f32 %v2289, 0.0
        %v2418 = vmax.f32 %v2290, 0.0
        %v2419 = vmax.f32 %v2291, 0.0
        %v2420 = vmax.f32 %v2292, 0.0
        %v2421 = vmax.f32 %v2293, 0.0
        %v2422 = vmax.f32 %v2294, 0.0
        %v2423 = vmax.f32 %v2295, 0.0
        %v2424 = vmax.f32 %v2296, 0.0
        %v2425 = vmax.f32 %v2297, 0.0
        %v2426 = vmax.f32 %v2298, 0.0
        %v2427 = vmax.f32 %v2299, 0.0
        %v2428 = vmax.f32 %v2300, 0.0
        %v2429 = vmax.f32 %v2301, 0.0
        %v2430 = vmax.f32 %v2302, 0.0
        %v2431 = vmax.f32 %v2303, 0.0
        %v2432 = vmax.f32 %v2304, 0.0
        %v2433 = vmax.f32 %v2305, 0.0
        %v2434 = vmax.f32 %v2306, 0.0
        %v2435 = vmax.f32 %v2307, 0.0
        %v2436 = vmax.f32 %v2308, 0.0
        %v2437 = vmax.f32 %v2309, 0.0
        %v2438 = vmax.f32 %v2310, 0.0
        %v2439 = vmax.f32 %v2311, 0.0
        %v2440 = vmax.f32 %v2312, 0.0
        %v2441 = vmax.f32 %v2313, 0.0
        %v2442 = vmax.f32 %v2314, 0.0
        %v2443 = vmax.f32 %v2315, 0.0
        %v2444 = vmax.f32 %v2316, 0.0
        %v2445 = vmax.f32 %v2317, 0.0
        %v2446 = vmax.f32 %v2318, 0.0
        %v2447 = vmax.f32 %v2319, 0.0
        %v2448 = vmax.f32 %v2320, 0.0
        %v2449 = vmax.f32 %v2321, 0.0
        %v2450 = vmax.f32 %v2322, 0.0
        %v2451 = vmax.f32 %v2323, 0.0
        %v2452 = vmax.f32 %v2324, 0.0
        %v2453 = vmax.f32 %v2325, 0.0
        %v2454 = vmax.f32 %v2326, 0.0
        %v2455 = vmax.f32 %v2327, 0.0
        %v2456 = vmax.f32 %v2328, 0.0
        %v2457 = vmax.f32 %v2329, 0.0
        %v2458 = vmax.f32 %v2330, 0.0
        %v2459 = vmax.f32 %v2331, 0.0
        %v2460 = vmax.f32 %v2332, 0.0
        %v2461 = vmax.f32 %v2333, 0.0
        %v2462 = vmax.f32 %v2334, 0.0
        %v2463 = vmax.f32 %v2335, 0.0
        %v2464 = vmax.f32 %v2336, 0.0
        %v2465 = vmax.f32 %v2337, 0.0
        %v2466 = vmax.f32 %v2338, 0.0
        %v2467 = vpack.c.bf16 %v2340, %v2339
        %v2468 = vpack.c.bf16 %v2342, %v2341
        %v2469 = vpack.c.bf16 %v2344, %v2343
        %v2470 = vpack.c.bf16 %v2346, %v2345
        %v2471 = vpack.c.bf16 %v2348, %v2347
        %v2472 = vpack.c.bf16 %v2350, %v2349
        %v2473 = vpack.c.bf16 %v2352, %v2351
        %v2474 = vpack.c.bf16 %v2354, %v2353
        %v2475 = vpack.c.bf16 %v2356, %v2355
        %v2476 = vpack.c.bf16 %v2358, %v2357
        %v2477 = vpack.c.bf16 %v2360, %v2359
        %v2478 = vpack.c.bf16 %v2362, %v2361
        %v2479 = vpack.c.bf16 %v2364, %v2363
        %v2480 = vpack.c.bf16 %v2366, %v2365
        %v2481 = vpack.c.bf16 %v2368, %v2367
        %v2482 = vpack.c.bf16 %v2370, %v2369
        %v2483 = vpack.c.bf16 %v2372, %v2371
        %v2484 = vpack.c.bf16 %v2374, %v2373
        %v2485 = vpack.c.bf16 %v2376, %v2375
        %v2486 = vpack.c.bf16 %v2378, %v2377
        %v2487 = vpack.c.bf16 %v2380, %v2379
        %v2488 = vpack.c.bf16 %v2382, %v2381
        %v2489 = vpack.c.bf16 %v2384, %v2383
        %v2490 = vpack.c.bf16 %v2386, %v2385
        %v2491 = vpack.c.bf16 %v2388, %v2387
        %v2492 = vpack.c.bf16 %v2390, %v2389
        %v2493 = vpack.c.bf16 %v2392, %v2391
        %v2494 = vpack.c.bf16 %v2394, %v2393
        %v2495 = vpack.c.bf16 %v2396, %v2395
        %v2496 = vpack.c.bf16 %v2398, %v2397
        %v2497 = vpack.c.bf16 %v2400, %v2399
        %v2498 = vpack.c.bf16 %v2402, %v2401
        %v2499 = vpack.c.bf16 %v2404, %v2403
        %v2500 = vpack.c.bf16 %v2406, %v2405
        %v2501 = vpack.c.bf16 %v2408, %v2407
        %v2502 = vpack.c.bf16 %v2410, %v2409
        %v2503 = vpack.c.bf16 %v2412, %v2411
        %v2504 = vpack.c.bf16 %v2414, %v2413
        %v2505 = vpack.c.bf16 %v2416, %v2415
        %v2506 = vpack.c.bf16 %v2418, %v2417
        %v2507 = vpack.c.bf16 %v2420, %v2419
        %v2508 = vpack.c.bf16 %v2422, %v2421
        %v2509 = vpack.c.bf16 %v2424, %v2423
        %v2510 = vpack.c.bf16 %v2426, %v2425
        %v2511 = vpack.c.bf16 %v2428, %v2427
        %v2512 = vpack.c.bf16 %v2430, %v2429
        %v2513 = vpack.c.bf16 %v2432, %v2431
        %v2514 = vpack.c.bf16 %v2434, %v2433
        %v2515 = vpack.c.bf16 %v2436, %v2435
        %v2516 = vpack.c.bf16 %v2438, %v2437
        %v2517 = vpack.c.bf16 %v2440, %v2439
        %v2518 = vpack.c.bf16 %v2442, %v2441
        %v2519 = vpack.c.bf16 %v2444, %v2443
        %v2520 = vpack.c.bf16 %v2446, %v2445
        %v2521 = vpack.c.bf16 %v2448, %v2447
        %v2522 = vpack.c.bf16 %v2450, %v2449
        %v2523 = vpack.c.bf16 %v2452, %v2451
        %v2524 = vpack.c.bf16 %v2454, %v2453
        %v2525 = vpack.c.bf16 %v2456, %v2455
        %v2526 = vpack.c.bf16 %v2458, %v2457
        %v2527 = vpack.c.bf16 %v2460, %v2459
        %v2528 = vpack.c.bf16 %v2462, %v2461
        %v2529 = vpack.c.bf16 %v2464, %v2463
        %v2530 = vpack.c.bf16 %v2466, %v2465
        %v2595 = vunpack.c.l.b16 %v2467
        %v2596 = vunpack.c.h.b16 %v2467
        %v2597 = vunpack.c.l.b16 %v2468
        %v2598 = vunpack.c.h.b16 %v2468
        %v2599 = vunpack.c.l.b16 %v2469
        %v2600 = vunpack.c.h.b16 %v2469
        %v2601 = vunpack.c.l.b16 %v2470
        %v2602 = vunpack.c.h.b16 %v2470
        %v2603 = vunpack.c.l.b16 %v2471
        %v2604 = vunpack.c.h.b16 %v2471
        %v2605 = vunpack.c.l.b16 %v2472
        %v2606 = vunpack.c.h.b16 %v2472
        %v2607 = vunpack.c.l.b16 %v2473
        %v2608 = vunpack.c.h.b16 %v2473
        %v2609 = vunpack.c.l.b16 %v2474
        %v2610 = vunpack.c.h.b16 %v2474
        %v2611 = vunpack.c.l.b16 %v2475
        %v2612 = vunpack.c.h.b16 %v2475
        %v2613 = vunpack.c.l.b16 %v2476
        %v2614 = vunpack.c.h.b16 %v2476
        %v2615 = vunpack.c.l.b16 %v2477
        %v2616 = vunpack.c.h.b16 %v2477
        %v2617 = vunpack.c.l.b16 %v2478
        %v2618 = vunpack.c.h.b16 %v2478
        %v2619 = vunpack.c.l.b16 %v2479
        %v2620 = vunpack.c.h.b16 %v2479
        %v2621 = vunpack.c.l.b16 %v2480
        %v2622 = vunpack.c.h.b16 %v2480
        %v2623 = vunpack.c.l.b16 %v2481
        %v2624 = vunpack.c.h.b16 %v2481
        %v2625 = vunpack.c.l.b16 %v2482
        %v2626 = vunpack.c.h.b16 %v2482
        %v2627 = vunpack.c.l.b16 %v2483
        %v2628 = vunpack.c.h.b16 %v2483
        %v2629 = vunpack.c.l.b16 %v2484
        %v2630 = vunpack.c.h.b16 %v2484
        %v2631 = vunpack.c.l.b16 %v2485
        %v2632 = vunpack.c.h.b16 %v2485
        %v2633 = vunpack.c.l.b16 %v2486
        %v2634 = vunpack.c.h.b16 %v2486
        %v2635 = vunpack.c.l.b16 %v2487
        %v2636 = vunpack.c.h.b16 %v2487
        %v2637 = vunpack.c.l.b16 %v2488
        %v2638 = vunpack.c.h.b16 %v2488
        %v2639 = vunpack.c.l.b16 %v2489
        %v2640 = vunpack.c.h.b16 %v2489
        %v2641 = vunpack.c.l.b16 %v2490
        %v2642 = vunpack.c.h.b16 %v2490
        %v2643 = vunpack.c.l.b16 %v2491
        %v2644 = vunpack.c.h.b16 %v2491
        %v2645 = vunpack.c.l.b16 %v2492
        %v2646 = vunpack.c.h.b16 %v2492
        %v2647 = vunpack.c.l.b16 %v2493
        %v2648 = vunpack.c.h.b16 %v2493
        %v2649 = vunpack.c.l.b16 %v2494
        %v2650 = vunpack.c.h.b16 %v2494
        %v2651 = vunpack.c.l.b16 %v2495
        %v2652 = vunpack.c.h.b16 %v2495
        %v2653 = vunpack.c.l.b16 %v2496
        %v2654 = vunpack.c.h.b16 %v2496
        %v2655 = vunpack.c.l.b16 %v2497
        %v2656 = vunpack.c.h.b16 %v2497
        %v2657 = vunpack.c.l.b16 %v2498
        %v2658 = vunpack.c.h.b16 %v2498
        %v2659 = vunpack.c.l.b16 %v2499
        %v2660 = vunpack.c.h.b16 %v2499
        %v2661 = vunpack.c.l.b16 %v2500
        %v2662 = vunpack.c.h.b16 %v2500
        %v2663 = vunpack.c.l.b16 %v2501
        %v2664 = vunpack.c.h.b16 %v2501
        %v2665 = vunpack.c.l.b16 %v2502
        %v2666 = vunpack.c.h.b16 %v2502
        %v2667 = vunpack.c.l.b16 %v2503
        %v2668 = vunpack.c.h.b16 %v2503
        %v2669 = vunpack.c.l.b16 %v2504
        %v2670 = vunpack.c.h.b16 %v2504
        %v2671 = vunpack.c.l.b16 %v2505
        %v2672 = vunpack.c.h.b16 %v2505
        %v2673 = vunpack.c.l.b16 %v2506
        %v2674 = vunpack.c.h.b16 %v2506
        %v2675 = vunpack.c.l.b16 %v2507
        %v2676 = vunpack.c.h.b16 %v2507
        %v2677 = vunpack.c.l.b16 %v2508
        %v2678 = vunpack.c.h.b16 %v2508
        %v2679 = vunpack.c.l.b16 %v2509
        %v2680 = vunpack.c.h.b16 %v2509
        %v2681 = vunpack.c.l.b16 %v2510
        %v2682 = vunpack.c.h.b16 %v2510
        %v2683 = vunpack.c.l.b16 %v2511
        %v2684 = vunpack.c.h.b16 %v2511
        %v2685 = vunpack.c.l.b16 %v2512
        %v2686 = vunpack.c.h.b16 %v2512
        %v2687 = vunpack.c.l.b16 %v2513
        %v2688 = vunpack.c.h.b16 %v2513
        %v2689 = vunpack.c.l.b16 %v2514
        %v2690 = vunpack.c.h.b16 %v2514
        %v2691 = vunpack.c.l.b16 %v2515
        %v2692 = vunpack.c.h.b16 %v2515
        %v2693 = vunpack.c.l.b16 %v2516
        %v2694 = vunpack.c.h.b16 %v2516
        %v2695 = vunpack.c.l.b16 %v2517
        %v2696 = vunpack.c.h.b16 %v2517
        %v2697 = vunpack.c.l.b16 %v2518
        %v2698 = vunpack.c.h.b16 %v2518
        %v2699 = vunpack.c.l.b16 %v2519
        %v2700 = vunpack.c.h.b16 %v2519
        %v2701 = vunpack.c.l.b16 %v2520
        %v2702 = vunpack.c.h.b16 %v2520
        %v2703 = vunpack.c.l.b16 %v2521
        %v2704 = vunpack.c.h.b16 %v2521
        %v2705 = vunpack.c.l.b16 %v2522
        %v2706 = vunpack.c.h.b16 %v2522
        %v2707 = vunpack.c.l.b16 %v2523
        %v2708 = vunpack.c.h.b16 %v2523
        %v2709 = vunpack.c.l.b16 %v2524
        %v2710 = vunpack.c.h.b16 %v2524
        %v2711 = vunpack.c.l.b16 %v2525
        %v2712 = vunpack.c.h.b16 %v2525
        %v2713 = vunpack.c.l.b16 %v2526
        %v2714 = vunpack.c.h.b16 %v2526
        %v2715 = vunpack.c.l.b16 %v2527
        %v2716 = vunpack.c.h.b16 %v2527
        %v2717 = vunpack.c.l.b16 %v2528
        %v2718 = vunpack.c.h.b16 %v2528
        %v2719 = vunpack.c.l.b16 %v2529
        %v2720 = vunpack.c.h.b16 %v2529
        %v2721 = vunpack.c.l.b16 %v2530
        %v2722 = vunpack.c.h.b16 %v2530
        %v2723 = vpack.c.b16 %v2595, %v2595
        %v2724 = vpack.c.b16 %v2596, %v2596
        %v2725 = vpack.c.b16 %v2597, %v2597
        %v2726 = vpack.c.b16 %v2598, %v2598
        %v2727 = vpack.c.b16 %v2599, %v2599
        %v2728 = vpack.c.b16 %v2600, %v2600
        %v2729 = vpack.c.b16 %v2601, %v2601
        %v2730 = vpack.c.b16 %v2602, %v2602
        %v2731 = vpack.c.b16 %v2603, %v2603
        %v2732 = vpack.c.b16 %v2604, %v2604
        %v2733 = vpack.c.b16 %v2605, %v2605
        %v2734 = vpack.c.b16 %v2606, %v2606
        %v2735 = vpack.c.b16 %v2607, %v2607
        %v2736 = vpack.c.b16 %v2608, %v2608
        %v2737 = vpack.c.b16 %v2609, %v2609
        %v2738 = vpack.c.b16 %v2610, %v2610
        %v2739 = vpack.c.b16 %v2611, %v2611
        %v2740 = vpack.c.b16 %v2612, %v2612
        %v2741 = vpack.c.b16 %v2613, %v2613
        %v2742 = vpack.c.b16 %v2614, %v2614
        %v2743 = vpack.c.b16 %v2615, %v2615
        %v2744 = vpack.c.b16 %v2616, %v2616
        %v2745 = vpack.c.b16 %v2617, %v2617
        %v2746 = vpack.c.b16 %v2618, %v2618
        %v2747 = vpack.c.b16 %v2619, %v2619
        %v2748 = vpack.c.b16 %v2620, %v2620
        %v2749 = vpack.c.b16 %v2621, %v2621
        %v2750 = vpack.c.b16 %v2622, %v2622
        %v2751 = vpack.c.b16 %v2623, %v2623
        %v2752 = vpack.c.b16 %v2624, %v2624
        %v2753 = vpack.c.b16 %v2625, %v2625
        %v2754 = vpack.c.b16 %v2626, %v2626
        %v2755 = vpack.c.b16 %v2627, %v2627
        %v2756 = vpack.c.b16 %v2628, %v2628
        %v2757 = vpack.c.b16 %v2629, %v2629
        %v2758 = vpack.c.b16 %v2630, %v2630
        %v2759 = vpack.c.b16 %v2631, %v2631
        %v2760 = vpack.c.b16 %v2632, %v2632
        %v2761 = vpack.c.b16 %v2633, %v2633
        %v2762 = vpack.c.b16 %v2634, %v2634
        %v2763 = vpack.c.b16 %v2635, %v2635
        %v2764 = vpack.c.b16 %v2636, %v2636
        %v2765 = vpack.c.b16 %v2637, %v2637
        %v2766 = vpack.c.b16 %v2638, %v2638
        %v2767 = vpack.c.b16 %v2639, %v2639
        %v2768 = vpack.c.b16 %v2640, %v2640
        %v2769 = vpack.c.b16 %v2641, %v2641
        %v2770 = vpack.c.b16 %v2642, %v2642
        %v2771 = vpack.c.b16 %v2643, %v2643
        %v2772 = vpack.c.b16 %v2644, %v2644
        %v2773 = vpack.c.b16 %v2645, %v2645
        %v2774 = vpack.c.b16 %v2646, %v2646
        %v2775 = vpack.c.b16 %v2647, %v2647
        %v2776 = vpack.c.b16 %v2648, %v2648
        %v2777 = vpack.c.b16 %v2649, %v2649
        %v2778 = vpack.c.b16 %v2650, %v2650
        %v2779 = vpack.c.b16 %v2651, %v2651
        %v2780 = vpack.c.b16 %v2652, %v2652
        %v2781 = vpack.c.b16 %v2653, %v2653
        %v2782 = vpack.c.b16 %v2654, %v2654
        %v2783 = vpack.c.b16 %v2655, %v2655
        %v2784 = vpack.c.b16 %v2656, %v2656
        %v2785 = vpack.c.b16 %v2657, %v2657
        %v2786 = vpack.c.b16 %v2658, %v2658
        %v2787 = vpack.c.b16 %v2659, %v2659
        %v2788 = vpack.c.b16 %v2660, %v2660
        %v2789 = vpack.c.b16 %v2661, %v2661
        %v2790 = vpack.c.b16 %v2662, %v2662
        %v2791 = vpack.c.b16 %v2663, %v2663
        %v2792 = vpack.c.b16 %v2664, %v2664
        %v2793 = vpack.c.b16 %v2665, %v2665
        %v2794 = vpack.c.b16 %v2666, %v2666
        %v2795 = vpack.c.b16 %v2667, %v2667
        %v2796 = vpack.c.b16 %v2668, %v2668
        %v2797 = vpack.c.b16 %v2669, %v2669
        %v2798 = vpack.c.b16 %v2670, %v2670
        %v2799 = vpack.c.b16 %v2671, %v2671
        %v2800 = vpack.c.b16 %v2672, %v2672
        %v2801 = vpack.c.b16 %v2673, %v2673
        %v2802 = vpack.c.b16 %v2674, %v2674
        %v2803 = vpack.c.b16 %v2675, %v2675
        %v2804 = vpack.c.b16 %v2676, %v2676
        %v2805 = vpack.c.b16 %v2677, %v2677
        %v2806 = vpack.c.b16 %v2678, %v2678
        %v2807 = vpack.c.b16 %v2679, %v2679
        %v2808 = vpack.c.b16 %v2680, %v2680
        %v2809 = vpack.c.b16 %v2681, %v2681
        %v2810 = vpack.c.b16 %v2682, %v2682
        %v2811 = vpack.c.b16 %v2683, %v2683
        %v2812 = vpack.c.b16 %v2684, %v2684
        %v2813 = vpack.c.b16 %v2685, %v2685
        %v2814 = vpack.c.b16 %v2686, %v2686
        %v2815 = vpack.c.b16 %v2687, %v2687
        %v2816 = vpack.c.b16 %v2688, %v2688
        %v2817 = vpack.c.b16 %v2689, %v2689
        %v2818 = vpack.c.b16 %v2690, %v2690
        %v2819 = vpack.c.b16 %v2691, %v2691
        %v2820 = vpack.c.b16 %v2692, %v2692
        %v2821 = vpack.c.b16 %v2693, %v2693
        %v2822 = vpack.c.b16 %v2694, %v2694
        %v2823 = vpack.c.b16 %v2695, %v2695
        %v2824 = vpack.c.b16 %v2696, %v2696
        %v2825 = vpack.c.b16 %v2697, %v2697
        %v2826 = vpack.c.b16 %v2698, %v2698
        %v2827 = vpack.c.b16 %v2699, %v2699
        %v2828 = vpack.c.b16 %v2700, %v2700
        %v2829 = vpack.c.b16 %v2701, %v2701
        %v2830 = vpack.c.b16 %v2702, %v2702
        %v2831 = vpack.c.b16 %v2703, %v2703
        %v2832 = vpack.c.b16 %v2704, %v2704
        %v2833 = vpack.c.b16 %v2705, %v2705
        %v2834 = vpack.c.b16 %v2706, %v2706
        %v2835 = vpack.c.b16 %v2707, %v2707
        %v2836 = vpack.c.b16 %v2708, %v2708
        %v2837 = vpack.c.b16 %v2709, %v2709
        %v2838 = vpack.c.b16 %v2710, %v2710
        %v2839 = vpack.c.b16 %v2711, %v2711
        %v2840 = vpack.c.b16 %v2712, %v2712
        %v2841 = vpack.c.b16 %v2713, %v2713
        %v2842 = vpack.c.b16 %v2714, %v2714
        %v2843 = vpack.c.b16 %v2715, %v2715
        %v2844 = vpack.c.b16 %v2716, %v2716
        %v2845 = vpack.c.b16 %v2717, %v2717
        %v2846 = vpack.c.b16 %v2718, %v2718
        %v2847 = vpack.c.b16 %v2719, %v2719
        %v2848 = vpack.c.b16 %v2720, %v2720
        %v2849 = vpack.c.b16 %v2721, %v2721
        %v2850 = vpack.c.b16 %v2722, %v2722
        %2979 = vst [vmem:[%s298] sm:$0xf] %v2723
        %2980 = vst [vmem:[%s298 + $0x4] sm:$0xf] %v2724
        %2981 = vst [vmem:[%s298 + $0x8] sm:$0xf] %v2725
        %2982 = vst [vmem:[%s298 + $0xc] sm:$0xf] %v2726
        %2983 = vst [vmem:[%s298 + $0x10] sm:$0xf] %v2727
        %2984 = vst [vmem:[%s298 + $0x14] sm:$0xf] %v2728
        %2985 = vst [vmem:[%s298 + $0x18] sm:$0xf] %v2729
        %2986 = vst [vmem:[%s298 + $0x1c] sm:$0xf] %v2730
        %2987 = vst [vmem:[%s298 + $0x20] sm:$0xf] %v2731
        %2988 = vst [vmem:[%s298 + $0x24] sm:$0xf] %v2732
        %2989 = vst [vmem:[%s298 + $0x28] sm:$0xf] %v2733
        %2990 = vst [vmem:[%s298 + $0x2c] sm:$0xf] %v2734
        %2991 = vst [vmem:[%s298 + $0x30] sm:$0xf] %v2735
        %2992 = vst [vmem:[%s298 + $0x34] sm:$0xf] %v2736
        %2993 = vst [vmem:[%s298 + $0x38] sm:$0xf] %v2737
        %2994 = vst [vmem:[%s298 + $0x3c] sm:$0xf] %v2738
        %2995 = vst [vmem:[%s298 + $0x40] sm:$0xf] %v2739
        %2996 = vst [vmem:[%s298 + $0x44] sm:$0xf] %v2740
        %2997 = vst [vmem:[%s298 + $0x48] sm:$0xf] %v2741
        %2998 = vst [vmem:[%s298 + $0x4c] sm:$0xf] %v2742
        %2999 = vst [vmem:[%s298 + $0x50] sm:$0xf] %v2743
        %3000 = vst [vmem:[%s298 + $0x54] sm:$0xf] %v2744
        %3001 = vst [vmem:[%s298 + $0x58] sm:$0xf] %v2745
        %3002 = vst [vmem:[%s298 + $0x5c] sm:$0xf] %v2746
        %3003 = vst [vmem:[%s298 + $0x60] sm:$0xf] %v2747
        %3004 = vst [vmem:[%s298 + $0x64] sm:$0xf] %v2748
        %3005 = vst [vmem:[%s298 + $0x68] sm:$0xf] %v2749
        %3006 = vst [vmem:[%s298 + $0x6c] sm:$0xf] %v2750
        %3007 = vst [vmem:[%s298 + $0x70] sm:$0xf] %v2751
        %3008 = vst [vmem:[%s298 + $0x74] sm:$0xf] %v2752
        %3009 = vst [vmem:[%s298 + $0x78] sm:$0xf] %v2753
        %3010 = vst [vmem:[%s298 + $0x7c] sm:$0xf] %v2754
        %3011 = vst [vmem:[%s298 + $0x80] sm:$0xf] %v2755
        %3012 = vst [vmem:[%s298 + $0x84] sm:$0xf] %v2756
        %3013 = vst [vmem:[%s298 + $0x88] sm:$0xf] %v2757
        %3014 = vst [vmem:[%s298 + $0x8c] sm:$0xf] %v2758
        %3015 = vst [vmem:[%s298 + $0x90] sm:$0xf] %v2759
        %3016 = vst [vmem:[%s298 + $0x94] sm:$0xf] %v2760
        %3017 = vst [vmem:[%s298 + $0x98] sm:$0xf] %v2761
        %3018 = vst [vmem:[%s298 + $0x9c] sm:$0xf] %v2762
        %3019 = vst [vmem:[%s298 + $0xa0] sm:$0xf] %v2763
        %3020 = vst [vmem:[%s298 + $0xa4] sm:$0xf] %v2764
        %3021 = vst [vmem:[%s298 + $0xa8] sm:$0xf] %v2765
        %3022 = vst [vmem:[%s298 + $0xac] sm:$0xf] %v2766
        %3023 = vst [vmem:[%s298 + $0xb0] sm:$0xf] %v2767
        %3024 = vst [vmem:[%s298 + $0xb4] sm:$0xf] %v2768
        %3025 = vst [vmem:[%s298 + $0xb8] sm:$0xf] %v2769
        %3026 = vst [vmem:[%s298 + $0xbc] sm:$0xf] %v2770
        %3027 = vst [vmem:[%s298 + $0xc0] sm:$0xf] %v2771
        %3028 = vst [vmem:[%s298 + $0xc4] sm:$0xf] %v2772
        %3029 = vst [vmem:[%s298 + $0xc8] sm:$0xf] %v2773
        %3030 = vst [vmem:[%s298 + $0xcc] sm:$0xf] %v2774
        %3031 = vst [vmem:[%s298 + $0xd0] sm:$0xf] %v2775
        %3032 = vst [vmem:[%s298 + $0xd4] sm:$0xf] %v2776
        %3033 = vst [vmem:[%s298 + $0xd8] sm:$0xf] %v2777
        %3034 = vst [vmem:[%s298 + $0xdc] sm:$0xf] %v2778
        %3035 = vst [vmem:[%s298 + $0xe0] sm:$0xf] %v2779
        %3036 = vst [vmem:[%s298 + $0xe4] sm:$0xf] %v2780
        %3037 = vst [vmem:[%s298 + $0xe8] sm:$0xf] %v2781
        %3038 = vst [vmem:[%s298 + $0xec] sm:$0xf] %v2782
        %3039 = vst [vmem:[%s298 + $0xf0] sm:$0xf] %v2783
        %3040 = vst [vmem:[%s298 + $0xf4] sm:$0xf] %v2784
        %3041 = vst [vmem:[%s298 + $0xf8] sm:$0xf] %v2785
        %3042 = vst [vmem:[%s298 + $0xfc] sm:$0xf] %v2786
        %3043 = vst [vmem:[%s298 + $0x100] sm:$0xf] %v2787
        %3044 = vst [vmem:[%s298 + $0x104] sm:$0xf] %v2788
        %3045 = vst [vmem:[%s298 + $0x108] sm:$0xf] %v2789
        %3046 = vst [vmem:[%s298 + $0x10c] sm:$0xf] %v2790
        %3047 = vst [vmem:[%s298 + $0x110] sm:$0xf] %v2791
        %3048 = vst [vmem:[%s298 + $0x114] sm:$0xf] %v2792
        %3049 = vst [vmem:[%s298 + $0x118] sm:$0xf] %v2793
        %3050 = vst [vmem:[%s298 + $0x11c] sm:$0xf] %v2794
        %3051 = vst [vmem:[%s298 + $0x120] sm:$0xf] %v2795
        %3052 = vst [vmem:[%s298 + $0x124] sm:$0xf] %v2796
        %3053 = vst [vmem:[%s298 + $0x128] sm:$0xf] %v2797
        %3054 = vst [vmem:[%s298 + $0x12c] sm:$0xf] %v2798
        %3055 = vst [vmem:[%s298 + $0x130] sm:$0xf] %v2799
        %3056 = vst [vmem:[%s298 + $0x134] sm:$0xf] %v2800
        %3057 = vst [vmem:[%s298 + $0x138] sm:$0xf] %v2801
        %3058 = vst [vmem:[%s298 + $0x13c] sm:$0xf] %v2802
        %3059 = vst [vmem:[%s298 + $0x140] sm:$0xf] %v2803
        %3060 = vst [vmem:[%s298 + $0x144] sm:$0xf] %v2804
        %3061 = vst [vmem:[%s298 + $0x148] sm:$0xf] %v2805
        %3062 = vst [vmem:[%s298 + $0x14c] sm:$0xf] %v2806
        %3063 = vst [vmem:[%s298 + $0x150] sm:$0xf] %v2807
        %3064 = vst [vmem:[%s298 + $0x154] sm:$0xf] %v2808
        %3065 = vst [vmem:[%s298 + $0x158] sm:$0xf] %v2809
        %3066 = vst [vmem:[%s298 + $0x15c] sm:$0xf] %v2810
        %3067 = vst [vmem:[%s298 + $0x160] sm:$0xf] %v2811
        %3068 = vst [vmem:[%s298 + $0x164] sm:$0xf] %v2812
        %3069 = vst [vmem:[%s298 + $0x168] sm:$0xf] %v2813
        %3070 = vst [vmem:[%s298 + $0x16c] sm:$0xf] %v2814
        %3071 = vst [vmem:[%s298 + $0x170] sm:$0xf] %v2815
        %3072 = vst [vmem:[%s298 + $0x174] sm:$0xf] %v2816
        %3073 = vst [vmem:[%s298 + $0x178] sm:$0xf] %v2817
        %3074 = vst [vmem:[%s298 + $0x17c] sm:$0xf] %v2818
        %3075 = vst [vmem:[%s298 + $0x180] sm:$0xf] %v2819
        %3076 = vst [vmem:[%s298 + $0x184] sm:$0xf] %v2820
        %3077 = vst [vmem:[%s298 + $0x188] sm:$0xf] %v2821
        %3078 = vst [vmem:[%s298 + $0x18c] sm:$0xf] %v2822
        %3079 = vst [vmem:[%s298 + $0x190] sm:$0xf] %v2823
        %3080 = vst [vmem:[%s298 + $0x194] sm:$0xf] %v2824
        %3081 = vst [vmem:[%s298 + $0x198] sm:$0xf] %v2825
        %3082 = vst [vmem:[%s298 + $0x19c] sm:$0xf] %v2826
        %3083 = vst [vmem:[%s298 + $0x1a0] sm:$0xf] %v2827
        %3084 = vst [vmem:[%s298 + $0x1a4] sm:$0xf] %v2828
        %3085 = vst [vmem:[%s298 + $0x1a8] sm:$0xf] %v2829
        %3086 = vst [vmem:[%s298 + $0x1ac] sm:$0xf] %v2830
        %3087 = vst [vmem:[%s298 + $0x1b0] sm:$0xf] %v2831
        %3088 = vst [vmem:[%s298 + $0x1b4] sm:$0xf] %v2832
        %3089 = vst [vmem:[%s298 + $0x1b8] sm:$0xf] %v2833
        %3090 = vst [vmem:[%s298 + $0x1bc] sm:$0xf] %v2834
        %3091 = vst [vmem:[%s298 + $0x1c0] sm:$0xf] %v2835
        %3092 = vst [vmem:[%s298 + $0x1c4] sm:$0xf] %v2836
        %3093 = vst [vmem:[%s298 + $0x1c8] sm:$0xf] %v2837
        %3094 = vst [vmem:[%s298 + $0x1cc] sm:$0xf] %v2838
        %3095 = vst [vmem:[%s298 + $0x1d0] sm:$0xf] %v2839
        %3096 = vst [vmem:[%s298 + $0x1d4] sm:$0xf] %v2840
        %3097 = vst [vmem:[%s298 + $0x1d8] sm:$0xf] %v2841
        %3098 = vst [vmem:[%s298 + $0x1dc] sm:$0xf] %v2842
        %3099 = vst [vmem:[%s298 + $0x1e0] sm:$0xf] %v2843
        %3100 = vst [vmem:[%s298 + $0x1e4] sm:$0xf] %v2844
        %3101 = vst [vmem:[%s298 + $0x1e8] sm:$0xf] %v2845
        %3102 = vst [vmem:[%s298 + $0x1ec] sm:$0xf] %v2846
        %3103 = vst [vmem:[%s298 + $0x1f0] sm:$0xf] %v2847
        %3104 = vst [vmem:[%s298 + $0x1f4] sm:$0xf] %v2848
        %3105 = vst [vmem:[%s298 + $0x1f8] sm:$0xf] %v2849
        %3106 = vst [vmem:[%s298 + $0x1fc] sm:$0xf] %v2850
      $region44: #{depth_lstm_forward.10} parent=35 // pred_fallthru
        _
      %s3107 = smul.u32 128, %s20
      %p3108 = scmp.lt.s32.totalorder %s3107, 255
      %s3109 = scalar_select %p3108, %s3107, 255
      %p3110 = scmp.lt.s32.totalorder %s21, 0
      %s3111 = scalar_select %p3110, %s21, 0
      %s3112 = sadd.s32 %s3111, %s3109
      %s3113 = smul.addr %s3112, 4
      %s3114 = scalar_lea.vmem %s4, %s3113
      // Predicated region
      $region45: #{depth_lstm_forward.10} parent=35 // pred_check
        %p3115 = pneg %p162
      $region46: #{depth_lstm_forward.10} parent=35 // pred_check_branch
        %3117 = sbr.rel (%p3115) target = $region48
      $region47: #{depth_lstm_forward.10} parent=35 // pred_region
        %s3118 = smul.u32 128, %s20
      $region48: #{depth_lstm_forward.10} parent=35 // pred_fallthru
        _
    $region36: #{depth_lstm_forward.10} parent=5 // pred_fallthru
      _
    %p3119 = scmp.le.s32.totalorder 2, %s10
    // Predicated region
    $region49: #{depth_lstm_forward.10} parent=5 // pred_check
      %p3120 = pneg %p3119
    $region50: #{depth_lstm_forward.10} parent=5 // pred_check_branch
      %3122 = sbr.rel (%p3120) target = $region52
    $region51: #{depth_lstm_forward.10} parent=5 // pred_region
      %s3123 = ssub.s32 %s10, 2
      // Predicated region
      $region53: #{depth_lstm_forward.10} parent=51 // pred_check
        %p3124 = pneg %p168
      $region54: #{depth_lstm_forward.10} parent=51 // pred_check_branch
        %3126 = sbr.rel (%p3124) target = $region56
      $region55: #{depth_lstm_forward.10} parent=51 // pred_region
        %s3127 = smul.u32 128, %s23
        %p3128 = scmp.lt.s32.totalorder %s3127, 255
        %s3129 = scalar_select %p3128, %s3127, 255
        %p3130 = scmp.lt.s32.totalorder %s24, 0
        %s3131 = scalar_select %p3130, %s24, 0
        %s3132 = sadd.s32 %s3131, %s3129
        %s3133 = smul.addr %s3132, 4
        %s3134 = scalar_lea.vmem %s4, %s3133
      $region56: #{depth_lstm_forward.10} parent=51 // pred_fallthru
        _
    $region52: #{depth_lstm_forward.10} parent=5 // pred_fallthru
      _
  $region6: #{depth_lstm_forward.10} parent=0 // loop_footer
    %s14 = sadd.s32 1, %s10
  $region7: #{depth_lstm_forward.10} parent=0 // loop_footer_branch
    %9 = sbr.rel target = $region3
  $region8: #{depth_lstm_forward.10} parent=0 // loop_exit
    _

// kernel: depth_lstm_forward.13
$region0: #{depth_lstm_forward.13}
  #allocation0 [shape = 'u32[]', space=smem, size = 0x4, offset = 0x4, fixed_abs, tag = 'smem constant byte address 0x4 - core index']
  #allocation1 [shape = 'u32[144,128]{1,0:T(1,128)}', space=vmem, size = 0x12000, scoped, tag = 'internal scratch']
  #allocation2 [shape = 'f32[120,256]{1,0:T(8,128)}', space=vmem, size = 0x1e000, scoped, tag = 'scratch operand']
  %s0 = inlined_call_operand.vmem [shape: bf16[120,128], index: 0, kind: input, shape index: {}]
  %s1 = inlined_call_operand.vmem [shape: bf16[128,256], index: 1, kind: input, shape index: {}]
  %s2 = inlined_call_operand.vmem [shape: f32[1,256], index: 2, kind: input, shape index: {}]
  %s3 = inlined_call_operand.vmem [shape: f32[1,256], index: 3, kind: input, shape index: {}]
  %s4 = inlined_call_operand.vmem [shape: f32[120,256], index: 4, kind: output, shape index: {}]
  %s5 = sld [smem:[#allocation0]]
  $region34: #{depth_lstm_forward.13} parent=0
    _
  %s7 = ssub.s32 1, %s5
  %s8 = scalar_select 0, %s7, %s5
  // Predicated region
  $region2: #{depth_lstm_forward.13} parent=0 // pred_check
    _
  $region3: #{depth_lstm_forward.13} parent=0 // pred_check_branch
    %10 = sbr.rel (0) target = $region5
  $region4: #{depth_lstm_forward.13} parent=0 // pred_region
    _
  $region5: #{depth_lstm_forward.13} parent=0 // pred_fallthru
    _
  // Predicated region
  $region6: #{depth_lstm_forward.13} parent=0 // pred_check
    _
  $region7: #{depth_lstm_forward.13} parent=0 // pred_check_branch
    %12 = sbr.rel (0) target = $region9
  $region8: #{depth_lstm_forward.13} parent=0 // pred_region
    _
  $region9: #{depth_lstm_forward.13} parent=0 // pred_fallthru
    _
  // Predicated region
  $region10: #{depth_lstm_forward.13} parent=0 // pred_check
    _
  $region11: #{depth_lstm_forward.13} parent=0 // pred_check_branch
    %14 = sbr.rel (0) target = $region13
  $region12: #{depth_lstm_forward.13} parent=0 // pred_region
    _
  $region13: #{depth_lstm_forward.13} parent=0 // pred_fallthru
    _
  // Predicated region
  $region14: #{depth_lstm_forward.13} parent=0 // pred_check
    _
  $region15: #{depth_lstm_forward.13} parent=0 // pred_check_branch
    %16 = sbr.rel (0) target = $region17
  $region16: #{depth_lstm_forward.13} parent=0 // pred_region
    _
  $region17: #{depth_lstm_forward.13} parent=0 // pred_fallthru
    _
  %p18 = scmp.eq.s32.totalorder 0, 0
  // Predicated region
  $region18: #{depth_lstm_forward.13} parent=0 // pred_check
    %p19 = pneg %p18
  $region19: #{depth_lstm_forward.13} parent=0 // pred_check_branch
    %21 = sbr.rel (%p19) target = $region21
  $region20: #{depth_lstm_forward.13} parent=0 // pred_region
    %22 = vst [vmem:[#allocation2] sm:$0xff] 0.0
    %23 = vst [vmem:[#allocation2 + $0x8] sm:$0xff] 0.0
    %24 = vst [vmem:[#allocation2 + $0x10] sm:$0xff] 0.0
    %25 = vst [vmem:[#allocation2 + $0x18] sm:$0xff] 0.0
    %26 = vst [vmem:[#allocation2 + $0x20] sm:$0xff] 0.0
    %27 = vst [vmem:[#allocation2 + $0x28] sm:$0xff] 0.0
    %28 = vst [vmem:[#allocation2 + $0x30] sm:$0xff] 0.0
    %29 = vst [vmem:[#allocation2 + $0x38] sm:$0xff] 0.0
    %30 = vst [vmem:[#allocation2 + $0x40] sm:$0xff] 0.0
    %31 = vst [vmem:[#allocation2 + $0x48] sm:$0xff] 0.0
    %32 = vst [vmem:[#allocation2 + $0x50] sm:$0xff] 0.0
    %33 = vst [vmem:[#allocation2 + $0x58] sm:$0xff] 0.0
    %34 = vst [vmem:[#allocation2 + $0x60] sm:$0xff] 0.0
    %35 = vst [vmem:[#allocation2 + $0x68] sm:$0xff] 0.0
    %36 = vst [vmem:[#allocation2 + $0x70] sm:$0xff] 0.0
    %37 = vst [vmem:[#allocation2 + $0x78] sm:$0xff] 0.0
    %38 = vst [vmem:[#allocation2 + $0x80] sm:$0xff] 0.0
    %39 = vst [vmem:[#allocation2 + $0x88] sm:$0xff] 0.0
    %40 = vst [vmem:[#allocation2 + $0x90] sm:$0xff] 0.0
    %41 = vst [vmem:[#allocation2 + $0x98] sm:$0xff] 0.0
    %42 = vst [vmem:[#allocation2 + $0xa0] sm:$0xff] 0.0
    %43 = vst [vmem:[#allocation2 + $0xa8] sm:$0xff] 0.0
    %44 = vst [vmem:[#allocation2 + $0xb0] sm:$0xff] 0.0
    %45 = vst [vmem:[#allocation2 + $0xb8] sm:$0xff] 0.0
    %46 = vst [vmem:[#allocation2 + $0xc0] sm:$0xff] 0.0
    %47 = vst [vmem:[#allocation2 + $0xc8] sm:$0xff] 0.0
    %48 = vst [vmem:[#allocation2 + $0xd0] sm:$0xff] 0.0
    %49 = vst [vmem:[#allocation2 + $0xd8] sm:$0xff] 0.0
    %50 = vst [vmem:[#allocation2 + $0xe0] sm:$0xff] 0.0
    %51 = vst [vmem:[#allocation2 + $0xe8] sm:$0xff] 0.0
  $region21: #{depth_lstm_forward.13} parent=0 // pred_fallthru
    _
  %v52 = vld [vmem:[#allocation2] sm:$0xff]
  %v53 = vld [vmem:[#allocation2 + $0x8] sm:$0xff]
  %v54 = vld [vmem:[#allocation2 + $0x10] sm:$0xff]
  %v55 = vld [vmem:[#allocation2 + $0x18] sm:$0xff]
  %v56 = vld [vmem:[#allocation2 + $0x20] sm:$0xff]
  %v57 = vld [vmem:[#allocation2 + $0x28] sm:$0xff]
  %v58 = vld [vmem:[#allocation2 + $0x30] sm:$0xff]
  %v59 = vld [vmem:[#allocation2 + $0x38] sm:$0xff]
  %v60 = vld [vmem:[#allocation2 + $0x40] sm:$0xff]
  %v61 = vld [vmem:[#allocation2 + $0x48] sm:$0xff]
  %v62 = vld [vmem:[#allocation2 + $0x50] sm:$0xff]
  %v63 = vld [vmem:[#allocation2 + $0x58] sm:$0xff]
  %v64 = vld [vmem:[#allocation2 + $0x60] sm:$0xff]
  %v65 = vld [vmem:[#allocation2 + $0x68] sm:$0xff]
  %v66 = vld [vmem:[#allocation2 + $0x70] sm:$0xff]
  %v67 = vld [vmem:[#allocation2 + $0x78] sm:$0xff]
  %v68 = vld [vmem:[#allocation2 + $0x80] sm:$0xff]
  %v69 = vld [vmem:[#allocation2 + $0x88] sm:$0xff]
  %v70 = vld [vmem:[#allocation2 + $0x90] sm:$0xff]
  %v71 = vld [vmem:[#allocation2 + $0x98] sm:$0xff]
  %v72 = vld [vmem:[#allocation2 + $0xa0] sm:$0xff]
  %v73 = vld [vmem:[#allocation2 + $0xa8] sm:$0xff]
  %v74 = vld [vmem:[#allocation2 + $0xb0] sm:$0xff]
  %v75 = vld [vmem:[#allocation2 + $0xb8] sm:$0xff]
  %v76 = vld [vmem:[#allocation2 + $0xc0] sm:$0xff]
  %v77 = vld [vmem:[#allocation2 + $0xc8] sm:$0xff]
  %v78 = vld [vmem:[#allocation2 + $0xd0] sm:$0xff]
  %v79 = vld [vmem:[#allocation2 + $0xd8] sm:$0xff]
  %v80 = vld [vmem:[#allocation2 + $0xe0] sm:$0xff]
  %v81 = vld [vmem:[#allocation2 + $0xe8] sm:$0xff]
  %v82 = vld [vmem:[%s0] sm:$0xf]
  %v83 = vld [vmem:[%s0 + $0x4] sm:$0xf]
  %v84 = vld [vmem:[%s0 + $0x8] sm:$0xf]
  %v85 = vld [vmem:[%s0 + $0xc] sm:$0xf]
  %v86 = vld [vmem:[%s0 + $0x10] sm:$0xf]
  %v87 = vld [vmem:[%s0 + $0x14] sm:$0xf]
  %v88 = vld [vmem:[%s0 + $0x18] sm:$0xf]
  %v89 = vld [vmem:[%s0 + $0x1c] sm:$0xf]
  %v90 = vld [vmem:[%s0 + $0x20] sm:$0xf]
  %v91 = vld [vmem:[%s0 + $0x24] sm:$0xf]
  %v92 = vld [vmem:[%s0 + $0x28] sm:$0xf]
  %v93 = vld [vmem:[%s0 + $0x2c] sm:$0xf]
  %v94 = vld [vmem:[%s0 + $0x30] sm:$0xf]
  %v95 = vld [vmem:[%s0 + $0x34] sm:$0xf]
  %v96 = vld [vmem:[%s0 + $0x38] sm:$0xf]
  %v97 = vld [vmem:[%s1] sm:$0xff]
  %v98 = vld [vmem:[%s1 + $0x8] sm:$0xff]
  %v99 = vld [vmem:[%s1 + $0x10] sm:$0xff]
  %v100 = vld [vmem:[%s1 + $0x18] sm:$0xff]
  %v101 = vld [vmem:[%s1 + $0x20] sm:$0xff]
  %v102 = vld [vmem:[%s1 + $0x28] sm:$0xff]
  %v103 = vld [vmem:[%s1 + $0x30] sm:$0xff]
  %v104 = vld [vmem:[%s1 + $0x38] sm:$0xff]
  %v105 = vld [vmem:[%s1 + $0x40] sm:$0xff]
  %v106 = vld [vmem:[%s1 + $0x48] sm:$0xff]
  %v107 = vld [vmem:[%s1 + $0x50] sm:$0xff]
  %v108 = vld [vmem:[%s1 + $0x58] sm:$0xff]
  %v109 = vld [vmem:[%s1 + $0x60] sm:$0xff]
  %v110 = vld [vmem:[%s1 + $0x68] sm:$0xff]
  %v111 = vld [vmem:[%s1 + $0x70] sm:$0xff]
  %v112 = vld [vmem:[%s1 + $0x78] sm:$0xff]
  %v128 = vunpack.c.l.b16 %v82
  %v129 = vunpack.c.l.b16 %v83
  %v130 = vunpack.c.l.b16 %v84
  %v131 = vunpack.c.l.b16 %v85
  %v132 = vunpack.c.l.b16 %v86
  %v133 = vunpack.c.l.b16 %v87
  %v134 = vunpack.c.l.b16 %v88
  %v135 = vunpack.c.l.b16 %v89
  %v136 = vunpack.c.l.b16 %v90
  %v137 = vunpack.c.l.b16 %v91
  %v138 = vunpack.c.l.b16 %v92
  %v139 = vunpack.c.l.b16 %v93
  %v140 = vunpack.c.l.b16 %v94
  %v141 = vunpack.c.l.b16 %v95
  %v142 = vunpack.c.l.b16 %v96
  %v143 = vpack.c.b16 %v129, %v128
  %v144 = vpack.c.b16 %v131, %v130
  %v145 = vpack.c.b16 %v133, %v132
  %v146 = vpack.c.b16 %v135, %v134
  %v147 = vpack.c.b16 %v137, %v136
  %v148 = vpack.c.b16 %v139, %v138
  %v149 = vpack.c.b16 %v141, %v140
  %v150 = vpack.c.b16 %v142, %v142
  %v175 = vunpack.c.l.b16 %v97
  %v176 = vunpack.c.h.b16 %v97
  %v177 = vunpack.c.l.b16 %v98
  %v178 = vunpack.c.h.b16 %v98
  %v179 = vunpack.c.l.b16 %v99
  %v180 = vunpack.c.h.b16 %v99
  %v181 = vunpack.c.l.b16 %v100
  %v182 = vunpack.c.h.b16 %v100
  %v183 = vunpack.c.l.b16 %v101
  %v184 = vunpack.c.h.b16 %v101
  %v185 = vunpack.c.l.b16 %v102
  %v186 = vunpack.c.h.b16 %v102
  %v187 = vunpack.c.l.b16 %v103
  %v188 = vunpack.c.h.b16 %v103
  %v189 = vunpack.c.l.b16 %v104
  %v190 = vunpack.c.h.b16 %v104
  %v191 = vunpack.c.l.b16 %v105
  %v192 = vunpack.c.h.b16 %v105
  %v193 = vunpack.c.l.b16 %v106
  %v194 = vunpack.c.h.b16 %v106
  %v195 = vunpack.c.l.b16 %v107
  %v196 = vunpack.c.h.b16 %v107
  %v197 = vunpack.c.l.b16 %v108
  %v198 = vunpack.c.h.b16 %v108
  %v199 = vunpack.c.l.b16 %v109
  %v200 = vunpack.c.h.b16 %v109
  %v201 = vunpack.c.l.b16 %v110
  %v202 = vunpack.c.h.b16 %v110
  %v203 = vunpack.c.l.b16 %v111
  %v204 = vunpack.c.h.b16 %v111
  %v205 = vunpack.c.l.b16 %v112
  %v206 = vunpack.c.h.b16 %v112
  %v207 = vpack.c.b16 %v177, %v175
  %v208 = vpack.c.b16 %v178, %v176
  %v209 = vpack.c.b16 %v181, %v179
  %v210 = vpack.c.b16 %v182, %v180
  %v211 = vpack.c.b16 %v185, %v183
  %v212 = vpack.c.b16 %v186, %v184
  %v213 = vpack.c.b16 %v189, %v187
  %v214 = vpack.c.b16 %v190, %v188
  %v215 = vpack.c.b16 %v193, %v191
  %v216 = vpack.c.b16 %v194, %v192
  %v217 = vpack.c.b16 %v197, %v195
  %v218 = vpack.c.b16 %v198, %v196
  %v219 = vpack.c.b16 %v201, %v199
  %v220 = vpack.c.b16 %v202, %v200
  %v221 = vpack.c.b16 %v205, %v203
  %v222 = vpack.c.b16 %v206, %v204
  %239 = vmatprep.subr.bf16.mxu0 %v208
  %240 = vmatpush1.bf16.msra.mxu0 %v207
  %241 = vmatprep.subr.bf16.mxu0 %v210
  %242 = vmatpush1.bf16.msra.mxu0 %v209
  %243 = vmatprep.subr.bf16.mxu0 %v212
  %244 = vmatpush1.bf16.msra.mxu0 %v211
  %245 = vmatprep.subr.bf16.mxu0 %v214
  %246 = vmatpush1.bf16.msra.mxu0 %v213
  %247 = vmatprep.subr.bf16.mxu0 %v216
  %248 = vmatpush1.bf16.msra.mxu0 %v215
  %249 = vmatprep.subr.bf16.mxu0 %v218
  %250 = vmatpush1.bf16.msra.mxu0 %v217
  %251 = vmatprep.subr.bf16.mxu0 %v220
  %252 = vmatpush1.bf16.msra.mxu0 %v219
  %253 = vmatprep.subr.bf16.mxu0 %v222
  %254 = vmatpush1.bf16.msra.mxu0 %v221
  %255 = vmatprep.subr.bf16.mxu0 0
  %256 = vmatpush1.bf16.msra.mxu0 0
  %257 = vmatprep.subr.bf16.mxu0 0
  %258 = vmatpush1.bf16.msra.mxu0 0
  %259 = vmatprep.subr.bf16.mxu0 0
  %260 = vmatpush1.bf16.msra.mxu0 0
  %261 = vmatprep.subr.bf16.mxu0 0
  %262 = vmatpush1.bf16.msra.mxu0 0
  %263 = vmatprep.subr.bf16.mxu0 0
  %264 = vmatpush1.bf16.msra.mxu0 0
  %265 = vmatprep.subr.bf16.mxu0 0
  %266 = vmatpush1.bf16.msra.mxu0 0
  %267 = vmatprep.subr.bf16.mxu0 0
  %268 = vmatpush1.bf16.msra.mxu0 0
  %269 = vmatprep.subr.bf16.mxu0 0
  %270 = vmatpush1.bf16.msra.mxu0 0
  %271 = vmatprep.mubr.bf16.mxu0 0
  %272 = vmatmul.mubr.bf16.gmra.mrb[0].mxu0 %v143
  %v273 = vpop.f32.mrb[0].mxu0
  %v274 = vadd.f32 0.0, %v273
  %v275 = vpop.f32.mrb[0].mxu0
  %v276 = vadd.f32 0.0, %v275
  %v277 = vpop.f32.mrb[0].mxu0
  %v278 = vadd.f32 0.0, %v277
  %v279 = vpop.f32.mrb[0].mxu0
  %v280 = vadd.f32 0.0, %v279
  %281 = vmatprep.mubr.bf16.mxu0 0
  %282 = vmatmul.mubr.bf16.gmra.mrb[0].mxu0 %v144
  %v283 = vpop.f32.mrb[0].mxu0
  %v284 = vadd.f32 0.0, %v283
  %v285 = vpop.f32.mrb[0].mxu0
  %v286 = vadd.f32 0.0, %v285
  %v287 = vpop.f32.mrb[0].mxu0
  %v288 = vadd.f32 0.0, %v287
  %v289 = vpop.f32.mrb[0].mxu0
  %v290 = vadd.f32 0.0, %v289
  %291 = vmatprep.mubr.bf16.mxu0 0
  %292 = vmatmul.mubr.bf16.gmra.mrb[0].mxu0 %v145
  %v293 = vpop.f32.mrb[0].mxu0
  %v294 = vadd.f32 0.0, %v293
  %v295 = vpop.f32.mrb[0].mxu0
  %v296 = vadd.f32 0.0, %v295
  %v297 = vpop.f32.mrb[0].mxu0
  %v298 = vadd.f32 0.0, %v297
  %v299 = vpop.f32.mrb[0].mxu0
  %v300 = vadd.f32 0.0, %v299
  %301 = vmatprep.mubr.bf16.mxu0 0
  %302 = vmatmul.mubr.bf16.gmra.mrb[0].mxu0 %v146
  %v303 = vpop.f32.mrb[0].mxu0
  %v304 = vadd.f32 0.0, %v303
  %v305 = vpop.f32.mrb[0].mxu0
  %v306 = vadd.f32 0.0, %v305
  %v307 = vpop.f32.mrb[0].mxu0
  %v308 = vadd.f32 0.0, %v307
  %v309 = vpop.f32.mrb[0].mxu0
  %v310 = vadd.f32 0.0, %v309
  %311 = vmatprep.mubr.bf16.mxu0 0
  %312 = vmatmul.mubr.bf16.gmra.mrb[0].mxu0 %v147
  %v313 = vpop.f32.mrb[0].mxu0
  %v314 = vadd.f32 0.0, %v313
  %v315 = vpop.f32.mrb[0].mxu0
  %v316 = vadd.f32 0.0, %v315
  %v317 = vpop.f32.mrb[0].mxu0
  %v318 = vadd.f32 0.0, %v317
  %v319 = vpop.f32.mrb[0].mxu0
  %v320 = vadd.f32 0.0, %v319
  %321 = vmatprep.mubr.bf16.mxu0 0
  %322 = vmatmul.mubr.bf16.gmra.mrb[0].mxu0 %v148
  %v323 = vpop.f32.mrb[0].mxu0
  %v324 = vadd.f32 0.0, %v323
  %v325 = vpop.f32.mrb[0].mxu0
  %v326 = vadd.f32 0.0, %v325
  %v327 = vpop.f32.mrb[0].mxu0
  %v328 = vadd.f32 0.0, %v327
  %v329 = vpop.f32.mrb[0].mxu0
  %v330 = vadd.f32 0.0, %v329
  %331 = vmatprep.mubr.bf16.mxu0 0
  %332 = vmatmul.mubr.bf16.gmra.mrb[0].mxu0 %v149
  %v333 = vpop.f32.mrb[0].mxu0
  %v334 = vadd.f32 0.0, %v333
  %v335 = vpop.f32.mrb[0].mxu0
  %v336 = vadd.f32 0.0, %v335
  %v337 = vpop.f32.mrb[0].mxu0
  %v338 = vadd.f32 0.0, %v337
  %v339 = vpop.f32.mrb[0].mxu0
  %v340 = vadd.f32 0.0, %v339
  %341 = vmatprep.mubr.bf16.mxu0 0
  %342 = vmatmul.mubr.bf16.gmra.mrb[0].mxu0 %v150
  %v343 = vpop.f32.mrb[0].mxu0
  %v344 = vadd.f32 0.0, %v343
  %v345 = vpop.f32.mrb[0].mxu0
  %v346 = vadd.f32 0.0, %v345
  %v347 = vpop.f32.mrb[0].mxu0
  %v348 = vpop.f32.mrb[0].mxu0
  %349 = vdwg.mxu0
  %v350 = vadd.f32 %v52, %v274
  %v351 = vadd.f32 %v53, %v276
  %v352 = vadd.f32 %v54, %v278
  %v353 = vadd.f32 %v55, %v280
  %v354 = vadd.f32 %v56, %v284
  %v355 = vadd.f32 %v57, %v286
  %v356 = vadd.f32 %v58, %v288
  %v357 = vadd.f32 %v59, %v290
  %v358 = vadd.f32 %v60, %v294
  %v359 = vadd.f32 %v61, %v296
  %v360 = vadd.f32 %v62, %v298
  %v361 = vadd.f32 %v63, %v300
  %v362 = vadd.f32 %v64, %v304
  %v363 = vadd.f32 %v65, %v306
  %v364 = vadd.f32 %v66, %v308
  %v365 = vadd.f32 %v67, %v310
  %v366 = vadd.f32 %v68, %v314
  %v367 = vadd.f32 %v69, %v316
  %v368 = vadd.f32 %v70, %v318
  %v369 = vadd.f32 %v71, %v320
  %v370 = vadd.f32 %v72, %v324
  %v371 = vadd.f32 %v73, %v326
  %v372 = vadd.f32 %v74, %v328
  %v373 = vadd.f32 %v75, %v330
  %v374 = vadd.f32 %v76, %v334
  %v375 = vadd.f32 %v77, %v336
  %v376 = vadd.f32 %v78, %v338
  %v377 = vadd.f32 %v79, %v340
  %v378 = vadd.f32 %v80, %v344
  %v379 = vadd.f32 %v81, %v346
  %380 = vst [vmem:[#allocation2] sm:$0xff] %v350
  %381 = vst [vmem:[#allocation2 + $0x8] sm:$0xff] %v351
  %382 = vst [vmem:[#allocation2 + $0x10] sm:$0xff] %v352
  %383 = vst [vmem:[#allocation2 + $0x18] sm:$0xff] %v353
  %384 = vst [vmem:[#allocation2 + $0x20] sm:$0xff] %v354
  %385 = vst [vmem:[#allocation2 + $0x28] sm:$0xff] %v355
  %386 = vst [vmem:[#allocation2 + $0x30] sm:$0xff] %v356
  %387 = vst [vmem:[#allocation2 + $0x38] sm:$0xff] %v357
  %388 = vst [vmem:[#allocation2 + $0x40] sm:$0xff] %v358
  %389 = vst [vmem:[#allocation2 + $0x48] sm:$0xff] %v359
  %390 = vst [vmem:[#allocation2 + $0x50] sm:$0xff] %v360
  %391 = vst [vmem:[#allocation2 + $0x58] sm:$0xff] %v361
  %392 = vst [vmem:[#allocation2 + $0x60] sm:$0xff] %v362
  %393 = vst [vmem:[#allocation2 + $0x68] sm:$0xff] %v363
  %394 = vst [vmem:[#allocation2 + $0x70] sm:$0xff] %v364
  %395 = vst [vmem:[#allocation2 + $0x78] sm:$0xff] %v365
  %396 = vst [vmem:[#allocation2 + $0x80] sm:$0xff] %v366
  %397 = vst [vmem:[#allocation2 + $0x88] sm:$0xff] %v367
  %398 = vst [vmem:[#allocation2 + $0x90] sm:$0xff] %v368
  %399 = vst [vmem:[#allocation2 + $0x98] sm:$0xff] %v369
  %400 = vst [vmem:[#allocation2 + $0xa0] sm:$0xff] %v370
  %401 = vst [vmem:[#allocation2 + $0xa8] sm:$0xff] %v371
  %402 = vst [vmem:[#allocation2 + $0xb0] sm:$0xff] %v372
  %403 = vst [vmem:[#allocation2 + $0xb8] sm:$0xff] %v373
  %404 = vst [vmem:[#allocation2 + $0xc0] sm:$0xff] %v374
  %405 = vst [vmem:[#allocation2 + $0xc8] sm:$0xff] %v375
  %406 = vst [vmem:[#allocation2 + $0xd0] sm:$0xff] %v376
  %407 = vst [vmem:[#allocation2 + $0xd8] sm:$0xff] %v377
  %408 = vst [vmem:[#allocation2 + $0xe0] sm:$0xff] %v378
  %409 = vst [vmem:[#allocation2 + $0xe8] sm:$0xff] %v379
  // Predicated region
  $region22: #{depth_lstm_forward.13} parent=0 // pred_check
    %p410 = pneg %p18
  $region23: #{depth_lstm_forward.13} parent=0 // pred_check_branch
    %412 = sbr.rel (%p410) target = $region25
  $region24: #{depth_lstm_forward.13} parent=0 // pred_region
    %v413 = vld [vmem:[#allocation2] sm:$0xff]
    %v414 = vld [vmem:[#allocation2 + $0x8] sm:$0xff]
    %v415 = vld [vmem:[#allocation2 + $0x10] sm:$0xff]
    %v416 = vld [vmem:[#allocation2 + $0x18] sm:$0xff]
    %v417 = vld [vmem:[#allocation2 + $0x20] sm:$0xff]
    %v418 = vld [vmem:[#allocation2 + $0x28] sm:$0xff]
    %v419 = vld [vmem:[#allocation2 + $0x30] sm:$0xff]
    %v420 = vld [vmem:[#allocation2 + $0x38] sm:$0xff]
    %v421 = vld [vmem:[#allocation2 + $0x40] sm:$0xff]
    %v422 = vld [vmem:[#allocation2 + $0x48] sm:$0xff]
    %v423 = vld [vmem:[#allocation2 + $0x50] sm:$0xff]
    %v424 = vld [vmem:[#allocation2 + $0x58] sm:$0xff]
    %v425 = vld [vmem:[#allocation2 + $0x60] sm:$0xff]
    %v426 = vld [vmem:[#allocation2 + $0x68] sm:$0xff]
    %v427 = vld [vmem:[#allocation2 + $0x70] sm:$0xff]
    %v428 = vld [vmem:[#allocation2 + $0x78] sm:$0xff]
    %v429 = vld [vmem:[#allocation2 + $0x80] sm:$0xff]
    %v430 = vld [vmem:[#allocation2 + $0x88] sm:$0xff]
    %v431 = vld [vmem:[#allocation2 + $0x90] sm:$0xff]
    %v432 = vld [vmem:[#allocation2 + $0x98] sm:$0xff]
    %v433 = vld [vmem:[#allocation2 + $0xa0] sm:$0xff]
    %v434 = vld [vmem:[#allocation2 + $0xa8] sm:$0xff]
    %v435 = vld [vmem:[#allocation2 + $0xb0] sm:$0xff]
    %v436 = vld [vmem:[#allocation2 + $0xb8] sm:$0xff]
    %v437 = vld [vmem:[#allocation2 + $0xc0] sm:$0xff]
    %v438 = vld [vmem:[#allocation2 + $0xc8] sm:$0xff]
    %v439 = vld [vmem:[#allocation2 + $0xd0] sm:$0xff]
    %v440 = vld [vmem:[#allocation2 + $0xd8] sm:$0xff]
    %v441 = vld [vmem:[#allocation2 + $0xe0] sm:$0xff]
    %v442 = vld [vmem:[#allocation2 + $0xe8] sm:$0xff]
    %v443 = vld [vmem:[%s2] sm:$0x3]
    %v445 = vlaneseq
    %v446 = vshrl.u32 %v445, 7
    %v447 = vsub.s32 0, %v446
    %v448 = vrot.slane %v443, %v447
    %v449 = vlaneseq
    %v450 = vshrl.u32 %v449, 7
    %v451 = vsub.s32 1, %v450
    %v452 = vrot.slane %v443, %v451
    %v455 = vmul.f32 %v413, %v448
    %v456 = vmul.f32 %v414, %v452
    %v457 = vmul.f32 %v415, %v448
    %v458 = vmul.f32 %v416, %v452
    %v459 = vmul.f32 %v417, %v448
    %v460 = vmul.f32 %v418, %v452
    %v461 = vmul.f32 %v419, %v448
    %v462 = vmul.f32 %v420, %v452
    %v463 = vmul.f32 %v421, %v448
    %v464 = vmul.f32 %v422, %v452
    %v465 = vmul.f32 %v423, %v448
    %v466 = vmul.f32 %v424, %v452
    %v467 = vmul.f32 %v425, %v448
    %v468 = vmul.f32 %v426, %v452
    %v469 = vmul.f32 %v427, %v448
    %v470 = vmul.f32 %v428, %v452
    %v471 = vmul.f32 %v429, %v448
    %v472 = vmul.f32 %v430, %v452
    %v473 = vmul.f32 %v431, %v448
    %v474 = vmul.f32 %v432, %v452
    %v475 = vmul.f32 %v433, %v448
    %v476 = vmul.f32 %v434, %v452
    %v477 = vmul.f32 %v435, %v448
    %v478 = vmul.f32 %v436, %v452
    %v479 = vmul.f32 %v437, %v448
    %v480 = vmul.f32 %v438, %v452
    %v481 = vmul.f32 %v439, %v448
    %v482 = vmul.f32 %v440, %v452
    %v483 = vmul.f32 %v441, %v448
    %v484 = vmul.f32 %v442, %v452
    %v485 = vld [vmem:[%s3] sm:$0x3]
    %v487 = vlaneseq
    %v488 = vshrl.u32 %v487, 7
    %v489 = vsub.s32 0, %v488
    %v490 = vrot.slane %v485, %v489
    %v491 = vlaneseq
    %v492 = vshrl.u32 %v491, 7
    %v493 = vsub.s32 1, %v492
    %v494 = vrot.slane %v485, %v493
    %v497 = vadd.f32 %v455, %v490
    %v498 = vadd.f32 %v456, %v494
    %v499 = vadd.f32 %v457, %v490
    %v500 = vadd.f32 %v458, %v494
    %v501 = vadd.f32 %v459, %v490
    %v502 = vadd.f32 %v460, %v494
    %v503 = vadd.f32 %v461, %v490
    %v504 = vadd.f32 %v462, %v494
    %v505 = vadd.f32 %v463, %v490
    %v506 = vadd.f32 %v464, %v494
    %v507 = vadd.f32 %v465, %v490
    %v508 = vadd.f32 %v466, %v494
    %v509 = vadd.f32 %v467, %v490
    %v510 = vadd.f32 %v468, %v494
    %v511 = vadd.f32 %v469, %v490
    %v512 = vadd.f32 %v470, %v494
    %v513 = vadd.f32 %v471, %v490
    %v514 = vadd.f32 %v472, %v494
    %v515 = vadd.f32 %v473, %v490
    %v516 = vadd.f32 %v474, %v494
    %v517 = vadd.f32 %v475, %v490
    %v518 = vadd.f32 %v476, %v494
    %v519 = vadd.f32 %v477, %v490
    %v520 = vadd.f32 %v478, %v494
    %v521 = vadd.f32 %v479, %v490
    %v522 = vadd.f32 %v480, %v494
    %v523 = vadd.f32 %v481, %v490
    %v524 = vadd.f32 %v482, %v494
    %v525 = vadd.f32 %v483, %v490
    %v526 = vadd.f32 %v484, %v494
    %527 = vst [vmem:[%s4] sm:$0xff] %v497
    %528 = vst [vmem:[%s4 + $0x8] sm:$0xff] %v498
    %529 = vst [vmem:[%s4 + $0x10] sm:$0xff] %v499
    %530 = vst [vmem:[%s4 + $0x18] sm:$0xff] %v500
    %531 = vst [vmem:[%s4 + $0x20] sm:$0xff] %v501
    %532 = vst [vmem:[%s4 + $0x28] sm:$0xff] %v502
    %533 = vst [vmem:[%s4 + $0x30] sm:$0xff] %v503
    %534 = vst [vmem:[%s4 + $0x38] sm:$0xff] %v504
    %535 = vst [vmem:[%s4 + $0x40] sm:$0xff] %v505
    %536 = vst [vmem:[%s4 + $0x48] sm:$0xff] %v506
    %537 = vst [vmem:[%s4 + $0x50] sm:$0xff] %v507
    %538 = vst [vmem:[%s4 + $0x58] sm:$0xff] %v508
    %539 = vst [vmem:[%s4 + $0x60] sm:$0xff] %v509
    %540 = vst [vmem:[%s4 + $0x68] sm:$0xff] %v510
    %541 = vst [vmem:[%s4 + $0x70] sm:$0xff] %v511
    %542 = vst [vmem:[%s4 + $0x78] sm:$0xff] %v512
    %543 = vst [vmem:[%s4 + $0x80] sm:$0xff] %v513
    %544 = vst [vmem:[%s4 + $0x88] sm:$0xff] %v514
    %545 = vst [vmem:[%s4 + $0x90] sm:$0xff] %v515
    %546 = vst [vmem:[%s4 + $0x98] sm:$0xff] %v516
    %547 = vst [vmem:[%s4 + $0xa0] sm:$0xff] %v517
    %548 = vst [vmem:[%s4 + $0xa8] sm:$0xff] %v518
    %549 = vst [vmem:[%s4 + $0xb0] sm:$0xff] %v519
    %550 = vst [vmem:[%s4 + $0xb8] sm:$0xff] %v520
    %551 = vst [vmem:[%s4 + $0xc0] sm:$0xff] %v521
    %552 = vst [vmem:[%s4 + $0xc8] sm:$0xff] %v522
    %553 = vst [vmem:[%s4 + $0xd0] sm:$0xff] %v523
    %554 = vst [vmem:[%s4 + $0xd8] sm:$0xff] %v524
    %555 = vst [vmem:[%s4 + $0xe0] sm:$0xff] %v525
    %556 = vst [vmem:[%s4 + $0xe8] sm:$0xff] %v526
  $region25: #{depth_lstm_forward.13} parent=0 // pred_fallthru
    _
  // Predicated region
  $region26: #{depth_lstm_forward.13} parent=0 // pred_check
    _
  $region27: #{depth_lstm_forward.13} parent=0 // pred_check_branch
    %558 = sbr.rel (0) target = $region29
  $region28: #{depth_lstm_forward.13} parent=0 // pred_region
    _
  $region29: #{depth_lstm_forward.13} parent=0 // pred_fallthru
    _
  // Predicated region
  $region30: #{depth_lstm_forward.13} parent=0 // pred_check
    _
  $region31: #{depth_lstm_forward.13} parent=0 // pred_check_branch
    %560 = sbr.rel (0) target = $region33
  $region32: #{depth_lstm_forward.13} parent=0 // pred_region
    _
  $region33: #{depth_lstm_forward.13} parent=0 // pred_fallthru
    _

// kernel: depth_lstm_forward.14
$region0: #{depth_lstm_forward.14}
  #allocation0 [shape = 'u32[]', space=smem, size = 0x4, offset = 0x4, fixed_abs, tag = 'smem constant byte address 0x4 - core index']
  #allocation1 [shape = 'u32[144,128]{1,0:T(1,128)}', space=vmem, size = 0x12000, scoped, tag = 'internal scratch']
  %s0 = inlined_call_operand.vmem [shape: f32[2,60,2,128], index: 0, kind: input, shape index: {}]
  %s1 = inlined_call_operand.vmem [shape: bf16[2,32,128], index: 1, kind: input, shape index: {}]
  %s2 = inlined_call_operand.vmem [shape: f32[2,2,32], index: 2, kind: output, shape index: {}]
  %s3 = sld [smem:[#allocation0]]
  $region48: #{depth_lstm_forward.14} parent=0
    _
  %s5 = ssub.s32 1, %s3
  %s6 = scalar_select 0, %s5, %s3
  loop: start=0, step=1, limit=4
  $region2: #{depth_lstm_forward.14} parent=0 // loop_pre_header
    _
  $region3: #{depth_lstm_forward.14} parent=0 // loop_header
    %s8 = sphi 0, %s12
    %p9 = scmp.ge.s32.totalorder %s8, 4
    %s18 = sphi 0, %s20
    %s21 = sphi 0, %s18
    %s22 = sphi 0, %s21
    %s38 = sphi 0, %s22
    %s44 = sphi 0, %s46
    %s47 = sphi 0, %s44
    %s48 = sphi 0, %s47
    %s64 = sphi 0, %s48
    %s70 = sphi 0, %s72
    %s73 = sphi 0, %s70
    %s74 = sphi 0, %s73
    %s90 = sphi 0, %s74
  $region4: #{depth_lstm_forward.14} parent=0 // loop_header_branch
    %11 = sbr.rel (%p9) target = $region8
  $region5: #{depth_lstm_forward.14} parent=0 // loop_body
    %s13 = ssub.s32 %s8, 1
    %s14 = ssub.s32 %s8, 2
    %s15 = sadd.s32 %s8, 1
    %s16 = ssub.s32 %s8, %s15
    %p17 = scmp.eq.s32.totalorder %s16, 0
    %s19 = sadd.s32 %s18, 1
    %s20 = scalar_select %p17, %s18, %s19
    %p23 = pneg %p17
    %p24 = scmp.eq.s32.totalorder %s8, 1
    %p25 = por %p23, %p24
    %p26 = scmp.ne.s32.totalorder %s18, %s21
    %p27 = scmp.eq.s32.totalorder %s8, 0
    %p28 = por %p26, %p27
    %p29 = scmp.ne.s32.totalorder %s18, %s21
    %p30 = scmp.eq.s32.totalorder %s13, 1
    %p31 = por %p29, %p30
    %p32 = scmp.ne.s32.totalorder %s21, %s22
    %p33 = scmp.eq.s32.totalorder %s13, 0
    %p34 = por %p32, %p33
    %p35 = scmp.ne.s32.totalorder %s21, %s22
    %p36 = scmp.eq.s32.totalorder %s14, 1
    %p37 = por %p35, %p36
    %p39 = scmp.ne.s32.totalorder %s22, %s38
    %p40 = scmp.eq.s32.totalorder %s14, 0
    %p41 = por %p39, %p40
    %s42 = ssub.s32 %s8, %s15
    %p43 = scmp.eq.s32.totalorder %s42, 0
    %s45 = sadd.s32 %s44, 1
    %s46 = scalar_select %p43, %s44, %s45
    %p49 = pneg %p43
    %p50 = scmp.eq.s32.totalorder %s8, 1
    %p51 = por %p49, %p50
    %p52 = scmp.ne.s32.totalorder %s44, %s47
    %p53 = scmp.eq.s32.totalorder %s8, 0
    %p54 = por %p52, %p53
    %p55 = scmp.ne.s32.totalorder %s44, %s47
    %p56 = scmp.eq.s32.totalorder %s13, 1
    %p57 = por %p55, %p56
    %p58 = scmp.ne.s32.totalorder %s47, %s48
    %p59 = scmp.eq.s32.totalorder %s13, 0
    %p60 = por %p58, %p59
    %p61 = scmp.ne.s32.totalorder %s47, %s48
    %p62 = scmp.eq.s32.totalorder %s14, 1
    %p63 = por %p61, %p62
    %p65 = scmp.ne.s32.totalorder %s48, %s64
    %p66 = scmp.eq.s32.totalorder %s14, 0
    %p67 = por %p65, %p66
    %s68 = ssub.s32 %s8, %s15
    %p69 = scmp.eq.s32.totalorder %s68, 0
    %s71 = sadd.s32 %s70, 1
    %s72 = scalar_select %p69, %s70, %s71
    %p75 = pneg %p69
    %p76 = scmp.eq.s32.totalorder %s8, 1
    %p77 = por %p75, %p76
    %p78 = scmp.ne.s32.totalorder %s70, %s73
    %p79 = scmp.eq.s32.totalorder %s8, 0
    %p80 = por %p78, %p79
    %p81 = scmp.ne.s32.totalorder %s70, %s73
    %p82 = scmp.eq.s32.totalorder %s13, 1
    %p83 = por %p81, %p82
    %p84 = scmp.ne.s32.totalorder %s73, %s74
    %p85 = scmp.eq.s32.totalorder %s13, 0
    %p86 = por %p84, %p85
    %p87 = scmp.ne.s32.totalorder %s73, %s74
    %p88 = scmp.eq.s32.totalorder %s14, 1
    %p89 = por %p87, %p88
    %p91 = scmp.ne.s32.totalorder %s74, %s90
    %p92 = scmp.eq.s32.totalorder %s14, 0
    %p93 = por %p91, %p92
    %p94 = scmp.le.s32.totalorder 1, %s8
    %p95 = scmp.lt.s32.totalorder %s8, 3
    %p96 = pnand %p94, %p95
    %p97 = pneg %p96
    // Predicated region
    $region9: #{depth_lstm_forward.14} parent=5 // pred_check
      _
    $region10: #{depth_lstm_forward.14} parent=5 // pred_check_branch
      %99 = sbr.rel (%p96) target = $region12
    $region11: #{depth_lstm_forward.14} parent=5 // pred_region
      %s100 = ssub.s32 %s8, 1
    $region12: #{depth_lstm_forward.14} parent=5 // pred_fallthru
      _
    %p101 = scmp.lt.s32.totalorder %s8, 2
    // Predicated region
    $region13: #{depth_lstm_forward.14} parent=5 // pred_check
      %p102 = pneg %p101
    $region14: #{depth_lstm_forward.14} parent=5 // pred_check_branch
      %104 = sbr.rel (%p102) target = $region16
    $region15: #{depth_lstm_forward.14} parent=5 // pred_region
      // Predicated region
      $region17: #{depth_lstm_forward.14} parent=15 // pred_check
        %p105 = pneg %p28
      $region18: #{depth_lstm_forward.14} parent=15 // pred_check_branch
        %107 = sbr.rel (%p105) target = $region20
      $region19: #{depth_lstm_forward.14} parent=15 // pred_region
        %p108 = scmp.lt.s32.totalorder %s8, 1
        %s109 = scalar_select %p108, %s8, 1
        %s110 = smul.addr %s109, 60
        %s111 = smul.addr %s110, 2
        %s112 = scalar_lea.vmem %s0, %s111
      $region20: #{depth_lstm_forward.14} parent=15 // pred_fallthru
        _
      // Predicated region
      $region21: #{depth_lstm_forward.14} parent=15 // pred_check
        %p113 = pneg %p54
      $region22: #{depth_lstm_forward.14} parent=15 // pred_check_branch
        %115 = sbr.rel (%p113) target = $region24
      $region23: #{depth_lstm_forward.14} parent=15 // pred_region
        %p116 = scmp.lt.s32.totalorder %s8, 1
        %s117 = scalar_select %p116, %s8, 1
        %s118 = smul.addr %s117, 4
        %s119 = smul.addr %s118, 4
        %s120 = scalar_lea.vmem %s1, %s119
      $region24: #{depth_lstm_forward.14} parent=15 // pred_fallthru
        _
    $region16: #{depth_lstm_forward.14} parent=5 // pred_fallthru
      _
    %p121 = scmp.le.s32.totalorder 1, %s8
    %p122 = scmp.lt.s32.totalorder %s8, 3
    %p123 = pnand %p121, %p122
    %p124 = pneg %p123
    // Predicated region
    $region25: #{depth_lstm_forward.14} parent=5 // pred_check
      _
    $region26: #{depth_lstm_forward.14} parent=5 // pred_check_branch
      %126 = sbr.rel (%p123) target = $region28
    $region27: #{depth_lstm_forward.14} parent=5 // pred_region
      %s127 = ssub.s32 %s8, 1
      %p128 = scmp.lt.s32.totalorder %s13, 1
      %s129 = scalar_select %p128, %s13, 1
      %s130 = smul.addr %s129, 60
      %s131 = smul.addr %s130, 2
      %s132 = scalar_lea.vmem %s0, %s131
      %p133 = pneg %p34
      %p134 = pneg %p31
      %p135 = scmp.lt.s32.totalorder %s13, 1
      %s136 = scalar_select %p135, %s13, 1
      %s137 = smul.addr %s136, 4
      %s138 = smul.addr %s137, 4
      %s139 = scalar_lea.vmem %s1, %s138
      %p140 = pneg %p60
      %p141 = pneg %p57
      %p142 = pneg %p86
      %p143 = pneg %p83
      %p144 = scmp.lt.s32.totalorder %s13, 1
      %s145 = scalar_select %p144, %s13, 1
      %s146 = smul.addr %s145, 2
      %s147 = scalar_lea.vmem %s2, %s146
      %p148 = scmp.lt.s32.totalorder %s13, 1
      %s149 = scalar_select %p148, %s13, 1
      %s150 = smul.addr %s149, 60
      %s151 = smul.addr %s150, 2
      %s152 = scalar_lea.vmem %s0, %s151
      %p153 = scmp.lt.s32.totalorder %s13, 1
      %s154 = scalar_select %p153, %s13, 1
      %s155 = smul.addr %s154, 4
      %s156 = smul.addr %s155, 4
      %s157 = scalar_lea.vmem %s1, %s156
      %p158 = scmp.lt.s32.totalorder %s13, 1
      %s159 = scalar_select %p158, %s13, 1
      %s160 = smul.addr %s159, 2
      %s161 = scalar_lea.vmem %s2, %s160
      %v163 = vld [vmem:[%s157] sm:$0xf]
      %v164 = vld [vmem:[%s157 + $0x4] sm:$0xf]
      %v165 = vld [vmem:[%s157 + $0x8] sm:$0xf]
      %v166 = vld [vmem:[%s157 + $0xc] sm:$0xf]
      loop: start=0, step=1, limit=60
      $region29: #{depth_lstm_forward.14} parent=27 // loop_pre_header
        _
      $region30: #{depth_lstm_forward.14} parent=27 // loop_header
        %s168 = sphi 0, %s172
        %p169 = scmp.ge.s32.totalorder %s168, 60
        %v173 = vphi 0.0, %v262
        %v174 = vphi 0.0, %v256
      $region31: #{depth_lstm_forward.14} parent=27 // loop_header_branch
        %171 = sbr.rel (%p169) target = $region35
      $region32: #{depth_lstm_forward.14} parent=27 // loop_body
        %s175 = smul.u32 %s168, 2
        %s176 = scalar_lea.vmem %s152, %s175
        %v177 = vld [vmem:[%s176] sm:$0x3]
        %v178 = vpack.c.bf16 %v173, %v173
        %180 = vrot.lane.b32.xlu0 %v178, 32
        %v181 = vpop.permute.xlu0 %180
        %v186 = vunpack.c.l.b16 %v163
        %v187 = vunpack.c.l.b16 %v164
        %v188 = vunpack.c.l.b16 %v165
        %v189 = vunpack.c.l.b16 %v166
        %v190 = vpack.c.b16 %v187, %v186
        %v191 = vpack.c.b16 %v189, %v188
        %vm194 = vcmask 261120
        %v196 = vsel %vm194, %v181, 0
        %198 = vmatprep.subr.bf16.mxu0 0
        %199 = vmatpush1.bf16.msra.mxu0 %v190
        %200 = vmatprep.subr.bf16.mxu0 0
        %201 = vmatpush1.bf16.msra.mxu0 %v191
        %202 = vmatprep.subr.bf16.mxu0 0
        %203 = vmatpush1.bf16.msra.mxu0 0
        %204 = vmatprep.subr.bf16.mxu0 0
        %205 = vmatpush1.bf16.msra.mxu0 0
        %206 = vmatprep.subr.bf16.mxu0 0
        %207 = vmatpush1.bf16.msra.mxu0 0
        %208 = vmatprep.subr.bf16.mxu0 0
        %209 = vmatpush1.bf16.msra.mxu0 0
        %210 = vmatprep.subr.bf16.mxu0 0
        %211 = vmatpush1.bf16.msra.mxu0 0
        %212 = vmatprep.subr.bf16.mxu0 0
        %213 = vmatpush1.bf16.msra.mxu0 0
        %214 = vmatprep.subr.bf16.mxu0 0
        %215 = vmatpush1.bf16.msra.mxu0 0
        %216 = vmatprep.subr.bf16.mxu0 0
        %217 = vmatpush1.bf16.msra.mxu0 0
        %218 = vmatprep.subr.bf16.mxu0 0
        %219 = vmatpush1.bf16.msra.mxu0 0
        %220 = vmatprep.subr.bf16.mxu0 0
        %221 = vmatpush1.bf16.msra.mxu0 0
        %222 = vmatprep.subr.bf16.mxu0 0
        %223 = vmatpush1.bf16.msra.mxu0 0
        %224 = vmatprep.subr.bf16.mxu0 0
        %225 = vmatpush1.bf16.msra.mxu0 0
        %226 = vmatprep.subr.bf16.mxu0 0
        %227 = vmatpush1.bf16.msra.mxu0 0
        %228 = vmatprep.subr.bf16.mxu0 0
        %229 = vmatpush1.bf16.msra.mxu0 0
        %230 = vmatprep.mubr.bf16.mxu0 0
        %231 = vmatmul.mubr.bf16.gmra.mrb[0].mxu0 %v196
        %v232 = vpop.f32.mrb[0].mxu0
        %v233 = vadd.f32 0.0, %v232
        %v234 = vpop.f32.mrb[0].mxu0
        %v235 = vpop.f32.mrb[0].mxu0
        %v236 = vpop.f32.mrb[0].mxu0
        %237 = vdwg.mxu0
        %v238 = vadd.f32 %v177, %v233
        %v239 = vsub.f32 0.0, %v238
        %v240 = vmul.f32 %v239, 1.442695
        %v241 = vpow.pop %v240
        %v242 = vadd.f32 %v241, 1.0
        %v243 = vrcp.pop %v242
        %v244 = vmul.f32 1.0, %v243
        %v245 = vtanh.pop %v238
        %v246 = vmul.f32 %v244, %v174
        %248 = vrot.lane.b32.xlu0 %v245, 64
        %v249 = vpop.permute.xlu0 %248
        %v251 = vmul.f32 %v244, %v249
        %253 = vrot.lane.b32.xlu0 %v251, 32
        %v254 = vpop.permute.xlu0 %253
        %v256 = vadd.f32 %v246, %v254
        %v257 = vtanh.pop %v256
        %259 = vrot.lane.b32.xlu0 %v257, 64
        %v260 = vpop.permute.xlu0 %259
        %v262 = vmul.f32 %v244, %v260
      $region33: #{depth_lstm_forward.14} parent=27 // loop_footer
        %s172 = sadd.s32 1, %s168
      $region34: #{depth_lstm_forward.14} parent=27 // loop_footer_branch
        %167 = sbr.rel target = $region30
      $region35: #{depth_lstm_forward.14} parent=27 // loop_exit
        _
      %264 = vrot.lane.b32.xlu0 %v173, 32
      %v265 = vpop.permute.xlu0 %264
      %vm267 = vcmask 254976
      %268 = vst.msk [vmem:[%s161] sm:$0x3] %vm267, %v265
      %p269 = scmp.lt.s32.totalorder %s13, 1
      %s270 = scalar_select %p269, %s13, 1
      %s271 = smul.addr %s270, 2
      %s272 = scalar_lea.vmem %s2, %s271
      // Predicated region
      $region36: #{depth_lstm_forward.14} parent=27 // pred_check
        %p273 = pneg %p83
      $region37: #{depth_lstm_forward.14} parent=27 // pred_check_branch
        %275 = sbr.rel (%p273) target = $region39
      $region38: #{depth_lstm_forward.14} parent=27 // pred_region
        _
      $region39: #{depth_lstm_forward.14} parent=27 // pred_fallthru
        _
    $region28: #{depth_lstm_forward.14} parent=5 // pred_fallthru
      _
    %p276 = scmp.le.s32.totalorder 2, %s8
    // Predicated region
    $region40: #{depth_lstm_forward.14} parent=5 // pred_check
      %p277 = pneg %p276
    $region41: #{depth_lstm_forward.14} parent=5 // pred_check_branch
      %279 = sbr.rel (%p277) target = $region43
    $region42: #{depth_lstm_forward.14} parent=5 // pred_region
      %s280 = ssub.s32 %s8, 2
      // Predicated region
      $region44: #{depth_lstm_forward.14} parent=42 // pred_check
        %p281 = pneg %p89
      $region45: #{depth_lstm_forward.14} parent=42 // pred_check_branch
        %283 = sbr.rel (%p281) target = $region47
      $region46: #{depth_lstm_forward.14} parent=42 // pred_region
        %p284 = scmp.lt.s32.totalorder %s14, 1
        %s285 = scalar_select %p284, %s14, 1
        %s286 = smul.addr %s285, 2
        %s287 = scalar_lea.vmem %s2, %s286
      $region47: #{depth_lstm_forward.14} parent=42 // pred_fallthru
        _
    $region43: #{depth_lstm_forward.14} parent=5 // pred_fallthru
      _
  $region6: #{depth_lstm_forward.14} parent=0 // loop_footer
    %s12 = sadd.s32 1, %s8
  $region7: #{depth_lstm_forward.14} parent=0 // loop_footer_branch
    %7 = sbr.rel target = $region3
  $region8: #{depth_lstm_forward.14} parent=0 // loop_exit
    _

// kernel: depth_lstm_forward.15
$region0: #{depth_lstm_forward.15}
  #allocation0 [shape = 'u32[]', space=smem, size = 0x4, offset = 0x4, fixed_abs, tag = 'smem constant byte address 0x4 - core index']
  #allocation1 [shape = 'u32[144,128]{1,0:T(1,128)}', space=vmem, size = 0x12000, scoped, tag = 'internal scratch']
  #allocation2 [shape = 'f32[8,128]{1,0:T(8,128)}', space=vmem, size = 0x1000, scoped, tag = 'scratch operand']
  %s0 = inlined_call_operand.vmem [shape: bf16[8,128], index: 0, kind: input, shape index: {}]
  %s1 = inlined_call_operand.vmem [shape: bf16[128,128], index: 1, kind: input, shape index: {}]
  %s2 = inlined_call_operand.vmem [shape: f32[1,128], index: 2, kind: input, shape index: {}]
  %s3 = inlined_call_operand.vmem [shape: f32[1,128], index: 3, kind: input, shape index: {}]
  %s4 = inlined_call_operand.vmem [shape: f32[8,128], index: 4, kind: output, shape index: {}]
  %s5 = sld [smem:[#allocation0]]
  $region34: #{depth_lstm_forward.15} parent=0
    _
  %s7 = ssub.s32 1, %s5
  %s8 = scalar_select 0, %s7, %s5
  // Predicated region
  $region2: #{depth_lstm_forward.15} parent=0 // pred_check
    _
  $region3: #{depth_lstm_forward.15} parent=0 // pred_check_branch
    %10 = sbr.rel (0) target = $region5
  $region4: #{depth_lstm_forward.15} parent=0 // pred_region
    _
  $region5: #{depth_lstm_forward.15} parent=0 // pred_fallthru
    _
  // Predicated region
  $region6: #{depth_lstm_forward.15} parent=0 // pred_check
    _
  $region7: #{depth_lstm_forward.15} parent=0 // pred_check_branch
    %12 = sbr.rel (0) target = $region9
  $region8: #{depth_lstm_forward.15} parent=0 // pred_region
    _
  $region9: #{depth_lstm_forward.15} parent=0 // pred_fallthru
    _
  // Predicated region
  $region10: #{depth_lstm_forward.15} parent=0 // pred_check
    _
  $region11: #{depth_lstm_forward.15} parent=0 // pred_check_branch
    %14 = sbr.rel (0) target = $region13
  $region12: #{depth_lstm_forward.15} parent=0 // pred_region
    _
  $region13: #{depth_lstm_forward.15} parent=0 // pred_fallthru
    _
  // Predicated region
  $region14: #{depth_lstm_forward.15} parent=0 // pred_check
    _
  $region15: #{depth_lstm_forward.15} parent=0 // pred_check_branch
    %16 = sbr.rel (0) target = $region17
  $region16: #{depth_lstm_forward.15} parent=0 // pred_region
    _
  $region17: #{depth_lstm_forward.15} parent=0 // pred_fallthru
    _
  %p18 = scmp.eq.s32.totalorder 0, 0
  // Predicated region
  $region18: #{depth_lstm_forward.15} parent=0 // pred_check
    %p19 = pneg %p18
  $region19: #{depth_lstm_forward.15} parent=0 // pred_check_branch
    %21 = sbr.rel (%p19) target = $region21
  $region20: #{depth_lstm_forward.15} parent=0 // pred_region
    %22 = vst [vmem:[#allocation2] sm:$0xff] 0.0
  $region21: #{depth_lstm_forward.15} parent=0 // pred_fallthru
    _
  %v23 = vld [vmem:[#allocation2] sm:$0xff]
  %v24 = vld [vmem:[%s0] sm:$0xf]
  %v25 = vld [vmem:[%s1] sm:$0xf]
  %v26 = vld [vmem:[%s1 + $0x4] sm:$0xf]
  %v27 = vld [vmem:[%s1 + $0x8] sm:$0xf]
  %v28 = vld [vmem:[%s1 + $0xc] sm:$0xf]
  %v29 = vld [vmem:[%s1 + $0x10] sm:$0xf]
  %v30 = vld [vmem:[%s1 + $0x14] sm:$0xf]
  %v31 = vld [vmem:[%s1 + $0x18] sm:$0xf]
  %v32 = vld [vmem:[%s1 + $0x1c] sm:$0xf]
  %v33 = vld [vmem:[%s1 + $0x20] sm:$0xf]
  %v34 = vld [vmem:[%s1 + $0x24] sm:$0xf]
  %v35 = vld [vmem:[%s1 + $0x28] sm:$0xf]
  %v36 = vld [vmem:[%s1 + $0x2c] sm:$0xf]
  %v37 = vld [vmem:[%s1 + $0x30] sm:$0xf]
  %v38 = vld [vmem:[%s1 + $0x34] sm:$0xf]
  %v39 = vld [vmem:[%s1 + $0x38] sm:$0xf]
  %v40 = vld [vmem:[%s1 + $0x3c] sm:$0xf]
  %v57 = vunpack.c.l.b16 %v25
  %v58 = vunpack.c.l.b16 %v26
  %v59 = vunpack.c.l.b16 %v27
  %v60 = vunpack.c.l.b16 %v28
  %v61 = vunpack.c.l.b16 %v29
  %v62 = vunpack.c.l.b16 %v30
  %v63 = vunpack.c.l.b16 %v31
  %v64 = vunpack.c.l.b16 %v32
  %v65 = vunpack.c.l.b16 %v33
  %v66 = vunpack.c.l.b16 %v34
  %v67 = vunpack.c.l.b16 %v35
  %v68 = vunpack.c.l.b16 %v36
  %v69 = vunpack.c.l.b16 %v37
  %v70 = vunpack.c.l.b16 %v38
  %v71 = vunpack.c.l.b16 %v39
  %v72 = vunpack.c.l.b16 %v40
  %v73 = vpack.c.b16 %v58, %v57
  %v74 = vpack.c.b16 %v60, %v59
  %v75 = vpack.c.b16 %v62, %v61
  %v76 = vpack.c.b16 %v64, %v63
  %v77 = vpack.c.b16 %v66, %v65
  %v78 = vpack.c.b16 %v68, %v67
  %v79 = vpack.c.b16 %v70, %v69
  %v80 = vpack.c.b16 %v72, %v71
  %89 = vmatprep.subr.bf16.mxu0 0
  %90 = vmatpush1.bf16.msra.mxu0 %v73
  %91 = vmatprep.subr.bf16.mxu0 0
  %92 = vmatpush1.bf16.msra.mxu0 %v74
  %93 = vmatprep.subr.bf16.mxu0 0
  %94 = vmatpush1.bf16.msra.mxu0 %v75
  %95 = vmatprep.subr.bf16.mxu0 0
  %96 = vmatpush1.bf16.msra.mxu0 %v76
  %97 = vmatprep.subr.bf16.mxu0 0
  %98 = vmatpush1.bf16.msra.mxu0 %v77
  %99 = vmatprep.subr.bf16.mxu0 0
  %100 = vmatpush1.bf16.msra.mxu0 %v78
  %101 = vmatprep.subr.bf16.mxu0 0
  %102 = vmatpush1.bf16.msra.mxu0 %v79
  %103 = vmatprep.subr.bf16.mxu0 0
  %104 = vmatpush1.bf16.msra.mxu0 %v80
  %105 = vmatprep.subr.bf16.mxu0 0
  %106 = vmatpush1.bf16.msra.mxu0 0
  %107 = vmatprep.subr.bf16.mxu0 0
  %108 = vmatpush1.bf16.msra.mxu0 0
  %109 = vmatprep.subr.bf16.mxu0 0
  %110 = vmatpush1.bf16.msra.mxu0 0
  %111 = vmatprep.subr.bf16.mxu0 0
  %112 = vmatpush1.bf16.msra.mxu0 0
  %113 = vmatprep.subr.bf16.mxu0 0
  %114 = vmatpush1.bf16.msra.mxu0 0
  %115 = vmatprep.subr.bf16.mxu0 0
  %116 = vmatpush1.bf16.msra.mxu0 0
  %117 = vmatprep.subr.bf16.mxu0 0
  %118 = vmatpush1.bf16.msra.mxu0 0
  %119 = vmatprep.subr.bf16.mxu0 0
  %120 = vmatpush1.bf16.msra.mxu0 0
  %121 = vmatprep.mubr.bf16.mxu0 0
  %122 = vmatmul.mubr.bf16.gmra.mrb[0].mxu0 %v24
  %v123 = vpop.f32.mrb[0].mxu0
  %v124 = vadd.f32 0.0, %v123
  %v125 = vpop.f32.mrb[0].mxu0
  %v126 = vpop.f32.mrb[0].mxu0
  %v127 = vpop.f32.mrb[0].mxu0
  %128 = vdwg.mxu0
  %v129 = vadd.f32 %v23, %v124
  %130 = vst [vmem:[#allocation2] sm:$0xff] %v129
  // Predicated region
  $region22: #{depth_lstm_forward.15} parent=0 // pred_check
    %p131 = pneg %p18
  $region23: #{depth_lstm_forward.15} parent=0 // pred_check_branch
    %133 = sbr.rel (%p131) target = $region25
  $region24: #{depth_lstm_forward.15} parent=0 // pred_region
    %v134 = vld [vmem:[#allocation2] sm:$0xff]
    %v135 = vld [vmem:[%s2] sm:$0x1]
    %v137 = vlaneseq
    %v138 = vshrl.u32 %v137, 7
    %v139 = vsub.s32 0, %v138
    %v140 = vrot.slane %v135, %v139
    %v142 = vmul.f32 %v134, %v140
    %v143 = vld [vmem:[%s3] sm:$0x1]
    %v145 = vlaneseq
    %v146 = vshrl.u32 %v145, 7
    %v147 = vsub.s32 0, %v146
    %v148 = vrot.slane %v143, %v147
    %v150 = vadd.f32 %v142, %v148
    %v151 = vlaneseq
    %v152 = vand.u32 %v151, 127
    %vm153 = vcmp.lt.s32.totalorder %v152, 10
    %v154 = vsel %vm153, %v150, -1e+30
    %155 = vmax.xlane.f32.xlu0 %v154
    %v156 = vpop.xlane.xlu0 %155
    %v157 = vsub.f32 %v154, %v156
    %v158 = vmul.f32 %v157, 1.442695
    %v159 = vpow.pop %v158
    %160 = vadd.xlane.f32.xlu0 %v159
    %v161 = vpop.xlane.xlu0 %160
    %v162 = vrcp.pop %v161
    %v163 = vmul.f32 %v159, %v162
    %164 = vst [vmem:[%s4] sm:$0xff] %v163
  $region25: #{depth_lstm_forward.15} parent=0 // pred_fallthru
    _
  // Predicated region
  $region26: #{depth_lstm_forward.15} parent=0 // pred_check
    _
  $region27: #{depth_lstm_forward.15} parent=0 // pred_check_branch
    %166 = sbr.rel (0) target = $region29
  $region28: #{depth_lstm_forward.15} parent=0 // pred_region
    _
  $region29: #{depth_lstm_forward.15} parent=0 // pred_fallthru
    _
  // Predicated region
  $region30: #{depth_lstm_forward.15} parent=0 // pred_check
    _
  $region31: #{depth_lstm_forward.15} parent=0 // pred_check_branch
    %168 = sbr.rel (0) target = $region33
  $region32: #{depth_lstm_forward.15} parent=0 // pred_region
    _
  $region33: #{depth_lstm_forward.15} parent=0 // pred_fallthru
    _

</llo_original>
